<compile_context>
chip_gen: v7x
topology: tpu7x:2x2x1
jax: 0.10.0
libtpu: 0.0.40
codegen_flags: <defaults>
</compile_context>

<pallas_src>
import functools
import re

import numpy as np

import jax
import jax.numpy as jnp
from jax import lax
from jax.experimental import pallas as pl
from jax.experimental.pallas import tpu as pltpu


# ----------------------------------------------------------------------------
# Small helpers
# ----------------------------------------------------------------------------
def _round_up(x, m):
    return (x + m - 1) // m * m


def _tpu_generation():
    """Best-effort TPU generation from device_kind; 0 if unknown."""
    try:
        kind = jax.devices()[0].device_kind.lower()
    except Exception:
        return 0
    m = re.search(r"v(\d+)", kind)
    return int(m.group(1)) if m else 0


def _vmem_capacity_bytes():
    try:
        cap = int(pltpu.get_tpu_info().vmem_capacity_bytes)
    except Exception:
        cap = 64 << 20                       # conservative (v7x per-TC floor)
    return max(cap, 48 << 20)


def _pad_last(a, new):
    if a.shape[-1] == new:
        return a
    pad = [(0, 0)] * (a.ndim - 1) + [(0, new - a.shape[-1])]
    return jnp.pad(a, pad)


def _pad_gates_last(w, H, Hp):
    """Pad the last dim of a (..., 4H) gate-blocked array to (..., 4Hp)."""
    if H == Hp:
        return w
    lead = w.shape[:-1]
    w4 = w.reshape(lead + (4, H))
    w4 = jnp.pad(w4, [(0, 0)] * (len(lead) + 1) + [(0, Hp - H)])
    return w4.reshape(lead + (4 * Hp,))


# ----------------------------------------------------------------------------
# Pallas kernel: LSTM recurrence + additive attention pooling + fused
# Linear+Sigmoid classification head.
# ----------------------------------------------------------------------------
def lstm_attn_cls_kernel(x_ref, len_ref, w_ih_ref, w_hh_ref, b_ref,
                         w_att_ref, b_att_ref, u_ctx_ref, w_cls_ref, b_cls_ref,
                         pooled_ref, cls_ref, xw_ref, hs_ref, *, bf16_act):
    # x_ref:     (bt, T, D)  bf16  batch-major input tile (no host transpose)
    # len_ref:   (1, bt)     int32 sequence lengths (batch on the lane axis)
    # w_ih_ref:  (D, 4H) bf16, w_hh_ref: (H, 4H) bf16, b_ref: (1, 4H) f32
    # w_att_ref: (H, H) bf16, b_att_ref: (1, H) f32, u_ctx_ref: (1, H) f32
    # w_cls_ref: (C, H) f32 (torch Linear layout), b_cls_ref: (1, C) f32
    # pooled_ref:(bt, H) f32   attention-pooled representation
    # cls_ref:   (bt, C) f32   sigmoid(pooled @ w_cls.T + b_cls)
    # xw_ref:    (bt, T, 4H) bf16 scratch: hoisted input projection
    # hs_ref:    (T, bt, H)  bf16 scratch: stored hidden states
    bt, T, D = x_ref.shape
    H = w_hh_ref.shape[0]
    C = w_cls_ref.shape[0]
    f32 = jnp.float32
    act_dt = jnp.bfloat16 if bf16_act else jnp.float32

    # ---- hoisted input projection: ONE bf16 MXU matmul, f32 accumulate -----
    x_flat = x_ref[...].reshape(bt * T, D)
    xw = jnp.dot(x_flat, w_ih_ref[...],
                 preferred_element_type=f32) + b_ref[...]
    xw_ref[...] = xw.reshape(bt, T, 4 * H).astype(jnp.bfloat16)

    w_hh = w_hh_ref[...]                                    # bf16 (H, 4H)

    # ---- serial recurrence: only h @ W_hh stays on the critical path -------
    # T is static & small -> fully unrolled Python loop, all slice offsets are
    # static (xw_ref[:, t] is a static sublane-offset read).  H is padded to a
    # multiple of 128 by the wrapper so each gate slice is lane-tile aligned.
    # Cell state c stays f32; gate activations optionally bf16 (v6e/v7x EUP).
    h = jnp.zeros((bt, H), jnp.bfloat16)
    c = jnp.zeros((bt, H), f32)
    for t in range(T):
        gates = (xw_ref[:, t].astype(f32)
                 + jnp.dot(h, w_hh, preferred_element_type=f32))
        g_act = gates.astype(act_dt)
        i_g = jax.nn.sigmoid(g_act[:, 0 * H:1 * H])
        f_g = jax.nn.sigmoid(g_act[:, 1 * H:2 * H])
        g_g = jnp.tanh(g_act[:, 2 * H:3 * H])
        o_g = jax.nn.sigmoid(g_act[:, 3 * H:4 * H])
        c = f_g.astype(f32) * c + i_g.astype(f32) * g_g.astype(f32)
        h = (o_g * jnp.tanh(c.astype(act_dt))).astype(jnp.bfloat16)
        hs_ref[t] = h

    # ---- additive attention over T, masked by sequence lengths -------------
    # Lane-dense softmax: everything is (T, bt) with bt on the lane axis; the
    # only 3-D arrays are the final broadcasted multiplies.
    hs = hs_ref[...]                                        # (T, bt, H) bf16
    lens = len_ref[...]                                     # (1, bt) int32
    t_iota = lax.broadcasted_iota(jnp.int32, (T, bt), 0)
    mask = t_iota < lens                                    # (T, bt) bool
    maskf = mask.astype(f32)

    u = jnp.tanh(
        jnp.dot(hs.reshape(T * bt, H), w_att_ref[...],
                preferred_element_type=f32) + b_att_ref[...])
    scores = jnp.sum(u.reshape(T, bt, H) * u_ctx_ref[...], axis=-1)  # (T, bt)
    scores = jnp.where(mask, scores, f32(-1e30))
    m = jnp.max(scores, axis=0, keepdims=True)              # (1, bt)
    e = jnp.exp(scores - m) * maskf                         # (T, bt)
    denom = jnp.sum(e, axis=0, keepdims=True)               # (1, bt)
    # zero-length guard + EUP reciprocal instead of a divide
    inv = pl.reciprocal(jnp.maximum(denom, f32(1e-20)), approx=True)
    alpha = e * inv                                         # (T, bt)
    pooled = jnp.sum(alpha[:, :, None] * hs.astype(f32), axis=0)   # (bt, H)
    pooled_ref[...] = pooled

    # ---- fused classification head: Linear + Sigmoid ------------------------
    w_cls = w_cls_ref[...]
    b_cls = b_cls_ref[...]
    if C == 1:
        # binary head: VPU multiply + cross-lane reduce; avoid a 1-wide MXU col
        logit = jnp.sum(pooled * w_cls, axis=-1, keepdims=True) + b_cls
    else:
        logit = lax.dot_general(pooled, w_cls, (((1,), (1,)), ((), ())),
                                preferred_element_type=f32) + b_cls
    # TODO(synk): for large C emit (C, bt) lane-dense and transpose in wrapper.
    cls_ref[...] = jax.nn.sigmoid(logit)


# ----------------------------------------------------------------------------
# Wrapper
# ----------------------------------------------------------------------------
def lstm_attention_classify(x_btd, lengths, p, w_cls, b_cls, *, block_b=None,
                            bf16_activations=None, lane_align_hidden=128):
    """Run LSTM + attention pooling + fused sigmoid head.

    x_btd:   (B, T, D) batch-major input (PyTorch batch_first layout)
    lengths: (B,) int32 valid timesteps per row
    p:       dict with w_ih (D,4H), w_hh (H,4H), b (1,4H), w_att (H,H),
             b_att (1,H), u_ctx (1,H)
    w_cls:   (C, H) torch Linear weight, b_cls: (1, C)
    Returns (pooled (B, H), cls (B, C)).
    """
    B, T, D = x_btd.shape
    H = p['w_hh'].shape[0]
    C = w_cls.shape[0]

    gen = _tpu_generation()
    if block_b is None:
        # v6e MXU is 2x256x256 -> 256 rows fill it; v5e (4x128x128) and v7x
        # (64 MiB VMEM, 2 TCs -> prefer >=2 grid steps) use 128.
        block_b = 256 if gen == 6 else 128
    if bf16_activations is None:
        # bf16 EUP/VPU exists on v6e/v7x only; on v5e it would just add casts.
        bf16_activations = gen >= 6

    # --- lane-align hidden size (zero padding keeps the math exact) ---------
    Hp = _round_up(H, lane_align_hidden)
    G = 4 * Hp
    w_ih = _pad_gates_last(p['w_ih'], H, Hp).astype(jnp.bfloat16)       # (D, 4Hp)
    w_hh = _pad_gates_last(p['w_hh'], H, Hp)
    w_hh = jnp.pad(w_hh, ((0, Hp - H), (0, 0))).astype(jnp.bfloat16)    # (Hp, 4Hp)
    b = _pad_gates_last(p['b'], H, Hp).astype(jnp.float32)              # (1, 4Hp)
    w_att = jnp.pad(p['w_att'],
                    ((0, Hp - H), (0, Hp - H))).astype(jnp.bfloat16)    # (Hp, Hp)
    b_att = _pad_last(p['b_att'], Hp).astype(jnp.float32)               # (1, Hp)
    u_ctx = _pad_last(p['u_ctx'], Hp).astype(jnp.float32)               # (1, Hp)
    w_cls_p = _pad_last(w_cls, Hp).astype(jnp.float32)                  # (C, Hp)
    b_cls = b_cls.astype(jnp.float32)

    # --- batch tiling: bt multiple of 8; if multiple tiles, multiple of 128
    #     (keeps the (1, bt) lengths block lane-tile aligned) -----------------
    full = _round_up(B, 8)
    bt = full if full <= block_b else max(128, (block_b // 128) * 128)
    Bp = _round_up(B, bt)

    x = x_btd.astype(jnp.bfloat16)            # batch-major; NO host transpose
    lengths = lengths.astype(jnp.int32)
    if Bp != B:
        x = jnp.pad(x, ((0, Bp - B), (0, 0), (0, 0)))
        lengths = jnp.pad(lengths, (0, Bp - B))        # padded rows: length 0
    lens2 = lengths.reshape(1, Bp)

    # --- explicit VMEM budget (headroom for in-kernel f32 temporaries) ------
    tile_bytes = (
        2 * (bt * T * D * 2)                        # x tile, double-buffered bf16
        + (D * G + Hp * G + Hp * Hp) * 2            # bf16 weights
        + (G + 3 * Hp + C * Hp + C + Bp) * 4        # small f32 params + lengths
        + (bt * T * G + T * bt * Hp) * 2            # bf16 scratch (xw, hs)
        + 2 * (bt * Hp + bt * C) * 4                # outputs, double-buffered
    )
    cap = _vmem_capacity_bytes()
    vmem_limit = int(min(cap - (4 << 20),
                         max(3 * tile_bytes + (8 << 20), 32 << 20)))

    kernel = functools.partial(lstm_attn_cls_kernel, bf16_act=bf16_activations)
    grid = (Bp // bt,)

    def _call(weight_mode):
        wkw = {} if weight_mode is None else {'pipeline_mode': weight_mode}
        in_specs = [
            pl.BlockSpec((bt, T, D), lambda i: (i, 0, 0)),      # x tile
            pl.BlockSpec((1, bt), lambda i: (0, i)),            # lengths tile
            pl.BlockSpec((D, G), lambda i: (0, 0), **wkw),      # w_ih
            pl.BlockSpec((Hp, G), lambda i: (0, 0), **wkw),     # w_hh
            pl.BlockSpec((1, G), lambda i: (0, 0), **wkw),      # b
            pl.BlockSpec((Hp, Hp), lambda i: (0, 0), **wkw),    # w_att
            pl.BlockSpec((1, Hp), lambda i: (0, 0), **wkw),     # b_att
            pl.BlockSpec((1, Hp), lambda i: (0, 0), **wkw),     # u_ctx
            pl.BlockSpec((C, Hp), lambda i: (0, 0), **wkw),     # w_cls
            pl.BlockSpec((1, C), lambda i: (0, 0), **wkw),      # b_cls
        ]
        out_specs = [
            pl.BlockSpec((bt, Hp), lambda i: (i, 0)),           # pooled
            pl.BlockSpec((bt, C), lambda i: (i, 0)),            # classification
        ]
        return pl.pallas_call(
            kernel,
            out_shape=(jax.ShapeDtypeStruct((Bp, Hp), jnp.float32),
                       jax.ShapeDtypeStruct((Bp, C), jnp.float32)),
            grid=grid,
            in_specs=in_specs,
            out_specs=out_specs,
            scratch_shapes=[pltpu.VMEM((bt, T, G), jnp.bfloat16),
                            pltpu.VMEM((T, bt, Hp), jnp.bfloat16)],
            compiler_params=pltpu.CompilerParams(
                dimension_semantics=("parallel",),
                vmem_limit_bytes=vmem_limit),
        )(x, lens2, w_ih, w_hh, b, w_att, b_att, u_ctx, w_cls_p, b_cls)

    try:
        # Grid-invariant weights: single-buffer to halve their VMEM footprint.
        pooled, cls = _call(pl.Buffered(1))
    except Exception:
        pooled, cls = _call(None)      # fall back to default buffering

    return pooled[:B, :H], cls[:B]


# ----------------------------------------------------------------------------
# Glue: parameter init and batch_reshape (ragged regrouping + pad_sequence)
# ----------------------------------------------------------------------------
def xavier_normal(key, shape):
    fan_out, fan_in = shape[0], shape[1]
    std = jnp.sqrt(2.0 / (fan_in + fan_out))
    return std * jax.random.normal(key, shape, dtype=jnp.float32)


def init_lstm_attn_params(key, input_size, hidden):
    # NOTE: PyTorch nn.LSTM has two bias vectors (b_ih + b_hh); here `b`
    # represents their sum (forward math identical; flag for checkpoint parity).
    ks = jax.random.split(key, 5)
    s_ih = 1.0 / jnp.sqrt(jnp.float32(input_size))
    s_hh = 1.0 / jnp.sqrt(jnp.float32(hidden))
    return {
        'w_ih': s_ih * jax.random.normal(ks[0], (input_size, 4 * hidden), jnp.float32),
        'w_hh': s_hh * jax.random.normal(ks[1], (hidden, 4 * hidden), jnp.float32),
        'b': jnp.zeros((1, 4 * hidden), jnp.float32),
        'w_att': s_hh * jax.random.normal(ks[2], (hidden, hidden), jnp.float32),
        'b_att': jnp.zeros((1, hidden), jnp.float32),
        'u_ctx': s_hh * jax.random.normal(ks[3], (1, hidden), jnp.float32),
    }


def batch_reshape(rep, paragraph_lengths):
    """Regroup sentence representations into padded paragraphs.

    rep: (N_sent, H); paragraph_lengths: static python list of ints.
    Returns (N_par, max(paragraph_lengths), H): equivalent of the PyTorch
    cumsum-slice + pad_sequence(batch_first=True) path, done as ONE gather.
    """
    # TODO(synk): at production scale fold this into the sentence kernel's
    # out_spec via scalar-prefetched paragraph offsets (P2 pattern).
    max_len = max(paragraph_lengths)
    n_par = len(paragraph_lengths)
    H = rep.shape[1]
    idx = np.zeros((n_par, max_len), dtype=np.int32)
    valid = np.zeros((n_par, max_len, 1), dtype=np.float32)
    start = 0
    for p_i, L in enumerate(paragraph_lengths):
        idx[p_i, :L] = np.arange(start, start + L, dtype=np.int32)
        valid[p_i, :L, 0] = 1.0
        start += L
    gathered = jnp.take(rep, jnp.asarray(idx.reshape(-1)), axis=0)
    return gathered.reshape(n_par, max_len, H) * jnp.asarray(valid)


# ----------------------------------------------------------------------------
# Full MLHAN_Binary forward
# ----------------------------------------------------------------------------
def mlhan_binary_forward(params, input_values, level_1_lengths,
                         level_2_lengths_static):
    # Dropout runs in eval mode -> identity (no RNG), matching inference.
    x = input_values

    # sentence-level LSTM + attention with fused sigmoid head
    sentence_rep, sentence_cls = lstm_attention_classify(
        x, level_1_lengths, params['lstm_sentence'],
        params['sent_cls_w'], params['sent_cls_b'])           # (N_sent, Hs), (N_sent, C)

    # regroup sentences into paragraphs (static lengths -> single gather)
    reshaped = batch_reshape(sentence_rep, level_2_lengths_static)  # (N_par, Ts, Hs)

    # paragraph-level LSTM + attention with fused sigmoid head
    par_lengths = jnp.asarray(level_2_lengths_static, dtype=jnp.int32)
    _, paragraph_cls = lstm_attention_classify(
        reshaped, par_lengths, params['lstm_paragraph'],
        params['par_cls_w'], params['par_cls_b'])             # (N_par, C)

    return sentence_cls, paragraph_cls


# ----------------------------------------------------------------------------
# Pure-JAX reference (for correctness sanity check)
# ----------------------------------------------------------------------------
def _ref_lstm_attn_cls(x_btd, lengths, p, w_cls, b_cls):
    B, T, D = x_btd.shape
    H = p['w_hh'].shape[0]
    x_tbd = jnp.transpose(x_btd, (1, 0, 2)).astype(jnp.float32)

    def step(carry, x_t):
        h, c = carry
        g = x_t @ p['w_ih'] + h @ p['w_hh'] + p['b']
        i = jax.nn.sigmoid(g[:, :H]); f = jax.nn.sigmoid(g[:, H:2 * H])
        gg = jnp.tanh(g[:, 2 * H:3 * H]); o = jax.nn.sigmoid(g[:, 3 * H:])
        c = f * c + i * gg
        h = o * jnp.tanh(c)
        return (h, c), h

    (_, _), hs = lax.scan(step, (jnp.zeros((B, H), jnp.float32),
                                 jnp.zeros((B, H), jnp.float32)), x_tbd)
    mask = (jnp.arange(T)[:, None] < lengths[None, :]).astype(jnp.float32)[:, :, None]
    u = jnp.tanh(hs @ p['w_att'] + p['b_att'])
    s = jnp.sum(u * p['u_ctx'], axis=-1, keepdims=True)
    s = jnp.where(mask > 0, s, -1e30)
    e = jnp.exp(s - jnp.max(s, axis=0, keepdims=True)) * mask
    alpha = e / jnp.maximum(jnp.sum(e, axis=0, keepdims=True), 1e-20)
    pooled = jnp.sum(alpha * hs, axis=0)
    cls = jax.nn.sigmoid(pooled @ w_cls.T + b_cls)
    return pooled, cls


if __name__ == "__main__":
    # small, module-consistent shapes
    input_size = 16                  # word-embedding dim
    sentence_hidden = 32
    paragraph_hidden = 32
    nb_classes = 1                   # binary, sigmoid output
    n_sentences = 6                  # total sentences across all paragraphs
    max_words = 8                    # max words per sentence
    level_2_lengths_static = [4, 2]  # 2 paragraphs: 4 + 2 = 6 sentences

    key = jax.random.PRNGKey(0)
    k_in, k_s, k_p, k_cs, k_cp = jax.random.split(key, 5)

    # inputs
    input_values = jax.random.normal(
        k_in, (n_sentences, max_words, input_size), dtype=jnp.float32)
    level_1_lengths = jnp.array([8, 5, 7, 3, 6, 8], dtype=jnp.int32)

    # parameters (deterministic init; xavier_normal for classification layers,
    # stored in torch Linear layout (out, in))
    params = {
        'lstm_sentence': init_lstm_attn_params(k_s, input_size, sentence_hidden),
        'lstm_paragraph': init_lstm_attn_params(k_p, sentence_hidden,
                                                paragraph_hidden),
        'sent_cls_w': xavier_normal(k_cs, (nb_classes, sentence_hidden)),
        'sent_cls_b': jnp.zeros((1, nb_classes), jnp.float32),
        'par_cls_w': xavier_normal(k_cp, (nb_classes, paragraph_hidden)),
        'par_cls_b': jnp.zeros((1, nb_classes), jnp.float32),
    }

    sentence_cls, paragraph_cls = mlhan_binary_forward(
        params, input_values, level_1_lengths, level_2_lengths_static)
    jax.block_until_ready((sentence_cls, paragraph_cls))

    # shape / range checks
    assert sentence_cls.shape == (n_sentences, nb_classes)
    assert paragraph_cls.shape == (len(level_2_lengths_static), nb_classes)
    assert bool(jnp.all((sentence_cls >= 0) & (sentence_cls <= 1)))
    assert bool(jnp.all((paragraph_cls >= 0) & (paragraph_cls <= 1)))

    # numerical check against a pure-JAX f32 reference (loose tolerance: bf16
    # MXU operands / bf16 gate activations + approx reciprocal in the kernel)
    ref_srep, ref_scls = _ref_lstm_attn_cls(
        input_values, level_1_lengths, params['lstm_sentence'],
        params['sent_cls_w'], params['sent_cls_b'])
    ref_reshaped = batch_reshape(ref_srep, level_2_lengths_static)
    _, ref_pcls = _ref_lstm_attn_cls(
        ref_reshaped, jnp.asarray(level_2_lengths_static, jnp.int32),
        params['lstm_paragraph'], params['par_cls_w'], params['par_cls_b'])
    assert bool(jnp.allclose(sentence_cls, ref_scls, atol=2e-2, rtol=2e-2))
    assert bool(jnp.allclose(paragraph_cls, ref_pcls, atol=2e-2, rtol=2e-2))

    print("KERNEL_OK")
</pallas_src>

<mosaic_0001>
module attributes {stable_mosaic.version = 11 : i64} {
  func.func @lstm_attn_cls_kernel(%arg0: i32, %arg1: memref<8x8x16xbf16, #tpu.memory_space<vmem>>, %arg2: memref<1x8xi32, #tpu.memory_space<vmem>>, %arg3: memref<16x512xbf16, #tpu.memory_space<vmem>>, %arg4: memref<128x512xbf16, #tpu.memory_space<vmem>>, %arg5: memref<1x512xf32, #tpu.memory_space<vmem>>, %arg6: memref<128x128xbf16, #tpu.memory_space<vmem>>, %arg7: memref<1x128xf32, #tpu.memory_space<vmem>>, %arg8: memref<1x128xf32, #tpu.memory_space<vmem>>, %arg9: memref<1x128xf32, #tpu.memory_space<vmem>>, %arg10: memref<1x1xf32, #tpu.memory_space<vmem>>, %arg11: memref<8x128xf32, #tpu.memory_space<vmem>>, %arg12: memref<8x1xf32, #tpu.memory_space<vmem>>, %arg13: memref<8x8x512xbf16, #tpu.memory_space<vmem>>, %arg14: memref<8x8x128xbf16, #tpu.memory_space<vmem>>) attributes {dimension_semantics = [#tpu.dimension_semantics<parallel>], iteration_bounds = array<i64: 1>, scalar_prefetch = 0 : i64, scratch_operands = 2 : i64, tpu.core_type = #tpu.core_type<tc>, window_params = [{transform_indices = @transform_0, window_bounds = array<i64: 8, 8, 16>}, {transform_indices = @transform_1, window_bounds = array<i64: 1, 8>}, {pipeline_mode = #tpu.pipeline_mode<synchronous>, transform_indices = @transform_2, window_bounds = array<i64: 16, 512>}, {pipeline_mode = #tpu.pipeline_mode<synchronous>, transform_indices = @transform_3, window_bounds = array<i64: 128, 512>}, {pipeline_mode = #tpu.pipeline_mode<synchronous>, transform_indices = @transform_4, window_bounds = array<i64: 1, 512>}, {pipeline_mode = #tpu.pipeline_mode<synchronous>, transform_indices = @transform_5, window_bounds = array<i64: 128, 128>}, {pipeline_mode = #tpu.pipeline_mode<synchronous>, transform_indices = @transform_6, window_bounds = array<i64: 1, 128>}, {pipeline_mode = #tpu.pipeline_mode<synchronous>, transform_indices = @transform_7, window_bounds = array<i64: 1, 128>}, {pipeline_mode = #tpu.pipeline_mode<synchronous>, transform_indices = @transform_8, window_bounds = array<i64: 1, 128>}, {pipeline_mode = #tpu.pipeline_mode<synchronous>, transform_indices = @transform_9, window_bounds = array<i64: 1, 1>}, {transform_indices = @transform_10, window_bounds = array<i64: 8, 128>}, {transform_indices = @transform_11, window_bounds = array<i64: 8, 1>}]} {
    %c0 = arith.constant 0 : index
    %c0_0 = arith.constant 0 : index
    %c0_1 = arith.constant 0 : index
    %0 = vector.load %arg1[%c0, %c0_0, %c0_1] : memref<8x8x16xbf16, #tpu.memory_space<vmem>>, vector<8x8x16xbf16>
    %1 = vector.shape_cast %0 : vector<8x8x16xbf16> to vector<64x16xbf16>
    %c0_2 = arith.constant 0 : index
    %c0_3 = arith.constant 0 : index
    %2 = vector.load %arg3[%c0_2, %c0_3] : memref<16x512xbf16, #tpu.memory_space<vmem>>, vector<16x512xbf16>
    %cst = arith.constant dense<0.000000e+00> : vector<64x512xf32>
    %3 = tpu.matmul %1, %2, %cst {dimension_numbers = #tpu.dot_dimension_numbers<[1], [0], [0], [1], [0, 0, 1, 1], [], []>} : vector<64x16xbf16>, vector<16x512xbf16>, vector<64x512xf32> -> vector<64x512xf32>
    %c0_4 = arith.constant 0 : index
    %c0_5 = arith.constant 0 : index
    %4 = vector.load %arg5[%c0_4, %c0_5] : memref<1x512xf32, #tpu.memory_space<vmem>>, vector<1x512xf32>
    %5 = vector.broadcast %4 : vector<1x512xf32> to vector<64x512xf32>
    %6 = arith.addf %3, %5 : vector<64x512xf32>
    %7 = vector.shape_cast %6 : vector<64x512xf32> to vector<8x8x512xf32>
    %8 = arith.truncf %7 : vector<8x8x512xf32> to vector<8x8x512xbf16>
    %c0_6 = arith.constant 0 : index
    %c0_7 = arith.constant 0 : index
    %c0_8 = arith.constant 0 : index
    %9 = vector.load %arg13[%c0_6, %c0_7, %c0_8] : memref<8x8x512xbf16, #tpu.memory_space<vmem>>, vector<8x8x512xbf16>
    tpu.vector_store %arg13[%c0_6, %c0_7, %c0_8], %8 {strides = array<i32>} : memref<8x8x512xbf16, #tpu.memory_space<vmem>>, vector<8x8x512xbf16>,
    %c0_9 = arith.constant 0 : index
    %c0_10 = arith.constant 0 : index
    %10 = vector.load %arg4[%c0_9, %c0_10] : memref<128x512xbf16, #tpu.memory_space<vmem>>, vector<128x512xbf16>
    %cst_11 = arith.constant 0.000000e+00 : bf16
    %11 = vector.broadcast %cst_11 : bf16 to vector<8x128xbf16>
    %cst_12 = arith.constant 0.000000e+00 : f32
    %12 = vector.broadcast %cst_12 : f32 to vector<8x128xf32>
    %c0_13 = arith.constant 0 : index
    %c0_14 = arith.constant 0 : index
    %c0_15 = arith.constant 0 : index
    %13 = vector.load %arg13[%c0_13, %c0_14, %c0_15] : memref<8x8x512xbf16, #tpu.memory_space<vmem>>, vector<8x1x512xbf16>
    %14 = vector.shape_cast %13 : vector<8x1x512xbf16> to vector<8x512xbf16>
    %15 = arith.extf %14 : vector<8x512xbf16> to vector<8x512xf32>
    %cst_16 = arith.constant dense<0.000000e+00> : vector<8x512xf32>
    %16 = tpu.matmul %11, %10, %cst_16 {dimension_numbers = #tpu.dot_dimension_numbers<[1], [0], [0], [1], [0, 0, 1, 1], [], []>} : vector<8x128xbf16>, vector<128x512xbf16>, vector<8x512xf32> -> vector<8x512xf32>
    %17 = arith.addf %15, %16 : vector<8x512xf32>
    %18 = vector.extract_strided_slice %17 {offsets = [0, 0], sizes = [8, 128], strides = [1, 1]} : vector<8x512xf32> to vector<8x128xf32>
    %19 = arith.negf %18 : vector<8x128xf32>
    %20 = math.exp %19 : vector<8x128xf32>
    %cst_17 = arith.constant 1.000000e+00 : f32
    %21 = vector.broadcast %cst_17 : f32 to vector<8x128xf32>
    %22 = arith.addf %21, %20 : vector<8x128xf32>
    %23 = arith.divf %21, %22 : vector<8x128xf32>
    %24 = vector.extract_strided_slice %17 {offsets = [0, 128], sizes = [8, 128], strides = [1, 1]} : vector<8x512xf32> to vector<8x128xf32>
    %25 = arith.negf %24 : vector<8x128xf32>
    %26 = math.exp %25 : vector<8x128xf32>
    %cst_18 = arith.constant 1.000000e+00 : f32
    %27 = vector.broadcast %cst_18 : f32 to vector<8x128xf32>
    %28 = arith.addf %27, %26 : vector<8x128xf32>
    %29 = arith.divf %27, %28 : vector<8x128xf32>
    %30 = vector.extract_strided_slice %17 {offsets = [0, 256], sizes = [8, 128], strides = [1, 1]} : vector<8x512xf32> to vector<8x128xf32>
    %31 = math.tanh %30 : vector<8x128xf32>
    %32 = vector.extract_strided_slice %17 {offsets = [0, 384], sizes = [8, 128], strides = [1, 1]} : vector<8x512xf32> to vector<8x128xf32>
    %33 = arith.negf %32 : vector<8x128xf32>
    %34 = math.exp %33 : vector<8x128xf32>
    %cst_19 = arith.constant 1.000000e+00 : f32
    %35 = vector.broadcast %cst_19 : f32 to vector<8x128xf32>
    %36 = arith.addf %35, %34 : vector<8x128xf32>
    %37 = arith.divf %35, %36 : vector<8x128xf32>
    %38 = arith.mulf %29, %12 : vector<8x128xf32>
    %39 = arith.mulf %23, %31 : vector<8x128xf32>
    %40 = arith.addf %38, %39 : vector<8x128xf32>
    %41 = math.tanh %40 : vector<8x128xf32>
    %42 = arith.mulf %37, %41 : vector<8x128xf32>
    %43 = arith.truncf %42 : vector<8x128xf32> to vector<8x128xbf16>
    %c0_20 = arith.constant 0 : index
    %c0_21 = arith.constant 0 : index
    %c0_22 = arith.constant 0 : index
    %44 = vector.load %arg14[%c0_20, %c0_21, %c0_22] : memref<8x8x128xbf16, #tpu.memory_space<vmem>>, vector<1x8x128xbf16>
    %45 = vector.shape_cast %44 : vector<1x8x128xbf16> to vector<8x128xbf16>
    %46 = vector.shape_cast %43 : vector<8x128xbf16> to vector<1x8x128xbf16>
    tpu.vector_store %arg14[%c0_20, %c0_21, %c0_22], %46 {strides = array<i32>} : memref<8x8x128xbf16, #tpu.memory_space<vmem>>, vector<1x8x128xbf16>,
    %c0_23 = arith.constant 0 : index
    %c1 = arith.constant 1 : index
    %c0_24 = arith.constant 0 : index
    %47 = vector.load %arg13[%c0_23, %c1, %c0_24] : memref<8x8x512xbf16, #tpu.memory_space<vmem>>, vector<8x1x512xbf16>
    %48 = vector.shape_cast %47 : vector<8x1x512xbf16> to vector<8x512xbf16>
    %49 = arith.extf %48 : vector<8x512xbf16> to vector<8x512xf32>
    %cst_25 = arith.constant dense<0.000000e+00> : vector<8x512xf32>
    %50 = tpu.matmul %43, %10, %cst_25 {dimension_numbers = #tpu.dot_dimension_numbers<[1], [0], [0], [1], [0, 0, 1, 1], [], []>} : vector<8x128xbf16>, vector<128x512xbf16>, vector<8x512xf32> -> vector<8x512xf32>
    %51 = arith.addf %49, %50 : vector<8x512xf32>
    %52 = vector.extract_strided_slice %51 {offsets = [0, 0], sizes = [8, 128], strides = [1, 1]} : vector<8x512xf32> to vector<8x128xf32>
    %53 = arith.negf %52 : vector<8x128xf32>
    %54 = math.exp %53 : vector<8x128xf32>
    %cst_26 = arith.constant 1.000000e+00 : f32
    %55 = vector.broadcast %cst_26 : f32 to vector<8x128xf32>
    %56 = arith.addf %55, %54 : vector<8x128xf32>
    %57 = arith.divf %55, %56 : vector<8x128xf32>
    %58 = vector.extract_strided_slice %51 {offsets = [0, 128], sizes = [8, 128], strides = [1, 1]} : vector<8x512xf32> to vector<8x128xf32>
    %59 = arith.negf %58 : vector<8x128xf32>
    %60 = math.exp %59 : vector<8x128xf32>
    %cst_27 = arith.constant 1.000000e+00 : f32
    %61 = vector.broadcast %cst_27 : f32 to vector<8x128xf32>
    %62 = arith.addf %61, %60 : vector<8x128xf32>
    %63 = arith.divf %61, %62 : vector<8x128xf32>
    %64 = vector.extract_strided_slice %51 {offsets = [0, 256], sizes = [8, 128], strides = [1, 1]} : vector<8x512xf32> to vector<8x128xf32>
    %65 = math.tanh %64 : vector<8x128xf32>
    %66 = vector.extract_strided_slice %51 {offsets = [0, 384], sizes = [8, 128], strides = [1, 1]} : vector<8x512xf32> to vector<8x128xf32>
    %67 = arith.negf %66 : vector<8x128xf32>
    %68 = math.exp %67 : vector<8x128xf32>
    %cst_28 = arith.constant 1.000000e+00 : f32
    %69 = vector.broadcast %cst_28 : f32 to vector<8x128xf32>
    %70 = arith.addf %69, %68 : vector<8x128xf32>
    %71 = arith.divf %69, %70 : vector<8x128xf32>
    %72 = arith.mulf %63, %40 : vector<8x128xf32>
    %73 = arith.mulf %57, %65 : vector<8x128xf32>
    %74 = arith.addf %72, %73 : vector<8x128xf32>
    %75 = math.tanh %74 : vector<8x128xf32>
    %76 = arith.mulf %71, %75 : vector<8x128xf32>
    %77 = arith.truncf %76 : vector<8x128xf32> to vector<8x128xbf16>
    %c1_29 = arith.constant 1 : index
    %c0_30 = arith.constant 0 : index
    %c0_31 = arith.constant 0 : index
    %78 = vector.load %arg14[%c1_29, %c0_30, %c0_31] : memref<8x8x128xbf16, #tpu.memory_space<vmem>>, vector<1x8x128xbf16>
    %79 = vector.shape_cast %78 : vector<1x8x128xbf16> to vector<8x128xbf16>
    %80 = vector.shape_cast %77 : vector<8x128xbf16> to vector<1x8x128xbf16>
    tpu.vector_store %arg14[%c1_29, %c0_30, %c0_31], %80 {strides = array<i32>} : memref<8x8x128xbf16, #tpu.memory_space<vmem>>, vector<1x8x128xbf16>,
    %c0_32 = arith.constant 0 : index
    %c2 = arith.constant 2 : index
    %c0_33 = arith.constant 0 : index
    %81 = vector.load %arg13[%c0_32, %c2, %c0_33] : memref<8x8x512xbf16, #tpu.memory_space<vmem>>, vector<8x1x512xbf16>
    %82 = vector.shape_cast %81 : vector<8x1x512xbf16> to vector<8x512xbf16>
    %83 = arith.extf %82 : vector<8x512xbf16> to vector<8x512xf32>
    %cst_34 = arith.constant dense<0.000000e+00> : vector<8x512xf32>
    %84 = tpu.matmul %77, %10, %cst_34 {dimension_numbers = #tpu.dot_dimension_numbers<[1], [0], [0], [1], [0, 0, 1, 1], [], []>} : vector<8x128xbf16>, vector<128x512xbf16>, vector<8x512xf32> -> vector<8x512xf32>
    %85 = arith.addf %83, %84 : vector<8x512xf32>
    %86 = vector.extract_strided_slice %85 {offsets = [0, 0], sizes = [8, 128], strides = [1, 1]} : vector<8x512xf32> to vector<8x128xf32>
    %87 = arith.negf %86 : vector<8x128xf32>
    %88 = math.exp %87 : vector<8x128xf32>
    %cst_35 = arith.constant 1.000000e+00 : f32
    %89 = vector.broadcast %cst_35 : f32 to vector<8x128xf32>
    %90 = arith.addf %89, %88 : vector<8x128xf32>
    %91 = arith.divf %89, %90 : vector<8x128xf32>
    %92 = vector.extract_strided_slice %85 {offsets = [0, 128], sizes = [8, 128], strides = [1, 1]} : vector<8x512xf32> to vector<8x128xf32>
    %93 = arith.negf %92 : vector<8x128xf32>
    %94 = math.exp %93 : vector<8x128xf32>
    %cst_36 = arith.constant 1.000000e+00 : f32
    %95 = vector.broadcast %cst_36 : f32 to vector<8x128xf32>
    %96 = arith.addf %95, %94 : vector<8x128xf32>
    %97 = arith.divf %95, %96 : vector<8x128xf32>
    %98 = vector.extract_strided_slice %85 {offsets = [0, 256], sizes = [8, 128], strides = [1, 1]} : vector<8x512xf32> to vector<8x128xf32>
    %99 = math.tanh %98 : vector<8x128xf32>
    %100 = vector.extract_strided_slice %85 {offsets = [0, 384], sizes = [8, 128], strides = [1, 1]} : vector<8x512xf32> to vector<8x128xf32>
    %101 = arith.negf %100 : vector<8x128xf32>
    %102 = math.exp %101 : vector<8x128xf32>
    %cst_37 = arith.constant 1.000000e+00 : f32
    %103 = vector.broadcast %cst_37 : f32 to vector<8x128xf32>
    %104 = arith.addf %103, %102 : vector<8x128xf32>
    %105 = arith.divf %103, %104 : vector<8x128xf32>
    %106 = arith.mulf %97, %74 : vector<8x128xf32>
    %107 = arith.mulf %91, %99 : vector<8x128xf32>
    %108 = arith.addf %106, %107 : vector<8x128xf32>
    %109 = math.tanh %108 : vector<8x128xf32>
    %110 = arith.mulf %105, %109 : vector<8x128xf32>
    %111 = arith.truncf %110 : vector<8x128xf32> to vector<8x128xbf16>
    %c2_38 = arith.constant 2 : index
    %c0_39 = arith.constant 0 : index
    %c0_40 = arith.constant 0 : index
    %112 = vector.load %arg14[%c2_38, %c0_39, %c0_40] : memref<8x8x128xbf16, #tpu.memory_space<vmem>>, vector<1x8x128xbf16>
    %113 = vector.shape_cast %112 : vector<1x8x128xbf16> to vector<8x128xbf16>
    %114 = vector.shape_cast %111 : vector<8x128xbf16> to vector<1x8x128xbf16>
    tpu.vector_store %arg14[%c2_38, %c0_39, %c0_40], %114 {strides = array<i32>} : memref<8x8x128xbf16, #tpu.memory_space<vmem>>, vector<1x8x128xbf16>,
    %c0_41 = arith.constant 0 : index
    %c3 = arith.constant 3 : index
    %c0_42 = arith.constant 0 : index
    %115 = vector.load %arg13[%c0_41, %c3, %c0_42] : memref<8x8x512xbf16, #tpu.memory_space<vmem>>, vector<8x1x512xbf16>
    %116 = vector.shape_cast %115 : vector<8x1x512xbf16> to vector<8x512xbf16>
    %117 = arith.extf %116 : vector<8x512xbf16> to vector<8x512xf32>
    %cst_43 = arith.constant dense<0.000000e+00> : vector<8x512xf32>
    %118 = tpu.matmul %111, %10, %cst_43 {dimension_numbers = #tpu.dot_dimension_numbers<[1], [0], [0], [1], [0, 0, 1, 1], [], []>} : vector<8x128xbf16>, vector<128x512xbf16>, vector<8x512xf32> -> vector<8x512xf32>
    %119 = arith.addf %117, %118 : vector<8x512xf32>
    %120 = vector.extract_strided_slice %119 {offsets = [0, 0], sizes = [8, 128], strides = [1, 1]} : vector<8x512xf32> to vector<8x128xf32>
    %121 = arith.negf %120 : vector<8x128xf32>
    %122 = math.exp %121 : vector<8x128xf32>
    %cst_44 = arith.constant 1.000000e+00 : f32
    %123 = vector.broadcast %cst_44 : f32 to vector<8x128xf32>
    %124 = arith.addf %123, %122 : vector<8x128xf32>
    %125 = arith.divf %123, %124 : vector<8x128xf32>
    %126 = vector.extract_strided_slice %119 {offsets = [0, 128], sizes = [8, 128], strides = [1, 1]} : vector<8x512xf32> to vector<8x128xf32>
    %127 = arith.negf %126 : vector<8x128xf32>
    %128 = math.exp %127 : vector<8x128xf32>
    %cst_45 = arith.constant 1.000000e+00 : f32
    %129 = vector.broadcast %cst_45 : f32 to vector<8x128xf32>
    %130 = arith.addf %129, %128 : vector<8x128xf32>
    %131 = arith.divf %129, %130 : vector<8x128xf32>
    %132 = vector.extract_strided_slice %119 {offsets = [0, 256], sizes = [8, 128], strides = [1, 1]} : vector<8x512xf32> to vector<8x128xf32>
    %133 = math.tanh %132 : vector<8x128xf32>
    %134 = vector.extract_strided_slice %119 {offsets = [0, 384], sizes = [8, 128], strides = [1, 1]} : vector<8x512xf32> to vector<8x128xf32>
    %135 = arith.negf %134 : vector<8x128xf32>
    %136 = math.exp %135 : vector<8x128xf32>
    %cst_46 = arith.constant 1.000000e+00 : f32
    %137 = vector.broadcast %cst_46 : f32 to vector<8x128xf32>
    %138 = arith.addf %137, %136 : vector<8x128xf32>
    %139 = arith.divf %137, %138 : vector<8x128xf32>
    %140 = arith.mulf %131, %108 : vector<8x128xf32>
    %141 = arith.mulf %125, %133 : vector<8x128xf32>
    %142 = arith.addf %140, %141 : vector<8x128xf32>
    %143 = math.tanh %142 : vector<8x128xf32>
    %144 = arith.mulf %139, %143 : vector<8x128xf32>
    %145 = arith.truncf %144 : vector<8x128xf32> to vector<8x128xbf16>
    %c3_47 = arith.constant 3 : index
    %c0_48 = arith.constant 0 : index
    %c0_49 = arith.constant 0 : index
    %146 = vector.load %arg14[%c3_47, %c0_48, %c0_49] : memref<8x8x128xbf16, #tpu.memory_space<vmem>>, vector<1x8x128xbf16>
    %147 = vector.shape_cast %146 : vector<1x8x128xbf16> to vector<8x128xbf16>
    %148 = vector.shape_cast %145 : vector<8x128xbf16> to vector<1x8x128xbf16>
    tpu.vector_store %arg14[%c3_47, %c0_48, %c0_49], %148 {strides = array<i32>} : memref<8x8x128xbf16, #tpu.memory_space<vmem>>, vector<1x8x128xbf16>,
    %c0_50 = arith.constant 0 : index
    %c4 = arith.constant 4 : index
    %c0_51 = arith.constant 0 : index
    %149 = vector.load %arg13[%c0_50, %c4, %c0_51] : memref<8x8x512xbf16, #tpu.memory_space<vmem>>, vector<8x1x512xbf16>
    %150 = vector.shape_cast %149 : vector<8x1x512xbf16> to vector<8x512xbf16>
    %151 = arith.extf %150 : vector<8x512xbf16> to vector<8x512xf32>
    %cst_52 = arith.constant dense<0.000000e+00> : vector<8x512xf32>
    %152 = tpu.matmul %145, %10, %cst_52 {dimension_numbers = #tpu.dot_dimension_numbers<[1], [0], [0], [1], [0, 0, 1, 1], [], []>} : vector<8x128xbf16>, vector<128x512xbf16>, vector<8x512xf32> -> vector<8x512xf32>
    %153 = arith.addf %151, %152 : vector<8x512xf32>
    %154 = vector.extract_strided_slice %153 {offsets = [0, 0], sizes = [8, 128], strides = [1, 1]} : vector<8x512xf32> to vector<8x128xf32>
    %155 = arith.negf %154 : vector<8x128xf32>
    %156 = math.exp %155 : vector<8x128xf32>
    %cst_53 = arith.constant 1.000000e+00 : f32
    %157 = vector.broadcast %cst_53 : f32 to vector<8x128xf32>
    %158 = arith.addf %157, %156 : vector<8x128xf32>
    %159 = arith.divf %157, %158 : vector<8x128xf32>
    %160 = vector.extract_strided_slice %153 {offsets = [0, 128], sizes = [8, 128], strides = [1, 1]} : vector<8x512xf32> to vector<8x128xf32>
    %161 = arith.negf %160 : vector<8x128xf32>
    %162 = math.exp %161 : vector<8x128xf32>
    %cst_54 = arith.constant 1.000000e+00 : f32
    %163 = vector.broadcast %cst_54 : f32 to vector<8x128xf32>
    %164 = arith.addf %163, %162 : vector<8x128xf32>
    %165 = arith.divf %163, %164 : vector<8x128xf32>
    %166 = vector.extract_strided_slice %153 {offsets = [0, 256], sizes = [8, 128], strides = [1, 1]} : vector<8x512xf32> to vector<8x128xf32>
    %167 = math.tanh %166 : vector<8x128xf32>
    %168 = vector.extract_strided_slice %153 {offsets = [0, 384], sizes = [8, 128], strides = [1, 1]} : vector<8x512xf32> to vector<8x128xf32>
    %169 = arith.negf %168 : vector<8x128xf32>
    %170 = math.exp %169 : vector<8x128xf32>
    %cst_55 = arith.constant 1.000000e+00 : f32
    %171 = vector.broadcast %cst_55 : f32 to vector<8x128xf32>
    %172 = arith.addf %171, %170 : vector<8x128xf32>
    %173 = arith.divf %171, %172 : vector<8x128xf32>
    %174 = arith.mulf %165, %142 : vector<8x128xf32>
    %175 = arith.mulf %159, %167 : vector<8x128xf32>
    %176 = arith.addf %174, %175 : vector<8x128xf32>
    %177 = math.tanh %176 : vector<8x128xf32>
    %178 = arith.mulf %173, %177 : vector<8x128xf32>
    %179 = arith.truncf %178 : vector<8x128xf32> to vector<8x128xbf16>
    %c4_56 = arith.constant 4 : index
    %c0_57 = arith.constant 0 : index
    %c0_58 = arith.constant 0 : index
    %180 = vector.load %arg14[%c4_56, %c0_57, %c0_58] : memref<8x8x128xbf16, #tpu.memory_space<vmem>>, vector<1x8x128xbf16>
    %181 = vector.shape_cast %180 : vector<1x8x128xbf16> to vector<8x128xbf16>
    %182 = vector.shape_cast %179 : vector<8x128xbf16> to vector<1x8x128xbf16>
    tpu.vector_store %arg14[%c4_56, %c0_57, %c0_58], %182 {strides = array<i32>} : memref<8x8x128xbf16, #tpu.memory_space<vmem>>, vector<1x8x128xbf16>,
    %c0_59 = arith.constant 0 : index
    %c5 = arith.constant 5 : index
    %c0_60 = arith.constant 0 : index
    %183 = vector.load %arg13[%c0_59, %c5, %c0_60] : memref<8x8x512xbf16, #tpu.memory_space<vmem>>, vector<8x1x512xbf16>
    %184 = vector.shape_cast %183 : vector<8x1x512xbf16> to vector<8x512xbf16>
    %185 = arith.extf %184 : vector<8x512xbf16> to vector<8x512xf32>
    %cst_61 = arith.constant dense<0.000000e+00> : vector<8x512xf32>
    %186 = tpu.matmul %179, %10, %cst_61 {dimension_numbers = #tpu.dot_dimension_numbers<[1], [0], [0], [1], [0, 0, 1, 1], [], []>} : vector<8x128xbf16>, vector<128x512xbf16>, vector<8x512xf32> -> vector<8x512xf32>
    %187 = arith.addf %185, %186 : vector<8x512xf32>
    %188 = vector.extract_strided_slice %187 {offsets = [0, 0], sizes = [8, 128], strides = [1, 1]} : vector<8x512xf32> to vector<8x128xf32>
    %189 = arith.negf %188 : vector<8x128xf32>
    %190 = math.exp %189 : vector<8x128xf32>
    %cst_62 = arith.constant 1.000000e+00 : f32
    %191 = vector.broadcast %cst_62 : f32 to vector<8x128xf32>
    %192 = arith.addf %191, %190 : vector<8x128xf32>
    %193 = arith.divf %191, %192 : vector<8x128xf32>
    %194 = vector.extract_strided_slice %187 {offsets = [0, 128], sizes = [8, 128], strides = [1, 1]} : vector<8x512xf32> to vector<8x128xf32>
    %195 = arith.negf %194 : vector<8x128xf32>
    %196 = math.exp %195 : vector<8x128xf32>
    %cst_63 = arith.constant 1.000000e+00 : f32
    %197 = vector.broadcast %cst_63 : f32 to vector<8x128xf32>
    %198 = arith.addf %197, %196 : vector<8x128xf32>
    %199 = arith.divf %197, %198 : vector<8x128xf32>
    %200 = vector.extract_strided_slice %187 {offsets = [0, 256], sizes = [8, 128], strides = [1, 1]} : vector<8x512xf32> to vector<8x128xf32>
    %201 = math.tanh %200 : vector<8x128xf32>
    %202 = vector.extract_strided_slice %187 {offsets = [0, 384], sizes = [8, 128], strides = [1, 1]} : vector<8x512xf32> to vector<8x128xf32>
    %203 = arith.negf %202 : vector<8x128xf32>
    %204 = math.exp %203 : vector<8x128xf32>
    %cst_64 = arith.constant 1.000000e+00 : f32
    %205 = vector.broadcast %cst_64 : f32 to vector<8x128xf32>
    %206 = arith.addf %205, %204 : vector<8x128xf32>
    %207 = arith.divf %205, %206 : vector<8x128xf32>
    %208 = arith.mulf %199, %176 : vector<8x128xf32>
    %209 = arith.mulf %193, %201 : vector<8x128xf32>
    %210 = arith.addf %208, %209 : vector<8x128xf32>
    %211 = math.tanh %210 : vector<8x128xf32>
    %212 = arith.mulf %207, %211 : vector<8x128xf32>
    %213 = arith.truncf %212 : vector<8x128xf32> to vector<8x128xbf16>
    %c5_65 = arith.constant 5 : index
    %c0_66 = arith.constant 0 : index
    %c0_67 = arith.constant 0 : index
    %214 = vector.load %arg14[%c5_65, %c0_66, %c0_67] : memref<8x8x128xbf16, #tpu.memory_space<vmem>>, vector<1x8x128xbf16>
    %215 = vector.shape_cast %214 : vector<1x8x128xbf16> to vector<8x128xbf16>
    %216 = vector.shape_cast %213 : vector<8x128xbf16> to vector<1x8x128xbf16>
    tpu.vector_store %arg14[%c5_65, %c0_66, %c0_67], %216 {strides = array<i32>} : memref<8x8x128xbf16, #tpu.memory_space<vmem>>, vector<1x8x128xbf16>,
    %c0_68 = arith.constant 0 : index
    %c6 = arith.constant 6 : index
    %c0_69 = arith.constant 0 : index
    %217 = vector.load %arg13[%c0_68, %c6, %c0_69] : memref<8x8x512xbf16, #tpu.memory_space<vmem>>, vector<8x1x512xbf16>
    %218 = vector.shape_cast %217 : vector<8x1x512xbf16> to vector<8x512xbf16>
    %219 = arith.extf %218 : vector<8x512xbf16> to vector<8x512xf32>
    %cst_70 = arith.constant dense<0.000000e+00> : vector<8x512xf32>
    %220 = tpu.matmul %213, %10, %cst_70 {dimension_numbers = #tpu.dot_dimension_numbers<[1], [0], [0], [1], [0, 0, 1, 1], [], []>} : vector<8x128xbf16>, vector<128x512xbf16>, vector<8x512xf32> -> vector<8x512xf32>
    %221 = arith.addf %219, %220 : vector<8x512xf32>
    %222 = vector.extract_strided_slice %221 {offsets = [0, 0], sizes = [8, 128], strides = [1, 1]} : vector<8x512xf32> to vector<8x128xf32>
    %223 = arith.negf %222 : vector<8x128xf32>
    %224 = math.exp %223 : vector<8x128xf32>
    %cst_71 = arith.constant 1.000000e+00 : f32
    %225 = vector.broadcast %cst_71 : f32 to vector<8x128xf32>
    %226 = arith.addf %225, %224 : vector<8x128xf32>
    %227 = arith.divf %225, %226 : vector<8x128xf32>
    %228 = vector.extract_strided_slice %221 {offsets = [0, 128], sizes = [8, 128], strides = [1, 1]} : vector<8x512xf32> to vector<8x128xf32>
    %229 = arith.negf %228 : vector<8x128xf32>
    %230 = math.exp %229 : vector<8x128xf32>
    %cst_72 = arith.constant 1.000000e+00 : f32
    %231 = vector.broadcast %cst_72 : f32 to vector<8x128xf32>
    %232 = arith.addf %231, %230 : vector<8x128xf32>
    %233 = arith.divf %231, %232 : vector<8x128xf32>
    %234 = vector.extract_strided_slice %221 {offsets = [0, 256], sizes = [8, 128], strides = [1, 1]} : vector<8x512xf32> to vector<8x128xf32>
    %235 = math.tanh %234 : vector<8x128xf32>
    %236 = vector.extract_strided_slice %221 {offsets = [0, 384], sizes = [8, 128], strides = [1, 1]} : vector<8x512xf32> to vector<8x128xf32>
    %237 = arith.negf %236 : vector<8x128xf32>
    %238 = math.exp %237 : vector<8x128xf32>
    %cst_73 = arith.constant 1.000000e+00 : f32
    %239 = vector.broadcast %cst_73 : f32 to vector<8x128xf32>
    %240 = arith.addf %239, %238 : vector<8x128xf32>
    %241 = arith.divf %239, %240 : vector<8x128xf32>
    %242 = arith.mulf %233, %210 : vector<8x128xf32>
    %243 = arith.mulf %227, %235 : vector<8x128xf32>
    %244 = arith.addf %242, %243 : vector<8x128xf32>
    %245 = math.tanh %244 : vector<8x128xf32>
    %246 = arith.mulf %241, %245 : vector<8x128xf32>
    %247 = arith.truncf %246 : vector<8x128xf32> to vector<8x128xbf16>
    %c6_74 = arith.constant 6 : index
    %c0_75 = arith.constant 0 : index
    %c0_76 = arith.constant 0 : index
    %248 = vector.load %arg14[%c6_74, %c0_75, %c0_76] : memref<8x8x128xbf16, #tpu.memory_space<vmem>>, vector<1x8x128xbf16>
    %249 = vector.shape_cast %248 : vector<1x8x128xbf16> to vector<8x128xbf16>
    %250 = vector.shape_cast %247 : vector<8x128xbf16> to vector<1x8x128xbf16>
    tpu.vector_store %arg14[%c6_74, %c0_75, %c0_76], %250 {strides = array<i32>} : memref<8x8x128xbf16, #tpu.memory_space<vmem>>, vector<1x8x128xbf16>,
    %c0_77 = arith.constant 0 : index
    %c7 = arith.constant 7 : index
    %c0_78 = arith.constant 0 : index
    %251 = vector.load %arg13[%c0_77, %c7, %c0_78] : memref<8x8x512xbf16, #tpu.memory_space<vmem>>, vector<8x1x512xbf16>
    %252 = vector.shape_cast %251 : vector<8x1x512xbf16> to vector<8x512xbf16>
    %253 = arith.extf %252 : vector<8x512xbf16> to vector<8x512xf32>
    %cst_79 = arith.constant dense<0.000000e+00> : vector<8x512xf32>
    %254 = tpu.matmul %247, %10, %cst_79 {dimension_numbers = #tpu.dot_dimension_numbers<[1], [0], [0], [1], [0, 0, 1, 1], [], []>} : vector<8x128xbf16>, vector<128x512xbf16>, vector<8x512xf32> -> vector<8x512xf32>
    %255 = arith.addf %253, %254 : vector<8x512xf32>
    %256 = vector.extract_strided_slice %255 {offsets = [0, 0], sizes = [8, 128], strides = [1, 1]} : vector<8x512xf32> to vector<8x128xf32>
    %257 = arith.negf %256 : vector<8x128xf32>
    %258 = math.exp %257 : vector<8x128xf32>
    %cst_80 = arith.constant 1.000000e+00 : f32
    %259 = vector.broadcast %cst_80 : f32 to vector<8x128xf32>
    %260 = arith.addf %259, %258 : vector<8x128xf32>
    %261 = arith.divf %259, %260 : vector<8x128xf32>
    %262 = vector.extract_strided_slice %255 {offsets = [0, 128], sizes = [8, 128], strides = [1, 1]} : vector<8x512xf32> to vector<8x128xf32>
    %263 = arith.negf %262 : vector<8x128xf32>
    %264 = math.exp %263 : vector<8x128xf32>
    %cst_81 = arith.constant 1.000000e+00 : f32
    %265 = vector.broadcast %cst_81 : f32 to vector<8x128xf32>
    %266 = arith.addf %265, %264 : vector<8x128xf32>
    %267 = arith.divf %265, %266 : vector<8x128xf32>
    %268 = vector.extract_strided_slice %255 {offsets = [0, 256], sizes = [8, 128], strides = [1, 1]} : vector<8x512xf32> to vector<8x128xf32>
    %269 = math.tanh %268 : vector<8x128xf32>
    %270 = vector.extract_strided_slice %255 {offsets = [0, 384], sizes = [8, 128], strides = [1, 1]} : vector<8x512xf32> to vector<8x128xf32>
    %271 = arith.negf %270 : vector<8x128xf32>
    %272 = math.exp %271 : vector<8x128xf32>
    %cst_82 = arith.constant 1.000000e+00 : f32
    %273 = vector.broadcast %cst_82 : f32 to vector<8x128xf32>
    %274 = arith.addf %273, %272 : vector<8x128xf32>
    %275 = arith.divf %273, %274 : vector<8x128xf32>
    %276 = arith.mulf %267, %244 : vector<8x128xf32>
    %277 = arith.mulf %261, %269 : vector<8x128xf32>
    %278 = arith.addf %276, %277 : vector<8x128xf32>
    %279 = math.tanh %278 : vector<8x128xf32>
    %280 = arith.mulf %275, %279 : vector<8x128xf32>
    %281 = arith.truncf %280 : vector<8x128xf32> to vector<8x128xbf16>
    %c7_83 = arith.constant 7 : index
    %c0_84 = arith.constant 0 : index
    %c0_85 = arith.constant 0 : index
    %282 = vector.load %arg14[%c7_83, %c0_84, %c0_85] : memref<8x8x128xbf16, #tpu.memory_space<vmem>>, vector<1x8x128xbf16>
    %283 = vector.shape_cast %282 : vector<1x8x128xbf16> to vector<8x128xbf16>
    %284 = vector.shape_cast %281 : vector<8x128xbf16> to vector<1x8x128xbf16>
    tpu.vector_store %arg14[%c7_83, %c0_84, %c0_85], %284 {strides = array<i32>} : memref<8x8x128xbf16, #tpu.memory_space<vmem>>, vector<1x8x128xbf16>,
    %c0_86 = arith.constant 0 : index
    %c0_87 = arith.constant 0 : index
    %c0_88 = arith.constant 0 : index
    %285 = vector.load %arg14[%c0_86, %c0_87, %c0_88] : memref<8x8x128xbf16, #tpu.memory_space<vmem>>, vector<8x8x128xbf16>
    %c0_89 = arith.constant 0 : index
    %c0_90 = arith.constant 0 : index
    %286 = vector.load %arg2[%c0_89, %c0_90] : memref<1x8xi32, #tpu.memory_space<vmem>>, vector<1x8xi32>
    %287 = tpu.iota {dimensions = array<i32: 0>} : vector<8x8xi32>
    %288 = vector.broadcast %286 : vector<1x8xi32> to vector<8x8xi32>
    %289 = arith.cmpi slt, %287, %288 : vector<8x8xi32>
    %290 = arith.extui %289 : vector<8x8xi1> to vector<8x8xi32>
    %291 = arith.sitofp %290 : vector<8x8xi32> to vector<8x8xf32>
    %292 = vector.shape_cast %285 : vector<8x8x128xbf16> to vector<64x128xbf16>
    %c0_91 = arith.constant 0 : index
    %c0_92 = arith.constant 0 : index
    %293 = vector.load %arg6[%c0_91, %c0_92] : memref<128x128xbf16, #tpu.memory_space<vmem>>, vector<128x128xbf16>
    %cst_93 = arith.constant dense<0.000000e+00> : vector<64x128xf32>
    %294 = tpu.matmul %292, %293, %cst_93 {dimension_numbers = #tpu.dot_dimension_numbers<[1], [0], [0], [1], [0, 0, 1, 1], [], []>} : vector<64x128xbf16>, vector<128x128xbf16>, vector<64x128xf32> -> vector<64x128xf32>
    %c0_94 = arith.constant 0 : index
    %c0_95 = arith.constant 0 : index
    %295 = vector.load %arg7[%c0_94, %c0_95] : memref<1x128xf32, #tpu.memory_space<vmem>>, vector<1x128xf32>
    %296 = vector.broadcast %295 : vector<1x128xf32> to vector<64x128xf32>
    %297 = arith.addf %294, %296 : vector<64x128xf32>
    %298 = math.tanh %297 : vector<64x128xf32>
    %299 = vector.shape_cast %298 : vector<64x128xf32> to vector<8x8x128xf32>
    %c0_96 = arith.constant 0 : index
    %c0_97 = arith.constant 0 : index
    %300 = vector.load %arg8[%c0_96, %c0_97] : memref<1x128xf32, #tpu.memory_space<vmem>>, vector<1x128xf32>
    %301 = vector.shape_cast %300 : vector<1x128xf32> to vector<1x1x128xf32>
    %302 = vector.broadcast %301 : vector<1x1x128xf32> to vector<8x8x128xf32>
    %303 = arith.mulf %299, %302 : vector<8x8x128xf32>
    %cst_98 = arith.constant dense<0.000000e+00> : vector<8x8xf32>
    %304 = vector.multi_reduction <add>, %303, %cst_98 [2] : vector<8x8x128xf32> to vector<8x8xf32>
    %cst_99 = arith.constant -1.000000e+30 : f32
    %305 = vector.broadcast %cst_99 : f32 to vector<8x8xf32>
    %306 = arith.select %289, %304, %305 : vector<8x8xi1>, vector<8x8xf32>
    %cst_100 = arith.constant dense<0xFF800000> : vector<8xf32>
    %307 = vector.multi_reduction <maximumf>, %306, %cst_100 [0] : vector<8x8xf32> to vector<8xf32>
    %308 = vector.shape_cast %307 : vector<8xf32> to vector<1x8xf32>
    %309 = vector.broadcast %308 : vector<1x8xf32> to vector<8x8xf32>
    %310 = arith.subf %306, %309 : vector<8x8xf32>
    %311 = math.exp %310 : vector<8x8xf32>
    %312 = arith.mulf %311, %291 : vector<8x8xf32>
    %cst_101 = arith.constant dense<0.000000e+00> : vector<8xf32>
    %313 = vector.multi_reduction <add>, %312, %cst_101 [0] : vector<8x8xf32> to vector<8xf32>
    %314 = vector.shape_cast %313 : vector<8xf32> to vector<1x8xf32>
    %cst_102 = arith.constant 9.99999968E-21 : f32
    %315 = vector.broadcast %cst_102 : f32 to vector<1x8xf32>
    %316 = arith.maximumf %314, %315 : vector<1x8xf32>
    %317 = tpu.reciprocal %316 {approx = true} : vector<1x8xf32> -> vector<1x8xf32>
    %318 = vector.broadcast %317 : vector<1x8xf32> to vector<8x8xf32>
    %319 = arith.mulf %312, %318 : vector<8x8xf32>
    %320 = vector.shape_cast %319 : vector<8x8xf32> to vector<8x8x1xf32>
    %321 = arith.extf %285 : vector<8x8x128xbf16> to vector<8x8x128xf32>
    %322 = vector.broadcast %320 : vector<8x8x1xf32> to vector<8x8x128xf32>
    %323 = arith.mulf %322, %321 : vector<8x8x128xf32>
    %cst_103 = arith.constant dense<0.000000e+00> : vector<8x128xf32>
    %324 = vector.multi_reduction <add>, %323, %cst_103 [0] : vector<8x8x128xf32> to vector<8x128xf32>
    %c0_104 = arith.constant 0 : index
    %c0_105 = arith.constant 0 : index
    %325 = vector.load %arg11[%c0_104, %c0_105] : memref<8x128xf32, #tpu.memory_space<vmem>>, vector<8x128xf32>
    tpu.vector_store %arg11[%c0_104, %c0_105], %324 {strides = array<i32>} : memref<8x128xf32, #tpu.memory_space<vmem>>, vector<8x128xf32>,
    %c0_106 = arith.constant 0 : index
    %c0_107 = arith.constant 0 : index
    %326 = vector.load %arg9[%c0_106, %c0_107] : memref<1x128xf32, #tpu.memory_space<vmem>>, vector<1x128xf32>
    %c0_108 = arith.constant 0 : index
    %c0_109 = arith.constant 0 : index
    %327 = vector.load %arg10[%c0_108, %c0_109] : memref<1x1xf32, #tpu.memory_space<vmem>>, vector<1x1xf32>
    %328 = vector.broadcast %326 : vector<1x128xf32> to vector<8x128xf32>
    %329 = arith.mulf %324, %328 : vector<8x128xf32>
    %cst_110 = arith.constant dense<0.000000e+00> : vector<8xf32>
    %330 = vector.multi_reduction <add>, %329, %cst_110 [1] : vector<8x128xf32> to vector<8xf32>
    %331 = vector.shape_cast %330 : vector<8xf32> to vector<8x1xf32>
    %332 = vector.broadcast %327 : vector<1x1xf32> to vector<8x1xf32>
    %333 = arith.addf %331, %332 : vector<8x1xf32>
    %334 = arith.negf %333 : vector<8x1xf32>
    %335 = math.exp %334 : vector<8x1xf32>
    %cst_111 = arith.constant 1.000000e+00 : f32
    %336 = vector.broadcast %cst_111 : f32 to vector<8x1xf32>
    %337 = arith.addf %336, %335 : vector<8x1xf32>
    %338 = arith.divf %336, %337 : vector<8x1xf32>
    %c0_112 = arith.constant 0 : index
    %c0_113 = arith.constant 0 : index
    %339 = vector.load %arg12[%c0_112, %c0_113] : memref<8x1xf32, #tpu.memory_space<vmem>>, vector<8x1xf32>
    tpu.vector_store %arg12[%c0_112, %c0_113], %338 {strides = array<i32>} : memref<8x1xf32, #tpu.memory_space<vmem>>, vector<8x1xf32>,
    return
  }
  func.func @transform_0(%arg0: i32) -> (i32, i32, i32) {
    %c0_i32 = arith.constant 0 : i32
    %c0_i32_0 = arith.constant 0 : i32
    %c0_i32_1 = arith.constant 0 : i32
    return %arg0, %c0_i32, %c0_i32_0 : i32, i32, i32
  }
  func.func @transform_1(%arg0: i32) -> (i32, i32) {
    %c0_i32 = arith.constant 0 : i32
    %c0_i32_0 = arith.constant 0 : i32
    return %c0_i32, %arg0 : i32, i32
  }
  func.func @transform_2(%arg0: i32) -> (i32, i32) {
    %c0_i32 = arith.constant 0 : i32
    %c0_i32_0 = arith.constant 0 : i32
    %c0_i32_1 = arith.constant 0 : i32
    return %c0_i32, %c0_i32_0 : i32, i32
  }
  func.func @transform_3(%arg0: i32) -> (i32, i32) {
    %c0_i32 = arith.constant 0 : i32
    %c0_i32_0 = arith.constant 0 : i32
    %c0_i32_1 = arith.constant 0 : i32
    return %c0_i32, %c0_i32_0 : i32, i32
  }
  func.func @transform_4(%arg0: i32) -> (i32, i32) {
    %c0_i32 = arith.constant 0 : i32
    %c0_i32_0 = arith.constant 0 : i32
    %c0_i32_1 = arith.constant 0 : i32
    return %c0_i32, %c0_i32_0 : i32, i32
  }
  func.func @transform_5(%arg0: i32) -> (i32, i32) {
    %c0_i32 = arith.constant 0 : i32
    %c0_i32_0 = arith.constant 0 : i32
    %c0_i32_1 = arith.constant 0 : i32
    return %c0_i32, %c0_i32_0 : i32, i32
  }
  func.func @transform_6(%arg0: i32) -> (i32, i32) {
    %c0_i32 = arith.constant 0 : i32
    %c0_i32_0 = arith.constant 0 : i32
    %c0_i32_1 = arith.constant 0 : i32
    return %c0_i32, %c0_i32_0 : i32, i32
  }
  func.func @transform_7(%arg0: i32) -> (i32, i32) {
    %c0_i32 = arith.constant 0 : i32
    %c0_i32_0 = arith.constant 0 : i32
    %c0_i32_1 = arith.constant 0 : i32
    return %c0_i32, %c0_i32_0 : i32, i32
  }
  func.func @transform_8(%arg0: i32) -> (i32, i32) {
    %c0_i32 = arith.constant 0 : i32
    %c0_i32_0 = arith.constant 0 : i32
    %c0_i32_1 = arith.constant 0 : i32
    return %c0_i32, %c0_i32_0 : i32, i32
  }
  func.func @transform_9(%arg0: i32) -> (i32, i32) {
    %c0_i32 = arith.constant 0 : i32
    %c0_i32_0 = arith.constant 0 : i32
    %c0_i32_1 = arith.constant 0 : i32
    return %c0_i32, %c0_i32_0 : i32, i32
  }
  func.func @transform_10(%arg0: i32) -> (i32, i32) {
    %c0_i32 = arith.constant 0 : i32
    %c0_i32_0 = arith.constant 0 : i32
    return %arg0, %c0_i32 : i32, i32
  }
  func.func @transform_11(%arg0: i32) -> (i32, i32) {
    %c0_i32 = arith.constant 0 : i32
    %c0_i32_0 = arith.constant 0 : i32
    return %arg0, %c0_i32 : i32, i32
  }
}

module attributes {stable_mosaic.version = 11 : i64} {
  func.func @lstm_attn_cls_kernel(%arg0: i32, %arg1: memref<8x8x16xbf16, #tpu.memory_space<vmem>>, %arg2: memref<1x8xi32, #tpu.memory_space<vmem>>, %arg3: memref<16x512xbf16, #tpu.memory_space<vmem>>, %arg4: memref<128x512xbf16, #tpu.memory_space<vmem>>, %arg5: memref<1x512xf32, #tpu.memory_space<vmem>>, %arg6: memref<128x128xbf16, #tpu.memory_space<vmem>>, %arg7: memref<1x128xf32, #tpu.memory_space<vmem>>, %arg8: memref<1x128xf32, #tpu.memory_space<vmem>>, %arg9: memref<1x128xf32, #tpu.memory_space<vmem>>, %arg10: memref<1x1xf32, #tpu.memory_space<vmem>>, %arg11: memref<8x128xf32, #tpu.memory_space<vmem>>, %arg12: memref<8x1xf32, #tpu.memory_space<vmem>>, %arg13: memref<8x8x512xbf16, #tpu.memory_space<vmem>>, %arg14: memref<8x8x128xbf16, #tpu.memory_space<vmem>>) attributes {dimension_semantics = [#tpu.dimension_semantics<parallel>], iteration_bounds = array<i64: 1>, scalar_prefetch = 0 : i64, scratch_operands = 2 : i64, tpu.core_type = #tpu.core_type<tc>, window_params = [{transform_indices = @transform_0, window_bounds = array<i64: 8, 8, 16>}, {transform_indices = @transform_1, window_bounds = array<i64: 1, 8>}, {pipeline_mode = #tpu.pipeline_mode<synchronous>, transform_indices = @transform_2, window_bounds = array<i64: 16, 512>}, {pipeline_mode = #tpu.pipeline_mode<synchronous>, transform_indices = @transform_3, window_bounds = array<i64: 128, 512>}, {pipeline_mode = #tpu.pipeline_mode<synchronous>, transform_indices = @transform_4, window_bounds = array<i64: 1, 512>}, {pipeline_mode = #tpu.pipeline_mode<synchronous>, transform_indices = @transform_5, window_bounds = array<i64: 128, 128>}, {pipeline_mode = #tpu.pipeline_mode<synchronous>, transform_indices = @transform_6, window_bounds = array<i64: 1, 128>}, {pipeline_mode = #tpu.pipeline_mode<synchronous>, transform_indices = @transform_7, window_bounds = array<i64: 1, 128>}, {pipeline_mode = #tpu.pipeline_mode<synchronous>, transform_indices = @transform_8, window_bounds = array<i64: 1, 128>}, {pipeline_mode = #tpu.pipeline_mode<synchronous>, transform_indices = @transform_9, window_bounds = array<i64: 1, 1>}, {transform_indices = @transform_10, window_bounds = array<i64: 8, 128>}, {transform_indices = @transform_11, window_bounds = array<i64: 8, 1>}]} {
    %c0 = arith.constant 0 : index
    %c0_0 = arith.constant 0 : index
    %c0_1 = arith.constant 0 : index
    %0 = vector.load %arg1[%c0, %c0_0, %c0_1] : memref<8x8x16xbf16, #tpu.memory_space<vmem>>, vector<8x8x16xbf16>
    %1 = vector.shape_cast %0 : vector<8x8x16xbf16> to vector<64x16xbf16>
    %c0_2 = arith.constant 0 : index
    %c0_3 = arith.constant 0 : index
    %2 = vector.load %arg3[%c0_2, %c0_3] : memref<16x512xbf16, #tpu.memory_space<vmem>>, vector<16x512xbf16>
    %cst = arith.constant dense<0.000000e+00> : vector<64x512xf32>
    %3 = tpu.matmul %1, %2, %cst {dimension_numbers = #tpu.dot_dimension_numbers<[1], [0], [0], [1], [0, 0, 1, 1], [], []>} : vector<64x16xbf16>, vector<16x512xbf16>, vector<64x512xf32> -> vector<64x512xf32>
    %c0_4 = arith.constant 0 : index
    %c0_5 = arith.constant 0 : index
    %4 = vector.load %arg5[%c0_4, %c0_5] : memref<1x512xf32, #tpu.memory_space<vmem>>, vector<1x512xf32>
    %5 = vector.broadcast %4 : vector<1x512xf32> to vector<64x512xf32>
    %6 = arith.addf %3, %5 : vector<64x512xf32>
    %7 = vector.shape_cast %6 : vector<64x512xf32> to vector<8x8x512xf32>
    %8 = arith.truncf %7 : vector<8x8x512xf32> to vector<8x8x512xbf16>
    %c0_6 = arith.constant 0 : index
    %c0_7 = arith.constant 0 : index
    %c0_8 = arith.constant 0 : index
    %9 = vector.load %arg13[%c0_6, %c0_7, %c0_8] : memref<8x8x512xbf16, #tpu.memory_space<vmem>>, vector<8x8x512xbf16>
    tpu.vector_store %arg13[%c0_6, %c0_7, %c0_8], %8 {strides = array<i32>} : memref<8x8x512xbf16, #tpu.memory_space<vmem>>, vector<8x8x512xbf16>,
    %c0_9 = arith.constant 0 : index
    %c0_10 = arith.constant 0 : index
    %10 = vector.load %arg4[%c0_9, %c0_10] : memref<128x512xbf16, #tpu.memory_space<vmem>>, vector<128x512xbf16>
    %cst_11 = arith.constant 0.000000e+00 : bf16
    %11 = vector.broadcast %cst_11 : bf16 to vector<8x128xbf16>
    %cst_12 = arith.constant 0.000000e+00 : f32
    %12 = vector.broadcast %cst_12 : f32 to vector<8x128xf32>
    %c0_13 = arith.constant 0 : index
    %c0_14 = arith.constant 0 : index
    %c0_15 = arith.constant 0 : index
    %13 = vector.load %arg13[%c0_13, %c0_14, %c0_15] : memref<8x8x512xbf16, #tpu.memory_space<vmem>>, vector<8x1x512xbf16>
    %14 = vector.shape_cast %13 : vector<8x1x512xbf16> to vector<8x512xbf16>
    %15 = arith.extf %14 : vector<8x512xbf16> to vector<8x512xf32>
    %cst_16 = arith.constant dense<0.000000e+00> : vector<8x512xf32>
    %16 = tpu.matmul %11, %10, %cst_16 {dimension_numbers = #tpu.dot_dimension_numbers<[1], [0], [0], [1], [0, 0, 1, 1], [], []>} : vector<8x128xbf16>, vector<128x512xbf16>, vector<8x512xf32> -> vector<8x512xf32>
    %17 = arith.addf %15, %16 : vector<8x512xf32>
    %18 = vector.extract_strided_slice %17 {offsets = [0, 0], sizes = [8, 128], strides = [1, 1]} : vector<8x512xf32> to vector<8x128xf32>
    %19 = arith.negf %18 : vector<8x128xf32>
    %20 = math.exp %19 : vector<8x128xf32>
    %cst_17 = arith.constant 1.000000e+00 : f32
    %21 = vector.broadcast %cst_17 : f32 to vector<8x128xf32>
    %22 = arith.addf %21, %20 : vector<8x128xf32>
    %23 = arith.divf %21, %22 : vector<8x128xf32>
    %24 = vector.extract_strided_slice %17 {offsets = [0, 128], sizes = [8, 128], strides = [1, 1]} : vector<8x512xf32> to vector<8x128xf32>
    %25 = arith.negf %24 : vector<8x128xf32>
    %26 = math.exp %25 : vector<8x128xf32>
    %cst_18 = arith.constant 1.000000e+00 : f32
    %27 = vector.broadcast %cst_18 : f32 to vector<8x128xf32>
    %28 = arith.addf %27, %26 : vector<8x128xf32>
    %29 = arith.divf %27, %28 : vector<8x128xf32>
    %30 = vector.extract_strided_slice %17 {offsets = [0, 256], sizes = [8, 128], strides = [1, 1]} : vector<8x512xf32> to vector<8x128xf32>
    %31 = math.tanh %30 : vector<8x128xf32>
    %32 = vector.extract_strided_slice %17 {offsets = [0, 384], sizes = [8, 128], strides = [1, 1]} : vector<8x512xf32> to vector<8x128xf32>
    %33 = arith.negf %32 : vector<8x128xf32>
    %34 = math.exp %33 : vector<8x128xf32>
    %cst_19 = arith.constant 1.000000e+00 : f32
    %35 = vector.broadcast %cst_19 : f32 to vector<8x128xf32>
    %36 = arith.addf %35, %34 : vector<8x128xf32>
    %37 = arith.divf %35, %36 : vector<8x128xf32>
    %38 = arith.mulf %29, %12 : vector<8x128xf32>
    %39 = arith.mulf %23, %31 : vector<8x128xf32>
    %40 = arith.addf %38, %39 : vector<8x128xf32>
    %41 = math.tanh %40 : vector<8x128xf32>
    %42 = arith.mulf %37, %41 : vector<8x128xf32>
    %43 = arith.truncf %42 : vector<8x128xf32> to vector<8x128xbf16>
    %c0_20 = arith.constant 0 : index
    %c0_21 = arith.constant 0 : index
    %c0_22 = arith.constant 0 : index
    %44 = vector.load %arg14[%c0_20, %c0_21, %c0_22] : memref<8x8x128xbf16, #tpu.memory_space<vmem>>, vector<1x8x128xbf16>
    %45 = vector.shape_cast %44 : vector<1x8x128xbf16> to vector<8x128xbf16>
    %46 = vector.shape_cast %43 : vector<8x128xbf16> to vector<1x8x128xbf16>
    tpu.vector_store %arg14[%c0_20, %c0_21, %c0_22], %46 {strides = array<i32>} : memref<8x8x128xbf16, #tpu.memory_space<vmem>>, vector<1x8x128xbf16>,
    %c0_23 = arith.constant 0 : index
    %c1 = arith.constant 1 : index
    %c0_24 = arith.constant 0 : index
    %47 = vector.load %arg13[%c0_23, %c1, %c0_24] : memref<8x8x512xbf16, #tpu.memory_space<vmem>>, vector<8x1x512xbf16>
    %48 = vector.shape_cast %47 : vector<8x1x512xbf16> to vector<8x512xbf16>
    %49 = arith.extf %48 : vector<8x512xbf16> to vector<8x512xf32>
    %cst_25 = arith.constant dense<0.000000e+00> : vector<8x512xf32>
    %50 = tpu.matmul %43, %10, %cst_25 {dimension_numbers = #tpu.dot_dimension_numbers<[1], [0], [0], [1], [0, 0, 1, 1], [], []>} : vector<8x128xbf16>, vector<128x512xbf16>, vector<8x512xf32> -> vector<8x512xf32>
    %51 = arith.addf %49, %50 : vector<8x512xf32>
    %52 = vector.extract_strided_slice %51 {offsets = [0, 0], sizes = [8, 128], strides = [1, 1]} : vector<8x512xf32> to vector<8x128xf32>
    %53 = arith.negf %52 : vector<8x128xf32>
    %54 = math.exp %53 : vector<8x128xf32>
    %cst_26 = arith.constant 1.000000e+00 : f32
    %55 = vector.broadcast %cst_26 : f32 to vector<8x128xf32>
    %56 = arith.addf %55, %54 : vector<8x128xf32>
    %57 = arith.divf %55, %56 : vector<8x128xf32>
    %58 = vector.extract_strided_slice %51 {offsets = [0, 128], sizes = [8, 128], strides = [1, 1]} : vector<8x512xf32> to vector<8x128xf32>
    %59 = arith.negf %58 : vector<8x128xf32>
    %60 = math.exp %59 : vector<8x128xf32>
    %cst_27 = arith.constant 1.000000e+00 : f32
    %61 = vector.broadcast %cst_27 : f32 to vector<8x128xf32>
    %62 = arith.addf %61, %60 : vector<8x128xf32>
    %63 = arith.divf %61, %62 : vector<8x128xf32>
    %64 = vector.extract_strided_slice %51 {offsets = [0, 256], sizes = [8, 128], strides = [1, 1]} : vector<8x512xf32> to vector<8x128xf32>
    %65 = math.tanh %64 : vector<8x128xf32>
    %66 = vector.extract_strided_slice %51 {offsets = [0, 384], sizes = [8, 128], strides = [1, 1]} : vector<8x512xf32> to vector<8x128xf32>
    %67 = arith.negf %66 : vector<8x128xf32>
    %68 = math.exp %67 : vector<8x128xf32>
    %cst_28 = arith.constant 1.000000e+00 : f32
    %69 = vector.broadcast %cst_28 : f32 to vector<8x128xf32>
    %70 = arith.addf %69, %68 : vector<8x128xf32>
    %71 = arith.divf %69, %70 : vector<8x128xf32>
    %72 = arith.mulf %63, %40 : vector<8x128xf32>
    %73 = arith.mulf %57, %65 : vector<8x128xf32>
    %74 = arith.addf %72, %73 : vector<8x128xf32>
    %75 = math.tanh %74 : vector<8x128xf32>
    %76 = arith.mulf %71, %75 : vector<8x128xf32>
    %77 = arith.truncf %76 : vector<8x128xf32> to vector<8x128xbf16>
    %c1_29 = arith.constant 1 : index
    %c0_30 = arith.constant 0 : index
    %c0_31 = arith.constant 0 : index
    %78 = vector.load %arg14[%c1_29, %c0_30, %c0_31] : memref<8x8x128xbf16, #tpu.memory_space<vmem>>, vector<1x8x128xbf16>
    %79 = vector.shape_cast %78 : vector<1x8x128xbf16> to vector<8x128xbf16>
    %80 = vector.shape_cast %77 : vector<8x128xbf16> to vector<1x8x128xbf16>
    tpu.vector_store %arg14[%c1_29, %c0_30, %c0_31], %80 {strides = array<i32>} : memref<8x8x128xbf16, #tpu.memory_space<vmem>>, vector<1x8x128xbf16>,
    %c0_32 = arith.constant 0 : index
    %c2 = arith.constant 2 : index
    %c0_33 = arith.constant 0 : index
    %81 = vector.load %arg13[%c0_32, %c2, %c0_33] : memref<8x8x512xbf16, #tpu.memory_space<vmem>>, vector<8x1x512xbf16>
    %82 = vector.shape_cast %81 : vector<8x1x512xbf16> to vector<8x512xbf16>
    %83 = arith.extf %82 : vector<8x512xbf16> to vector<8x512xf32>
    %cst_34 = arith.constant dense<0.000000e+00> : vector<8x512xf32>
    %84 = tpu.matmul %77, %10, %cst_34 {dimension_numbers = #tpu.dot_dimension_numbers<[1], [0], [0], [1], [0, 0, 1, 1], [], []>} : vector<8x128xbf16>, vector<128x512xbf16>, vector<8x512xf32> -> vector<8x512xf32>
    %85 = arith.addf %83, %84 : vector<8x512xf32>
    %86 = vector.extract_strided_slice %85 {offsets = [0, 0], sizes = [8, 128], strides = [1, 1]} : vector<8x512xf32> to vector<8x128xf32>
    %87 = arith.negf %86 : vector<8x128xf32>
    %88 = math.exp %87 : vector<8x128xf32>
    %cst_35 = arith.constant 1.000000e+00 : f32
    %89 = vector.broadcast %cst_35 : f32 to vector<8x128xf32>
    %90 = arith.addf %89, %88 : vector<8x128xf32>
    %91 = arith.divf %89, %90 : vector<8x128xf32>
    %92 = vector.extract_strided_slice %85 {offsets = [0, 128], sizes = [8, 128], strides = [1, 1]} : vector<8x512xf32> to vector<8x128xf32>
    %93 = arith.negf %92 : vector<8x128xf32>
    %94 = math.exp %93 : vector<8x128xf32>
    %cst_36 = arith.constant 1.000000e+00 : f32
    %95 = vector.broadcast %cst_36 : f32 to vector<8x128xf32>
    %96 = arith.addf %95, %94 : vector<8x128xf32>
    %97 = arith.divf %95, %96 : vector<8x128xf32>
    %98 = vector.extract_strided_slice %85 {offsets = [0, 256], sizes = [8, 128], strides = [1, 1]} : vector<8x512xf32> to vector<8x128xf32>
    %99 = math.tanh %98 : vector<8x128xf32>
    %100 = vector.extract_strided_slice %85 {offsets = [0, 384], sizes = [8, 128], strides = [1, 1]} : vector<8x512xf32> to vector<8x128xf32>
    %101 = arith.negf %100 : vector<8x128xf32>
    %102 = math.exp %101 : vector<8x128xf32>
    %cst_37 = arith.constant 1.000000e+00 : f32
    %103 = vector.broadcast %cst_37 : f32 to vector<8x128xf32>
    %104 = arith.addf %103, %102 : vector<8x128xf32>
    %105 = arith.divf %103, %104 : vector<8x128xf32>
    %106 = arith.mulf %97, %74 : vector<8x128xf32>
    %107 = arith.mulf %91, %99 : vector<8x128xf32>
    %108 = arith.addf %106, %107 : vector<8x128xf32>
    %109 = math.tanh %108 : vector<8x128xf32>
    %110 = arith.mulf %105, %109 : vector<8x128xf32>
    %111 = arith.truncf %110 : vector<8x128xf32> to vector<8x128xbf16>
    %c2_38 = arith.constant 2 : index
    %c0_39 = arith.constant 0 : index
    %c0_40 = arith.constant 0 : index
    %112 = vector.load %arg14[%c2_38, %c0_39, %c0_40] : memref<8x8x128xbf16, #tpu.memory_space<vmem>>, vector<1x8x128xbf16>
    %113 = vector.shape_cast %112 : vector<1x8x128xbf16> to vector<8x128xbf16>
    %114 = vector.shape_cast %111 : vector<8x128xbf16> to vector<1x8x128xbf16>
    tpu.vector_store %arg14[%c2_38, %c0_39, %c0_40], %114 {strides = array<i32>} : memref<8x8x128xbf16, #tpu.memory_space<vmem>>, vector<1x8x128xbf16>,
    %c0_41 = arith.constant 0 : index
    %c3 = arith.constant 3 : index
    %c0_42 = arith.constant 0 : index
    %115 = vector.load %arg13[%c0_41, %c3, %c0_42] : memref<8x8x512xbf16, #tpu.memory_space<vmem>>, vector<8x1x512xbf16>
    %116 = vector.shape_cast %115 : vector<8x1x512xbf16> to vector<8x512xbf16>
    %117 = arith.extf %116 : vector<8x512xbf16> to vector<8x512xf32>
    %cst_43 = arith.constant dense<0.000000e+00> : vector<8x512xf32>
    %118 = tpu.matmul %111, %10, %cst_43 {dimension_numbers = #tpu.dot_dimension_numbers<[1], [0], [0], [1], [0, 0, 1, 1], [], []>} : vector<8x128xbf16>, vector<128x512xbf16>, vector<8x512xf32> -> vector<8x512xf32>
    %119 = arith.addf %117, %118 : vector<8x512xf32>
    %120 = vector.extract_strided_slice %119 {offsets = [0, 0], sizes = [8, 128], strides = [1, 1]} : vector<8x512xf32> to vector<8x128xf32>
    %121 = arith.negf %120 : vector<8x128xf32>
    %122 = math.exp %121 : vector<8x128xf32>
    %cst_44 = arith.constant 1.000000e+00 : f32
    %123 = vector.broadcast %cst_44 : f32 to vector<8x128xf32>
    %124 = arith.addf %123, %122 : vector<8x128xf32>
    %125 = arith.divf %123, %124 : vector<8x128xf32>
    %126 = vector.extract_strided_slice %119 {offsets = [0, 128], sizes = [8, 128], strides = [1, 1]} : vector<8x512xf32> to vector<8x128xf32>
    %127 = arith.negf %126 : vector<8x128xf32>
    %128 = math.exp %127 : vector<8x128xf32>
    %cst_45 = arith.constant 1.000000e+00 : f32
    %129 = vector.broadcast %cst_45 : f32 to vector<8x128xf32>
    %130 = arith.addf %129, %128 : vector<8x128xf32>
    %131 = arith.divf %129, %130 : vector<8x128xf32>
    %132 = vector.extract_strided_slice %119 {offsets = [0, 256], sizes = [8, 128], strides = [1, 1]} : vector<8x512xf32> to vector<8x128xf32>
    %133 = math.tanh %132 : vector<8x128xf32>
    %134 = vector.extract_strided_slice %119 {offsets = [0, 384], sizes = [8, 128], strides = [1, 1]} : vector<8x512xf32> to vector<8x128xf32>
    %135 = arith.negf %134 : vector<8x128xf32>
    %136 = math.exp %135 : vector<8x128xf32>
    %cst_46 = arith.constant 1.000000e+00 : f32
    %137 = vector.broadcast %cst_46 : f32 to vector<8x128xf32>
    %138 = arith.addf %137, %136 : vector<8x128xf32>
    %139 = arith.divf %137, %138 : vector<8x128xf32>
    %140 = arith.mulf %131, %108 : vector<8x128xf32>
    %141 = arith.mulf %125, %133 : vector<8x128xf32>
    %142 = arith.addf %140, %141 : vector<8x128xf32>
    %143 = math.tanh %142 : vector<8x128xf32>
    %144 = arith.mulf %139, %143 : vector<8x128xf32>
    %145 = arith.truncf %144 : vector<8x128xf32> to vector<8x128xbf16>
    %c3_47 = arith.constant 3 : index
    %c0_48 = arith.constant 0 : index
    %c0_49 = arith.constant 0 : index
    %146 = vector.load %arg14[%c3_47, %c0_48, %c0_49] : memref<8x8x128xbf16, #tpu.memory_space<vmem>>, vector<1x8x128xbf16>
    %147 = vector.shape_cast %146 : vector<1x8x128xbf16> to vector<8x128xbf16>
    %148 = vector.shape_cast %145 : vector<8x128xbf16> to vector<1x8x128xbf16>
    tpu.vector_store %arg14[%c3_47, %c0_48, %c0_49], %148 {strides = array<i32>} : memref<8x8x128xbf16, #tpu.memory_space<vmem>>, vector<1x8x128xbf16>,
    %c0_50 = arith.constant 0 : index
    %c4 = arith.constant 4 : index
    %c0_51 = arith.constant 0 : index
    %149 = vector.load %arg13[%c0_50, %c4, %c0_51] : memref<8x8x512xbf16, #tpu.memory_space<vmem>>, vector<8x1x512xbf16>
    %150 = vector.shape_cast %149 : vector<8x1x512xbf16> to vector<8x512xbf16>
    %151 = arith.extf %150 : vector<8x512xbf16> to vector<8x512xf32>
    %cst_52 = arith.constant dense<0.000000e+00> : vector<8x512xf32>
    %152 = tpu.matmul %145, %10, %cst_52 {dimension_numbers = #tpu.dot_dimension_numbers<[1], [0], [0], [1], [0, 0, 1, 1], [], []>} : vector<8x128xbf16>, vector<128x512xbf16>, vector<8x512xf32> -> vector<8x512xf32>
    %153 = arith.addf %151, %152 : vector<8x512xf32>
    %154 = vector.extract_strided_slice %153 {offsets = [0, 0], sizes = [8, 128], strides = [1, 1]} : vector<8x512xf32> to vector<8x128xf32>
    %155 = arith.negf %154 : vector<8x128xf32>
    %156 = math.exp %155 : vector<8x128xf32>
    %cst_53 = arith.constant 1.000000e+00 : f32
    %157 = vector.broadcast %cst_53 : f32 to vector<8x128xf32>
    %158 = arith.addf %157, %156 : vector<8x128xf32>
    %159 = arith.divf %157, %158 : vector<8x128xf32>
    %160 = vector.extract_strided_slice %153 {offsets = [0, 128], sizes = [8, 128], strides = [1, 1]} : vector<8x512xf32> to vector<8x128xf32>
    %161 = arith.negf %160 : vector<8x128xf32>
    %162 = math.exp %161 : vector<8x128xf32>
    %cst_54 = arith.constant 1.000000e+00 : f32
    %163 = vector.broadcast %cst_54 : f32 to vector<8x128xf32>
    %164 = arith.addf %163, %162 : vector<8x128xf32>
    %165 = arith.divf %163, %164 : vector<8x128xf32>
    %166 = vector.extract_strided_slice %153 {offsets = [0, 256], sizes = [8, 128], strides = [1, 1]} : vector<8x512xf32> to vector<8x128xf32>
    %167 = math.tanh %166 : vector<8x128xf32>
    %168 = vector.extract_strided_slice %153 {offsets = [0, 384], sizes = [8, 128], strides = [1, 1]} : vector<8x512xf32> to vector<8x128xf32>
    %169 = arith.negf %168 : vector<8x128xf32>
    %170 = math.exp %169 : vector<8x128xf32>
    %cst_55 = arith.constant 1.000000e+00 : f32
    %171 = vector.broadcast %cst_55 : f32 to vector<8x128xf32>
    %172 = arith.addf %171, %170 : vector<8x128xf32>
    %173 = arith.divf %171, %172 : vector<8x128xf32>
    %174 = arith.mulf %165, %142 : vector<8x128xf32>
    %175 = arith.mulf %159, %167 : vector<8x128xf32>
    %176 = arith.addf %174, %175 : vector<8x128xf32>
    %177 = math.tanh %176 : vector<8x128xf32>
    %178 = arith.mulf %173, %177 : vector<8x128xf32>
    %179 = arith.truncf %178 : vector<8x128xf32> to vector<8x128xbf16>
    %c4_56 = arith.constant 4 : index
    %c0_57 = arith.constant 0 : index
    %c0_58 = arith.constant 0 : index
    %180 = vector.load %arg14[%c4_56, %c0_57, %c0_58] : memref<8x8x128xbf16, #tpu.memory_space<vmem>>, vector<1x8x128xbf16>
    %181 = vector.shape_cast %180 : vector<1x8x128xbf16> to vector<8x128xbf16>
    %182 = vector.shape_cast %179 : vector<8x128xbf16> to vector<1x8x128xbf16>
    tpu.vector_store %arg14[%c4_56, %c0_57, %c0_58], %182 {strides = array<i32>} : memref<8x8x128xbf16, #tpu.memory_space<vmem>>, vector<1x8x128xbf16>,
    %c0_59 = arith.constant 0 : index
    %c5 = arith.constant 5 : index
    %c0_60 = arith.constant 0 : index
    %183 = vector.load %arg13[%c0_59, %c5, %c0_60] : memref<8x8x512xbf16, #tpu.memory_space<vmem>>, vector<8x1x512xbf16>
    %184 = vector.shape_cast %183 : vector<8x1x512xbf16> to vector<8x512xbf16>
    %185 = arith.extf %184 : vector<8x512xbf16> to vector<8x512xf32>
    %cst_61 = arith.constant dense<0.000000e+00> : vector<8x512xf32>
    %186 = tpu.matmul %179, %10, %cst_61 {dimension_numbers = #tpu.dot_dimension_numbers<[1], [0], [0], [1], [0, 0, 1, 1], [], []>} : vector<8x128xbf16>, vector<128x512xbf16>, vector<8x512xf32> -> vector<8x512xf32>
    %187 = arith.addf %185, %186 : vector<8x512xf32>
    %188 = vector.extract_strided_slice %187 {offsets = [0, 0], sizes = [8, 128], strides = [1, 1]} : vector<8x512xf32> to vector<8x128xf32>
    %189 = arith.negf %188 : vector<8x128xf32>
    %190 = math.exp %189 : vector<8x128xf32>
    %cst_62 = arith.constant 1.000000e+00 : f32
    %191 = vector.broadcast %cst_62 : f32 to vector<8x128xf32>
    %192 = arith.addf %191, %190 : vector<8x128xf32>
    %193 = arith.divf %191, %192 : vector<8x128xf32>
    %194 = vector.extract_strided_slice %187 {offsets = [0, 128], sizes = [8, 128], strides = [1, 1]} : vector<8x512xf32> to vector<8x128xf32>
    %195 = arith.negf %194 : vector<8x128xf32>
    %196 = math.exp %195 : vector<8x128xf32>
    %cst_63 = arith.constant 1.000000e+00 : f32
    %197 = vector.broadcast %cst_63 : f32 to vector<8x128xf32>
    %198 = arith.addf %197, %196 : vector<8x128xf32>
    %199 = arith.divf %197, %198 : vector<8x128xf32>
    %200 = vector.extract_strided_slice %187 {offsets = [0, 256], sizes = [8, 128], strides = [1, 1]} : vector<8x512xf32> to vector<8x128xf32>
    %201 = math.tanh %200 : vector<8x128xf32>
    %202 = vector.extract_strided_slice %187 {offsets = [0, 384], sizes = [8, 128], strides = [1, 1]} : vector<8x512xf32> to vector<8x128xf32>
    %203 = arith.negf %202 : vector<8x128xf32>
    %204 = math.exp %203 : vector<8x128xf32>
    %cst_64 = arith.constant 1.000000e+00 : f32
    %205 = vector.broadcast %cst_64 : f32 to vector<8x128xf32>
    %206 = arith.addf %205, %204 : vector<8x128xf32>
    %207 = arith.divf %205, %206 : vector<8x128xf32>
    %208 = arith.mulf %199, %176 : vector<8x128xf32>
    %209 = arith.mulf %193, %201 : vector<8x128xf32>
    %210 = arith.addf %208, %209 : vector<8x128xf32>
    %211 = math.tanh %210 : vector<8x128xf32>
    %212 = arith.mulf %207, %211 : vector<8x128xf32>
    %213 = arith.truncf %212 : vector<8x128xf32> to vector<8x128xbf16>
    %c5_65 = arith.constant 5 : index
    %c0_66 = arith.constant 0 : index
    %c0_67 = arith.constant 0 : index
    %214 = vector.load %arg14[%c5_65, %c0_66, %c0_67] : memref<8x8x128xbf16, #tpu.memory_space<vmem>>, vector<1x8x128xbf16>
    %215 = vector.shape_cast %214 : vector<1x8x128xbf16> to vector<8x128xbf16>
    %216 = vector.shape_cast %213 : vector<8x128xbf16> to vector<1x8x128xbf16>
    tpu.vector_store %arg14[%c5_65, %c0_66, %c0_67], %216 {strides = array<i32>} : memref<8x8x128xbf16, #tpu.memory_space<vmem>>, vector<1x8x128xbf16>,
    %c0_68 = arith.constant 0 : index
    %c6 = arith.constant 6 : index
    %c0_69 = arith.constant 0 : index
    %217 = vector.load %arg13[%c0_68, %c6, %c0_69] : memref<8x8x512xbf16, #tpu.memory_space<vmem>>, vector<8x1x512xbf16>
    %218 = vector.shape_cast %217 : vector<8x1x512xbf16> to vector<8x512xbf16>
    %219 = arith.extf %218 : vector<8x512xbf16> to vector<8x512xf32>
    %cst_70 = arith.constant dense<0.000000e+00> : vector<8x512xf32>
    %220 = tpu.matmul %213, %10, %cst_70 {dimension_numbers = #tpu.dot_dimension_numbers<[1], [0], [0], [1], [0, 0, 1, 1], [], []>} : vector<8x128xbf16>, vector<128x512xbf16>, vector<8x512xf32> -> vector<8x512xf32>
    %221 = arith.addf %219, %220 : vector<8x512xf32>
    %222 = vector.extract_strided_slice %221 {offsets = [0, 0], sizes = [8, 128], strides = [1, 1]} : vector<8x512xf32> to vector<8x128xf32>
    %223 = arith.negf %222 : vector<8x128xf32>
    %224 = math.exp %223 : vector<8x128xf32>
    %cst_71 = arith.constant 1.000000e+00 : f32
    %225 = vector.broadcast %cst_71 : f32 to vector<8x128xf32>
    %226 = arith.addf %225, %224 : vector<8x128xf32>
    %227 = arith.divf %225, %226 : vector<8x128xf32>
    %228 = vector.extract_strided_slice %221 {offsets = [0, 128], sizes = [8, 128], strides = [1, 1]} : vector<8x512xf32> to vector<8x128xf32>
    %229 = arith.negf %228 : vector<8x128xf32>
    %230 = math.exp %229 : vector<8x128xf32>
    %cst_72 = arith.constant 1.000000e+00 : f32
    %231 = vector.broadcast %cst_72 : f32 to vector<8x128xf32>
    %232 = arith.addf %231, %230 : vector<8x128xf32>
    %233 = arith.divf %231, %232 : vector<8x128xf32>
    %234 = vector.extract_strided_slice %221 {offsets = [0, 256], sizes = [8, 128], strides = [1, 1]} : vector<8x512xf32> to vector<8x128xf32>
    %235 = math.tanh %234 : vector<8x128xf32>
    %236 = vector.extract_strided_slice %221 {offsets = [0, 384], sizes = [8, 128], strides = [1, 1]} : vector<8x512xf32> to vector<8x128xf32>
    %237 = arith.negf %236 : vector<8x128xf32>
    %238 = math.exp %237 : vector<8x128xf32>
    %cst_73 = arith.constant 1.000000e+00 : f32
    %239 = vector.broadcast %cst_73 : f32 to vector<8x128xf32>
    %240 = arith.addf %239, %238 : vector<8x128xf32>
    %241 = arith.divf %239, %240 : vector<8x128xf32>
    %242 = arith.mulf %233, %210 : vector<8x128xf32>
    %243 = arith.mulf %227, %235 : vector<8x128xf32>
    %244 = arith.addf %242, %243 : vector<8x128xf32>
    %245 = math.tanh %244 : vector<8x128xf32>
    %246 = arith.mulf %241, %245 : vector<8x128xf32>
    %247 = arith.truncf %246 : vector<8x128xf32> to vector<8x128xbf16>
    %c6_74 = arith.constant 6 : index
    %c0_75 = arith.constant 0 : index
    %c0_76 = arith.constant 0 : index
    %248 = vector.load %arg14[%c6_74, %c0_75, %c0_76] : memref<8x8x128xbf16, #tpu.memory_space<vmem>>, vector<1x8x128xbf16>
    %249 = vector.shape_cast %248 : vector<1x8x128xbf16> to vector<8x128xbf16>
    %250 = vector.shape_cast %247 : vector<8x128xbf16> to vector<1x8x128xbf16>
    tpu.vector_store %arg14[%c6_74, %c0_75, %c0_76], %250 {strides = array<i32>} : memref<8x8x128xbf16, #tpu.memory_space<vmem>>, vector<1x8x128xbf16>,
    %c0_77 = arith.constant 0 : index
    %c7 = arith.constant 7 : index
    %c0_78 = arith.constant 0 : index
    %251 = vector.load %arg13[%c0_77, %c7, %c0_78] : memref<8x8x512xbf16, #tpu.memory_space<vmem>>, vector<8x1x512xbf16>
    %252 = vector.shape_cast %251 : vector<8x1x512xbf16> to vector<8x512xbf16>
    %253 = arith.extf %252 : vector<8x512xbf16> to vector<8x512xf32>
    %cst_79 = arith.constant dense<0.000000e+00> : vector<8x512xf32>
    %254 = tpu.matmul %247, %10, %cst_79 {dimension_numbers = #tpu.dot_dimension_numbers<[1], [0], [0], [1], [0, 0, 1, 1], [], []>} : vector<8x128xbf16>, vector<128x512xbf16>, vector<8x512xf32> -> vector<8x512xf32>
    %255 = arith.addf %253, %254 : vector<8x512xf32>
    %256 = vector.extract_strided_slice %255 {offsets = [0, 0], sizes = [8, 128], strides = [1, 1]} : vector<8x512xf32> to vector<8x128xf32>
    %257 = arith.negf %256 : vector<8x128xf32>
    %258 = math.exp %257 : vector<8x128xf32>
    %cst_80 = arith.constant 1.000000e+00 : f32
    %259 = vector.broadcast %cst_80 : f32 to vector<8x128xf32>
    %260 = arith.addf %259, %258 : vector<8x128xf32>
    %261 = arith.divf %259, %260 : vector<8x128xf32>
    %262 = vector.extract_strided_slice %255 {offsets = [0, 128], sizes = [8, 128], strides = [1, 1]} : vector<8x512xf32> to vector<8x128xf32>
    %263 = arith.negf %262 : vector<8x128xf32>
    %264 = math.exp %263 : vector<8x128xf32>
    %cst_81 = arith.constant 1.000000e+00 : f32
    %265 = vector.broadcast %cst_81 : f32 to vector<8x128xf32>
    %266 = arith.addf %265, %264 : vector<8x128xf32>
    %267 = arith.divf %265, %266 : vector<8x128xf32>
    %268 = vector.extract_strided_slice %255 {offsets = [0, 256], sizes = [8, 128], strides = [1, 1]} : vector<8x512xf32> to vector<8x128xf32>
    %269 = math.tanh %268 : vector<8x128xf32>
    %270 = vector.extract_strided_slice %255 {offsets = [0, 384], sizes = [8, 128], strides = [1, 1]} : vector<8x512xf32> to vector<8x128xf32>
    %271 = arith.negf %270 : vector<8x128xf32>
    %272 = math.exp %271 : vector<8x128xf32>
    %cst_82 = arith.constant 1.000000e+00 : f32
    %273 = vector.broadcast %cst_82 : f32 to vector<8x128xf32>
    %274 = arith.addf %273, %272 : vector<8x128xf32>
    %275 = arith.divf %273, %274 : vector<8x128xf32>
    %276 = arith.mulf %267, %244 : vector<8x128xf32>
    %277 = arith.mulf %261, %269 : vector<8x128xf32>
    %278 = arith.addf %276, %277 : vector<8x128xf32>
    %279 = math.tanh %278 : vector<8x128xf32>
    %280 = arith.mulf %275, %279 : vector<8x128xf32>
    %281 = arith.truncf %280 : vector<8x128xf32> to vector<8x128xbf16>
    %c7_83 = arith.constant 7 : index
    %c0_84 = arith.constant 0 : index
    %c0_85 = arith.constant 0 : index
    %282 = vector.load %arg14[%c7_83, %c0_84, %c0_85] : memref<8x8x128xbf16, #tpu.memory_space<vmem>>, vector<1x8x128xbf16>
    %283 = vector.shape_cast %282 : vector<1x8x128xbf16> to vector<8x128xbf16>
    %284 = vector.shape_cast %281 : vector<8x128xbf16> to vector<1x8x128xbf16>
    tpu.vector_store %arg14[%c7_83, %c0_84, %c0_85], %284 {strides = array<i32>} : memref<8x8x128xbf16, #tpu.memory_space<vmem>>, vector<1x8x128xbf16>,
    %c0_86 = arith.constant 0 : index
    %c0_87 = arith.constant 0 : index
    %c0_88 = arith.constant 0 : index
    %285 = vector.load %arg14[%c0_86, %c0_87, %c0_88] : memref<8x8x128xbf16, #tpu.memory_space<vmem>>, vector<8x8x128xbf16>
    %c0_89 = arith.constant 0 : index
    %c0_90 = arith.constant 0 : index
    %286 = vector.load %arg2[%c0_89, %c0_90] : memref<1x8xi32, #tpu.memory_space<vmem>>, vector<1x8xi32>
    %287 = tpu.iota {dimensions = array<i32: 0>} : vector<8x8xi32>
    %288 = vector.broadcast %286 : vector<1x8xi32> to vector<8x8xi32>
    %289 = arith.cmpi slt, %287, %288 : vector<8x8xi32>
    %290 = arith.extui %289 : vector<8x8xi1> to vector<8x8xi32>
    %291 = arith.sitofp %290 : vector<8x8xi32> to vector<8x8xf32>
    %292 = vector.shape_cast %285 : vector<8x8x128xbf16> to vector<64x128xbf16>
    %c0_91 = arith.constant 0 : index
    %c0_92 = arith.constant 0 : index
    %293 = vector.load %arg6[%c0_91, %c0_92] : memref<128x128xbf16, #tpu.memory_space<vmem>>, vector<128x128xbf16>
    %cst_93 = arith.constant dense<0.000000e+00> : vector<64x128xf32>
    %294 = tpu.matmul %292, %293, %cst_93 {dimension_numbers = #tpu.dot_dimension_numbers<[1], [0], [0], [1], [0, 0, 1, 1], [], []>} : vector<64x128xbf16>, vector<128x128xbf16>, vector<64x128xf32> -> vector<64x128xf32>
    %c0_94 = arith.constant 0 : index
    %c0_95 = arith.constant 0 : index
    %295 = vector.load %arg7[%c0_94, %c0_95] : memref<1x128xf32, #tpu.memory_space<vmem>>, vector<1x128xf32>
    %296 = vector.broadcast %295 : vector<1x128xf32> to vector<64x128xf32>
    %297 = arith.addf %294, %296 : vector<64x128xf32>
    %298 = math.tanh %297 : vector<64x128xf32>
    %299 = vector.shape_cast %298 : vector<64x128xf32> to vector<8x8x128xf32>
    %c0_96 = arith.constant 0 : index
    %c0_97 = arith.constant 0 : index
    %300 = vector.load %arg8[%c0_96, %c0_97] : memref<1x128xf32, #tpu.memory_space<vmem>>, vector<1x128xf32>
    %301 = vector.shape_cast %300 : vector<1x128xf32> to vector<1x1x128xf32>
    %302 = vector.broadcast %301 : vector<1x1x128xf32> to vector<8x8x128xf32>
    %303 = arith.mulf %299, %302 : vector<8x8x128xf32>
    %cst_98 = arith.constant dense<0.000000e+00> : vector<8x8xf32>
    %304 = vector.multi_reduction <add>, %303, %cst_98 [2] : vector<8x8x128xf32> to vector<8x8xf32>
    %cst_99 = arith.constant -1.000000e+30 : f32
    %305 = vector.broadcast %cst_99 : f32 to vector<8x8xf32>
    %306 = arith.select %289, %304, %305 : vector<8x8xi1>, vector<8x8xf32>
    %cst_100 = arith.constant dense<0xFF800000> : vector<8xf32>
    %307 = vector.multi_reduction <maximumf>, %306, %cst_100 [0] : vector<8x8xf32> to vector<8xf32>
    %308 = vector.shape_cast %307 : vector<8xf32> to vector<1x8xf32>
    %309 = vector.broadcast %308 : vector<1x8xf32> to vector<8x8xf32>
    %310 = arith.subf %306, %309 : vector<8x8xf32>
    %311 = math.exp %310 : vector<8x8xf32>
    %312 = arith.mulf %311, %291 : vector<8x8xf32>
    %cst_101 = arith.constant dense<0.000000e+00> : vector<8xf32>
    %313 = vector.multi_reduction <add>, %312, %cst_101 [0] : vector<8x8xf32> to vector<8xf32>
    %314 = vector.shape_cast %313 : vector<8xf32> to vector<1x8xf32>
    %cst_102 = arith.constant 9.99999968E-21 : f32
    %315 = vector.broadcast %cst_102 : f32 to vector<1x8xf32>
    %316 = arith.maximumf %314, %315 : vector<1x8xf32>
    %317 = tpu.reciprocal %316 {approx = true} : vector<1x8xf32> -> vector<1x8xf32>
    %318 = vector.broadcast %317 : vector<1x8xf32> to vector<8x8xf32>
    %319 = arith.mulf %312, %318 : vector<8x8xf32>
    %320 = vector.shape_cast %319 : vector<8x8xf32> to vector<8x8x1xf32>
    %321 = arith.extf %285 : vector<8x8x128xbf16> to vector<8x8x128xf32>
    %322 = vector.broadcast %320 : vector<8x8x1xf32> to vector<8x8x128xf32>
    %323 = arith.mulf %322, %321 : vector<8x8x128xf32>
    %cst_103 = arith.constant dense<0.000000e+00> : vector<8x128xf32>
    %324 = vector.multi_reduction <add>, %323, %cst_103 [0] : vector<8x8x128xf32> to vector<8x128xf32>
    %c0_104 = arith.constant 0 : index
    %c0_105 = arith.constant 0 : index
    %325 = vector.load %arg11[%c0_104, %c0_105] : memref<8x128xf32, #tpu.memory_space<vmem>>, vector<8x128xf32>
    tpu.vector_store %arg11[%c0_104, %c0_105], %324 {strides = array<i32>} : memref<8x128xf32, #tpu.memory_space<vmem>>, vector<8x128xf32>,
    %c0_106 = arith.constant 0 : index
    %c0_107 = arith.constant 0 : index
    %326 = vector.load %arg9[%c0_106, %c0_107] : memref<1x128xf32, #tpu.memory_space<vmem>>, vector<1x128xf32>
    %c0_108 = arith.constant 0 : index
    %c0_109 = arith.constant 0 : index
    %327 = vector.load %arg10[%c0_108, %c0_109] : memref<1x1xf32, #tpu.memory_space<vmem>>, vector<1x1xf32>
    %328 = vector.broadcast %326 : vector<1x128xf32> to vector<8x128xf32>
    %329 = arith.mulf %324, %328 : vector<8x128xf32>
    %cst_110 = arith.constant dense<0.000000e+00> : vector<8xf32>
    %330 = vector.multi_reduction <add>, %329, %cst_110 [1] : vector<8x128xf32> to vector<8xf32>
    %331 = vector.shape_cast %330 : vector<8xf32> to vector<8x1xf32>
    %332 = vector.broadcast %327 : vector<1x1xf32> to vector<8x1xf32>
    %333 = arith.addf %331, %332 : vector<8x1xf32>
    %334 = arith.negf %333 : vector<8x1xf32>
    %335 = math.exp %334 : vector<8x1xf32>
    %cst_111 = arith.constant 1.000000e+00 : f32
    %336 = vector.broadcast %cst_111 : f32 to vector<8x1xf32>
    %337 = arith.addf %336, %335 : vector<8x1xf32>
    %338 = arith.divf %336, %337 : vector<8x1xf32>
    %c0_112 = arith.constant 0 : index
    %c0_113 = arith.constant 0 : index
    %339 = vector.load %arg12[%c0_112, %c0_113] : memref<8x1xf32, #tpu.memory_space<vmem>>, vector<8x1xf32>
    tpu.vector_store %arg12[%c0_112, %c0_113], %338 {strides = array<i32>} : memref<8x1xf32, #tpu.memory_space<vmem>>, vector<8x1xf32>,
    return
  }
  func.func @transform_0(%arg0: i32) -> (i32, i32, i32) {
    %c0_i32 = arith.constant 0 : i32
    %c0_i32_0 = arith.constant 0 : i32
    %c0_i32_1 = arith.constant 0 : i32
    return %arg0, %c0_i32, %c0_i32_0 : i32, i32, i32
  }
  func.func @transform_1(%arg0: i32) -> (i32, i32) {
    %c0_i32 = arith.constant 0 : i32
    %c0_i32_0 = arith.constant 0 : i32
    return %c0_i32, %arg0 : i32, i32
  }
  func.func @transform_2(%arg0: i32) -> (i32, i32) {
    %c0_i32 = arith.constant 0 : i32
    %c0_i32_0 = arith.constant 0 : i32
    %c0_i32_1 = arith.constant 0 : i32
    return %c0_i32, %c0_i32_0 : i32, i32
  }
  func.func @transform_3(%arg0: i32) -> (i32, i32) {
    %c0_i32 = arith.constant 0 : i32
    %c0_i32_0 = arith.constant 0 : i32
    %c0_i32_1 = arith.constant 0 : i32
    return %c0_i32, %c0_i32_0 : i32, i32
  }
  func.func @transform_4(%arg0: i32) -> (i32, i32) {
    %c0_i32 = arith.constant 0 : i32
    %c0_i32_0 = arith.constant 0 : i32
    %c0_i32_1 = arith.constant 0 : i32
    return %c0_i32, %c0_i32_0 : i32, i32
  }
  func.func @transform_5(%arg0: i32) -> (i32, i32) {
    %c0_i32 = arith.constant 0 : i32
    %c0_i32_0 = arith.constant 0 : i32
    %c0_i32_1 = arith.constant 0 : i32
    return %c0_i32, %c0_i32_0 : i32, i32
  }
  func.func @transform_6(%arg0: i32) -> (i32, i32) {
    %c0_i32 = arith.constant 0 : i32
    %c0_i32_0 = arith.constant 0 : i32
    %c0_i32_1 = arith.constant 0 : i32
    return %c0_i32, %c0_i32_0 : i32, i32
  }
  func.func @transform_7(%arg0: i32) -> (i32, i32) {
    %c0_i32 = arith.constant 0 : i32
    %c0_i32_0 = arith.constant 0 : i32
    %c0_i32_1 = arith.constant 0 : i32
    return %c0_i32, %c0_i32_0 : i32, i32
  }
  func.func @transform_8(%arg0: i32) -> (i32, i32) {
    %c0_i32 = arith.constant 0 : i32
    %c0_i32_0 = arith.constant 0 : i32
    %c0_i32_1 = arith.constant 0 : i32
    return %c0_i32, %c0_i32_0 : i32, i32
  }
  func.func @transform_9(%arg0: i32) -> (i32, i32) {
    %c0_i32 = arith.constant 0 : i32
    %c0_i32_0 = arith.constant 0 : i32
    %c0_i32_1 = arith.constant 0 : i32
    return %c0_i32, %c0_i32_0 : i32, i32
  }
  func.func @transform_10(%arg0: i32) -> (i32, i32) {
    %c0_i32 = arith.constant 0 : i32
    %c0_i32_0 = arith.constant 0 : i32
    return %arg0, %c0_i32 : i32, i32
  }
  func.func @transform_11(%arg0: i32) -> (i32, i32) {
    %c0_i32 = arith.constant 0 : i32
    %c0_i32_0 = arith.constant 0 : i32
    return %arg0, %c0_i32 : i32, i32
  }
}

</mosaic_0001>

<llo_original>
// kernel: tpu_custom_call.1
$region0: #{tpu_custom_call.1}
  #allocation0 [shape = 'u32[]', space=smem, size = 0x4, offset = 0x4, fixed_abs, tag = 'smem constant byte address 0x4 - core index']
  #allocation1 [shape = 'u32[144,128]{1,0:T(1,128)}', space=vmem, size = 0x12000, scoped, tag = 'internal scratch']
  #allocation2 [shape = 'bf16[8,8,512]{2,1,0:T(8,128)(2,1)}', space=vmem, size = 0x10000, scoped, tag = 'scratch operand']
  #allocation3 [shape = 'bf16[8,8,128]{2,1,0:T(8,128)(2,1)}', space=vmem, size = 0x4000, scoped, tag = 'scratch operand']
  #allocation4 [shape = 'f32[1,1]{1,0:T(1,128)S(1)}', space=vmem, size = 0x200, scoped, tag = 'scoped memory for tpu_custom_call.1']
  %s0 = inlined_call_operand.hbm [shape: bf16[8,8,16], index: 0, kind: input, shape index: {}]
  %s1 = inlined_call_operand.vmem [shape: s32[1,8], index: 1, kind: input, shape index: {}]
  %s2 = inlined_call_operand.hbm [shape: bf16[16,512], index: 2, kind: input, shape index: {}]
  %s3 = inlined_call_operand.hbm [shape: bf16[128,512], index: 3, kind: input, shape index: {}]
  %s4 = inlined_call_operand.vmem [shape: f32[1,512], index: 4, kind: input, shape index: {}]
  %s5 = inlined_call_operand.hbm [shape: bf16[128,128], index: 5, kind: input, shape index: {}]
  %s6 = inlined_call_operand.vmem [shape: f32[1,128], index: 6, kind: input, shape index: {}]
  %s7 = inlined_call_operand.vmem [shape: f32[1,128], index: 7, kind: input, shape index: {}]
  %s8 = inlined_call_operand.vmem [shape: f32[1,128], index: 8, kind: input, shape index: {}]
  %s9 = inlined_call_operand.<no memory space> [shape: f32[1,1], index: 9, kind: input, shape index: {}]
  %s10 = inlined_call_operand.hbm [shape: f32[8,128], index: 10, kind: output, shape index: {0}]
  %s11 = inlined_call_operand.vmem [shape: f32[8,1], index: 11, kind: output, shape index: {1}]
  %12 = xla_tuple %s10, %s11
  %s13 = sld [smem:[#allocation0]]
  $region74: #{tpu_custom_call.1} parent=0
    _
  %s15 = ssub.s32 1, %s13
  %s16 = scalar_select 0, %s15, %s13
  %v17 = vstv %s9
  %18 = vst [vmem:[#allocation4] sm:$0x1] %v17
  $region1: #{tpu_custom_call.1} parent=0
    #allocation5 [shape = 'u8[16384]{0}', space=vmem, size = 0x4000, scoped, tag = 'input window, operand 0, single buffered']
    #allocation6 [shape = 's32[1]{0}', space=sflag, size = 0x4, scoped, tag = 'scoped memory for tpu_custom_call.1']
    #allocation7 [shape = 's32[1]{0}', space=sflag, size = 0x4, scoped, tag = 'scoped memory for tpu_custom_call.1']
    #allocation8 [shape = 'u8[16384]{0}', space=vmem, size = 0x4000, scoped, tag = 'input window, operand 2, single buffered']
    #allocation9 [shape = 's32[1]{0}', space=sflag, size = 0x4, scoped, tag = 'scoped memory for tpu_custom_call.1']
    #allocation10 [shape = 'u8[131072]{0}', space=vmem, size = 0x20000, scoped, tag = 'input window, operand 3, single buffered']
    #allocation11 [shape = 'u8[32768]{0}', space=vmem, size = 0x8000, scoped, tag = 'input window, operand 5, single buffered']
    #allocation12 [shape = 's32[1]{0}', space=sflag, size = 0x4, scoped, tag = 'scoped memory for tpu_custom_call.1']
    #allocation13 [shape = 'u8[4096]{0}', space=vmem, size = 0x1000, scoped, tag = 'output window, operand 0, single buffered']
    %19 = vsyncpa [#allocation6], 0
    %20 = vsyncpa [#allocation9], 0
    %21 = vsyncpa [#allocation12], 0
    %22 = vsyncpa [#allocation7], 0
    // Predicated region
    $region2: #{tpu_custom_call.1} parent=1 // pred_check
      _
    $region3: #{tpu_custom_call.1} parent=1 // pred_check_branch
      %24 = sbr.rel (0) target = $region5
    $region4: #{tpu_custom_call.1} parent=1 // pred_region
      %s26 = ssub.s32 512, 512
      %27 = vsyncadd [#allocation6], %s26
      %s28 = sshll.u32 [#allocation5], 4
      %s29 = int_to_ptr.vmem [resolvable:$true] %s28
      %34 = dma.hbm_to_vmem [thread:$0]  %s0, 512, %s29, [#allocation6], 64, 64, 4
    $region5: #{tpu_custom_call.1} parent=1 // pred_fallthru
      _
    // Predicated region
    $region6: #{tpu_custom_call.1} parent=1 // pred_check
      _
    $region7: #{tpu_custom_call.1} parent=1 // pred_check_branch
      %36 = sbr.rel (0) target = $region9
    $region8: #{tpu_custom_call.1} parent=1 // pred_region
      _
    $region9: #{tpu_custom_call.1} parent=1 // pred_fallthru
      _
    // Predicated region
    $region10: #{tpu_custom_call.1} parent=1 // pred_check
      _
    $region11: #{tpu_custom_call.1} parent=1 // pred_check_branch
      %38 = sbr.rel (0) target = $region13
    $region12: #{tpu_custom_call.1} parent=1 // pred_region
      %s40 = ssub.s32 512, 512
      %41 = vsyncadd [#allocation9], %s40
      %s42 = sshll.u32 [#allocation8], 4
      %s43 = int_to_ptr.vmem [resolvable:$true] %s42
      %48 = dma.hbm_to_vmem [thread:$0]  %s2, 512, %s43, [#allocation9], 256, 256, 16
    $region13: #{tpu_custom_call.1} parent=1 // pred_fallthru
      _
    // Predicated region
    $region14: #{tpu_custom_call.1} parent=1 // pred_check
      _
    $region15: #{tpu_custom_call.1} parent=1 // pred_check_branch
      %50 = sbr.rel (0) target = $region17
    $region16: #{tpu_custom_call.1} parent=1 // pred_region
      %s52 = ssub.s32 4096, 4096
      %53 = vsyncadd [#allocation9], %s52
      %s54 = sshll.u32 [#allocation10], 4
      %s55 = int_to_ptr.vmem [resolvable:$true] %s54
      %60 = dma.hbm_to_vmem [thread:$0]  %s3, 4096, %s55, [#allocation9], 256, 256, 16
    $region17: #{tpu_custom_call.1} parent=1 // pred_fallthru
      _
    // Predicated region
    $region18: #{tpu_custom_call.1} parent=1 // pred_check
      _
    $region19: #{tpu_custom_call.1} parent=1 // pred_check_branch
      %62 = sbr.rel (0) target = $region21
    $region20: #{tpu_custom_call.1} parent=1 // pred_region
      _
    $region21: #{tpu_custom_call.1} parent=1 // pred_fallthru
      _
    // Predicated region
    $region22: #{tpu_custom_call.1} parent=1 // pred_check
      _
    $region23: #{tpu_custom_call.1} parent=1 // pred_check_branch
      %64 = sbr.rel (0) target = $region25
    $region24: #{tpu_custom_call.1} parent=1 // pred_region
      %s66 = ssub.s32 1024, 1024
      %67 = vsyncadd [#allocation12], %s66
      %s68 = sshll.u32 [#allocation11], 4
      %s69 = int_to_ptr.vmem [resolvable:$true] %s68
      %74 = dma.hbm_to_vmem [thread:$0]  %s5, 1024, %s69, [#allocation12], 64, 64, 4
    $region25: #{tpu_custom_call.1} parent=1 // pred_fallthru
      _
    // Predicated region
    $region26: #{tpu_custom_call.1} parent=1 // pred_check
      _
    $region27: #{tpu_custom_call.1} parent=1 // pred_check_branch
      %76 = sbr.rel (0) target = $region29
    $region28: #{tpu_custom_call.1} parent=1 // pred_region
      _
    $region29: #{tpu_custom_call.1} parent=1 // pred_fallthru
      _
    // Predicated region
    $region30: #{tpu_custom_call.1} parent=1 // pred_check
      _
    $region31: #{tpu_custom_call.1} parent=1 // pred_check_branch
      %78 = sbr.rel (0) target = $region33
    $region32: #{tpu_custom_call.1} parent=1 // pred_region
      _
    $region33: #{tpu_custom_call.1} parent=1 // pred_fallthru
      _
    // Predicated region
    $region34: #{tpu_custom_call.1} parent=1 // pred_check
      _
    $region35: #{tpu_custom_call.1} parent=1 // pred_check_branch
      %80 = sbr.rel (0) target = $region37
    $region36: #{tpu_custom_call.1} parent=1 // pred_region
      _
    $region37: #{tpu_custom_call.1} parent=1 // pred_fallthru
      _
    // Predicated region
    $region38: #{tpu_custom_call.1} parent=1 // pred_check
      _
    $region39: #{tpu_custom_call.1} parent=1 // pred_check_branch
      %82 = sbr.rel (0) target = $region41
    $region40: #{tpu_custom_call.1} parent=1 // pred_region
      _
    $region41: #{tpu_custom_call.1} parent=1 // pred_fallthru
      _
    // Predicated region
    $region42: #{tpu_custom_call.1} parent=1 // pred_check
      _
    $region43: #{tpu_custom_call.1} parent=1 // pred_check_branch
      %84 = sbr.rel (0) target = $region45
    $region44: #{tpu_custom_call.1} parent=1 // pred_region
      %85 = dma.done [#allocation6], 512
    $region45: #{tpu_custom_call.1} parent=1 // pred_fallthru
      _
    // Predicated region
    $region46: #{tpu_custom_call.1} parent=1 // pred_check
      _
    $region47: #{tpu_custom_call.1} parent=1 // pred_check_branch
      %87 = sbr.rel (0) target = $region49
    $region48: #{tpu_custom_call.1} parent=1 // pred_region
      %88 = dma.done [#allocation9], 512
    $region49: #{tpu_custom_call.1} parent=1 // pred_fallthru
      _
    // Predicated region
    $region50: #{tpu_custom_call.1} parent=1 // pred_check
      _
    $region51: #{tpu_custom_call.1} parent=1 // pred_check_branch
      %90 = sbr.rel (0) target = $region53
    $region52: #{tpu_custom_call.1} parent=1 // pred_region
      %91 = dma.done [#allocation9], 4096
    $region53: #{tpu_custom_call.1} parent=1 // pred_fallthru
      _
    // Predicated region
    $region54: #{tpu_custom_call.1} parent=1 // pred_check
      _
    $region55: #{tpu_custom_call.1} parent=1 // pred_check_branch
      %93 = sbr.rel (0) target = $region57
    $region56: #{tpu_custom_call.1} parent=1 // pred_region
      %94 = dma.done [#allocation12], 1024
    $region57: #{tpu_custom_call.1} parent=1 // pred_fallthru
      _
    %v96 = vld [vmem:[#allocation5] sm:$0xf]
    %v97 = vld [vmem:[#allocation5 + $0x4] sm:$0xf]
    %v98 = vld [vmem:[#allocation5 + $0x8] sm:$0xf]
    %v99 = vld [vmem:[#allocation5 + $0xc] sm:$0xf]
    %v100 = vld [vmem:[#allocation5 + $0x10] sm:$0xf]
    %v101 = vld [vmem:[#allocation5 + $0x14] sm:$0xf]
    %v102 = vld [vmem:[#allocation5 + $0x18] sm:$0xf]
    %v103 = vld [vmem:[#allocation5 + $0x1c] sm:$0xf]
    %v104 = vld [vmem:[#allocation8] sm:$0xff]
    %v105 = vld [vmem:[#allocation8 + $0x8] sm:$0xff]
    %v106 = vld [vmem:[#allocation8 + $0x10] sm:$0xff]
    %v107 = vld [vmem:[#allocation8 + $0x18] sm:$0xff]
    %v108 = vld [vmem:[%s4] sm:$0xf]
    %v110 = vlaneseq
    %v111 = vshrl.u32 %v110, 7
    %v112 = vsub.s32 0, %v111
    %v113 = vrot.slane %v108, %v112
    %v114 = vlaneseq
    %v115 = vshrl.u32 %v114, 7
    %v116 = vsub.s32 1, %v115
    %v117 = vrot.slane %v108, %v116
    %v118 = vlaneseq
    %v119 = vshrl.u32 %v118, 7
    %v120 = vsub.s32 2, %v119
    %v121 = vrot.slane %v108, %v120
    %v122 = vlaneseq
    %v123 = vshrl.u32 %v122, 7
    %v124 = vsub.s32 3, %v123
    %v125 = vrot.slane %v108, %v124
    %v138 = vunpack.c.l.b16 %v96
    %v139 = vunpack.c.l.b16 %v97
    %v140 = vunpack.c.l.b16 %v98
    %v141 = vunpack.c.l.b16 %v99
    %v142 = vunpack.c.l.b16 %v100
    %v143 = vunpack.c.l.b16 %v101
    %v144 = vunpack.c.l.b16 %v102
    %v145 = vunpack.c.l.b16 %v103
    %v146 = vpack.c.b16 %v139, %v138
    %v147 = vpack.c.b16 %v141, %v140
    %v148 = vpack.c.b16 %v143, %v142
    %v149 = vpack.c.b16 %v145, %v144
    %v154 = vunpack.c.l.b16 %v104
    %v155 = vunpack.c.h.b16 %v104
    %v156 = vunpack.c.l.b16 %v105
    %v157 = vunpack.c.h.b16 %v105
    %v158 = vunpack.c.l.b16 %v106
    %v159 = vunpack.c.h.b16 %v106
    %v160 = vunpack.c.l.b16 %v107
    %v161 = vunpack.c.h.b16 %v107
    %v162 = vpack.c.b16 %v158, %v154
    %v163 = vpack.c.b16 %v159, %v155
    %v164 = vpack.c.b16 %v160, %v156
    %v165 = vpack.c.b16 %v161, %v157
    %vm170 = vcmask 130048
    %v172 = vsel %vm170, %v146, 0
    %v175 = vsel %vm170, %v147, 0
    %v178 = vsel %vm170, %v148, 0
    %v181 = vsel %vm170, %v149, 0
    %183 = vmatprep.subr.bf16.mxu0 %v163
    %184 = vmatpush1.bf16.msra.mxu0 %v162
    %185 = vmatprep.subr.bf16.mxu0 0
    %186 = vmatpush1.bf16.msra.mxu0 0
    %187 = vmatprep.subr.bf16.mxu0 0
    %188 = vmatpush1.bf16.msra.mxu0 0
    %189 = vmatprep.subr.bf16.mxu0 0
    %190 = vmatpush1.bf16.msra.mxu0 0
    %191 = vmatprep.subr.bf16.mxu0 0
    %192 = vmatpush1.bf16.msra.mxu0 0
    %193 = vmatprep.subr.bf16.mxu0 0
    %194 = vmatpush1.bf16.msra.mxu0 0
    %195 = vmatprep.subr.bf16.mxu0 0
    %196 = vmatpush1.bf16.msra.mxu0 0
    %197 = vmatprep.subr.bf16.mxu0 0
    %198 = vmatpush1.bf16.msra.mxu0 0
    %199 = vmatprep.subr.bf16.mxu0 0
    %200 = vmatpush1.bf16.msra.mxu0 0
    %201 = vmatprep.subr.bf16.mxu0 0
    %202 = vmatpush1.bf16.msra.mxu0 0
    %203 = vmatprep.subr.bf16.mxu0 0
    %204 = vmatpush1.bf16.msra.mxu0 0
    %205 = vmatprep.subr.bf16.mxu0 0
    %206 = vmatpush1.bf16.msra.mxu0 0
    %207 = vmatprep.subr.bf16.mxu0 0
    %208 = vmatpush1.bf16.msra.mxu0 0
    %209 = vmatprep.subr.bf16.mxu0 0
    %210 = vmatpush1.bf16.msra.mxu0 0
    %211 = vmatprep.subr.bf16.mxu0 0
    %212 = vmatpush1.bf16.msra.mxu0 0
    %213 = vmatprep.subr.bf16.mxu0 0
    %214 = vmatpush1.bf16.msra.mxu0 0
    %215 = vmatprep.mubr.bf16.mxu0 0
    %216 = vmatmul.mubr.bf16.gmra.mrb[0].mxu0 %v172
    %v217 = vpop.f32.mrb[0].mxu0
    %v218 = vadd.f32 %v113, %v217
    %v219 = vpop.f32.mrb[0].mxu0
    %v220 = vadd.f32 %v117, %v219
    %v221 = vpop.f32.mrb[0].mxu0
    %v222 = vadd.f32 %v113, %v221
    %v223 = vpop.f32.mrb[0].mxu0
    %v224 = vadd.f32 %v117, %v223
    %225 = vmatprep.mubr.bf16.mxu0 0
    %226 = vmatmul.mubr.bf16.gmra.mrb[0].mxu0 %v175
    %v227 = vpop.f32.mrb[0].mxu0
    %v228 = vadd.f32 %v113, %v227
    %v229 = vpop.f32.mrb[0].mxu0
    %v230 = vadd.f32 %v117, %v229
    %v231 = vpop.f32.mrb[0].mxu0
    %v232 = vadd.f32 %v113, %v231
    %v233 = vpop.f32.mrb[0].mxu0
    %v234 = vadd.f32 %v117, %v233
    %235 = vmatprep.mubr.bf16.mxu0 0
    %236 = vmatmul.mubr.bf16.gmra.mrb[0].mxu0 %v178
    %v237 = vpop.f32.mrb[0].mxu0
    %v238 = vadd.f32 %v113, %v237
    %v239 = vpop.f32.mrb[0].mxu0
    %v240 = vadd.f32 %v117, %v239
    %v241 = vpop.f32.mrb[0].mxu0
    %v242 = vadd.f32 %v113, %v241
    %v243 = vpop.f32.mrb[0].mxu0
    %v244 = vadd.f32 %v117, %v243
    %245 = vmatprep.mubr.bf16.mxu0 0
    %246 = vmatmul.mubr.bf16.gmra.mrb[0].mxu0 %v181
    %v247 = vpop.f32.mrb[0].mxu0
    %v248 = vadd.f32 %v113, %v247
    %v249 = vpop.f32.mrb[0].mxu0
    %v250 = vadd.f32 %v117, %v249
    %v251 = vpop.f32.mrb[0].mxu0
    %v252 = vadd.f32 %v113, %v251
    %v253 = vpop.f32.mrb[0].mxu0
    %v254 = vadd.f32 %v117, %v253
    %255 = vdwg.mxu0
    %256 = vmatprep.subr.bf16.mxu0 %v165
    %257 = vmatpush1.bf16.msra.mxu0 %v164
    %258 = vmatprep.subr.bf16.mxu0 0
    %259 = vmatpush1.bf16.msra.mxu0 0
    %260 = vmatprep.subr.bf16.mxu0 0
    %261 = vmatpush1.bf16.msra.mxu0 0
    %262 = vmatprep.subr.bf16.mxu0 0
    %263 = vmatpush1.bf16.msra.mxu0 0
    %264 = vmatprep.subr.bf16.mxu0 0
    %265 = vmatpush1.bf16.msra.mxu0 0
    %266 = vmatprep.subr.bf16.mxu0 0
    %267 = vmatpush1.bf16.msra.mxu0 0
    %268 = vmatprep.subr.bf16.mxu0 0
    %269 = vmatpush1.bf16.msra.mxu0 0
    %270 = vmatprep.subr.bf16.mxu0 0
    %271 = vmatpush1.bf16.msra.mxu0 0
    %272 = vmatprep.subr.bf16.mxu0 0
    %273 = vmatpush1.bf16.msra.mxu0 0
    %274 = vmatprep.subr.bf16.mxu0 0
    %275 = vmatpush1.bf16.msra.mxu0 0
    %276 = vmatprep.subr.bf16.mxu0 0
    %277 = vmatpush1.bf16.msra.mxu0 0
    %278 = vmatprep.subr.bf16.mxu0 0
    %279 = vmatpush1.bf16.msra.mxu0 0
    %280 = vmatprep.subr.bf16.mxu0 0
    %281 = vmatpush1.bf16.msra.mxu0 0
    %282 = vmatprep.subr.bf16.mxu0 0
    %283 = vmatpush1.bf16.msra.mxu0 0
    %284 = vmatprep.subr.bf16.mxu0 0
    %285 = vmatpush1.bf16.msra.mxu0 0
    %286 = vmatprep.subr.bf16.mxu0 0
    %287 = vmatpush1.bf16.msra.mxu0 0
    %288 = vmatprep.mubr.bf16.mxu0 0
    %289 = vmatmul.mubr.bf16.gmra.mrb[0].mxu0 %v172
    %v290 = vpop.f32.mrb[0].mxu0
    %v291 = vadd.f32 %v121, %v290
    %v292 = vpop.f32.mrb[0].mxu0
    %v293 = vadd.f32 %v125, %v292
    %v294 = vpop.f32.mrb[0].mxu0
    %v295 = vadd.f32 %v121, %v294
    %v296 = vpop.f32.mrb[0].mxu0
    %v297 = vadd.f32 %v125, %v296
    %298 = vmatprep.mubr.bf16.mxu0 0
    %299 = vmatmul.mubr.bf16.gmra.mrb[0].mxu0 %v175
    %v300 = vpop.f32.mrb[0].mxu0
    %v301 = vadd.f32 %v121, %v300
    %v302 = vpop.f32.mrb[0].mxu0
    %v303 = vadd.f32 %v125, %v302
    %v304 = vpop.f32.mrb[0].mxu0
    %v305 = vadd.f32 %v121, %v304
    %v306 = vpop.f32.mrb[0].mxu0
    %v307 = vadd.f32 %v125, %v306
    %308 = vmatprep.mubr.bf16.mxu0 0
    %309 = vmatmul.mubr.bf16.gmra.mrb[0].mxu0 %v178
    %v310 = vpop.f32.mrb[0].mxu0
    %v311 = vadd.f32 %v121, %v310
    %v312 = vpop.f32.mrb[0].mxu0
    %v313 = vadd.f32 %v125, %v312
    %v314 = vpop.f32.mrb[0].mxu0
    %v315 = vadd.f32 %v121, %v314
    %v316 = vpop.f32.mrb[0].mxu0
    %v317 = vadd.f32 %v125, %v316
    %318 = vmatprep.mubr.bf16.mxu0 0
    %319 = vmatmul.mubr.bf16.gmra.mrb[0].mxu0 %v181
    %v320 = vpop.f32.mrb[0].mxu0
    %v321 = vadd.f32 %v121, %v320
    %v322 = vpop.f32.mrb[0].mxu0
    %v323 = vadd.f32 %v125, %v322
    %v324 = vpop.f32.mrb[0].mxu0
    %v325 = vadd.f32 %v121, %v324
    %v326 = vpop.f32.mrb[0].mxu0
    %v327 = vadd.f32 %v125, %v326
    %328 = vdwg.mxu0
    %v329 = vpack.c.bf16 %v218, %v218
    %v330 = vpack.c.bf16 %v220, %v220
    %v331 = vpack.c.bf16 %v291, %v291
    %v332 = vpack.c.bf16 %v293, %v293
    %v333 = vpack.c.bf16 %v222, %v222
    %v334 = vpack.c.bf16 %v224, %v224
    %v335 = vpack.c.bf16 %v295, %v295
    %v336 = vpack.c.bf16 %v297, %v297
    %v337 = vpack.c.bf16 %v228, %v228
    %v338 = vpack.c.bf16 %v230, %v230
    %v339 = vpack.c.bf16 %v301, %v301
    %v340 = vpack.c.bf16 %v303, %v303
    %v341 = vpack.c.bf16 %v232, %v232
    %v342 = vpack.c.bf16 %v234, %v234
    %v343 = vpack.c.bf16 %v305, %v305
    %v344 = vpack.c.bf16 %v307, %v307
    %v345 = vpack.c.bf16 %v238, %v238
    %v346 = vpack.c.bf16 %v240, %v240
    %v347 = vpack.c.bf16 %v311, %v311
    %v348 = vpack.c.bf16 %v313, %v313
    %v349 = vpack.c.bf16 %v242, %v242
    %v350 = vpack.c.bf16 %v244, %v244
    %v351 = vpack.c.bf16 %v315, %v315
    %v352 = vpack.c.bf16 %v317, %v317
    %v353 = vpack.c.bf16 %v248, %v248
    %v354 = vpack.c.bf16 %v250, %v250
    %v355 = vpack.c.bf16 %v321, %v321
    %v356 = vpack.c.bf16 %v323, %v323
    %v357 = vpack.c.bf16 %v252, %v252
    %v358 = vpack.c.bf16 %v254, %v254
    %v359 = vpack.c.bf16 %v325, %v325
    %v360 = vpack.c.bf16 %v327, %v327
    %v393 = vunpack.c.l.b16 %v329
    %v394 = vunpack.c.l.b16 %v330
    %v395 = vunpack.c.l.b16 %v331
    %v396 = vunpack.c.l.b16 %v332
    %v397 = vunpack.c.l.b16 %v333
    %v398 = vunpack.c.l.b16 %v334
    %v399 = vunpack.c.l.b16 %v335
    %v400 = vunpack.c.l.b16 %v336
    %v401 = vunpack.c.l.b16 %v337
    %v402 = vunpack.c.l.b16 %v338
    %v403 = vunpack.c.l.b16 %v339
    %v404 = vunpack.c.l.b16 %v340
    %v405 = vunpack.c.l.b16 %v341
    %v406 = vunpack.c.l.b16 %v342
    %v407 = vunpack.c.l.b16 %v343
    %v408 = vunpack.c.l.b16 %v344
    %v409 = vunpack.c.l.b16 %v345
    %v410 = vunpack.c.l.b16 %v346
    %v411 = vunpack.c.l.b16 %v347
    %v412 = vunpack.c.l.b16 %v348
    %v413 = vunpack.c.l.b16 %v349
    %v414 = vunpack.c.l.b16 %v350
    %v415 = vunpack.c.l.b16 %v351
    %v416 = vunpack.c.l.b16 %v352
    %v417 = vunpack.c.l.b16 %v353
    %v418 = vunpack.c.l.b16 %v354
    %v419 = vunpack.c.l.b16 %v355
    %v420 = vunpack.c.l.b16 %v356
    %v421 = vunpack.c.l.b16 %v357
    %v422 = vunpack.c.l.b16 %v358
    %v423 = vunpack.c.l.b16 %v359
    %v424 = vunpack.c.l.b16 %v360
    %v425 = vpack.c.b16 %v394, %v393
    %v426 = vpack.c.b16 %v396, %v395
    %v427 = vpack.c.b16 %v398, %v397
    %v428 = vpack.c.b16 %v400, %v399
    %v429 = vpack.c.b16 %v402, %v401
    %v430 = vpack.c.b16 %v404, %v403
    %v431 = vpack.c.b16 %v406, %v405
    %v432 = vpack.c.b16 %v408, %v407
    %v433 = vpack.c.b16 %v410, %v409
    %v434 = vpack.c.b16 %v412, %v411
    %v435 = vpack.c.b16 %v414, %v413
    %v436 = vpack.c.b16 %v416, %v415
    %v437 = vpack.c.b16 %v418, %v417
    %v438 = vpack.c.b16 %v420, %v419
    %v439 = vpack.c.b16 %v422, %v421
    %v440 = vpack.c.b16 %v424, %v423
    %457 = vst [vmem:[#allocation2] sm:$0xff] %v425
    %458 = vst [vmem:[#allocation2 + $0x8] sm:$0xff] %v426
    %459 = vst [vmem:[#allocation2 + $0x10] sm:$0xff] %v427
    %460 = vst [vmem:[#allocation2 + $0x18] sm:$0xff] %v428
    %461 = vst [vmem:[#allocation2 + $0x20] sm:$0xff] %v429
    %462 = vst [vmem:[#allocation2 + $0x28] sm:$0xff] %v430
    %463 = vst [vmem:[#allocation2 + $0x30] sm:$0xff] %v431
    %464 = vst [vmem:[#allocation2 + $0x38] sm:$0xff] %v432
    %465 = vst [vmem:[#allocation2 + $0x40] sm:$0xff] %v433
    %466 = vst [vmem:[#allocation2 + $0x48] sm:$0xff] %v434
    %467 = vst [vmem:[#allocation2 + $0x50] sm:$0xff] %v435
    %468 = vst [vmem:[#allocation2 + $0x58] sm:$0xff] %v436
    %469 = vst [vmem:[#allocation2 + $0x60] sm:$0xff] %v437
    %470 = vst [vmem:[#allocation2 + $0x68] sm:$0xff] %v438
    %471 = vst [vmem:[#allocation2 + $0x70] sm:$0xff] %v439
    %472 = vst [vmem:[#allocation2 + $0x78] sm:$0xff] %v440
    %v473 = vld [vmem:[#allocation10] sm:$0xff]
    %v474 = vld [vmem:[#allocation10 + $0x8] sm:$0xff]
    %v475 = vld [vmem:[#allocation10 + $0x10] sm:$0xff]
    %v476 = vld [vmem:[#allocation10 + $0x18] sm:$0xff]
    %v477 = vld [vmem:[#allocation10 + $0x20] sm:$0xff]
    %v478 = vld [vmem:[#allocation10 + $0x28] sm:$0xff]
    %v479 = vld [vmem:[#allocation10 + $0x30] sm:$0xff]
    %v480 = vld [vmem:[#allocation10 + $0x38] sm:$0xff]
    %v481 = vld [vmem:[#allocation10 + $0x40] sm:$0xff]
    %v482 = vld [vmem:[#allocation10 + $0x48] sm:$0xff]
    %v483 = vld [vmem:[#allocation10 + $0x50] sm:$0xff]
    %v484 = vld [vmem:[#allocation10 + $0x58] sm:$0xff]
    %v485 = vld [vmem:[#allocation10 + $0x60] sm:$0xff]
    %v486 = vld [vmem:[#allocation10 + $0x68] sm:$0xff]
    %v487 = vld [vmem:[#allocation10 + $0x70] sm:$0xff]
    %v488 = vld [vmem:[#allocation10 + $0x78] sm:$0xff]
    %v489 = vld [vmem:[#allocation10 + $0x80] sm:$0xff]
    %v490 = vld [vmem:[#allocation10 + $0x88] sm:$0xff]
    %v491 = vld [vmem:[#allocation10 + $0x90] sm:$0xff]
    %v492 = vld [vmem:[#allocation10 + $0x98] sm:$0xff]
    %v493 = vld [vmem:[#allocation10 + $0xa0] sm:$0xff]
    %v494 = vld [vmem:[#allocation10 + $0xa8] sm:$0xff]
    %v495 = vld [vmem:[#allocation10 + $0xb0] sm:$0xff]
    %v496 = vld [vmem:[#allocation10 + $0xb8] sm:$0xff]
    %v497 = vld [vmem:[#allocation10 + $0xc0] sm:$0xff]
    %v498 = vld [vmem:[#allocation10 + $0xc8] sm:$0xff]
    %v499 = vld [vmem:[#allocation10 + $0xd0] sm:$0xff]
    %v500 = vld [vmem:[#allocation10 + $0xd8] sm:$0xff]
    %v501 = vld [vmem:[#allocation10 + $0xe0] sm:$0xff]
    %v502 = vld [vmem:[#allocation10 + $0xe8] sm:$0xff]
    %v503 = vld [vmem:[#allocation10 + $0xf0] sm:$0xff]
    %v504 = vld [vmem:[#allocation10 + $0xf8] sm:$0xff]
    %v505 = vld [vmem:[#allocation2] sm:$0x11]
    %v506 = vld [vmem:[#allocation2 + $0x8] sm:$0x11]
    %v507 = vld [vmem:[#allocation2 + $0x10] sm:$0x11]
    %v508 = vld [vmem:[#allocation2 + $0x18] sm:$0x11]
    %v509 = vld [vmem:[#allocation2 + $0x20] sm:$0x11]
    %v510 = vld [vmem:[#allocation2 + $0x28] sm:$0x11]
    %v511 = vld [vmem:[#allocation2 + $0x30] sm:$0x11]
    %v512 = vld [vmem:[#allocation2 + $0x38] sm:$0x11]
    %v513 = vld [vmem:[#allocation2 + $0x40] sm:$0x11]
    %v514 = vld [vmem:[#allocation2 + $0x48] sm:$0x11]
    %v515 = vld [vmem:[#allocation2 + $0x50] sm:$0x11]
    %v516 = vld [vmem:[#allocation2 + $0x58] sm:$0x11]
    %v517 = vld [vmem:[#allocation2 + $0x60] sm:$0x11]
    %v518 = vld [vmem:[#allocation2 + $0x68] sm:$0x11]
    %v519 = vld [vmem:[#allocation2 + $0x70] sm:$0x11]
    %v520 = vld [vmem:[#allocation2 + $0x78] sm:$0x11]
    %v521 = vunpack.c.l.bf16 %v505
    %v522 = vunpack.c.h.bf16 %v505
    %v523 = vunpack.c.l.bf16 %v506
    %v524 = vunpack.c.h.bf16 %v506
    %v525 = vunpack.c.l.bf16 %v507
    %v526 = vunpack.c.h.bf16 %v507
    %v527 = vunpack.c.l.bf16 %v508
    %v528 = vunpack.c.h.bf16 %v508
    %v529 = vunpack.c.l.bf16 %v509
    %v530 = vunpack.c.h.bf16 %v509
    %v531 = vunpack.c.l.bf16 %v510
    %v532 = vunpack.c.h.bf16 %v510
    %v533 = vunpack.c.l.bf16 %v511
    %v534 = vunpack.c.h.bf16 %v511
    %v535 = vunpack.c.l.bf16 %v512
    %v536 = vunpack.c.h.bf16 %v512
    %v537 = vunpack.c.l.bf16 %v513
    %v538 = vunpack.c.h.bf16 %v513
    %v539 = vunpack.c.l.bf16 %v514
    %v540 = vunpack.c.h.bf16 %v514
    %v541 = vunpack.c.l.bf16 %v515
    %v542 = vunpack.c.h.bf16 %v515
    %v543 = vunpack.c.l.bf16 %v516
    %v544 = vunpack.c.h.bf16 %v516
    %v545 = vunpack.c.l.bf16 %v517
    %v546 = vunpack.c.h.bf16 %v517
    %v547 = vunpack.c.l.bf16 %v518
    %v548 = vunpack.c.h.bf16 %v518
    %v549 = vunpack.c.l.bf16 %v519
    %v550 = vunpack.c.h.bf16 %v519
    %v551 = vunpack.c.l.bf16 %v520
    %v552 = vunpack.c.h.bf16 %v520
    %v585 = vunpack.c.l.b16 %v473
    %v586 = vunpack.c.h.b16 %v473
    %v587 = vunpack.c.l.b16 %v474
    %v588 = vunpack.c.h.b16 %v474
    %v589 = vunpack.c.l.b16 %v475
    %v590 = vunpack.c.h.b16 %v475
    %v591 = vunpack.c.l.b16 %v476
    %v592 = vunpack.c.h.b16 %v476
    %v593 = vunpack.c.l.b16 %v477
    %v594 = vunpack.c.h.b16 %v477
    %v595 = vunpack.c.l.b16 %v478
    %v596 = vunpack.c.h.b16 %v478
    %v597 = vunpack.c.l.b16 %v479
    %v598 = vunpack.c.h.b16 %v479
    %v599 = vunpack.c.l.b16 %v480
    %v600 = vunpack.c.h.b16 %v480
    %v601 = vunpack.c.l.b16 %v481
    %v602 = vunpack.c.h.b16 %v481
    %v603 = vunpack.c.l.b16 %v482
    %v604 = vunpack.c.h.b16 %v482
    %v605 = vunpack.c.l.b16 %v483
    %v606 = vunpack.c.h.b16 %v483
    %v607 = vunpack.c.l.b16 %v484
    %v608 = vunpack.c.h.b16 %v484
    %v609 = vunpack.c.l.b16 %v485
    %v610 = vunpack.c.h.b16 %v485
    %v611 = vunpack.c.l.b16 %v486
    %v612 = vunpack.c.h.b16 %v486
    %v613 = vunpack.c.l.b16 %v487
    %v614 = vunpack.c.h.b16 %v487
    %v615 = vunpack.c.l.b16 %v488
    %v616 = vunpack.c.h.b16 %v488
    %v617 = vunpack.c.l.b16 %v489
    %v618 = vunpack.c.h.b16 %v489
    %v619 = vunpack.c.l.b16 %v490
    %v620 = vunpack.c.h.b16 %v490
    %v621 = vunpack.c.l.b16 %v491
    %v622 = vunpack.c.h.b16 %v491
    %v623 = vunpack.c.l.b16 %v492
    %v624 = vunpack.c.h.b16 %v492
    %v625 = vunpack.c.l.b16 %v493
    %v626 = vunpack.c.h.b16 %v493
    %v627 = vunpack.c.l.b16 %v494
    %v628 = vunpack.c.h.b16 %v494
    %v629 = vunpack.c.l.b16 %v495
    %v630 = vunpack.c.h.b16 %v495
    %v631 = vunpack.c.l.b16 %v496
    %v632 = vunpack.c.h.b16 %v496
    %v633 = vunpack.c.l.b16 %v497
    %v634 = vunpack.c.h.b16 %v497
    %v635 = vunpack.c.l.b16 %v498
    %v636 = vunpack.c.h.b16 %v498
    %v637 = vunpack.c.l.b16 %v499
    %v638 = vunpack.c.h.b16 %v499
    %v639 = vunpack.c.l.b16 %v500
    %v640 = vunpack.c.h.b16 %v500
    %v641 = vunpack.c.l.b16 %v501
    %v642 = vunpack.c.h.b16 %v501
    %v643 = vunpack.c.l.b16 %v502
    %v644 = vunpack.c.h.b16 %v502
    %v645 = vunpack.c.l.b16 %v503
    %v646 = vunpack.c.h.b16 %v503
    %v647 = vunpack.c.l.b16 %v504
    %v648 = vunpack.c.h.b16 %v504
    %v649 = vpack.c.b16 %v589, %v585
    %v650 = vpack.c.b16 %v590, %v586
    %v651 = vpack.c.b16 %v591, %v587
    %v652 = vpack.c.b16 %v592, %v588
    %v653 = vpack.c.b16 %v597, %v593
    %v654 = vpack.c.b16 %v598, %v594
    %v655 = vpack.c.b16 %v599, %v595
    %v656 = vpack.c.b16 %v600, %v596
    %v657 = vpack.c.b16 %v605, %v601
    %v658 = vpack.c.b16 %v606, %v602
    %v659 = vpack.c.b16 %v607, %v603
    %v660 = vpack.c.b16 %v608, %v604
    %v661 = vpack.c.b16 %v613, %v609
    %v662 = vpack.c.b16 %v614, %v610
    %v663 = vpack.c.b16 %v615, %v611
    %v664 = vpack.c.b16 %v616, %v612
    %v665 = vpack.c.b16 %v621, %v617
    %v666 = vpack.c.b16 %v622, %v618
    %v667 = vpack.c.b16 %v623, %v619
    %v668 = vpack.c.b16 %v624, %v620
    %v669 = vpack.c.b16 %v629, %v625
    %v670 = vpack.c.b16 %v630, %v626
    %v671 = vpack.c.b16 %v631, %v627
    %v672 = vpack.c.b16 %v632, %v628
    %v673 = vpack.c.b16 %v637, %v633
    %v674 = vpack.c.b16 %v638, %v634
    %v675 = vpack.c.b16 %v639, %v635
    %v676 = vpack.c.b16 %v640, %v636
    %v677 = vpack.c.b16 %v645, %v641
    %v678 = vpack.c.b16 %v646, %v642
    %v679 = vpack.c.b16 %v647, %v643
    %v680 = vpack.c.b16 %v648, %v644
    %713 = vmatprep.subr.bf16.mxu0 %v650
    %714 = vmatpush1.bf16.msra.mxu0 %v649
    %715 = vmatprep.subr.bf16.mxu0 %v654
    %716 = vmatpush1.bf16.msra.mxu0 %v653
    %717 = vmatprep.subr.bf16.mxu0 %v658
    %718 = vmatpush1.bf16.msra.mxu0 %v657
    %719 = vmatprep.subr.bf16.mxu0 %v662
    %720 = vmatpush1.bf16.msra.mxu0 %v661
    %721 = vmatprep.subr.bf16.mxu0 %v666
    %722 = vmatpush1.bf16.msra.mxu0 %v665
    %723 = vmatprep.subr.bf16.mxu0 %v670
    %724 = vmatpush1.bf16.msra.mxu0 %v669
    %725 = vmatprep.subr.bf16.mxu0 %v674
    %726 = vmatpush1.bf16.msra.mxu0 %v673
    %727 = vmatprep.subr.bf16.mxu0 %v678
    %728 = vmatpush1.bf16.msra.mxu0 %v677
    %729 = vmatprep.subr.bf16.mxu0 0
    %730 = vmatpush1.bf16.msra.mxu0 0
    %731 = vmatprep.subr.bf16.mxu0 0
    %732 = vmatpush1.bf16.msra.mxu0 0
    %733 = vmatprep.subr.bf16.mxu0 0
    %734 = vmatpush1.bf16.msra.mxu0 0
    %735 = vmatprep.subr.bf16.mxu0 0
    %736 = vmatpush1.bf16.msra.mxu0 0
    %737 = vmatprep.subr.bf16.mxu0 0
    %738 = vmatpush1.bf16.msra.mxu0 0
    %739 = vmatprep.subr.bf16.mxu0 0
    %740 = vmatpush1.bf16.msra.mxu0 0
    %741 = vmatprep.subr.bf16.mxu0 0
    %742 = vmatpush1.bf16.msra.mxu0 0
    %743 = vmatprep.subr.bf16.mxu0 0
    %744 = vmatpush1.bf16.msra.mxu0 0
    %745 = vmatprep.mubr.bf16.mxu0 0
    %746 = vmatmul.mubr.bf16.gmra.mrb[0].mxu0 0
    %v747 = vpop.f32.mrb[0].mxu0
    %v748 = vadd.f32 0.0, %v747
    %v749 = vpop.f32.mrb[0].mxu0
    %v750 = vadd.f32 0.0, %v749
    %v751 = vpop.f32.mrb[0].mxu0
    %v752 = vpop.f32.mrb[0].mxu0
    %753 = vdwg.mxu0
    %754 = vmatprep.subr.bf16.mxu0 %v652
    %755 = vmatpush1.bf16.msra.mxu0 %v651
    %756 = vmatprep.subr.bf16.mxu0 %v656
    %757 = vmatpush1.bf16.msra.mxu0 %v655
    %758 = vmatprep.subr.bf16.mxu0 %v660
    %759 = vmatpush1.bf16.msra.mxu0 %v659
    %760 = vmatprep.subr.bf16.mxu0 %v664
    %761 = vmatpush1.bf16.msra.mxu0 %v663
    %762 = vmatprep.subr.bf16.mxu0 %v668
    %763 = vmatpush1.bf16.msra.mxu0 %v667
    %764 = vmatprep.subr.bf16.mxu0 %v672
    %765 = vmatpush1.bf16.msra.mxu0 %v671
    %766 = vmatprep.subr.bf16.mxu0 %v676
    %767 = vmatpush1.bf16.msra.mxu0 %v675
    %768 = vmatprep.subr.bf16.mxu0 %v680
    %769 = vmatpush1.bf16.msra.mxu0 %v679
    %770 = vmatprep.subr.bf16.mxu0 0
    %771 = vmatpush1.bf16.msra.mxu0 0
    %772 = vmatprep.subr.bf16.mxu0 0
    %773 = vmatpush1.bf16.msra.mxu0 0
    %774 = vmatprep.subr.bf16.mxu0 0
    %775 = vmatpush1.bf16.msra.mxu0 0
    %776 = vmatprep.subr.bf16.mxu0 0
    %777 = vmatpush1.bf16.msra.mxu0 0
    %778 = vmatprep.subr.bf16.mxu0 0
    %779 = vmatpush1.bf16.msra.mxu0 0
    %780 = vmatprep.subr.bf16.mxu0 0
    %781 = vmatpush1.bf16.msra.mxu0 0
    %782 = vmatprep.subr.bf16.mxu0 0
    %783 = vmatpush1.bf16.msra.mxu0 0
    %784 = vmatprep.subr.bf16.mxu0 0
    %785 = vmatpush1.bf16.msra.mxu0 0
    %786 = vmatprep.mubr.bf16.mxu0 0
    %787 = vmatmul.mubr.bf16.gmra.mrb[0].mxu0 0
    %v788 = vpop.f32.mrb[0].mxu0
    %v789 = vadd.f32 0.0, %v788
    %v790 = vpop.f32.mrb[0].mxu0
    %v791 = vadd.f32 0.0, %v790
    %v792 = vpop.f32.mrb[0].mxu0
    %v793 = vpop.f32.mrb[0].mxu0
    %794 = vdwg.mxu0
    %v799 = vrot.slane %v748, 1
    %v800 = vrot.slane %v750, 1
    %v801 = vrot.slane %v789, 1
    %v802 = vrot.slane %v791, 1
    %v803 = vrot.slane %v748, 2
    %v804 = vrot.slane %v750, 2
    %v805 = vrot.slane %v789, 2
    %v806 = vrot.slane %v791, 2
    %v807 = vrot.slane %v748, 3
    %v808 = vrot.slane %v750, 3
    %v809 = vrot.slane %v789, 3
    %v810 = vrot.slane %v791, 3
    %v811 = vrot.slane %v748, 4
    %v812 = vrot.slane %v750, 4
    %v813 = vrot.slane %v789, 4
    %v814 = vrot.slane %v791, 4
    %v815 = vrot.slane %v748, 5
    %v816 = vrot.slane %v750, 5
    %v817 = vrot.slane %v789, 5
    %v818 = vrot.slane %v791, 5
    %v819 = vrot.slane %v748, 6
    %v820 = vrot.slane %v750, 6
    %v821 = vrot.slane %v789, 6
    %v822 = vrot.slane %v791, 6
    %v823 = vrot.slane %v748, 7
    %v824 = vrot.slane %v750, 7
    %v825 = vrot.slane %v789, 7
    %v826 = vrot.slane %v791, 7
    %v859 = vadd.f32 %v521, %v748
    %v860 = vadd.f32 %v522, %v750
    %v861 = vadd.f32 %v523, %v789
    %v862 = vadd.f32 %v524, %v791
    %v863 = vadd.f32 %v525, %v799
    %v864 = vadd.f32 %v526, %v800
    %v865 = vadd.f32 %v527, %v801
    %v866 = vadd.f32 %v528, %v802
    %v867 = vadd.f32 %v529, %v803
    %v868 = vadd.f32 %v530, %v804
    %v869 = vadd.f32 %v531, %v805
    %v870 = vadd.f32 %v532, %v806
    %v871 = vadd.f32 %v533, %v807
    %v872 = vadd.f32 %v534, %v808
    %v873 = vadd.f32 %v535, %v809
    %v874 = vadd.f32 %v536, %v810
    %v875 = vadd.f32 %v537, %v811
    %v876 = vadd.f32 %v538, %v812
    %v877 = vadd.f32 %v539, %v813
    %v878 = vadd.f32 %v540, %v814
    %v879 = vadd.f32 %v541, %v815
    %v880 = vadd.f32 %v542, %v816
    %v881 = vadd.f32 %v543, %v817
    %v882 = vadd.f32 %v544, %v818
    %v883 = vadd.f32 %v545, %v819
    %v884 = vadd.f32 %v546, %v820
    %v885 = vadd.f32 %v547, %v821
    %v886 = vadd.f32 %v548, %v822
    %v887 = vadd.f32 %v549, %v823
    %v888 = vadd.f32 %v550, %v824
    %v889 = vadd.f32 %v551, %v825
    %v890 = vadd.f32 %v552, %v826
    %v891 = vxor.u32 %v859, 2147483648
    %v892 = vxor.u32 %v863, 2147483648
    %v893 = vxor.u32 %v867, 2147483648
    %v894 = vxor.u32 %v871, 2147483648
    %v895 = vxor.u32 %v875, 2147483648
    %v896 = vxor.u32 %v879, 2147483648
    %v897 = vxor.u32 %v883, 2147483648
    %v898 = vxor.u32 %v887, 2147483648
    %v899 = vmul.f32 %v891, 1.442695
    %v900 = vpow.pop %v899
    %v901 = vmul.f32 %v892, 1.442695
    %v902 = vpow.pop %v901
    %v903 = vmul.f32 %v893, 1.442695
    %v904 = vpow.pop %v903
    %v905 = vmul.f32 %v894, 1.442695
    %v906 = vpow.pop %v905
    %v907 = vmul.f32 %v895, 1.442695
    %v908 = vpow.pop %v907
    %v909 = vmul.f32 %v896, 1.442695
    %v910 = vpow.pop %v909
    %v911 = vmul.f32 %v897, 1.442695
    %v912 = vpow.pop %v911
    %v913 = vmul.f32 %v898, 1.442695
    %v914 = vpow.pop %v913
    %v915 = vadd.f32 %v900, 1.0
    %v916 = vadd.f32 %v902, 1.0
    %v917 = vadd.f32 %v904, 1.0
    %v918 = vadd.f32 %v906, 1.0
    %v919 = vadd.f32 %v908, 1.0
    %v920 = vadd.f32 %v910, 1.0
    %v921 = vadd.f32 %v912, 1.0
    %v922 = vadd.f32 %v914, 1.0
    %v923 = vrcp.pop %v915
    %v924 = vmul.f32 1.0, %v923
    %v925 = vrcp.pop %v916
    %v926 = vmul.f32 1.0, %v925
    %v927 = vrcp.pop %v917
    %v928 = vmul.f32 1.0, %v927
    %v929 = vrcp.pop %v918
    %v930 = vmul.f32 1.0, %v929
    %v931 = vrcp.pop %v919
    %v932 = vmul.f32 1.0, %v931
    %v933 = vrcp.pop %v920
    %v934 = vmul.f32 1.0, %v933
    %v935 = vrcp.pop %v921
    %v936 = vmul.f32 1.0, %v935
    %v937 = vrcp.pop %v922
    %v938 = vmul.f32 1.0, %v937
    %v939 = vxor.u32 %v860, 2147483648
    %v940 = vxor.u32 %v864, 2147483648
    %v941 = vxor.u32 %v868, 2147483648
    %v942 = vxor.u32 %v872, 2147483648
    %v943 = vxor.u32 %v876, 2147483648
    %v944 = vxor.u32 %v880, 2147483648
    %v945 = vxor.u32 %v884, 2147483648
    %v946 = vxor.u32 %v888, 2147483648
    %v947 = vmul.f32 %v939, 1.442695
    %v948 = vpow.pop %v947
    %v949 = vmul.f32 %v940, 1.442695
    %v950 = vpow.pop %v949
    %v951 = vmul.f32 %v941, 1.442695
    %v952 = vpow.pop %v951
    %v953 = vmul.f32 %v942, 1.442695
    %v954 = vpow.pop %v953
    %v955 = vmul.f32 %v943, 1.442695
    %v956 = vpow.pop %v955
    %v957 = vmul.f32 %v944, 1.442695
    %v958 = vpow.pop %v957
    %v959 = vmul.f32 %v945, 1.442695
    %v960 = vpow.pop %v959
    %v961 = vmul.f32 %v946, 1.442695
    %v962 = vpow.pop %v961
    %v963 = vadd.f32 %v948, 1.0
    %v964 = vadd.f32 %v950, 1.0
    %v965 = vadd.f32 %v952, 1.0
    %v966 = vadd.f32 %v954, 1.0
    %v967 = vadd.f32 %v956, 1.0
    %v968 = vadd.f32 %v958, 1.0
    %v969 = vadd.f32 %v960, 1.0
    %v970 = vadd.f32 %v962, 1.0
    %v971 = vrcp.pop %v963
    %v972 = vmul.f32 1.0, %v971
    %v973 = vrcp.pop %v964
    %v974 = vmul.f32 1.0, %v973
    %v975 = vrcp.pop %v965
    %v976 = vmul.f32 1.0, %v975
    %v977 = vrcp.pop %v966
    %v978 = vmul.f32 1.0, %v977
    %v979 = vrcp.pop %v967
    %v980 = vmul.f32 1.0, %v979
    %v981 = vrcp.pop %v968
    %v982 = vmul.f32 1.0, %v981
    %v983 = vrcp.pop %v969
    %v984 = vmul.f32 1.0, %v983
    %v985 = vrcp.pop %v970
    %v986 = vmul.f32 1.0, %v985
    %v987 = vtanh.pop %v861
    %v988 = vtanh.pop %v865
    %v989 = vtanh.pop %v869
    %v990 = vtanh.pop %v873
    %v991 = vtanh.pop %v877
    %v992 = vtanh.pop %v881
    %v993 = vtanh.pop %v885
    %v994 = vtanh.pop %v889
    %v995 = vxor.u32 %v862, 2147483648
    %v996 = vxor.u32 %v866, 2147483648
    %v997 = vxor.u32 %v870, 2147483648
    %v998 = vxor.u32 %v874, 2147483648
    %v999 = vxor.u32 %v878, 2147483648
    %v1000 = vxor.u32 %v882, 2147483648
    %v1001 = vxor.u32 %v886, 2147483648
    %v1002 = vxor.u32 %v890, 2147483648
    %v1003 = vmul.f32 %v995, 1.442695
    %v1004 = vpow.pop %v1003
    %v1005 = vmul.f32 %v996, 1.442695
    %v1006 = vpow.pop %v1005
    %v1007 = vmul.f32 %v997, 1.442695
    %v1008 = vpow.pop %v1007
    %v1009 = vmul.f32 %v998, 1.442695
    %v1010 = vpow.pop %v1009
    %v1011 = vmul.f32 %v999, 1.442695
    %v1012 = vpow.pop %v1011
    %v1013 = vmul.f32 %v1000, 1.442695
    %v1014 = vpow.pop %v1013
    %v1015 = vmul.f32 %v1001, 1.442695
    %v1016 = vpow.pop %v1015
    %v1017 = vmul.f32 %v1002, 1.442695
    %v1018 = vpow.pop %v1017
    %v1019 = vadd.f32 %v1004, 1.0
    %v1020 = vadd.f32 %v1006, 1.0
    %v1021 = vadd.f32 %v1008, 1.0
    %v1022 = vadd.f32 %v1010, 1.0
    %v1023 = vadd.f32 %v1012, 1.0
    %v1024 = vadd.f32 %v1014, 1.0
    %v1025 = vadd.f32 %v1016, 1.0
    %v1026 = vadd.f32 %v1018, 1.0
    %v1027 = vrcp.pop %v1019
    %v1028 = vmul.f32 1.0, %v1027
    %v1029 = vrcp.pop %v1020
    %v1030 = vmul.f32 1.0, %v1029
    %v1031 = vrcp.pop %v1021
    %v1032 = vmul.f32 1.0, %v1031
    %v1033 = vrcp.pop %v1022
    %v1034 = vmul.f32 1.0, %v1033
    %v1035 = vrcp.pop %v1023
    %v1036 = vmul.f32 1.0, %v1035
    %v1037 = vrcp.pop %v1024
    %v1038 = vmul.f32 1.0, %v1037
    %v1039 = vrcp.pop %v1025
    %v1040 = vmul.f32 1.0, %v1039
    %v1041 = vrcp.pop %v1026
    %v1042 = vmul.f32 1.0, %v1041
    %v1043 = vmul.f32 %v972, 0.0
    %v1044 = vmul.f32 %v974, 0.0
    %v1045 = vmul.f32 %v976, 0.0
    %v1046 = vmul.f32 %v978, 0.0
    %v1047 = vmul.f32 %v980, 0.0
    %v1048 = vmul.f32 %v982, 0.0
    %v1049 = vmul.f32 %v984, 0.0
    %v1050 = vmul.f32 %v986, 0.0
    %v1051 = vmul.f32 %v924, %v987
    %v1052 = vmul.f32 %v926, %v988
    %v1053 = vmul.f32 %v928, %v989
    %v1054 = vmul.f32 %v930, %v990
    %v1055 = vmul.f32 %v932, %v991
    %v1056 = vmul.f32 %v934, %v992
    %v1057 = vmul.f32 %v936, %v993
    %v1058 = vmul.f32 %v938, %v994
    %v1059 = vadd.f32 %v1043, %v1051
    %v1060 = vadd.f32 %v1044, %v1052
    %v1061 = vadd.f32 %v1045, %v1053
    %v1062 = vadd.f32 %v1046, %v1054
    %v1063 = vadd.f32 %v1047, %v1055
    %v1064 = vadd.f32 %v1048, %v1056
    %v1065 = vadd.f32 %v1049, %v1057
    %v1066 = vadd.f32 %v1050, %v1058
    %v1067 = vtanh.pop %v1059
    %v1068 = vtanh.pop %v1060
    %v1069 = vtanh.pop %v1061
    %v1070 = vtanh.pop %v1062
    %v1071 = vtanh.pop %v1063
    %v1072 = vtanh.pop %v1064
    %v1073 = vtanh.pop %v1065
    %v1074 = vtanh.pop %v1066
    %v1075 = vmul.f32 %v1028, %v1067
    %v1076 = vmul.f32 %v1030, %v1068
    %v1077 = vmul.f32 %v1032, %v1069
    %v1078 = vmul.f32 %v1034, %v1070
    %v1079 = vmul.f32 %v1036, %v1071
    %v1080 = vmul.f32 %v1038, %v1072
    %v1081 = vmul.f32 %v1040, %v1073
    %v1082 = vmul.f32 %v1042, %v1074
    %v1083 = vpack.c.bf16 %v1075, %v1075
    %v1084 = vpack.c.bf16 %v1076, %v1076
    %v1085 = vpack.c.bf16 %v1077, %v1077
    %v1086 = vpack.c.bf16 %v1078, %v1078
    %v1087 = vpack.c.bf16 %v1079, %v1079
    %v1088 = vpack.c.bf16 %v1080, %v1080
    %v1089 = vpack.c.bf16 %v1081, %v1081
    %v1090 = vpack.c.bf16 %v1082, %v1082
    %v1099 = vunpack.c.l.b16 %v1083
    %v1100 = vunpack.c.l.b16 %v1084
    %v1101 = vunpack.c.l.b16 %v1085
    %v1102 = vunpack.c.l.b16 %v1086
    %v1103 = vunpack.c.l.b16 %v1087
    %v1104 = vunpack.c.l.b16 %v1088
    %v1105 = vunpack.c.l.b16 %v1089
    %v1106 = vunpack.c.l.b16 %v1090
    %v1107 = vpack.c.b16 %v1099, %v1099
    %v1108 = vpack.c.b16 %v1100, %v1100
    %v1109 = vpack.c.b16 %v1101, %v1101
    %v1110 = vpack.c.b16 %v1102, %v1102
    %v1111 = vpack.c.b16 %v1103, %v1103
    %v1112 = vpack.c.b16 %v1104, %v1104
    %v1113 = vpack.c.b16 %v1105, %v1105
    %v1114 = vpack.c.b16 %v1106, %v1106
    %v1115 = vunpack.c.l.b16 %v1107
    %v1116 = vunpack.c.l.b16 %v1108
    %v1117 = vunpack.c.l.b16 %v1109
    %v1118 = vunpack.c.l.b16 %v1110
    %v1119 = vunpack.c.l.b16 %v1111
    %v1120 = vunpack.c.l.b16 %v1112
    %v1121 = vunpack.c.l.b16 %v1113
    %v1122 = vunpack.c.l.b16 %v1114
    %v1123 = vrot.slane %v1116, 7
    %vm1124 = vcmask 1041409
    %v1125 = vsel %vm1124, %v1123, %v1115
    %v1126 = vrot.slane %v1117, 6
    %vm1127 = vcmask 1042434
    %v1128 = vsel %vm1127, %v1126, %v1125
    %v1129 = vrot.slane %v1118, 5
    %vm1130 = vcmask 1043459
    %v1131 = vsel %vm1130, %v1129, %v1128
    %v1132 = vrot.slane %v1119, 4
    %vm1133 = vcmask 1044484
    %v1134 = vsel %vm1133, %v1132, %v1131
    %v1135 = vrot.slane %v1120, 3
    %vm1136 = vcmask 1045509
    %v1137 = vsel %vm1136, %v1135, %v1134
    %v1138 = vrot.slane %v1121, 2
    %vm1139 = vcmask 1046534
    %v1140 = vsel %vm1139, %v1138, %v1137
    %v1141 = vrot.slane %v1122, 1
    %vm1142 = vcmask 1047559
    %v1143 = vsel %vm1142, %v1141, %v1140
    %v1144 = vpack.c.b16 %v1143, %v1143
    %1146 = vst [vmem:[#allocation3] sm:$0xf] %v1144
    %v1147 = vld [vmem:[#allocation2] sm:$0x11]
    %v1148 = vld [vmem:[#allocation2 + $0x8] sm:$0x11]
    %v1149 = vld [vmem:[#allocation2 + $0x10] sm:$0x11]
    %v1150 = vld [vmem:[#allocation2 + $0x18] sm:$0x11]
    %v1151 = vld [vmem:[#allocation2 + $0x20] sm:$0x11]
    %v1152 = vld [vmem:[#allocation2 + $0x28] sm:$0x11]
    %v1153 = vld [vmem:[#allocation2 + $0x30] sm:$0x11]
    %v1154 = vld [vmem:[#allocation2 + $0x38] sm:$0x11]
    %v1155 = vld [vmem:[#allocation2 + $0x40] sm:$0x11]
    %v1156 = vld [vmem:[#allocation2 + $0x48] sm:$0x11]
    %v1157 = vld [vmem:[#allocation2 + $0x50] sm:$0x11]
    %v1158 = vld [vmem:[#allocation2 + $0x58] sm:$0x11]
    %v1159 = vld [vmem:[#allocation2 + $0x60] sm:$0x11]
    %v1160 = vld [vmem:[#allocation2 + $0x68] sm:$0x11]
    %v1161 = vld [vmem:[#allocation2 + $0x70] sm:$0x11]
    %v1162 = vld [vmem:[#allocation2 + $0x78] sm:$0x11]
    %v1163 = vunpack.c.l.bf16 %v1147
    %v1164 = vunpack.c.h.bf16 %v1147
    %v1165 = vunpack.c.l.bf16 %v1148
    %v1166 = vunpack.c.h.bf16 %v1148
    %v1167 = vunpack.c.l.bf16 %v1149
    %v1168 = vunpack.c.h.bf16 %v1149
    %v1169 = vunpack.c.l.bf16 %v1150
    %v1170 = vunpack.c.h.bf16 %v1150
    %v1171 = vunpack.c.l.bf16 %v1151
    %v1172 = vunpack.c.h.bf16 %v1151
    %v1173 = vunpack.c.l.bf16 %v1152
    %v1174 = vunpack.c.h.bf16 %v1152
    %v1175 = vunpack.c.l.bf16 %v1153
    %v1176 = vunpack.c.h.bf16 %v1153
    %v1177 = vunpack.c.l.bf16 %v1154
    %v1178 = vunpack.c.h.bf16 %v1154
    %v1179 = vunpack.c.l.bf16 %v1155
    %v1180 = vunpack.c.h.bf16 %v1155
    %v1181 = vunpack.c.l.bf16 %v1156
    %v1182 = vunpack.c.h.bf16 %v1156
    %v1183 = vunpack.c.l.bf16 %v1157
    %v1184 = vunpack.c.h.bf16 %v1157
    %v1185 = vunpack.c.l.bf16 %v1158
    %v1186 = vunpack.c.h.bf16 %v1158
    %v1187 = vunpack.c.l.bf16 %v1159
    %v1188 = vunpack.c.h.bf16 %v1159
    %v1189 = vunpack.c.l.bf16 %v1160
    %v1190 = vunpack.c.h.bf16 %v1160
    %v1191 = vunpack.c.l.bf16 %v1161
    %v1192 = vunpack.c.h.bf16 %v1161
    %v1193 = vunpack.c.l.bf16 %v1162
    %v1194 = vunpack.c.h.bf16 %v1162
    %v1195 = vrot.slane %v1100, 7
    %v1196 = vsel %vm1124, %v1195, %v1099
    %v1197 = vrot.slane %v1101, 6
    %v1198 = vsel %vm1127, %v1197, %v1196
    %v1199 = vrot.slane %v1102, 5
    %v1200 = vsel %vm1130, %v1199, %v1198
    %v1201 = vrot.slane %v1103, 4
    %v1202 = vsel %vm1133, %v1201, %v1200
    %v1203 = vrot.slane %v1104, 3
    %v1204 = vsel %vm1136, %v1203, %v1202
    %v1205 = vrot.slane %v1105, 2
    %v1206 = vsel %vm1139, %v1205, %v1204
    %v1207 = vrot.slane %v1106, 1
    %v1208 = vsel %vm1142, %v1207, %v1206
    %v1209 = vpack.c.b16 %v1208, %v1208
    %1211 = vmatprep.subr.bf16.mxu0 %v650
    %1212 = vmatpush1.bf16.msra.mxu0 %v649
    %1213 = vmatprep.subr.bf16.mxu0 %v654
    %1214 = vmatpush1.bf16.msra.mxu0 %v653
    %1215 = vmatprep.subr.bf16.mxu0 %v658
    %1216 = vmatpush1.bf16.msra.mxu0 %v657
    %1217 = vmatprep.subr.bf16.mxu0 %v662
    %1218 = vmatpush1.bf16.msra.mxu0 %v661
    %1219 = vmatprep.subr.bf16.mxu0 %v666
    %1220 = vmatpush1.bf16.msra.mxu0 %v665
    %1221 = vmatprep.subr.bf16.mxu0 %v670
    %1222 = vmatpush1.bf16.msra.mxu0 %v669
    %1223 = vmatprep.subr.bf16.mxu0 %v674
    %1224 = vmatpush1.bf16.msra.mxu0 %v673
    %1225 = vmatprep.subr.bf16.mxu0 %v678
    %1226 = vmatpush1.bf16.msra.mxu0 %v677
    %1227 = vmatprep.subr.bf16.mxu0 0
    %1228 = vmatpush1.bf16.msra.mxu0 0
    %1229 = vmatprep.subr.bf16.mxu0 0
    %1230 = vmatpush1.bf16.msra.mxu0 0
    %1231 = vmatprep.subr.bf16.mxu0 0
    %1232 = vmatpush1.bf16.msra.mxu0 0
    %1233 = vmatprep.subr.bf16.mxu0 0
    %1234 = vmatpush1.bf16.msra.mxu0 0
    %1235 = vmatprep.subr.bf16.mxu0 0
    %1236 = vmatpush1.bf16.msra.mxu0 0
    %1237 = vmatprep.subr.bf16.mxu0 0
    %1238 = vmatpush1.bf16.msra.mxu0 0
    %1239 = vmatprep.subr.bf16.mxu0 0
    %1240 = vmatpush1.bf16.msra.mxu0 0
    %1241 = vmatprep.subr.bf16.mxu0 0
    %1242 = vmatpush1.bf16.msra.mxu0 0
    %1243 = vmatprep.mubr.bf16.mxu0 0
    %1244 = vmatmul.mubr.bf16.gmra.mrb[0].mxu0 %v1209
    %v1245 = vpop.f32.mrb[0].mxu0
    %v1246 = vadd.f32 0.0, %v1245
    %v1247 = vpop.f32.mrb[0].mxu0
    %v1248 = vadd.f32 0.0, %v1247
    %v1249 = vpop.f32.mrb[0].mxu0
    %v1250 = vpop.f32.mrb[0].mxu0
    %1251 = vdwg.mxu0
    %1252 = vmatprep.subr.bf16.mxu0 %v652
    %1253 = vmatpush1.bf16.msra.mxu0 %v651
    %1254 = vmatprep.subr.bf16.mxu0 %v656
    %1255 = vmatpush1.bf16.msra.mxu0 %v655
    %1256 = vmatprep.subr.bf16.mxu0 %v660
    %1257 = vmatpush1.bf16.msra.mxu0 %v659
    %1258 = vmatprep.subr.bf16.mxu0 %v664
    %1259 = vmatpush1.bf16.msra.mxu0 %v663
    %1260 = vmatprep.subr.bf16.mxu0 %v668
    %1261 = vmatpush1.bf16.msra.mxu0 %v667
    %1262 = vmatprep.subr.bf16.mxu0 %v672
    %1263 = vmatpush1.bf16.msra.mxu0 %v671
    %1264 = vmatprep.subr.bf16.mxu0 %v676
    %1265 = vmatpush1.bf16.msra.mxu0 %v675
    %1266 = vmatprep.subr.bf16.mxu0 %v680
    %1267 = vmatpush1.bf16.msra.mxu0 %v679
    %1268 = vmatprep.subr.bf16.mxu0 0
    %1269 = vmatpush1.bf16.msra.mxu0 0
    %1270 = vmatprep.subr.bf16.mxu0 0
    %1271 = vmatpush1.bf16.msra.mxu0 0
    %1272 = vmatprep.subr.bf16.mxu0 0
    %1273 = vmatpush1.bf16.msra.mxu0 0
    %1274 = vmatprep.subr.bf16.mxu0 0
    %1275 = vmatpush1.bf16.msra.mxu0 0
    %1276 = vmatprep.subr.bf16.mxu0 0
    %1277 = vmatpush1.bf16.msra.mxu0 0
    %1278 = vmatprep.subr.bf16.mxu0 0
    %1279 = vmatpush1.bf16.msra.mxu0 0
    %1280 = vmatprep.subr.bf16.mxu0 0
    %1281 = vmatpush1.bf16.msra.mxu0 0
    %1282 = vmatprep.subr.bf16.mxu0 0
    %1283 = vmatpush1.bf16.msra.mxu0 0
    %1284 = vmatprep.mubr.bf16.mxu0 0
    %1285 = vmatmul.mubr.bf16.gmra.mrb[0].mxu0 %v1209
    %v1286 = vpop.f32.mrb[0].mxu0
    %v1287 = vadd.f32 0.0, %v1286
    %v1288 = vpop.f32.mrb[0].mxu0
    %v1289 = vadd.f32 0.0, %v1288
    %v1290 = vpop.f32.mrb[0].mxu0
    %v1291 = vpop.f32.mrb[0].mxu0
    %1292 = vdwg.mxu0
    %v1297 = vrot.slane %v1246, 7
    %v1298 = vrot.slane %v1248, 7
    %v1299 = vrot.slane %v1287, 7
    %v1300 = vrot.slane %v1289, 7
    %v1301 = vrot.slane %v1246, 1
    %v1302 = vrot.slane %v1248, 1
    %v1303 = vrot.slane %v1287, 1
    %v1304 = vrot.slane %v1289, 1
    %v1305 = vrot.slane %v1246, 2
    %v1306 = vrot.slane %v1248, 2
    %v1307 = vrot.slane %v1287, 2
    %v1308 = vrot.slane %v1289, 2
    %v1309 = vrot.slane %v1246, 3
    %v1310 = vrot.slane %v1248, 3
    %v1311 = vrot.slane %v1287, 3
    %v1312 = vrot.slane %v1289, 3
    %v1313 = vrot.slane %v1246, 4
    %v1314 = vrot.slane %v1248, 4
    %v1315 = vrot.slane %v1287, 4
    %v1316 = vrot.slane %v1289, 4
    %v1317 = vrot.slane %v1246, 5
    %v1318 = vrot.slane %v1248, 5
    %v1319 = vrot.slane %v1287, 5
    %v1320 = vrot.slane %v1289, 5
    %v1321 = vrot.slane %v1246, 6
    %v1322 = vrot.slane %v1248, 6
    %v1323 = vrot.slane %v1287, 6
    %v1324 = vrot.slane %v1289, 6
    %v1357 = vadd.f32 %v1163, %v1297
    %v1358 = vadd.f32 %v1164, %v1298
    %v1359 = vadd.f32 %v1165, %v1299
    %v1360 = vadd.f32 %v1166, %v1300
    %v1361 = vadd.f32 %v1167, %v1246
    %v1362 = vadd.f32 %v1168, %v1248
    %v1363 = vadd.f32 %v1169, %v1287
    %v1364 = vadd.f32 %v1170, %v1289
    %v1365 = vadd.f32 %v1171, %v1301
    %v1366 = vadd.f32 %v1172, %v1302
    %v1367 = vadd.f32 %v1173, %v1303
    %v1368 = vadd.f32 %v1174, %v1304
    %v1369 = vadd.f32 %v1175, %v1305
    %v1370 = vadd.f32 %v1176, %v1306
    %v1371 = vadd.f32 %v1177, %v1307
    %v1372 = vadd.f32 %v1178, %v1308
    %v1373 = vadd.f32 %v1179, %v1309
    %v1374 = vadd.f32 %v1180, %v1310
    %v1375 = vadd.f32 %v1181, %v1311
    %v1376 = vadd.f32 %v1182, %v1312
    %v1377 = vadd.f32 %v1183, %v1313
    %v1378 = vadd.f32 %v1184, %v1314
    %v1379 = vadd.f32 %v1185, %v1315
    %v1380 = vadd.f32 %v1186, %v1316
    %v1381 = vadd.f32 %v1187, %v1317
    %v1382 = vadd.f32 %v1188, %v1318
    %v1383 = vadd.f32 %v1189, %v1319
    %v1384 = vadd.f32 %v1190, %v1320
    %v1385 = vadd.f32 %v1191, %v1321
    %v1386 = vadd.f32 %v1192, %v1322
    %v1387 = vadd.f32 %v1193, %v1323
    %v1388 = vadd.f32 %v1194, %v1324
    %v1389 = vxor.u32 %v1357, 2147483648
    %v1390 = vxor.u32 %v1361, 2147483648
    %v1391 = vxor.u32 %v1365, 2147483648
    %v1392 = vxor.u32 %v1369, 2147483648
    %v1393 = vxor.u32 %v1373, 2147483648
    %v1394 = vxor.u32 %v1377, 2147483648
    %v1395 = vxor.u32 %v1381, 2147483648
    %v1396 = vxor.u32 %v1385, 2147483648
    %v1397 = vmul.f32 %v1389, 1.442695
    %v1398 = vpow.pop %v1397
    %v1399 = vmul.f32 %v1390, 1.442695
    %v1400 = vpow.pop %v1399
    %v1401 = vmul.f32 %v1391, 1.442695
    %v1402 = vpow.pop %v1401
    %v1403 = vmul.f32 %v1392, 1.442695
    %v1404 = vpow.pop %v1403
    %v1405 = vmul.f32 %v1393, 1.442695
    %v1406 = vpow.pop %v1405
    %v1407 = vmul.f32 %v1394, 1.442695
    %v1408 = vpow.pop %v1407
    %v1409 = vmul.f32 %v1395, 1.442695
    %v1410 = vpow.pop %v1409
    %v1411 = vmul.f32 %v1396, 1.442695
    %v1412 = vpow.pop %v1411
    %v1413 = vadd.f32 %v1398, 1.0
    %v1414 = vadd.f32 %v1400, 1.0
    %v1415 = vadd.f32 %v1402, 1.0
    %v1416 = vadd.f32 %v1404, 1.0
    %v1417 = vadd.f32 %v1406, 1.0
    %v1418 = vadd.f32 %v1408, 1.0
    %v1419 = vadd.f32 %v1410, 1.0
    %v1420 = vadd.f32 %v1412, 1.0
    %v1421 = vrcp.pop %v1413
    %v1422 = vmul.f32 1.0, %v1421
    %v1423 = vrcp.pop %v1414
    %v1424 = vmul.f32 1.0, %v1423
    %v1425 = vrcp.pop %v1415
    %v1426 = vmul.f32 1.0, %v1425
    %v1427 = vrcp.pop %v1416
    %v1428 = vmul.f32 1.0, %v1427
    %v1429 = vrcp.pop %v1417
    %v1430 = vmul.f32 1.0, %v1429
    %v1431 = vrcp.pop %v1418
    %v1432 = vmul.f32 1.0, %v1431
    %v1433 = vrcp.pop %v1419
    %v1434 = vmul.f32 1.0, %v1433
    %v1435 = vrcp.pop %v1420
    %v1436 = vmul.f32 1.0, %v1435
    %v1437 = vxor.u32 %v1358, 2147483648
    %v1438 = vxor.u32 %v1362, 2147483648
    %v1439 = vxor.u32 %v1366, 2147483648
    %v1440 = vxor.u32 %v1370, 2147483648
    %v1441 = vxor.u32 %v1374, 2147483648
    %v1442 = vxor.u32 %v1378, 2147483648
    %v1443 = vxor.u32 %v1382, 2147483648
    %v1444 = vxor.u32 %v1386, 2147483648
    %v1445 = vmul.f32 %v1437, 1.442695
    %v1446 = vpow.pop %v1445
    %v1447 = vmul.f32 %v1438, 1.442695
    %v1448 = vpow.pop %v1447
    %v1449 = vmul.f32 %v1439, 1.442695
    %v1450 = vpow.pop %v1449
    %v1451 = vmul.f32 %v1440, 1.442695
    %v1452 = vpow.pop %v1451
    %v1453 = vmul.f32 %v1441, 1.442695
    %v1454 = vpow.pop %v1453
    %v1455 = vmul.f32 %v1442, 1.442695
    %v1456 = vpow.pop %v1455
    %v1457 = vmul.f32 %v1443, 1.442695
    %v1458 = vpow.pop %v1457
    %v1459 = vmul.f32 %v1444, 1.442695
    %v1460 = vpow.pop %v1459
    %v1461 = vadd.f32 %v1446, 1.0
    %v1462 = vadd.f32 %v1448, 1.0
    %v1463 = vadd.f32 %v1450, 1.0
    %v1464 = vadd.f32 %v1452, 1.0
    %v1465 = vadd.f32 %v1454, 1.0
    %v1466 = vadd.f32 %v1456, 1.0
    %v1467 = vadd.f32 %v1458, 1.0
    %v1468 = vadd.f32 %v1460, 1.0
    %v1469 = vrcp.pop %v1461
    %v1470 = vmul.f32 1.0, %v1469
    %v1471 = vrcp.pop %v1462
    %v1472 = vmul.f32 1.0, %v1471
    %v1473 = vrcp.pop %v1463
    %v1474 = vmul.f32 1.0, %v1473
    %v1475 = vrcp.pop %v1464
    %v1476 = vmul.f32 1.0, %v1475
    %v1477 = vrcp.pop %v1465
    %v1478 = vmul.f32 1.0, %v1477
    %v1479 = vrcp.pop %v1466
    %v1480 = vmul.f32 1.0, %v1479
    %v1481 = vrcp.pop %v1467
    %v1482 = vmul.f32 1.0, %v1481
    %v1483 = vrcp.pop %v1468
    %v1484 = vmul.f32 1.0, %v1483
    %v1485 = vtanh.pop %v1359
    %v1486 = vtanh.pop %v1363
    %v1487 = vtanh.pop %v1367
    %v1488 = vtanh.pop %v1371
    %v1489 = vtanh.pop %v1375
    %v1490 = vtanh.pop %v1379
    %v1491 = vtanh.pop %v1383
    %v1492 = vtanh.pop %v1387
    %v1493 = vxor.u32 %v1360, 2147483648
    %v1494 = vxor.u32 %v1364, 2147483648
    %v1495 = vxor.u32 %v1368, 2147483648
    %v1496 = vxor.u32 %v1372, 2147483648
    %v1497 = vxor.u32 %v1376, 2147483648
    %v1498 = vxor.u32 %v1380, 2147483648
    %v1499 = vxor.u32 %v1384, 2147483648
    %v1500 = vxor.u32 %v1388, 2147483648
    %v1501 = vmul.f32 %v1493, 1.442695
    %v1502 = vpow.pop %v1501
    %v1503 = vmul.f32 %v1494, 1.442695
    %v1504 = vpow.pop %v1503
    %v1505 = vmul.f32 %v1495, 1.442695
    %v1506 = vpow.pop %v1505
    %v1507 = vmul.f32 %v1496, 1.442695
    %v1508 = vpow.pop %v1507
    %v1509 = vmul.f32 %v1497, 1.442695
    %v1510 = vpow.pop %v1509
    %v1511 = vmul.f32 %v1498, 1.442695
    %v1512 = vpow.pop %v1511
    %v1513 = vmul.f32 %v1499, 1.442695
    %v1514 = vpow.pop %v1513
    %v1515 = vmul.f32 %v1500, 1.442695
    %v1516 = vpow.pop %v1515
    %v1517 = vadd.f32 %v1502, 1.0
    %v1518 = vadd.f32 %v1504, 1.0
    %v1519 = vadd.f32 %v1506, 1.0
    %v1520 = vadd.f32 %v1508, 1.0
    %v1521 = vadd.f32 %v1510, 1.0
    %v1522 = vadd.f32 %v1512, 1.0
    %v1523 = vadd.f32 %v1514, 1.0
    %v1524 = vadd.f32 %v1516, 1.0
    %v1525 = vrcp.pop %v1517
    %v1526 = vmul.f32 1.0, %v1525
    %v1527 = vrcp.pop %v1518
    %v1528 = vmul.f32 1.0, %v1527
    %v1529 = vrcp.pop %v1519
    %v1530 = vmul.f32 1.0, %v1529
    %v1531 = vrcp.pop %v1520
    %v1532 = vmul.f32 1.0, %v1531
    %v1533 = vrcp.pop %v1521
    %v1534 = vmul.f32 1.0, %v1533
    %v1535 = vrcp.pop %v1522
    %v1536 = vmul.f32 1.0, %v1535
    %v1537 = vrcp.pop %v1523
    %v1538 = vmul.f32 1.0, %v1537
    %v1539 = vrcp.pop %v1524
    %v1540 = vmul.f32 1.0, %v1539
    %v1549 = vrot.slane %v1059, 7
    %v1550 = vrot.slane %v1060, 7
    %v1551 = vrot.slane %v1061, 7
    %v1552 = vrot.slane %v1062, 7
    %v1553 = vrot.slane %v1063, 7
    %v1554 = vrot.slane %v1064, 7
    %v1555 = vrot.slane %v1065, 7
    %v1556 = vrot.slane %v1066, 7
    %v1565 = vmul.f32 %v1470, %v1549
    %v1566 = vmul.f32 %v1472, %v1550
    %v1567 = vmul.f32 %v1474, %v1551
    %v1568 = vmul.f32 %v1476, %v1552
    %v1569 = vmul.f32 %v1478, %v1553
    %v1570 = vmul.f32 %v1480, %v1554
    %v1571 = vmul.f32 %v1482, %v1555
    %v1572 = vmul.f32 %v1484, %v1556
    %v1573 = vmul.f32 %v1422, %v1485
    %v1574 = vmul.f32 %v1424, %v1486
    %v1575 = vmul.f32 %v1426, %v1487
    %v1576 = vmul.f32 %v1428, %v1488
    %v1577 = vmul.f32 %v1430, %v1489
    %v1578 = vmul.f32 %v1432, %v1490
    %v1579 = vmul.f32 %v1434, %v1491
    %v1580 = vmul.f32 %v1436, %v1492
    %v1581 = vadd.f32 %v1565, %v1573
    %v1582 = vadd.f32 %v1566, %v1574
    %v1583 = vadd.f32 %v1567, %v1575
    %v1584 = vadd.f32 %v1568, %v1576
    %v1585 = vadd.f32 %v1569, %v1577
    %v1586 = vadd.f32 %v1570, %v1578
    %v1587 = vadd.f32 %v1571, %v1579
    %v1588 = vadd.f32 %v1572, %v1580
    %v1589 = vtanh.pop %v1581
    %v1590 = vtanh.pop %v1582
    %v1591 = vtanh.pop %v1583
    %v1592 = vtanh.pop %v1584
    %v1593 = vtanh.pop %v1585
    %v1594 = vtanh.pop %v1586
    %v1595 = vtanh.pop %v1587
    %v1596 = vtanh.pop %v1588
    %v1597 = vmul.f32 %v1526, %v1589
    %v1598 = vmul.f32 %v1528, %v1590
    %v1599 = vmul.f32 %v1530, %v1591
    %v1600 = vmul.f32 %v1532, %v1592
    %v1601 = vmul.f32 %v1534, %v1593
    %v1602 = vmul.f32 %v1536, %v1594
    %v1603 = vmul.f32 %v1538, %v1595
    %v1604 = vmul.f32 %v1540, %v1596
    %v1605 = vpack.c.bf16 %v1597, %v1597
    %v1606 = vpack.c.bf16 %v1598, %v1598
    %v1607 = vpack.c.bf16 %v1599, %v1599
    %v1608 = vpack.c.bf16 %v1600, %v1600
    %v1609 = vpack.c.bf16 %v1601, %v1601
    %v1610 = vpack.c.bf16 %v1602, %v1602
    %v1611 = vpack.c.bf16 %v1603, %v1603
    %v1612 = vpack.c.bf16 %v1604, %v1604
    %v1621 = vunpack.c.l.b16 %v1605
    %v1622 = vunpack.c.l.b16 %v1606
    %v1623 = vunpack.c.l.b16 %v1607
    %v1624 = vunpack.c.l.b16 %v1608
    %v1625 = vunpack.c.l.b16 %v1609
    %v1626 = vunpack.c.l.b16 %v1610
    %v1627 = vunpack.c.l.b16 %v1611
    %v1628 = vunpack.c.l.b16 %v1612
    %v1629 = vpack.c.b16 %v1621, %v1621
    %v1630 = vpack.c.b16 %v1622, %v1622
    %v1631 = vpack.c.b16 %v1623, %v1623
    %v1632 = vpack.c.b16 %v1624, %v1624
    %v1633 = vpack.c.b16 %v1625, %v1625
    %v1634 = vpack.c.b16 %v1626, %v1626
    %v1635 = vpack.c.b16 %v1627, %v1627
    %v1636 = vpack.c.b16 %v1628, %v1628
    %v1637 = vunpack.c.l.b16 %v1629
    %v1638 = vunpack.c.l.b16 %v1630
    %v1639 = vunpack.c.l.b16 %v1631
    %v1640 = vunpack.c.l.b16 %v1632
    %v1641 = vunpack.c.l.b16 %v1633
    %v1642 = vunpack.c.l.b16 %v1634
    %v1643 = vunpack.c.l.b16 %v1635
    %v1644 = vunpack.c.l.b16 %v1636
    %v1645 = vrot.slane %v1637, 1
    %v1646 = vsel %vm1124, %v1638, %v1645
    %v1647 = vrot.slane %v1639, 7
    %v1648 = vsel %vm1127, %v1647, %v1646
    %v1649 = vrot.slane %v1640, 6
    %v1650 = vsel %vm1130, %v1649, %v1648
    %v1651 = vrot.slane %v1641, 5
    %v1652 = vsel %vm1133, %v1651, %v1650
    %v1653 = vrot.slane %v1642, 4
    %v1654 = vsel %vm1136, %v1653, %v1652
    %v1655 = vrot.slane %v1643, 3
    %v1656 = vsel %vm1139, %v1655, %v1654
    %v1657 = vrot.slane %v1644, 2
    %v1658 = vsel %vm1142, %v1657, %v1656
    %v1659 = vpack.c.b16 %v1658, %v1658
    %s1661 = scalar_lea.vmem [#allocation3], 4
    %1662 = vst [vmem:[%s1661] sm:$0xf] %v1659
    %v1663 = vld [vmem:[#allocation2] sm:$0x22]
    %v1664 = vld [vmem:[#allocation2 + $0x8] sm:$0x22]
    %v1665 = vld [vmem:[#allocation2 + $0x10] sm:$0x22]
    %v1666 = vld [vmem:[#allocation2 + $0x18] sm:$0x22]
    %v1667 = vld [vmem:[#allocation2 + $0x20] sm:$0x22]
    %v1668 = vld [vmem:[#allocation2 + $0x28] sm:$0x22]
    %v1669 = vld [vmem:[#allocation2 + $0x30] sm:$0x22]
    %v1670 = vld [vmem:[#allocation2 + $0x38] sm:$0x22]
    %v1671 = vld [vmem:[#allocation2 + $0x40] sm:$0x22]
    %v1672 = vld [vmem:[#allocation2 + $0x48] sm:$0x22]
    %v1673 = vld [vmem:[#allocation2 + $0x50] sm:$0x22]
    %v1674 = vld [vmem:[#allocation2 + $0x58] sm:$0x22]
    %v1675 = vld [vmem:[#allocation2 + $0x60] sm:$0x22]
    %v1676 = vld [vmem:[#allocation2 + $0x68] sm:$0x22]
    %v1677 = vld [vmem:[#allocation2 + $0x70] sm:$0x22]
    %v1678 = vld [vmem:[#allocation2 + $0x78] sm:$0x22]
    %v1679 = vunpack.c.l.bf16 %v1663
    %v1680 = vunpack.c.h.bf16 %v1663
    %v1681 = vunpack.c.l.bf16 %v1664
    %v1682 = vunpack.c.h.bf16 %v1664
    %v1683 = vunpack.c.l.bf16 %v1665
    %v1684 = vunpack.c.h.bf16 %v1665
    %v1685 = vunpack.c.l.bf16 %v1666
    %v1686 = vunpack.c.h.bf16 %v1666
    %v1687 = vunpack.c.l.bf16 %v1667
    %v1688 = vunpack.c.h.bf16 %v1667
    %v1689 = vunpack.c.l.bf16 %v1668
    %v1690 = vunpack.c.h.bf16 %v1668
    %v1691 = vunpack.c.l.bf16 %v1669
    %v1692 = vunpack.c.h.bf16 %v1669
    %v1693 = vunpack.c.l.bf16 %v1670
    %v1694 = vunpack.c.h.bf16 %v1670
    %v1695 = vunpack.c.l.bf16 %v1671
    %v1696 = vunpack.c.h.bf16 %v1671
    %v1697 = vunpack.c.l.bf16 %v1672
    %v1698 = vunpack.c.h.bf16 %v1672
    %v1699 = vunpack.c.l.bf16 %v1673
    %v1700 = vunpack.c.h.bf16 %v1673
    %v1701 = vunpack.c.l.bf16 %v1674
    %v1702 = vunpack.c.h.bf16 %v1674
    %v1703 = vunpack.c.l.bf16 %v1675
    %v1704 = vunpack.c.h.bf16 %v1675
    %v1705 = vunpack.c.l.bf16 %v1676
    %v1706 = vunpack.c.h.bf16 %v1676
    %v1707 = vunpack.c.l.bf16 %v1677
    %v1708 = vunpack.c.h.bf16 %v1677
    %v1709 = vunpack.c.l.bf16 %v1678
    %v1710 = vunpack.c.h.bf16 %v1678
    %v1711 = vrot.slane %v1621, 1
    %v1712 = vsel %vm1124, %v1622, %v1711
    %v1713 = vrot.slane %v1623, 7
    %v1714 = vsel %vm1127, %v1713, %v1712
    %v1715 = vrot.slane %v1624, 6
    %v1716 = vsel %vm1130, %v1715, %v1714
    %v1717 = vrot.slane %v1625, 5
    %v1718 = vsel %vm1133, %v1717, %v1716
    %v1719 = vrot.slane %v1626, 4
    %v1720 = vsel %vm1136, %v1719, %v1718
    %v1721 = vrot.slane %v1627, 3
    %v1722 = vsel %vm1139, %v1721, %v1720
    %v1723 = vrot.slane %v1628, 2
    %v1724 = vsel %vm1142, %v1723, %v1722
    %v1725 = vpack.c.b16 %v1724, %v1724
    %1727 = vmatprep.subr.bf16.mxu0 %v650
    %1728 = vmatpush1.bf16.msra.mxu0 %v649
    %1729 = vmatprep.subr.bf16.mxu0 %v654
    %1730 = vmatpush1.bf16.msra.mxu0 %v653
    %1731 = vmatprep.subr.bf16.mxu0 %v658
    %1732 = vmatpush1.bf16.msra.mxu0 %v657
    %1733 = vmatprep.subr.bf16.mxu0 %v662
    %1734 = vmatpush1.bf16.msra.mxu0 %v661
    %1735 = vmatprep.subr.bf16.mxu0 %v666
    %1736 = vmatpush1.bf16.msra.mxu0 %v665
    %1737 = vmatprep.subr.bf16.mxu0 %v670
    %1738 = vmatpush1.bf16.msra.mxu0 %v669
    %1739 = vmatprep.subr.bf16.mxu0 %v674
    %1740 = vmatpush1.bf16.msra.mxu0 %v673
    %1741 = vmatprep.subr.bf16.mxu0 %v678
    %1742 = vmatpush1.bf16.msra.mxu0 %v677
    %1743 = vmatprep.subr.bf16.mxu0 0
    %1744 = vmatpush1.bf16.msra.mxu0 0
    %1745 = vmatprep.subr.bf16.mxu0 0
    %1746 = vmatpush1.bf16.msra.mxu0 0
    %1747 = vmatprep.subr.bf16.mxu0 0
    %1748 = vmatpush1.bf16.msra.mxu0 0
    %1749 = vmatprep.subr.bf16.mxu0 0
    %1750 = vmatpush1.bf16.msra.mxu0 0
    %1751 = vmatprep.subr.bf16.mxu0 0
    %1752 = vmatpush1.bf16.msra.mxu0 0
    %1753 = vmatprep.subr.bf16.mxu0 0
    %1754 = vmatpush1.bf16.msra.mxu0 0
    %1755 = vmatprep.subr.bf16.mxu0 0
    %1756 = vmatpush1.bf16.msra.mxu0 0
    %1757 = vmatprep.subr.bf16.mxu0 0
    %1758 = vmatpush1.bf16.msra.mxu0 0
    %1759 = vmatprep.mubr.bf16.mxu0 0
    %1760 = vmatmul.mubr.bf16.gmra.mrb[0].mxu0 %v1725
    %v1761 = vpop.f32.mrb[0].mxu0
    %v1762 = vadd.f32 0.0, %v1761
    %v1763 = vpop.f32.mrb[0].mxu0
    %v1764 = vadd.f32 0.0, %v1763
    %v1765 = vpop.f32.mrb[0].mxu0
    %v1766 = vpop.f32.mrb[0].mxu0
    %1767 = vdwg.mxu0
    %1768 = vmatprep.subr.bf16.mxu0 %v652
    %1769 = vmatpush1.bf16.msra.mxu0 %v651
    %1770 = vmatprep.subr.bf16.mxu0 %v656
    %1771 = vmatpush1.bf16.msra.mxu0 %v655
    %1772 = vmatprep.subr.bf16.mxu0 %v660
    %1773 = vmatpush1.bf16.msra.mxu0 %v659
    %1774 = vmatprep.subr.bf16.mxu0 %v664
    %1775 = vmatpush1.bf16.msra.mxu0 %v663
    %1776 = vmatprep.subr.bf16.mxu0 %v668
    %1777 = vmatpush1.bf16.msra.mxu0 %v667
    %1778 = vmatprep.subr.bf16.mxu0 %v672
    %1779 = vmatpush1.bf16.msra.mxu0 %v671
    %1780 = vmatprep.subr.bf16.mxu0 %v676
    %1781 = vmatpush1.bf16.msra.mxu0 %v675
    %1782 = vmatprep.subr.bf16.mxu0 %v680
    %1783 = vmatpush1.bf16.msra.mxu0 %v679
    %1784 = vmatprep.subr.bf16.mxu0 0
    %1785 = vmatpush1.bf16.msra.mxu0 0
    %1786 = vmatprep.subr.bf16.mxu0 0
    %1787 = vmatpush1.bf16.msra.mxu0 0
    %1788 = vmatprep.subr.bf16.mxu0 0
    %1789 = vmatpush1.bf16.msra.mxu0 0
    %1790 = vmatprep.subr.bf16.mxu0 0
    %1791 = vmatpush1.bf16.msra.mxu0 0
    %1792 = vmatprep.subr.bf16.mxu0 0
    %1793 = vmatpush1.bf16.msra.mxu0 0
    %1794 = vmatprep.subr.bf16.mxu0 0
    %1795 = vmatpush1.bf16.msra.mxu0 0
    %1796 = vmatprep.subr.bf16.mxu0 0
    %1797 = vmatpush1.bf16.msra.mxu0 0
    %1798 = vmatprep.subr.bf16.mxu0 0
    %1799 = vmatpush1.bf16.msra.mxu0 0
    %1800 = vmatprep.mubr.bf16.mxu0 0
    %1801 = vmatmul.mubr.bf16.gmra.mrb[0].mxu0 %v1725
    %v1802 = vpop.f32.mrb[0].mxu0
    %v1803 = vadd.f32 0.0, %v1802
    %v1804 = vpop.f32.mrb[0].mxu0
    %v1805 = vadd.f32 0.0, %v1804
    %v1806 = vpop.f32.mrb[0].mxu0
    %v1807 = vpop.f32.mrb[0].mxu0
    %1808 = vdwg.mxu0
    %v1813 = vrot.slane %v1762, 6
    %v1814 = vrot.slane %v1764, 6
    %v1815 = vrot.slane %v1803, 6
    %v1816 = vrot.slane %v1805, 6
    %v1817 = vrot.slane %v1762, 7
    %v1818 = vrot.slane %v1764, 7
    %v1819 = vrot.slane %v1803, 7
    %v1820 = vrot.slane %v1805, 7
    %v1821 = vrot.slane %v1762, 1
    %v1822 = vrot.slane %v1764, 1
    %v1823 = vrot.slane %v1803, 1
    %v1824 = vrot.slane %v1805, 1
    %v1825 = vrot.slane %v1762, 2
    %v1826 = vrot.slane %v1764, 2
    %v1827 = vrot.slane %v1803, 2
    %v1828 = vrot.slane %v1805, 2
    %v1829 = vrot.slane %v1762, 3
    %v1830 = vrot.slane %v1764, 3
    %v1831 = vrot.slane %v1803, 3
    %v1832 = vrot.slane %v1805, 3
    %v1833 = vrot.slane %v1762, 4
    %v1834 = vrot.slane %v1764, 4
    %v1835 = vrot.slane %v1803, 4
    %v1836 = vrot.slane %v1805, 4
    %v1837 = vrot.slane %v1762, 5
    %v1838 = vrot.slane %v1764, 5
    %v1839 = vrot.slane %v1803, 5
    %v1840 = vrot.slane %v1805, 5
    %v1873 = vadd.f32 %v1679, %v1813
    %v1874 = vadd.f32 %v1680, %v1814
    %v1875 = vadd.f32 %v1681, %v1815
    %v1876 = vadd.f32 %v1682, %v1816
    %v1877 = vadd.f32 %v1683, %v1817
    %v1878 = vadd.f32 %v1684, %v1818
    %v1879 = vadd.f32 %v1685, %v1819
    %v1880 = vadd.f32 %v1686, %v1820
    %v1881 = vadd.f32 %v1687, %v1762
    %v1882 = vadd.f32 %v1688, %v1764
    %v1883 = vadd.f32 %v1689, %v1803
    %v1884 = vadd.f32 %v1690, %v1805
    %v1885 = vadd.f32 %v1691, %v1821
    %v1886 = vadd.f32 %v1692, %v1822
    %v1887 = vadd.f32 %v1693, %v1823
    %v1888 = vadd.f32 %v1694, %v1824
    %v1889 = vadd.f32 %v1695, %v1825
    %v1890 = vadd.f32 %v1696, %v1826
    %v1891 = vadd.f32 %v1697, %v1827
    %v1892 = vadd.f32 %v1698, %v1828
    %v1893 = vadd.f32 %v1699, %v1829
    %v1894 = vadd.f32 %v1700, %v1830
    %v1895 = vadd.f32 %v1701, %v1831
    %v1896 = vadd.f32 %v1702, %v1832
    %v1897 = vadd.f32 %v1703, %v1833
    %v1898 = vadd.f32 %v1704, %v1834
    %v1899 = vadd.f32 %v1705, %v1835
    %v1900 = vadd.f32 %v1706, %v1836
    %v1901 = vadd.f32 %v1707, %v1837
    %v1902 = vadd.f32 %v1708, %v1838
    %v1903 = vadd.f32 %v1709, %v1839
    %v1904 = vadd.f32 %v1710, %v1840
    %v1905 = vxor.u32 %v1873, 2147483648
    %v1906 = vxor.u32 %v1877, 2147483648
    %v1907 = vxor.u32 %v1881, 2147483648
    %v1908 = vxor.u32 %v1885, 2147483648
    %v1909 = vxor.u32 %v1889, 2147483648
    %v1910 = vxor.u32 %v1893, 2147483648
    %v1911 = vxor.u32 %v1897, 2147483648
    %v1912 = vxor.u32 %v1901, 2147483648
    %v1913 = vmul.f32 %v1905, 1.442695
    %v1914 = vpow.pop %v1913
    %v1915 = vmul.f32 %v1906, 1.442695
    %v1916 = vpow.pop %v1915
    %v1917 = vmul.f32 %v1907, 1.442695
    %v1918 = vpow.pop %v1917
    %v1919 = vmul.f32 %v1908, 1.442695
    %v1920 = vpow.pop %v1919
    %v1921 = vmul.f32 %v1909, 1.442695
    %v1922 = vpow.pop %v1921
    %v1923 = vmul.f32 %v1910, 1.442695
    %v1924 = vpow.pop %v1923
    %v1925 = vmul.f32 %v1911, 1.442695
    %v1926 = vpow.pop %v1925
    %v1927 = vmul.f32 %v1912, 1.442695
    %v1928 = vpow.pop %v1927
    %v1929 = vadd.f32 %v1914, 1.0
    %v1930 = vadd.f32 %v1916, 1.0
    %v1931 = vadd.f32 %v1918, 1.0
    %v1932 = vadd.f32 %v1920, 1.0
    %v1933 = vadd.f32 %v1922, 1.0
    %v1934 = vadd.f32 %v1924, 1.0
    %v1935 = vadd.f32 %v1926, 1.0
    %v1936 = vadd.f32 %v1928, 1.0
    %v1937 = vrcp.pop %v1929
    %v1938 = vmul.f32 1.0, %v1937
    %v1939 = vrcp.pop %v1930
    %v1940 = vmul.f32 1.0, %v1939
    %v1941 = vrcp.pop %v1931
    %v1942 = vmul.f32 1.0, %v1941
    %v1943 = vrcp.pop %v1932
    %v1944 = vmul.f32 1.0, %v1943
    %v1945 = vrcp.pop %v1933
    %v1946 = vmul.f32 1.0, %v1945
    %v1947 = vrcp.pop %v1934
    %v1948 = vmul.f32 1.0, %v1947
    %v1949 = vrcp.pop %v1935
    %v1950 = vmul.f32 1.0, %v1949
    %v1951 = vrcp.pop %v1936
    %v1952 = vmul.f32 1.0, %v1951
    %v1953 = vxor.u32 %v1874, 2147483648
    %v1954 = vxor.u32 %v1878, 2147483648
    %v1955 = vxor.u32 %v1882, 2147483648
    %v1956 = vxor.u32 %v1886, 2147483648
    %v1957 = vxor.u32 %v1890, 2147483648
    %v1958 = vxor.u32 %v1894, 2147483648
    %v1959 = vxor.u32 %v1898, 2147483648
    %v1960 = vxor.u32 %v1902, 2147483648
    %v1961 = vmul.f32 %v1953, 1.442695
    %v1962 = vpow.pop %v1961
    %v1963 = vmul.f32 %v1954, 1.442695
    %v1964 = vpow.pop %v1963
    %v1965 = vmul.f32 %v1955, 1.442695
    %v1966 = vpow.pop %v1965
    %v1967 = vmul.f32 %v1956, 1.442695
    %v1968 = vpow.pop %v1967
    %v1969 = vmul.f32 %v1957, 1.442695
    %v1970 = vpow.pop %v1969
    %v1971 = vmul.f32 %v1958, 1.442695
    %v1972 = vpow.pop %v1971
    %v1973 = vmul.f32 %v1959, 1.442695
    %v1974 = vpow.pop %v1973
    %v1975 = vmul.f32 %v1960, 1.442695
    %v1976 = vpow.pop %v1975
    %v1977 = vadd.f32 %v1962, 1.0
    %v1978 = vadd.f32 %v1964, 1.0
    %v1979 = vadd.f32 %v1966, 1.0
    %v1980 = vadd.f32 %v1968, 1.0
    %v1981 = vadd.f32 %v1970, 1.0
    %v1982 = vadd.f32 %v1972, 1.0
    %v1983 = vadd.f32 %v1974, 1.0
    %v1984 = vadd.f32 %v1976, 1.0
    %v1985 = vrcp.pop %v1977
    %v1986 = vmul.f32 1.0, %v1985
    %v1987 = vrcp.pop %v1978
    %v1988 = vmul.f32 1.0, %v1987
    %v1989 = vrcp.pop %v1979
    %v1990 = vmul.f32 1.0, %v1989
    %v1991 = vrcp.pop %v1980
    %v1992 = vmul.f32 1.0, %v1991
    %v1993 = vrcp.pop %v1981
    %v1994 = vmul.f32 1.0, %v1993
    %v1995 = vrcp.pop %v1982
    %v1996 = vmul.f32 1.0, %v1995
    %v1997 = vrcp.pop %v1983
    %v1998 = vmul.f32 1.0, %v1997
    %v1999 = vrcp.pop %v1984
    %v2000 = vmul.f32 1.0, %v1999
    %v2001 = vtanh.pop %v1875
    %v2002 = vtanh.pop %v1879
    %v2003 = vtanh.pop %v1883
    %v2004 = vtanh.pop %v1887
    %v2005 = vtanh.pop %v1891
    %v2006 = vtanh.pop %v1895
    %v2007 = vtanh.pop %v1899
    %v2008 = vtanh.pop %v1903
    %v2009 = vxor.u32 %v1876, 2147483648
    %v2010 = vxor.u32 %v1880, 2147483648
    %v2011 = vxor.u32 %v1884, 2147483648
    %v2012 = vxor.u32 %v1888, 2147483648
    %v2013 = vxor.u32 %v1892, 2147483648
    %v2014 = vxor.u32 %v1896, 2147483648
    %v2015 = vxor.u32 %v1900, 2147483648
    %v2016 = vxor.u32 %v1904, 2147483648
    %v2017 = vmul.f32 %v2009, 1.442695
    %v2018 = vpow.pop %v2017
    %v2019 = vmul.f32 %v2010, 1.442695
    %v2020 = vpow.pop %v2019
    %v2021 = vmul.f32 %v2011, 1.442695
    %v2022 = vpow.pop %v2021
    %v2023 = vmul.f32 %v2012, 1.442695
    %v2024 = vpow.pop %v2023
    %v2025 = vmul.f32 %v2013, 1.442695
    %v2026 = vpow.pop %v2025
    %v2027 = vmul.f32 %v2014, 1.442695
    %v2028 = vpow.pop %v2027
    %v2029 = vmul.f32 %v2015, 1.442695
    %v2030 = vpow.pop %v2029
    %v2031 = vmul.f32 %v2016, 1.442695
    %v2032 = vpow.pop %v2031
    %v2033 = vadd.f32 %v2018, 1.0
    %v2034 = vadd.f32 %v2020, 1.0
    %v2035 = vadd.f32 %v2022, 1.0
    %v2036 = vadd.f32 %v2024, 1.0
    %v2037 = vadd.f32 %v2026, 1.0
    %v2038 = vadd.f32 %v2028, 1.0
    %v2039 = vadd.f32 %v2030, 1.0
    %v2040 = vadd.f32 %v2032, 1.0
    %v2041 = vrcp.pop %v2033
    %v2042 = vmul.f32 1.0, %v2041
    %v2043 = vrcp.pop %v2034
    %v2044 = vmul.f32 1.0, %v2043
    %v2045 = vrcp.pop %v2035
    %v2046 = vmul.f32 1.0, %v2045
    %v2047 = vrcp.pop %v2036
    %v2048 = vmul.f32 1.0, %v2047
    %v2049 = vrcp.pop %v2037
    %v2050 = vmul.f32 1.0, %v2049
    %v2051 = vrcp.pop %v2038
    %v2052 = vmul.f32 1.0, %v2051
    %v2053 = vrcp.pop %v2039
    %v2054 = vmul.f32 1.0, %v2053
    %v2055 = vrcp.pop %v2040
    %v2056 = vmul.f32 1.0, %v2055
    %v2065 = vrot.slane %v1581, 7
    %v2066 = vrot.slane %v1582, 7
    %v2067 = vrot.slane %v1583, 7
    %v2068 = vrot.slane %v1584, 7
    %v2069 = vrot.slane %v1585, 7
    %v2070 = vrot.slane %v1586, 7
    %v2071 = vrot.slane %v1587, 7
    %v2072 = vrot.slane %v1588, 7
    %v2081 = vmul.f32 %v1986, %v2065
    %v2082 = vmul.f32 %v1988, %v2066
    %v2083 = vmul.f32 %v1990, %v2067
    %v2084 = vmul.f32 %v1992, %v2068
    %v2085 = vmul.f32 %v1994, %v2069
    %v2086 = vmul.f32 %v1996, %v2070
    %v2087 = vmul.f32 %v1998, %v2071
    %v2088 = vmul.f32 %v2000, %v2072
    %v2089 = vmul.f32 %v1938, %v2001
    %v2090 = vmul.f32 %v1940, %v2002
    %v2091 = vmul.f32 %v1942, %v2003
    %v2092 = vmul.f32 %v1944, %v2004
    %v2093 = vmul.f32 %v1946, %v2005
    %v2094 = vmul.f32 %v1948, %v2006
    %v2095 = vmul.f32 %v1950, %v2007
    %v2096 = vmul.f32 %v1952, %v2008
    %v2097 = vadd.f32 %v2081, %v2089
    %v2098 = vadd.f32 %v2082, %v2090
    %v2099 = vadd.f32 %v2083, %v2091
    %v2100 = vadd.f32 %v2084, %v2092
    %v2101 = vadd.f32 %v2085, %v2093
    %v2102 = vadd.f32 %v2086, %v2094
    %v2103 = vadd.f32 %v2087, %v2095
    %v2104 = vadd.f32 %v2088, %v2096
    %v2105 = vtanh.pop %v2097
    %v2106 = vtanh.pop %v2098
    %v2107 = vtanh.pop %v2099
    %v2108 = vtanh.pop %v2100
    %v2109 = vtanh.pop %v2101
    %v2110 = vtanh.pop %v2102
    %v2111 = vtanh.pop %v2103
    %v2112 = vtanh.pop %v2104
    %v2113 = vmul.f32 %v2042, %v2105
    %v2114 = vmul.f32 %v2044, %v2106
    %v2115 = vmul.f32 %v2046, %v2107
    %v2116 = vmul.f32 %v2048, %v2108
    %v2117 = vmul.f32 %v2050, %v2109
    %v2118 = vmul.f32 %v2052, %v2110
    %v2119 = vmul.f32 %v2054, %v2111
    %v2120 = vmul.f32 %v2056, %v2112
    %v2121 = vpack.c.bf16 %v2113, %v2113
    %v2122 = vpack.c.bf16 %v2114, %v2114
    %v2123 = vpack.c.bf16 %v2115, %v2115
    %v2124 = vpack.c.bf16 %v2116, %v2116
    %v2125 = vpack.c.bf16 %v2117, %v2117
    %v2126 = vpack.c.bf16 %v2118, %v2118
    %v2127 = vpack.c.bf16 %v2119, %v2119
    %v2128 = vpack.c.bf16 %v2120, %v2120
    %v2137 = vunpack.c.l.b16 %v2121
    %v2138 = vunpack.c.l.b16 %v2122
    %v2139 = vunpack.c.l.b16 %v2123
    %v2140 = vunpack.c.l.b16 %v2124
    %v2141 = vunpack.c.l.b16 %v2125
    %v2142 = vunpack.c.l.b16 %v2126
    %v2143 = vunpack.c.l.b16 %v2127
    %v2144 = vunpack.c.l.b16 %v2128
    %v2145 = vpack.c.b16 %v2137, %v2137
    %v2146 = vpack.c.b16 %v2138, %v2138
    %v2147 = vpack.c.b16 %v2139, %v2139
    %v2148 = vpack.c.b16 %v2140, %v2140
    %v2149 = vpack.c.b16 %v2141, %v2141
    %v2150 = vpack.c.b16 %v2142, %v2142
    %v2151 = vpack.c.b16 %v2143, %v2143
    %v2152 = vpack.c.b16 %v2144, %v2144
    %v2153 = vunpack.c.l.b16 %v2145
    %v2154 = vunpack.c.l.b16 %v2146
    %v2155 = vunpack.c.l.b16 %v2147
    %v2156 = vunpack.c.l.b16 %v2148
    %v2157 = vunpack.c.l.b16 %v2149
    %v2158 = vunpack.c.l.b16 %v2150
    %v2159 = vunpack.c.l.b16 %v2151
    %v2160 = vunpack.c.l.b16 %v2152
    %v2161 = vrot.slane %v2153, 2
    %v2162 = vrot.slane %v2154, 1
    %v2163 = vsel %vm1124, %v2162, %v2161
    %v2164 = vsel %vm1127, %v2155, %v2163
    %v2165 = vrot.slane %v2156, 7
    %v2166 = vsel %vm1130, %v2165, %v2164
    %v2167 = vrot.slane %v2157, 6
    %v2168 = vsel %vm1133, %v2167, %v2166
    %v2169 = vrot.slane %v2158, 5
    %v2170 = vsel %vm1136, %v2169, %v2168
    %v2171 = vrot.slane %v2159, 4
    %v2172 = vsel %vm1139, %v2171, %v2170
    %v2173 = vrot.slane %v2160, 3
    %v2174 = vsel %vm1142, %v2173, %v2172
    %v2175 = vpack.c.b16 %v2174, %v2174
    %s2177 = scalar_lea.vmem [#allocation3], 8
    %2178 = vst [vmem:[%s2177] sm:$0xf] %v2175
    %v2179 = vld [vmem:[#allocation2] sm:$0x22]
    %v2180 = vld [vmem:[#allocation2 + $0x8] sm:$0x22]
    %v2181 = vld [vmem:[#allocation2 + $0x10] sm:$0x22]
    %v2182 = vld [vmem:[#allocation2 + $0x18] sm:$0x22]
    %v2183 = vld [vmem:[#allocation2 + $0x20] sm:$0x22]
    %v2184 = vld [vmem:[#allocation2 + $0x28] sm:$0x22]
    %v2185 = vld [vmem:[#allocation2 + $0x30] sm:$0x22]
    %v2186 = vld [vmem:[#allocation2 + $0x38] sm:$0x22]
    %v2187 = vld [vmem:[#allocation2 + $0x40] sm:$0x22]
    %v2188 = vld [vmem:[#allocation2 + $0x48] sm:$0x22]
    %v2189 = vld [vmem:[#allocation2 + $0x50] sm:$0x22]
    %v2190 = vld [vmem:[#allocation2 + $0x58] sm:$0x22]
    %v2191 = vld [vmem:[#allocation2 + $0x60] sm:$0x22]
    %v2192 = vld [vmem:[#allocation2 + $0x68] sm:$0x22]
    %v2193 = vld [vmem:[#allocation2 + $0x70] sm:$0x22]
    %v2194 = vld [vmem:[#allocation2 + $0x78] sm:$0x22]
    %v2195 = vunpack.c.l.bf16 %v2179
    %v2196 = vunpack.c.h.bf16 %v2179
    %v2197 = vunpack.c.l.bf16 %v2180
    %v2198 = vunpack.c.h.bf16 %v2180
    %v2199 = vunpack.c.l.bf16 %v2181
    %v2200 = vunpack.c.h.bf16 %v2181
    %v2201 = vunpack.c.l.bf16 %v2182
    %v2202 = vunpack.c.h.bf16 %v2182
    %v2203 = vunpack.c.l.bf16 %v2183
    %v2204 = vunpack.c.h.bf16 %v2183
    %v2205 = vunpack.c.l.bf16 %v2184
    %v2206 = vunpack.c.h.bf16 %v2184
    %v2207 = vunpack.c.l.bf16 %v2185
    %v2208 = vunpack.c.h.bf16 %v2185
    %v2209 = vunpack.c.l.bf16 %v2186
    %v2210 = vunpack.c.h.bf16 %v2186
    %v2211 = vunpack.c.l.bf16 %v2187
    %v2212 = vunpack.c.h.bf16 %v2187
    %v2213 = vunpack.c.l.bf16 %v2188
    %v2214 = vunpack.c.h.bf16 %v2188
    %v2215 = vunpack.c.l.bf16 %v2189
    %v2216 = vunpack.c.h.bf16 %v2189
    %v2217 = vunpack.c.l.bf16 %v2190
    %v2218 = vunpack.c.h.bf16 %v2190
    %v2219 = vunpack.c.l.bf16 %v2191
    %v2220 = vunpack.c.h.bf16 %v2191
    %v2221 = vunpack.c.l.bf16 %v2192
    %v2222 = vunpack.c.h.bf16 %v2192
    %v2223 = vunpack.c.l.bf16 %v2193
    %v2224 = vunpack.c.h.bf16 %v2193
    %v2225 = vunpack.c.l.bf16 %v2194
    %v2226 = vunpack.c.h.bf16 %v2194
    %v2227 = vrot.slane %v2137, 2
    %v2228 = vrot.slane %v2138, 1
    %v2229 = vsel %vm1124, %v2228, %v2227
    %v2230 = vsel %vm1127, %v2139, %v2229
    %v2231 = vrot.slane %v2140, 7
    %v2232 = vsel %vm1130, %v2231, %v2230
    %v2233 = vrot.slane %v2141, 6
    %v2234 = vsel %vm1133, %v2233, %v2232
    %v2235 = vrot.slane %v2142, 5
    %v2236 = vsel %vm1136, %v2235, %v2234
    %v2237 = vrot.slane %v2143, 4
    %v2238 = vsel %vm1139, %v2237, %v2236
    %v2239 = vrot.slane %v2144, 3
    %v2240 = vsel %vm1142, %v2239, %v2238
    %v2241 = vpack.c.b16 %v2240, %v2240
    %2243 = vmatprep.subr.bf16.mxu0 %v650
    %2244 = vmatpush1.bf16.msra.mxu0 %v649
    %2245 = vmatprep.subr.bf16.mxu0 %v654
    %2246 = vmatpush1.bf16.msra.mxu0 %v653
    %2247 = vmatprep.subr.bf16.mxu0 %v658
    %2248 = vmatpush1.bf16.msra.mxu0 %v657
    %2249 = vmatprep.subr.bf16.mxu0 %v662
    %2250 = vmatpush1.bf16.msra.mxu0 %v661
    %2251 = vmatprep.subr.bf16.mxu0 %v666
    %2252 = vmatpush1.bf16.msra.mxu0 %v665
    %2253 = vmatprep.subr.bf16.mxu0 %v670
    %2254 = vmatpush1.bf16.msra.mxu0 %v669
    %2255 = vmatprep.subr.bf16.mxu0 %v674
    %2256 = vmatpush1.bf16.msra.mxu0 %v673
    %2257 = vmatprep.subr.bf16.mxu0 %v678
    %2258 = vmatpush1.bf16.msra.mxu0 %v677
    %2259 = vmatprep.subr.bf16.mxu0 0
    %2260 = vmatpush1.bf16.msra.mxu0 0
    %2261 = vmatprep.subr.bf16.mxu0 0
    %2262 = vmatpush1.bf16.msra.mxu0 0
    %2263 = vmatprep.subr.bf16.mxu0 0
    %2264 = vmatpush1.bf16.msra.mxu0 0
    %2265 = vmatprep.subr.bf16.mxu0 0
    %2266 = vmatpush1.bf16.msra.mxu0 0
    %2267 = vmatprep.subr.bf16.mxu0 0
    %2268 = vmatpush1.bf16.msra.mxu0 0
    %2269 = vmatprep.subr.bf16.mxu0 0
    %2270 = vmatpush1.bf16.msra.mxu0 0
    %2271 = vmatprep.subr.bf16.mxu0 0
    %2272 = vmatpush1.bf16.msra.mxu0 0
    %2273 = vmatprep.subr.bf16.mxu0 0
    %2274 = vmatpush1.bf16.msra.mxu0 0
    %2275 = vmatprep.mubr.bf16.mxu0 0
    %2276 = vmatmul.mubr.bf16.gmra.mrb[0].mxu0 %v2241
    %v2277 = vpop.f32.mrb[0].mxu0
    %v2278 = vadd.f32 0.0, %v2277
    %v2279 = vpop.f32.mrb[0].mxu0
    %v2280 = vadd.f32 0.0, %v2279
    %v2281 = vpop.f32.mrb[0].mxu0
    %v2282 = vpop.f32.mrb[0].mxu0
    %2283 = vdwg.mxu0
    %2284 = vmatprep.subr.bf16.mxu0 %v652
    %2285 = vmatpush1.bf16.msra.mxu0 %v651
    %2286 = vmatprep.subr.bf16.mxu0 %v656
    %2287 = vmatpush1.bf16.msra.mxu0 %v655
    %2288 = vmatprep.subr.bf16.mxu0 %v660
    %2289 = vmatpush1.bf16.msra.mxu0 %v659
    %2290 = vmatprep.subr.bf16.mxu0 %v664
    %2291 = vmatpush1.bf16.msra.mxu0 %v663
    %2292 = vmatprep.subr.bf16.mxu0 %v668
    %2293 = vmatpush1.bf16.msra.mxu0 %v667
    %2294 = vmatprep.subr.bf16.mxu0 %v672
    %2295 = vmatpush1.bf16.msra.mxu0 %v671
    %2296 = vmatprep.subr.bf16.mxu0 %v676
    %2297 = vmatpush1.bf16.msra.mxu0 %v675
    %2298 = vmatprep.subr.bf16.mxu0 %v680
    %2299 = vmatpush1.bf16.msra.mxu0 %v679
    %2300 = vmatprep.subr.bf16.mxu0 0
    %2301 = vmatpush1.bf16.msra.mxu0 0
    %2302 = vmatprep.subr.bf16.mxu0 0
    %2303 = vmatpush1.bf16.msra.mxu0 0
    %2304 = vmatprep.subr.bf16.mxu0 0
    %2305 = vmatpush1.bf16.msra.mxu0 0
    %2306 = vmatprep.subr.bf16.mxu0 0
    %2307 = vmatpush1.bf16.msra.mxu0 0
    %2308 = vmatprep.subr.bf16.mxu0 0
    %2309 = vmatpush1.bf16.msra.mxu0 0
    %2310 = vmatprep.subr.bf16.mxu0 0
    %2311 = vmatpush1.bf16.msra.mxu0 0
    %2312 = vmatprep.subr.bf16.mxu0 0
    %2313 = vmatpush1.bf16.msra.mxu0 0
    %2314 = vmatprep.subr.bf16.mxu0 0
    %2315 = vmatpush1.bf16.msra.mxu0 0
    %2316 = vmatprep.mubr.bf16.mxu0 0
    %2317 = vmatmul.mubr.bf16.gmra.mrb[0].mxu0 %v2241
    %v2318 = vpop.f32.mrb[0].mxu0
    %v2319 = vadd.f32 0.0, %v2318
    %v2320 = vpop.f32.mrb[0].mxu0
    %v2321 = vadd.f32 0.0, %v2320
    %v2322 = vpop.f32.mrb[0].mxu0
    %v2323 = vpop.f32.mrb[0].mxu0
    %2324 = vdwg.mxu0
    %v2329 = vrot.slane %v2278, 5
    %v2330 = vrot.slane %v2280, 5
    %v2331 = vrot.slane %v2319, 5
    %v2332 = vrot.slane %v2321, 5
    %v2333 = vrot.slane %v2278, 6
    %v2334 = vrot.slane %v2280, 6
    %v2335 = vrot.slane %v2319, 6
    %v2336 = vrot.slane %v2321, 6
    %v2337 = vrot.slane %v2278, 7
    %v2338 = vrot.slane %v2280, 7
    %v2339 = vrot.slane %v2319, 7
    %v2340 = vrot.slane %v2321, 7
    %v2341 = vrot.slane %v2278, 1
    %v2342 = vrot.slane %v2280, 1
    %v2343 = vrot.slane %v2319, 1
    %v2344 = vrot.slane %v2321, 1
    %v2345 = vrot.slane %v2278, 2
    %v2346 = vrot.slane %v2280, 2
    %v2347 = vrot.slane %v2319, 2
    %v2348 = vrot.slane %v2321, 2
    %v2349 = vrot.slane %v2278, 3
    %v2350 = vrot.slane %v2280, 3
    %v2351 = vrot.slane %v2319, 3
    %v2352 = vrot.slane %v2321, 3
    %v2353 = vrot.slane %v2278, 4
    %v2354 = vrot.slane %v2280, 4
    %v2355 = vrot.slane %v2319, 4
    %v2356 = vrot.slane %v2321, 4
    %v2389 = vadd.f32 %v2195, %v2329
    %v2390 = vadd.f32 %v2196, %v2330
    %v2391 = vadd.f32 %v2197, %v2331
    %v2392 = vadd.f32 %v2198, %v2332
    %v2393 = vadd.f32 %v2199, %v2333
    %v2394 = vadd.f32 %v2200, %v2334
    %v2395 = vadd.f32 %v2201, %v2335
    %v2396 = vadd.f32 %v2202, %v2336
    %v2397 = vadd.f32 %v2203, %v2337
    %v2398 = vadd.f32 %v2204, %v2338
    %v2399 = vadd.f32 %v2205, %v2339
    %v2400 = vadd.f32 %v2206, %v2340
    %v2401 = vadd.f32 %v2207, %v2278
    %v2402 = vadd.f32 %v2208, %v2280
    %v2403 = vadd.f32 %v2209, %v2319
    %v2404 = vadd.f32 %v2210, %v2321
    %v2405 = vadd.f32 %v2211, %v2341
    %v2406 = vadd.f32 %v2212, %v2342
    %v2407 = vadd.f32 %v2213, %v2343
    %v2408 = vadd.f32 %v2214, %v2344
    %v2409 = vadd.f32 %v2215, %v2345
    %v2410 = vadd.f32 %v2216, %v2346
    %v2411 = vadd.f32 %v2217, %v2347
    %v2412 = vadd.f32 %v2218, %v2348
    %v2413 = vadd.f32 %v2219, %v2349
    %v2414 = vadd.f32 %v2220, %v2350
    %v2415 = vadd.f32 %v2221, %v2351
    %v2416 = vadd.f32 %v2222, %v2352
    %v2417 = vadd.f32 %v2223, %v2353
    %v2418 = vadd.f32 %v2224, %v2354
    %v2419 = vadd.f32 %v2225, %v2355
    %v2420 = vadd.f32 %v2226, %v2356
    %v2421 = vxor.u32 %v2389, 2147483648
    %v2422 = vxor.u32 %v2393, 2147483648
    %v2423 = vxor.u32 %v2397, 2147483648
    %v2424 = vxor.u32 %v2401, 2147483648
    %v2425 = vxor.u32 %v2405, 2147483648
    %v2426 = vxor.u32 %v2409, 2147483648
    %v2427 = vxor.u32 %v2413, 2147483648
    %v2428 = vxor.u32 %v2417, 2147483648
    %v2429 = vmul.f32 %v2421, 1.442695
    %v2430 = vpow.pop %v2429
    %v2431 = vmul.f32 %v2422, 1.442695
    %v2432 = vpow.pop %v2431
    %v2433 = vmul.f32 %v2423, 1.442695
    %v2434 = vpow.pop %v2433
    %v2435 = vmul.f32 %v2424, 1.442695
    %v2436 = vpow.pop %v2435
    %v2437 = vmul.f32 %v2425, 1.442695
    %v2438 = vpow.pop %v2437
    %v2439 = vmul.f32 %v2426, 1.442695
    %v2440 = vpow.pop %v2439
    %v2441 = vmul.f32 %v2427, 1.442695
    %v2442 = vpow.pop %v2441
    %v2443 = vmul.f32 %v2428, 1.442695
    %v2444 = vpow.pop %v2443
    %v2445 = vadd.f32 %v2430, 1.0
    %v2446 = vadd.f32 %v2432, 1.0
    %v2447 = vadd.f32 %v2434, 1.0
    %v2448 = vadd.f32 %v2436, 1.0
    %v2449 = vadd.f32 %v2438, 1.0
    %v2450 = vadd.f32 %v2440, 1.0
    %v2451 = vadd.f32 %v2442, 1.0
    %v2452 = vadd.f32 %v2444, 1.0
    %v2453 = vrcp.pop %v2445
    %v2454 = vmul.f32 1.0, %v2453
    %v2455 = vrcp.pop %v2446
    %v2456 = vmul.f32 1.0, %v2455
    %v2457 = vrcp.pop %v2447
    %v2458 = vmul.f32 1.0, %v2457
    %v2459 = vrcp.pop %v2448
    %v2460 = vmul.f32 1.0, %v2459
    %v2461 = vrcp.pop %v2449
    %v2462 = vmul.f32 1.0, %v2461
    %v2463 = vrcp.pop %v2450
    %v2464 = vmul.f32 1.0, %v2463
    %v2465 = vrcp.pop %v2451
    %v2466 = vmul.f32 1.0, %v2465
    %v2467 = vrcp.pop %v2452
    %v2468 = vmul.f32 1.0, %v2467
    %v2469 = vxor.u32 %v2390, 2147483648
    %v2470 = vxor.u32 %v2394, 2147483648
    %v2471 = vxor.u32 %v2398, 2147483648
    %v2472 = vxor.u32 %v2402, 2147483648
    %v2473 = vxor.u32 %v2406, 2147483648
    %v2474 = vxor.u32 %v2410, 2147483648
    %v2475 = vxor.u32 %v2414, 2147483648
    %v2476 = vxor.u32 %v2418, 2147483648
    %v2477 = vmul.f32 %v2469, 1.442695
    %v2478 = vpow.pop %v2477
    %v2479 = vmul.f32 %v2470, 1.442695
    %v2480 = vpow.pop %v2479
    %v2481 = vmul.f32 %v2471, 1.442695
    %v2482 = vpow.pop %v2481
    %v2483 = vmul.f32 %v2472, 1.442695
    %v2484 = vpow.pop %v2483
    %v2485 = vmul.f32 %v2473, 1.442695
    %v2486 = vpow.pop %v2485
    %v2487 = vmul.f32 %v2474, 1.442695
    %v2488 = vpow.pop %v2487
    %v2489 = vmul.f32 %v2475, 1.442695
    %v2490 = vpow.pop %v2489
    %v2491 = vmul.f32 %v2476, 1.442695
    %v2492 = vpow.pop %v2491
    %v2493 = vadd.f32 %v2478, 1.0
    %v2494 = vadd.f32 %v2480, 1.0
    %v2495 = vadd.f32 %v2482, 1.0
    %v2496 = vadd.f32 %v2484, 1.0
    %v2497 = vadd.f32 %v2486, 1.0
    %v2498 = vadd.f32 %v2488, 1.0
    %v2499 = vadd.f32 %v2490, 1.0
    %v2500 = vadd.f32 %v2492, 1.0
    %v2501 = vrcp.pop %v2493
    %v2502 = vmul.f32 1.0, %v2501
    %v2503 = vrcp.pop %v2494
    %v2504 = vmul.f32 1.0, %v2503
    %v2505 = vrcp.pop %v2495
    %v2506 = vmul.f32 1.0, %v2505
    %v2507 = vrcp.pop %v2496
    %v2508 = vmul.f32 1.0, %v2507
    %v2509 = vrcp.pop %v2497
    %v2510 = vmul.f32 1.0, %v2509
    %v2511 = vrcp.pop %v2498
    %v2512 = vmul.f32 1.0, %v2511
    %v2513 = vrcp.pop %v2499
    %v2514 = vmul.f32 1.0, %v2513
    %v2515 = vrcp.pop %v2500
    %v2516 = vmul.f32 1.0, %v2515
    %v2517 = vtanh.pop %v2391
    %v2518 = vtanh.pop %v2395
    %v2519 = vtanh.pop %v2399
    %v2520 = vtanh.pop %v2403
    %v2521 = vtanh.pop %v2407
    %v2522 = vtanh.pop %v2411
    %v2523 = vtanh.pop %v2415
    %v2524 = vtanh.pop %v2419
    %v2525 = vxor.u32 %v2392, 2147483648
    %v2526 = vxor.u32 %v2396, 2147483648
    %v2527 = vxor.u32 %v2400, 2147483648
    %v2528 = vxor.u32 %v2404, 2147483648
    %v2529 = vxor.u32 %v2408, 2147483648
    %v2530 = vxor.u32 %v2412, 2147483648
    %v2531 = vxor.u32 %v2416, 2147483648
    %v2532 = vxor.u32 %v2420, 2147483648
    %v2533 = vmul.f32 %v2525, 1.442695
    %v2534 = vpow.pop %v2533
    %v2535 = vmul.f32 %v2526, 1.442695
    %v2536 = vpow.pop %v2535
    %v2537 = vmul.f32 %v2527, 1.442695
    %v2538 = vpow.pop %v2537
    %v2539 = vmul.f32 %v2528, 1.442695
    %v2540 = vpow.pop %v2539
    %v2541 = vmul.f32 %v2529, 1.442695
    %v2542 = vpow.pop %v2541
    %v2543 = vmul.f32 %v2530, 1.442695
    %v2544 = vpow.pop %v2543
    %v2545 = vmul.f32 %v2531, 1.442695
    %v2546 = vpow.pop %v2545
    %v2547 = vmul.f32 %v2532, 1.442695
    %v2548 = vpow.pop %v2547
    %v2549 = vadd.f32 %v2534, 1.0
    %v2550 = vadd.f32 %v2536, 1.0
    %v2551 = vadd.f32 %v2538, 1.0
    %v2552 = vadd.f32 %v2540, 1.0
    %v2553 = vadd.f32 %v2542, 1.0
    %v2554 = vadd.f32 %v2544, 1.0
    %v2555 = vadd.f32 %v2546, 1.0
    %v2556 = vadd.f32 %v2548, 1.0
    %v2557 = vrcp.pop %v2549
    %v2558 = vmul.f32 1.0, %v2557
    %v2559 = vrcp.pop %v2550
    %v2560 = vmul.f32 1.0, %v2559
    %v2561 = vrcp.pop %v2551
    %v2562 = vmul.f32 1.0, %v2561
    %v2563 = vrcp.pop %v2552
    %v2564 = vmul.f32 1.0, %v2563
    %v2565 = vrcp.pop %v2553
    %v2566 = vmul.f32 1.0, %v2565
    %v2567 = vrcp.pop %v2554
    %v2568 = vmul.f32 1.0, %v2567
    %v2569 = vrcp.pop %v2555
    %v2570 = vmul.f32 1.0, %v2569
    %v2571 = vrcp.pop %v2556
    %v2572 = vmul.f32 1.0, %v2571
    %v2581 = vrot.slane %v2097, 7
    %v2582 = vrot.slane %v2098, 7
    %v2583 = vrot.slane %v2099, 7
    %v2584 = vrot.slane %v2100, 7
    %v2585 = vrot.slane %v2101, 7
    %v2586 = vrot.slane %v2102, 7
    %v2587 = vrot.slane %v2103, 7
    %v2588 = vrot.slane %v2104, 7
    %v2597 = vmul.f32 %v2502, %v2581
    %v2598 = vmul.f32 %v2504, %v2582
    %v2599 = vmul.f32 %v2506, %v2583
    %v2600 = vmul.f32 %v2508, %v2584
    %v2601 = vmul.f32 %v2510, %v2585
    %v2602 = vmul.f32 %v2512, %v2586
    %v2603 = vmul.f32 %v2514, %v2587
    %v2604 = vmul.f32 %v2516, %v2588
    %v2605 = vmul.f32 %v2454, %v2517
    %v2606 = vmul.f32 %v2456, %v2518
    %v2607 = vmul.f32 %v2458, %v2519
    %v2608 = vmul.f32 %v2460, %v2520
    %v2609 = vmul.f32 %v2462, %v2521
    %v2610 = vmul.f32 %v2464, %v2522
    %v2611 = vmul.f32 %v2466, %v2523
    %v2612 = vmul.f32 %v2468, %v2524
    %v2613 = vadd.f32 %v2597, %v2605
    %v2614 = vadd.f32 %v2598, %v2606
    %v2615 = vadd.f32 %v2599, %v2607
    %v2616 = vadd.f32 %v2600, %v2608
    %v2617 = vadd.f32 %v2601, %v2609
    %v2618 = vadd.f32 %v2602, %v2610
    %v2619 = vadd.f32 %v2603, %v2611
    %v2620 = vadd.f32 %v2604, %v2612
    %v2621 = vtanh.pop %v2613
    %v2622 = vtanh.pop %v2614
    %v2623 = vtanh.pop %v2615
    %v2624 = vtanh.pop %v2616
    %v2625 = vtanh.pop %v2617
    %v2626 = vtanh.pop %v2618
    %v2627 = vtanh.pop %v2619
    %v2628 = vtanh.pop %v2620
    %v2629 = vmul.f32 %v2558, %v2621
    %v2630 = vmul.f32 %v2560, %v2622
    %v2631 = vmul.f32 %v2562, %v2623
    %v2632 = vmul.f32 %v2564, %v2624
    %v2633 = vmul.f32 %v2566, %v2625
    %v2634 = vmul.f32 %v2568, %v2626
    %v2635 = vmul.f32 %v2570, %v2627
    %v2636 = vmul.f32 %v2572, %v2628
    %v2637 = vpack.c.bf16 %v2629, %v2629
    %v2638 = vpack.c.bf16 %v2630, %v2630
    %v2639 = vpack.c.bf16 %v2631, %v2631
    %v2640 = vpack.c.bf16 %v2632, %v2632
    %v2641 = vpack.c.bf16 %v2633, %v2633
    %v2642 = vpack.c.bf16 %v2634, %v2634
    %v2643 = vpack.c.bf16 %v2635, %v2635
    %v2644 = vpack.c.bf16 %v2636, %v2636
    %v2653 = vunpack.c.l.b16 %v2637
    %v2654 = vunpack.c.l.b16 %v2638
    %v2655 = vunpack.c.l.b16 %v2639
    %v2656 = vunpack.c.l.b16 %v2640
    %v2657 = vunpack.c.l.b16 %v2641
    %v2658 = vunpack.c.l.b16 %v2642
    %v2659 = vunpack.c.l.b16 %v2643
    %v2660 = vunpack.c.l.b16 %v2644
    %v2661 = vpack.c.b16 %v2653, %v2653
    %v2662 = vpack.c.b16 %v2654, %v2654
    %v2663 = vpack.c.b16 %v2655, %v2655
    %v2664 = vpack.c.b16 %v2656, %v2656
    %v2665 = vpack.c.b16 %v2657, %v2657
    %v2666 = vpack.c.b16 %v2658, %v2658
    %v2667 = vpack.c.b16 %v2659, %v2659
    %v2668 = vpack.c.b16 %v2660, %v2660
    %v2669 = vunpack.c.l.b16 %v2661
    %v2670 = vunpack.c.l.b16 %v2662
    %v2671 = vunpack.c.l.b16 %v2663
    %v2672 = vunpack.c.l.b16 %v2664
    %v2673 = vunpack.c.l.b16 %v2665
    %v2674 = vunpack.c.l.b16 %v2666
    %v2675 = vunpack.c.l.b16 %v2667
    %v2676 = vunpack.c.l.b16 %v2668
    %v2677 = vrot.slane %v2669, 3
    %v2678 = vrot.slane %v2670, 2
    %v2679 = vsel %vm1124, %v2678, %v2677
    %v2680 = vrot.slane %v2671, 1
    %v2681 = vsel %vm1127, %v2680, %v2679
    %v2682 = vsel %vm1130, %v2672, %v2681
    %v2683 = vrot.slane %v2673, 7
    %v2684 = vsel %vm1133, %v2683, %v2682
    %v2685 = vrot.slane %v2674, 6
    %v2686 = vsel %vm1136, %v2685, %v2684
    %v2687 = vrot.slane %v2675, 5
    %v2688 = vsel %vm1139, %v2687, %v2686
    %v2689 = vrot.slane %v2676, 4
    %v2690 = vsel %vm1142, %v2689, %v2688
    %v2691 = vpack.c.b16 %v2690, %v2690
    %s2693 = scalar_lea.vmem [#allocation3], 12
    %2694 = vst [vmem:[%s2693] sm:$0xf] %v2691
    %v2695 = vld [vmem:[#allocation2] sm:$0x44]
    %v2696 = vld [vmem:[#allocation2 + $0x8] sm:$0x44]
    %v2697 = vld [vmem:[#allocation2 + $0x10] sm:$0x44]
    %v2698 = vld [vmem:[#allocation2 + $0x18] sm:$0x44]
    %v2699 = vld [vmem:[#allocation2 + $0x20] sm:$0x44]
    %v2700 = vld [vmem:[#allocation2 + $0x28] sm:$0x44]
    %v2701 = vld [vmem:[#allocation2 + $0x30] sm:$0x44]
    %v2702 = vld [vmem:[#allocation2 + $0x38] sm:$0x44]
    %v2703 = vld [vmem:[#allocation2 + $0x40] sm:$0x44]
    %v2704 = vld [vmem:[#allocation2 + $0x48] sm:$0x44]
    %v2705 = vld [vmem:[#allocation2 + $0x50] sm:$0x44]
    %v2706 = vld [vmem:[#allocation2 + $0x58] sm:$0x44]
    %v2707 = vld [vmem:[#allocation2 + $0x60] sm:$0x44]
    %v2708 = vld [vmem:[#allocation2 + $0x68] sm:$0x44]
    %v2709 = vld [vmem:[#allocation2 + $0x70] sm:$0x44]
    %v2710 = vld [vmem:[#allocation2 + $0x78] sm:$0x44]
    %v2711 = vunpack.c.l.bf16 %v2695
    %v2712 = vunpack.c.h.bf16 %v2695
    %v2713 = vunpack.c.l.bf16 %v2696
    %v2714 = vunpack.c.h.bf16 %v2696
    %v2715 = vunpack.c.l.bf16 %v2697
    %v2716 = vunpack.c.h.bf16 %v2697
    %v2717 = vunpack.c.l.bf16 %v2698
    %v2718 = vunpack.c.h.bf16 %v2698
    %v2719 = vunpack.c.l.bf16 %v2699
    %v2720 = vunpack.c.h.bf16 %v2699
    %v2721 = vunpack.c.l.bf16 %v2700
    %v2722 = vunpack.c.h.bf16 %v2700
    %v2723 = vunpack.c.l.bf16 %v2701
    %v2724 = vunpack.c.h.bf16 %v2701
    %v2725 = vunpack.c.l.bf16 %v2702
    %v2726 = vunpack.c.h.bf16 %v2702
    %v2727 = vunpack.c.l.bf16 %v2703
    %v2728 = vunpack.c.h.bf16 %v2703
    %v2729 = vunpack.c.l.bf16 %v2704
    %v2730 = vunpack.c.h.bf16 %v2704
    %v2731 = vunpack.c.l.bf16 %v2705
    %v2732 = vunpack.c.h.bf16 %v2705
    %v2733 = vunpack.c.l.bf16 %v2706
    %v2734 = vunpack.c.h.bf16 %v2706
    %v2735 = vunpack.c.l.bf16 %v2707
    %v2736 = vunpack.c.h.bf16 %v2707
    %v2737 = vunpack.c.l.bf16 %v2708
    %v2738 = vunpack.c.h.bf16 %v2708
    %v2739 = vunpack.c.l.bf16 %v2709
    %v2740 = vunpack.c.h.bf16 %v2709
    %v2741 = vunpack.c.l.bf16 %v2710
    %v2742 = vunpack.c.h.bf16 %v2710
    %v2743 = vrot.slane %v2653, 3
    %v2744 = vrot.slane %v2654, 2
    %v2745 = vsel %vm1124, %v2744, %v2743
    %v2746 = vrot.slane %v2655, 1
    %v2747 = vsel %vm1127, %v2746, %v2745
    %v2748 = vsel %vm1130, %v2656, %v2747
    %v2749 = vrot.slane %v2657, 7
    %v2750 = vsel %vm1133, %v2749, %v2748
    %v2751 = vrot.slane %v2658, 6
    %v2752 = vsel %vm1136, %v2751, %v2750
    %v2753 = vrot.slane %v2659, 5
    %v2754 = vsel %vm1139, %v2753, %v2752
    %v2755 = vrot.slane %v2660, 4
    %v2756 = vsel %vm1142, %v2755, %v2754
    %v2757 = vpack.c.b16 %v2756, %v2756
    %2759 = vmatprep.subr.bf16.mxu0 %v650
    %2760 = vmatpush1.bf16.msra.mxu0 %v649
    %2761 = vmatprep.subr.bf16.mxu0 %v654
    %2762 = vmatpush1.bf16.msra.mxu0 %v653
    %2763 = vmatprep.subr.bf16.mxu0 %v658
    %2764 = vmatpush1.bf16.msra.mxu0 %v657
    %2765 = vmatprep.subr.bf16.mxu0 %v662
    %2766 = vmatpush1.bf16.msra.mxu0 %v661
    %2767 = vmatprep.subr.bf16.mxu0 %v666
    %2768 = vmatpush1.bf16.msra.mxu0 %v665
    %2769 = vmatprep.subr.bf16.mxu0 %v670
    %2770 = vmatpush1.bf16.msra.mxu0 %v669
    %2771 = vmatprep.subr.bf16.mxu0 %v674
    %2772 = vmatpush1.bf16.msra.mxu0 %v673
    %2773 = vmatprep.subr.bf16.mxu0 %v678
    %2774 = vmatpush1.bf16.msra.mxu0 %v677
    %2775 = vmatprep.subr.bf16.mxu0 0
    %2776 = vmatpush1.bf16.msra.mxu0 0
    %2777 = vmatprep.subr.bf16.mxu0 0
    %2778 = vmatpush1.bf16.msra.mxu0 0
    %2779 = vmatprep.subr.bf16.mxu0 0
    %2780 = vmatpush1.bf16.msra.mxu0 0
    %2781 = vmatprep.subr.bf16.mxu0 0
    %2782 = vmatpush1.bf16.msra.mxu0 0
    %2783 = vmatprep.subr.bf16.mxu0 0
    %2784 = vmatpush1.bf16.msra.mxu0 0
    %2785 = vmatprep.subr.bf16.mxu0 0
    %2786 = vmatpush1.bf16.msra.mxu0 0
    %2787 = vmatprep.subr.bf16.mxu0 0
    %2788 = vmatpush1.bf16.msra.mxu0 0
    %2789 = vmatprep.subr.bf16.mxu0 0
    %2790 = vmatpush1.bf16.msra.mxu0 0
    %2791 = vmatprep.mubr.bf16.mxu0 0
    %2792 = vmatmul.mubr.bf16.gmra.mrb[0].mxu0 %v2757
    %v2793 = vpop.f32.mrb[0].mxu0
    %v2794 = vadd.f32 0.0, %v2793
    %v2795 = vpop.f32.mrb[0].mxu0
    %v2796 = vadd.f32 0.0, %v2795
    %v2797 = vpop.f32.mrb[0].mxu0
    %v2798 = vpop.f32.mrb[0].mxu0
    %2799 = vdwg.mxu0
    %2800 = vmatprep.subr.bf16.mxu0 %v652
    %2801 = vmatpush1.bf16.msra.mxu0 %v651
    %2802 = vmatprep.subr.bf16.mxu0 %v656
    %2803 = vmatpush1.bf16.msra.mxu0 %v655
    %2804 = vmatprep.subr.bf16.mxu0 %v660
    %2805 = vmatpush1.bf16.msra.mxu0 %v659
    %2806 = vmatprep.subr.bf16.mxu0 %v664
    %2807 = vmatpush1.bf16.msra.mxu0 %v663
    %2808 = vmatprep.subr.bf16.mxu0 %v668
    %2809 = vmatpush1.bf16.msra.mxu0 %v667
    %2810 = vmatprep.subr.bf16.mxu0 %v672
    %2811 = vmatpush1.bf16.msra.mxu0 %v671
    %2812 = vmatprep.subr.bf16.mxu0 %v676
    %2813 = vmatpush1.bf16.msra.mxu0 %v675
    %2814 = vmatprep.subr.bf16.mxu0 %v680
    %2815 = vmatpush1.bf16.msra.mxu0 %v679
    %2816 = vmatprep.subr.bf16.mxu0 0
    %2817 = vmatpush1.bf16.msra.mxu0 0
    %2818 = vmatprep.subr.bf16.mxu0 0
    %2819 = vmatpush1.bf16.msra.mxu0 0
    %2820 = vmatprep.subr.bf16.mxu0 0
    %2821 = vmatpush1.bf16.msra.mxu0 0
    %2822 = vmatprep.subr.bf16.mxu0 0
    %2823 = vmatpush1.bf16.msra.mxu0 0
    %2824 = vmatprep.subr.bf16.mxu0 0
    %2825 = vmatpush1.bf16.msra.mxu0 0
    %2826 = vmatprep.subr.bf16.mxu0 0
    %2827 = vmatpush1.bf16.msra.mxu0 0
    %2828 = vmatprep.subr.bf16.mxu0 0
    %2829 = vmatpush1.bf16.msra.mxu0 0
    %2830 = vmatprep.subr.bf16.mxu0 0
    %2831 = vmatpush1.bf16.msra.mxu0 0
    %2832 = vmatprep.mubr.bf16.mxu0 0
    %2833 = vmatmul.mubr.bf16.gmra.mrb[0].mxu0 %v2757
    %v2834 = vpop.f32.mrb[0].mxu0
    %v2835 = vadd.f32 0.0, %v2834
    %v2836 = vpop.f32.mrb[0].mxu0
    %v2837 = vadd.f32 0.0, %v2836
    %v2838 = vpop.f32.mrb[0].mxu0
    %v2839 = vpop.f32.mrb[0].mxu0
    %2840 = vdwg.mxu0
    %v2845 = vrot.slane %v2794, 4
    %v2846 = vrot.slane %v2796, 4
    %v2847 = vrot.slane %v2835, 4
    %v2848 = vrot.slane %v2837, 4
    %v2849 = vrot.slane %v2794, 5
    %v2850 = vrot.slane %v2796, 5
    %v2851 = vrot.slane %v2835, 5
    %v2852 = vrot.slane %v2837, 5
    %v2853 = vrot.slane %v2794, 6
    %v2854 = vrot.slane %v2796, 6
    %v2855 = vrot.slane %v2835, 6
    %v2856 = vrot.slane %v2837, 6
    %v2857 = vrot.slane %v2794, 7
    %v2858 = vrot.slane %v2796, 7
    %v2859 = vrot.slane %v2835, 7
    %v2860 = vrot.slane %v2837, 7
    %v2861 = vrot.slane %v2794, 1
    %v2862 = vrot.slane %v2796, 1
    %v2863 = vrot.slane %v2835, 1
    %v2864 = vrot.slane %v2837, 1
    %v2865 = vrot.slane %v2794, 2
    %v2866 = vrot.slane %v2796, 2
    %v2867 = vrot.slane %v2835, 2
    %v2868 = vrot.slane %v2837, 2
    %v2869 = vrot.slane %v2794, 3
    %v2870 = vrot.slane %v2796, 3
    %v2871 = vrot.slane %v2835, 3
    %v2872 = vrot.slane %v2837, 3
    %v2905 = vadd.f32 %v2711, %v2845
    %v2906 = vadd.f32 %v2712, %v2846
    %v2907 = vadd.f32 %v2713, %v2847
    %v2908 = vadd.f32 %v2714, %v2848
    %v2909 = vadd.f32 %v2715, %v2849
    %v2910 = vadd.f32 %v2716, %v2850
    %v2911 = vadd.f32 %v2717, %v2851
    %v2912 = vadd.f32 %v2718, %v2852
    %v2913 = vadd.f32 %v2719, %v2853
    %v2914 = vadd.f32 %v2720, %v2854
    %v2915 = vadd.f32 %v2721, %v2855
    %v2916 = vadd.f32 %v2722, %v2856
    %v2917 = vadd.f32 %v2723, %v2857
    %v2918 = vadd.f32 %v2724, %v2858
    %v2919 = vadd.f32 %v2725, %v2859
    %v2920 = vadd.f32 %v2726, %v2860
    %v2921 = vadd.f32 %v2727, %v2794
    %v2922 = vadd.f32 %v2728, %v2796
    %v2923 = vadd.f32 %v2729, %v2835
    %v2924 = vadd.f32 %v2730, %v2837
    %v2925 = vadd.f32 %v2731, %v2861
    %v2926 = vadd.f32 %v2732, %v2862
    %v2927 = vadd.f32 %v2733, %v2863
    %v2928 = vadd.f32 %v2734, %v2864
    %v2929 = vadd.f32 %v2735, %v2865
    %v2930 = vadd.f32 %v2736, %v2866
    %v2931 = vadd.f32 %v2737, %v2867
    %v2932 = vadd.f32 %v2738, %v2868
    %v2933 = vadd.f32 %v2739, %v2869
    %v2934 = vadd.f32 %v2740, %v2870
    %v2935 = vadd.f32 %v2741, %v2871
    %v2936 = vadd.f32 %v2742, %v2872
    %v2937 = vxor.u32 %v2905, 2147483648
    %v2938 = vxor.u32 %v2909, 2147483648
    %v2939 = vxor.u32 %v2913, 2147483648
    %v2940 = vxor.u32 %v2917, 2147483648
    %v2941 = vxor.u32 %v2921, 2147483648
    %v2942 = vxor.u32 %v2925, 2147483648
    %v2943 = vxor.u32 %v2929, 2147483648
    %v2944 = vxor.u32 %v2933, 2147483648
    %v2945 = vmul.f32 %v2937, 1.442695
    %v2946 = vpow.pop %v2945
    %v2947 = vmul.f32 %v2938, 1.442695
    %v2948 = vpow.pop %v2947
    %v2949 = vmul.f32 %v2939, 1.442695
    %v2950 = vpow.pop %v2949
    %v2951 = vmul.f32 %v2940, 1.442695
    %v2952 = vpow.pop %v2951
    %v2953 = vmul.f32 %v2941, 1.442695
    %v2954 = vpow.pop %v2953
    %v2955 = vmul.f32 %v2942, 1.442695
    %v2956 = vpow.pop %v2955
    %v2957 = vmul.f32 %v2943, 1.442695
    %v2958 = vpow.pop %v2957
    %v2959 = vmul.f32 %v2944, 1.442695
    %v2960 = vpow.pop %v2959
    %v2961 = vadd.f32 %v2946, 1.0
    %v2962 = vadd.f32 %v2948, 1.0
    %v2963 = vadd.f32 %v2950, 1.0
    %v2964 = vadd.f32 %v2952, 1.0
    %v2965 = vadd.f32 %v2954, 1.0
    %v2966 = vadd.f32 %v2956, 1.0
    %v2967 = vadd.f32 %v2958, 1.0
    %v2968 = vadd.f32 %v2960, 1.0
    %v2969 = vrcp.pop %v2961
    %v2970 = vmul.f32 1.0, %v2969
    %v2971 = vrcp.pop %v2962
    %v2972 = vmul.f32 1.0, %v2971
    %v2973 = vrcp.pop %v2963
    %v2974 = vmul.f32 1.0, %v2973
    %v2975 = vrcp.pop %v2964
    %v2976 = vmul.f32 1.0, %v2975
    %v2977 = vrcp.pop %v2965
    %v2978 = vmul.f32 1.0, %v2977
    %v2979 = vrcp.pop %v2966
    %v2980 = vmul.f32 1.0, %v2979
    %v2981 = vrcp.pop %v2967
    %v2982 = vmul.f32 1.0, %v2981
    %v2983 = vrcp.pop %v2968
    %v2984 = vmul.f32 1.0, %v2983
    %v2985 = vxor.u32 %v2906, 2147483648
    %v2986 = vxor.u32 %v2910, 2147483648
    %v2987 = vxor.u32 %v2914, 2147483648
    %v2988 = vxor.u32 %v2918, 2147483648
    %v2989 = vxor.u32 %v2922, 2147483648
    %v2990 = vxor.u32 %v2926, 2147483648
    %v2991 = vxor.u32 %v2930, 2147483648
    %v2992 = vxor.u32 %v2934, 2147483648
    %v2993 = vmul.f32 %v2985, 1.442695
    %v2994 = vpow.pop %v2993
    %v2995 = vmul.f32 %v2986, 1.442695
    %v2996 = vpow.pop %v2995
    %v2997 = vmul.f32 %v2987, 1.442695
    %v2998 = vpow.pop %v2997
    %v2999 = vmul.f32 %v2988, 1.442695
    %v3000 = vpow.pop %v2999
    %v3001 = vmul.f32 %v2989, 1.442695
    %v3002 = vpow.pop %v3001
    %v3003 = vmul.f32 %v2990, 1.442695
    %v3004 = vpow.pop %v3003
    %v3005 = vmul.f32 %v2991, 1.442695
    %v3006 = vpow.pop %v3005
    %v3007 = vmul.f32 %v2992, 1.442695
    %v3008 = vpow.pop %v3007
    %v3009 = vadd.f32 %v2994, 1.0
    %v3010 = vadd.f32 %v2996, 1.0
    %v3011 = vadd.f32 %v2998, 1.0
    %v3012 = vadd.f32 %v3000, 1.0
    %v3013 = vadd.f32 %v3002, 1.0
    %v3014 = vadd.f32 %v3004, 1.0
    %v3015 = vadd.f32 %v3006, 1.0
    %v3016 = vadd.f32 %v3008, 1.0
    %v3017 = vrcp.pop %v3009
    %v3018 = vmul.f32 1.0, %v3017
    %v3019 = vrcp.pop %v3010
    %v3020 = vmul.f32 1.0, %v3019
    %v3021 = vrcp.pop %v3011
    %v3022 = vmul.f32 1.0, %v3021
    %v3023 = vrcp.pop %v3012
    %v3024 = vmul.f32 1.0, %v3023
    %v3025 = vrcp.pop %v3013
    %v3026 = vmul.f32 1.0, %v3025
    %v3027 = vrcp.pop %v3014
    %v3028 = vmul.f32 1.0, %v3027
    %v3029 = vrcp.pop %v3015
    %v3030 = vmul.f32 1.0, %v3029
    %v3031 = vrcp.pop %v3016
    %v3032 = vmul.f32 1.0, %v3031
    %v3033 = vtanh.pop %v2907
    %v3034 = vtanh.pop %v2911
    %v3035 = vtanh.pop %v2915
    %v3036 = vtanh.pop %v2919
    %v3037 = vtanh.pop %v2923
    %v3038 = vtanh.pop %v2927
    %v3039 = vtanh.pop %v2931
    %v3040 = vtanh.pop %v2935
    %v3041 = vxor.u32 %v2908, 2147483648
    %v3042 = vxor.u32 %v2912, 2147483648
    %v3043 = vxor.u32 %v2916, 2147483648
    %v3044 = vxor.u32 %v2920, 2147483648
    %v3045 = vxor.u32 %v2924, 2147483648
    %v3046 = vxor.u32 %v2928, 2147483648
    %v3047 = vxor.u32 %v2932, 2147483648
    %v3048 = vxor.u32 %v2936, 2147483648
    %v3049 = vmul.f32 %v3041, 1.442695
    %v3050 = vpow.pop %v3049
    %v3051 = vmul.f32 %v3042, 1.442695
    %v3052 = vpow.pop %v3051
    %v3053 = vmul.f32 %v3043, 1.442695
    %v3054 = vpow.pop %v3053
    %v3055 = vmul.f32 %v3044, 1.442695
    %v3056 = vpow.pop %v3055
    %v3057 = vmul.f32 %v3045, 1.442695
    %v3058 = vpow.pop %v3057
    %v3059 = vmul.f32 %v3046, 1.442695
    %v3060 = vpow.pop %v3059
    %v3061 = vmul.f32 %v3047, 1.442695
    %v3062 = vpow.pop %v3061
    %v3063 = vmul.f32 %v3048, 1.442695
    %v3064 = vpow.pop %v3063
    %v3065 = vadd.f32 %v3050, 1.0
    %v3066 = vadd.f32 %v3052, 1.0
    %v3067 = vadd.f32 %v3054, 1.0
    %v3068 = vadd.f32 %v3056, 1.0
    %v3069 = vadd.f32 %v3058, 1.0
    %v3070 = vadd.f32 %v3060, 1.0
    %v3071 = vadd.f32 %v3062, 1.0
    %v3072 = vadd.f32 %v3064, 1.0
    %v3073 = vrcp.pop %v3065
    %v3074 = vmul.f32 1.0, %v3073
    %v3075 = vrcp.pop %v3066
    %v3076 = vmul.f32 1.0, %v3075
    %v3077 = vrcp.pop %v3067
    %v3078 = vmul.f32 1.0, %v3077
    %v3079 = vrcp.pop %v3068
    %v3080 = vmul.f32 1.0, %v3079
    %v3081 = vrcp.pop %v3069
    %v3082 = vmul.f32 1.0, %v3081
    %v3083 = vrcp.pop %v3070
    %v3084 = vmul.f32 1.0, %v3083
    %v3085 = vrcp.pop %v3071
    %v3086 = vmul.f32 1.0, %v3085
    %v3087 = vrcp.pop %v3072
    %v3088 = vmul.f32 1.0, %v3087
    %v3097 = vrot.slane %v2613, 7
    %v3098 = vrot.slane %v2614, 7
    %v3099 = vrot.slane %v2615, 7
    %v3100 = vrot.slane %v2616, 7
    %v3101 = vrot.slane %v2617, 7
    %v3102 = vrot.slane %v2618, 7
    %v3103 = vrot.slane %v2619, 7
    %v3104 = vrot.slane %v2620, 7
    %v3113 = vmul.f32 %v3018, %v3097
    %v3114 = vmul.f32 %v3020, %v3098
    %v3115 = vmul.f32 %v3022, %v3099
    %v3116 = vmul.f32 %v3024, %v3100
    %v3117 = vmul.f32 %v3026, %v3101
    %v3118 = vmul.f32 %v3028, %v3102
    %v3119 = vmul.f32 %v3030, %v3103
    %v3120 = vmul.f32 %v3032, %v3104
    %v3121 = vmul.f32 %v2970, %v3033
    %v3122 = vmul.f32 %v2972, %v3034
    %v3123 = vmul.f32 %v2974, %v3035
    %v3124 = vmul.f32 %v2976, %v3036
    %v3125 = vmul.f32 %v2978, %v3037
    %v3126 = vmul.f32 %v2980, %v3038
    %v3127 = vmul.f32 %v2982, %v3039
    %v3128 = vmul.f32 %v2984, %v3040
    %v3129 = vadd.f32 %v3113, %v3121
    %v3130 = vadd.f32 %v3114, %v3122
    %v3131 = vadd.f32 %v3115, %v3123
    %v3132 = vadd.f32 %v3116, %v3124
    %v3133 = vadd.f32 %v3117, %v3125
    %v3134 = vadd.f32 %v3118, %v3126
    %v3135 = vadd.f32 %v3119, %v3127
    %v3136 = vadd.f32 %v3120, %v3128
    %v3137 = vtanh.pop %v3129
    %v3138 = vtanh.pop %v3130
    %v3139 = vtanh.pop %v3131
    %v3140 = vtanh.pop %v3132
    %v3141 = vtanh.pop %v3133
    %v3142 = vtanh.pop %v3134
    %v3143 = vtanh.pop %v3135
    %v3144 = vtanh.pop %v3136
    %v3145 = vmul.f32 %v3074, %v3137
    %v3146 = vmul.f32 %v3076, %v3138
    %v3147 = vmul.f32 %v3078, %v3139
    %v3148 = vmul.f32 %v3080, %v3140
    %v3149 = vmul.f32 %v3082, %v3141
    %v3150 = vmul.f32 %v3084, %v3142
    %v3151 = vmul.f32 %v3086, %v3143
    %v3152 = vmul.f32 %v3088, %v3144
    %v3153 = vpack.c.bf16 %v3145, %v3145
    %v3154 = vpack.c.bf16 %v3146, %v3146
    %v3155 = vpack.c.bf16 %v3147, %v3147
    %v3156 = vpack.c.bf16 %v3148, %v3148
    %v3157 = vpack.c.bf16 %v3149, %v3149
    %v3158 = vpack.c.bf16 %v3150, %v3150
    %v3159 = vpack.c.bf16 %v3151, %v3151
    %v3160 = vpack.c.bf16 %v3152, %v3152
    %v3169 = vunpack.c.l.b16 %v3153
    %v3170 = vunpack.c.l.b16 %v3154
    %v3171 = vunpack.c.l.b16 %v3155
    %v3172 = vunpack.c.l.b16 %v3156
    %v3173 = vunpack.c.l.b16 %v3157
    %v3174 = vunpack.c.l.b16 %v3158
    %v3175 = vunpack.c.l.b16 %v3159
    %v3176 = vunpack.c.l.b16 %v3160
    %v3177 = vpack.c.b16 %v3169, %v3169
    %v3178 = vpack.c.b16 %v3170, %v3170
    %v3179 = vpack.c.b16 %v3171, %v3171
    %v3180 = vpack.c.b16 %v3172, %v3172
    %v3181 = vpack.c.b16 %v3173, %v3173
    %v3182 = vpack.c.b16 %v3174, %v3174
    %v3183 = vpack.c.b16 %v3175, %v3175
    %v3184 = vpack.c.b16 %v3176, %v3176
    %v3185 = vunpack.c.l.b16 %v3177
    %v3186 = vunpack.c.l.b16 %v3178
    %v3187 = vunpack.c.l.b16 %v3179
    %v3188 = vunpack.c.l.b16 %v3180
    %v3189 = vunpack.c.l.b16 %v3181
    %v3190 = vunpack.c.l.b16 %v3182
    %v3191 = vunpack.c.l.b16 %v3183
    %v3192 = vunpack.c.l.b16 %v3184
    %v3193 = vrot.slane %v3185, 4
    %v3194 = vrot.slane %v3186, 3
    %v3195 = vsel %vm1124, %v3194, %v3193
    %v3196 = vrot.slane %v3187, 2
    %v3197 = vsel %vm1127, %v3196, %v3195
    %v3198 = vrot.slane %v3188, 1
    %v3199 = vsel %vm1130, %v3198, %v3197
    %v3200 = vsel %vm1133, %v3189, %v3199
    %v3201 = vrot.slane %v3190, 7
    %v3202 = vsel %vm1136, %v3201, %v3200
    %v3203 = vrot.slane %v3191, 6
    %v3204 = vsel %vm1139, %v3203, %v3202
    %v3205 = vrot.slane %v3192, 5
    %v3206 = vsel %vm1142, %v3205, %v3204
    %v3207 = vpack.c.b16 %v3206, %v3206
    %s3209 = scalar_lea.vmem [#allocation3], 16
    %3210 = vst [vmem:[%s3209] sm:$0xf] %v3207
    %v3211 = vld [vmem:[#allocation2] sm:$0x44]
    %v3212 = vld [vmem:[#allocation2 + $0x8] sm:$0x44]
    %v3213 = vld [vmem:[#allocation2 + $0x10] sm:$0x44]
    %v3214 = vld [vmem:[#allocation2 + $0x18] sm:$0x44]
    %v3215 = vld [vmem:[#allocation2 + $0x20] sm:$0x44]
    %v3216 = vld [vmem:[#allocation2 + $0x28] sm:$0x44]
    %v3217 = vld [vmem:[#allocation2 + $0x30] sm:$0x44]
    %v3218 = vld [vmem:[#allocation2 + $0x38] sm:$0x44]
    %v3219 = vld [vmem:[#allocation2 + $0x40] sm:$0x44]
    %v3220 = vld [vmem:[#allocation2 + $0x48] sm:$0x44]
    %v3221 = vld [vmem:[#allocation2 + $0x50] sm:$0x44]
    %v3222 = vld [vmem:[#allocation2 + $0x58] sm:$0x44]
    %v3223 = vld [vmem:[#allocation2 + $0x60] sm:$0x44]
    %v3224 = vld [vmem:[#allocation2 + $0x68] sm:$0x44]
    %v3225 = vld [vmem:[#allocation2 + $0x70] sm:$0x44]
    %v3226 = vld [vmem:[#allocation2 + $0x78] sm:$0x44]
    %v3227 = vunpack.c.l.bf16 %v3211
    %v3228 = vunpack.c.h.bf16 %v3211
    %v3229 = vunpack.c.l.bf16 %v3212
    %v3230 = vunpack.c.h.bf16 %v3212
    %v3231 = vunpack.c.l.bf16 %v3213
    %v3232 = vunpack.c.h.bf16 %v3213
    %v3233 = vunpack.c.l.bf16 %v3214
    %v3234 = vunpack.c.h.bf16 %v3214
    %v3235 = vunpack.c.l.bf16 %v3215
    %v3236 = vunpack.c.h.bf16 %v3215
    %v3237 = vunpack.c.l.bf16 %v3216
    %v3238 = vunpack.c.h.bf16 %v3216
    %v3239 = vunpack.c.l.bf16 %v3217
    %v3240 = vunpack.c.h.bf16 %v3217
    %v3241 = vunpack.c.l.bf16 %v3218
    %v3242 = vunpack.c.h.bf16 %v3218
    %v3243 = vunpack.c.l.bf16 %v3219
    %v3244 = vunpack.c.h.bf16 %v3219
    %v3245 = vunpack.c.l.bf16 %v3220
    %v3246 = vunpack.c.h.bf16 %v3220
    %v3247 = vunpack.c.l.bf16 %v3221
    %v3248 = vunpack.c.h.bf16 %v3221
    %v3249 = vunpack.c.l.bf16 %v3222
    %v3250 = vunpack.c.h.bf16 %v3222
    %v3251 = vunpack.c.l.bf16 %v3223
    %v3252 = vunpack.c.h.bf16 %v3223
    %v3253 = vunpack.c.l.bf16 %v3224
    %v3254 = vunpack.c.h.bf16 %v3224
    %v3255 = vunpack.c.l.bf16 %v3225
    %v3256 = vunpack.c.h.bf16 %v3225
    %v3257 = vunpack.c.l.bf16 %v3226
    %v3258 = vunpack.c.h.bf16 %v3226
    %v3259 = vrot.slane %v3169, 4
    %v3260 = vrot.slane %v3170, 3
    %v3261 = vsel %vm1124, %v3260, %v3259
    %v3262 = vrot.slane %v3171, 2
    %v3263 = vsel %vm1127, %v3262, %v3261
    %v3264 = vrot.slane %v3172, 1
    %v3265 = vsel %vm1130, %v3264, %v3263
    %v3266 = vsel %vm1133, %v3173, %v3265
    %v3267 = vrot.slane %v3174, 7
    %v3268 = vsel %vm1136, %v3267, %v3266
    %v3269 = vrot.slane %v3175, 6
    %v3270 = vsel %vm1139, %v3269, %v3268
    %v3271 = vrot.slane %v3176, 5
    %v3272 = vsel %vm1142, %v3271, %v3270
    %v3273 = vpack.c.b16 %v3272, %v3272
    %3275 = vmatprep.subr.bf16.mxu0 %v650
    %3276 = vmatpush1.bf16.msra.mxu0 %v649
    %3277 = vmatprep.subr.bf16.mxu0 %v654
    %3278 = vmatpush1.bf16.msra.mxu0 %v653
    %3279 = vmatprep.subr.bf16.mxu0 %v658
    %3280 = vmatpush1.bf16.msra.mxu0 %v657
    %3281 = vmatprep.subr.bf16.mxu0 %v662
    %3282 = vmatpush1.bf16.msra.mxu0 %v661
    %3283 = vmatprep.subr.bf16.mxu0 %v666
    %3284 = vmatpush1.bf16.msra.mxu0 %v665
    %3285 = vmatprep.subr.bf16.mxu0 %v670
    %3286 = vmatpush1.bf16.msra.mxu0 %v669
    %3287 = vmatprep.subr.bf16.mxu0 %v674
    %3288 = vmatpush1.bf16.msra.mxu0 %v673
    %3289 = vmatprep.subr.bf16.mxu0 %v678
    %3290 = vmatpush1.bf16.msra.mxu0 %v677
    %3291 = vmatprep.subr.bf16.mxu0 0
    %3292 = vmatpush1.bf16.msra.mxu0 0
    %3293 = vmatprep.subr.bf16.mxu0 0
    %3294 = vmatpush1.bf16.msra.mxu0 0
    %3295 = vmatprep.subr.bf16.mxu0 0
    %3296 = vmatpush1.bf16.msra.mxu0 0
    %3297 = vmatprep.subr.bf16.mxu0 0
    %3298 = vmatpush1.bf16.msra.mxu0 0
    %3299 = vmatprep.subr.bf16.mxu0 0
    %3300 = vmatpush1.bf16.msra.mxu0 0
    %3301 = vmatprep.subr.bf16.mxu0 0
    %3302 = vmatpush1.bf16.msra.mxu0 0
    %3303 = vmatprep.subr.bf16.mxu0 0
    %3304 = vmatpush1.bf16.msra.mxu0 0
    %3305 = vmatprep.subr.bf16.mxu0 0
    %3306 = vmatpush1.bf16.msra.mxu0 0
    %3307 = vmatprep.mubr.bf16.mxu0 0
    %3308 = vmatmul.mubr.bf16.gmra.mrb[0].mxu0 %v3273
    %v3309 = vpop.f32.mrb[0].mxu0
    %v3310 = vadd.f32 0.0, %v3309
    %v3311 = vpop.f32.mrb[0].mxu0
    %v3312 = vadd.f32 0.0, %v3311
    %v3313 = vpop.f32.mrb[0].mxu0
    %v3314 = vpop.f32.mrb[0].mxu0
    %3315 = vdwg.mxu0
    %3316 = vmatprep.subr.bf16.mxu0 %v652
    %3317 = vmatpush1.bf16.msra.mxu0 %v651
    %3318 = vmatprep.subr.bf16.mxu0 %v656
    %3319 = vmatpush1.bf16.msra.mxu0 %v655
    %3320 = vmatprep.subr.bf16.mxu0 %v660
    %3321 = vmatpush1.bf16.msra.mxu0 %v659
    %3322 = vmatprep.subr.bf16.mxu0 %v664
    %3323 = vmatpush1.bf16.msra.mxu0 %v663
    %3324 = vmatprep.subr.bf16.mxu0 %v668
    %3325 = vmatpush1.bf16.msra.mxu0 %v667
    %3326 = vmatprep.subr.bf16.mxu0 %v672
    %3327 = vmatpush1.bf16.msra.mxu0 %v671
    %3328 = vmatprep.subr.bf16.mxu0 %v676
    %3329 = vmatpush1.bf16.msra.mxu0 %v675
    %3330 = vmatprep.subr.bf16.mxu0 %v680
    %3331 = vmatpush1.bf16.msra.mxu0 %v679
    %3332 = vmatprep.subr.bf16.mxu0 0
    %3333 = vmatpush1.bf16.msra.mxu0 0
    %3334 = vmatprep.subr.bf16.mxu0 0
    %3335 = vmatpush1.bf16.msra.mxu0 0
    %3336 = vmatprep.subr.bf16.mxu0 0
    %3337 = vmatpush1.bf16.msra.mxu0 0
    %3338 = vmatprep.subr.bf16.mxu0 0
    %3339 = vmatpush1.bf16.msra.mxu0 0
    %3340 = vmatprep.subr.bf16.mxu0 0
    %3341 = vmatpush1.bf16.msra.mxu0 0
    %3342 = vmatprep.subr.bf16.mxu0 0
    %3343 = vmatpush1.bf16.msra.mxu0 0
    %3344 = vmatprep.subr.bf16.mxu0 0
    %3345 = vmatpush1.bf16.msra.mxu0 0
    %3346 = vmatprep.subr.bf16.mxu0 0
    %3347 = vmatpush1.bf16.msra.mxu0 0
    %3348 = vmatprep.mubr.bf16.mxu0 0
    %3349 = vmatmul.mubr.bf16.gmra.mrb[0].mxu0 %v3273
    %v3350 = vpop.f32.mrb[0].mxu0
    %v3351 = vadd.f32 0.0, %v3350
    %v3352 = vpop.f32.mrb[0].mxu0
    %v3353 = vadd.f32 0.0, %v3352
    %v3354 = vpop.f32.mrb[0].mxu0
    %v3355 = vpop.f32.mrb[0].mxu0
    %3356 = vdwg.mxu0
    %v3361 = vrot.slane %v3310, 3
    %v3362 = vrot.slane %v3312, 3
    %v3363 = vrot.slane %v3351, 3
    %v3364 = vrot.slane %v3353, 3
    %v3365 = vrot.slane %v3310, 4
    %v3366 = vrot.slane %v3312, 4
    %v3367 = vrot.slane %v3351, 4
    %v3368 = vrot.slane %v3353, 4
    %v3369 = vrot.slane %v3310, 5
    %v3370 = vrot.slane %v3312, 5
    %v3371 = vrot.slane %v3351, 5
    %v3372 = vrot.slane %v3353, 5
    %v3373 = vrot.slane %v3310, 6
    %v3374 = vrot.slane %v3312, 6
    %v3375 = vrot.slane %v3351, 6
    %v3376 = vrot.slane %v3353, 6
    %v3377 = vrot.slane %v3310, 7
    %v3378 = vrot.slane %v3312, 7
    %v3379 = vrot.slane %v3351, 7
    %v3380 = vrot.slane %v3353, 7
    %v3381 = vrot.slane %v3310, 1
    %v3382 = vrot.slane %v3312, 1
    %v3383 = vrot.slane %v3351, 1
    %v3384 = vrot.slane %v3353, 1
    %v3385 = vrot.slane %v3310, 2
    %v3386 = vrot.slane %v3312, 2
    %v3387 = vrot.slane %v3351, 2
    %v3388 = vrot.slane %v3353, 2
    %v3421 = vadd.f32 %v3227, %v3361
    %v3422 = vadd.f32 %v3228, %v3362
    %v3423 = vadd.f32 %v3229, %v3363
    %v3424 = vadd.f32 %v3230, %v3364
    %v3425 = vadd.f32 %v3231, %v3365
    %v3426 = vadd.f32 %v3232, %v3366
    %v3427 = vadd.f32 %v3233, %v3367
    %v3428 = vadd.f32 %v3234, %v3368
    %v3429 = vadd.f32 %v3235, %v3369
    %v3430 = vadd.f32 %v3236, %v3370
    %v3431 = vadd.f32 %v3237, %v3371
    %v3432 = vadd.f32 %v3238, %v3372
    %v3433 = vadd.f32 %v3239, %v3373
    %v3434 = vadd.f32 %v3240, %v3374
    %v3435 = vadd.f32 %v3241, %v3375
    %v3436 = vadd.f32 %v3242, %v3376
    %v3437 = vadd.f32 %v3243, %v3377
    %v3438 = vadd.f32 %v3244, %v3378
    %v3439 = vadd.f32 %v3245, %v3379
    %v3440 = vadd.f32 %v3246, %v3380
    %v3441 = vadd.f32 %v3247, %v3310
    %v3442 = vadd.f32 %v3248, %v3312
    %v3443 = vadd.f32 %v3249, %v3351
    %v3444 = vadd.f32 %v3250, %v3353
    %v3445 = vadd.f32 %v3251, %v3381
    %v3446 = vadd.f32 %v3252, %v3382
    %v3447 = vadd.f32 %v3253, %v3383
    %v3448 = vadd.f32 %v3254, %v3384
    %v3449 = vadd.f32 %v3255, %v3385
    %v3450 = vadd.f32 %v3256, %v3386
    %v3451 = vadd.f32 %v3257, %v3387
    %v3452 = vadd.f32 %v3258, %v3388
    %v3453 = vxor.u32 %v3421, 2147483648
    %v3454 = vxor.u32 %v3425, 2147483648
    %v3455 = vxor.u32 %v3429, 2147483648
    %v3456 = vxor.u32 %v3433, 2147483648
    %v3457 = vxor.u32 %v3437, 2147483648
    %v3458 = vxor.u32 %v3441, 2147483648
    %v3459 = vxor.u32 %v3445, 2147483648
    %v3460 = vxor.u32 %v3449, 2147483648
    %v3461 = vmul.f32 %v3453, 1.442695
    %v3462 = vpow.pop %v3461
    %v3463 = vmul.f32 %v3454, 1.442695
    %v3464 = vpow.pop %v3463
    %v3465 = vmul.f32 %v3455, 1.442695
    %v3466 = vpow.pop %v3465
    %v3467 = vmul.f32 %v3456, 1.442695
    %v3468 = vpow.pop %v3467
    %v3469 = vmul.f32 %v3457, 1.442695
    %v3470 = vpow.pop %v3469
    %v3471 = vmul.f32 %v3458, 1.442695
    %v3472 = vpow.pop %v3471
    %v3473 = vmul.f32 %v3459, 1.442695
    %v3474 = vpow.pop %v3473
    %v3475 = vmul.f32 %v3460, 1.442695
    %v3476 = vpow.pop %v3475
    %v3477 = vadd.f32 %v3462, 1.0
    %v3478 = vadd.f32 %v3464, 1.0
    %v3479 = vadd.f32 %v3466, 1.0
    %v3480 = vadd.f32 %v3468, 1.0
    %v3481 = vadd.f32 %v3470, 1.0
    %v3482 = vadd.f32 %v3472, 1.0
    %v3483 = vadd.f32 %v3474, 1.0
    %v3484 = vadd.f32 %v3476, 1.0
    %v3485 = vrcp.pop %v3477
    %v3486 = vmul.f32 1.0, %v3485
    %v3487 = vrcp.pop %v3478
    %v3488 = vmul.f32 1.0, %v3487
    %v3489 = vrcp.pop %v3479
    %v3490 = vmul.f32 1.0, %v3489
    %v3491 = vrcp.pop %v3480
    %v3492 = vmul.f32 1.0, %v3491
    %v3493 = vrcp.pop %v3481
    %v3494 = vmul.f32 1.0, %v3493
    %v3495 = vrcp.pop %v3482
    %v3496 = vmul.f32 1.0, %v3495
    %v3497 = vrcp.pop %v3483
    %v3498 = vmul.f32 1.0, %v3497
    %v3499 = vrcp.pop %v3484
    %v3500 = vmul.f32 1.0, %v3499
    %v3501 = vxor.u32 %v3422, 2147483648
    %v3502 = vxor.u32 %v3426, 2147483648
    %v3503 = vxor.u32 %v3430, 2147483648
    %v3504 = vxor.u32 %v3434, 2147483648
    %v3505 = vxor.u32 %v3438, 2147483648
    %v3506 = vxor.u32 %v3442, 2147483648
    %v3507 = vxor.u32 %v3446, 2147483648
    %v3508 = vxor.u32 %v3450, 2147483648
    %v3509 = vmul.f32 %v3501, 1.442695
    %v3510 = vpow.pop %v3509
    %v3511 = vmul.f32 %v3502, 1.442695
    %v3512 = vpow.pop %v3511
    %v3513 = vmul.f32 %v3503, 1.442695
    %v3514 = vpow.pop %v3513
    %v3515 = vmul.f32 %v3504, 1.442695
    %v3516 = vpow.pop %v3515
    %v3517 = vmul.f32 %v3505, 1.442695
    %v3518 = vpow.pop %v3517
    %v3519 = vmul.f32 %v3506, 1.442695
    %v3520 = vpow.pop %v3519
    %v3521 = vmul.f32 %v3507, 1.442695
    %v3522 = vpow.pop %v3521
    %v3523 = vmul.f32 %v3508, 1.442695
    %v3524 = vpow.pop %v3523
    %v3525 = vadd.f32 %v3510, 1.0
    %v3526 = vadd.f32 %v3512, 1.0
    %v3527 = vadd.f32 %v3514, 1.0
    %v3528 = vadd.f32 %v3516, 1.0
    %v3529 = vadd.f32 %v3518, 1.0
    %v3530 = vadd.f32 %v3520, 1.0
    %v3531 = vadd.f32 %v3522, 1.0
    %v3532 = vadd.f32 %v3524, 1.0
    %v3533 = vrcp.pop %v3525
    %v3534 = vmul.f32 1.0, %v3533
    %v3535 = vrcp.pop %v3526
    %v3536 = vmul.f32 1.0, %v3535
    %v3537 = vrcp.pop %v3527
    %v3538 = vmul.f32 1.0, %v3537
    %v3539 = vrcp.pop %v3528
    %v3540 = vmul.f32 1.0, %v3539
    %v3541 = vrcp.pop %v3529
    %v3542 = vmul.f32 1.0, %v3541
    %v3543 = vrcp.pop %v3530
    %v3544 = vmul.f32 1.0, %v3543
    %v3545 = vrcp.pop %v3531
    %v3546 = vmul.f32 1.0, %v3545
    %v3547 = vrcp.pop %v3532
    %v3548 = vmul.f32 1.0, %v3547
    %v3549 = vtanh.pop %v3423
    %v3550 = vtanh.pop %v3427
    %v3551 = vtanh.pop %v3431
    %v3552 = vtanh.pop %v3435
    %v3553 = vtanh.pop %v3439
    %v3554 = vtanh.pop %v3443
    %v3555 = vtanh.pop %v3447
    %v3556 = vtanh.pop %v3451
    %v3557 = vxor.u32 %v3424, 2147483648
    %v3558 = vxor.u32 %v3428, 2147483648
    %v3559 = vxor.u32 %v3432, 2147483648
    %v3560 = vxor.u32 %v3436, 2147483648
    %v3561 = vxor.u32 %v3440, 2147483648
    %v3562 = vxor.u32 %v3444, 2147483648
    %v3563 = vxor.u32 %v3448, 2147483648
    %v3564 = vxor.u32 %v3452, 2147483648
    %v3565 = vmul.f32 %v3557, 1.442695
    %v3566 = vpow.pop %v3565
    %v3567 = vmul.f32 %v3558, 1.442695
    %v3568 = vpow.pop %v3567
    %v3569 = vmul.f32 %v3559, 1.442695
    %v3570 = vpow.pop %v3569
    %v3571 = vmul.f32 %v3560, 1.442695
    %v3572 = vpow.pop %v3571
    %v3573 = vmul.f32 %v3561, 1.442695
    %v3574 = vpow.pop %v3573
    %v3575 = vmul.f32 %v3562, 1.442695
    %v3576 = vpow.pop %v3575
    %v3577 = vmul.f32 %v3563, 1.442695
    %v3578 = vpow.pop %v3577
    %v3579 = vmul.f32 %v3564, 1.442695
    %v3580 = vpow.pop %v3579
    %v3581 = vadd.f32 %v3566, 1.0
    %v3582 = vadd.f32 %v3568, 1.0
    %v3583 = vadd.f32 %v3570, 1.0
    %v3584 = vadd.f32 %v3572, 1.0
    %v3585 = vadd.f32 %v3574, 1.0
    %v3586 = vadd.f32 %v3576, 1.0
    %v3587 = vadd.f32 %v3578, 1.0
    %v3588 = vadd.f32 %v3580, 1.0
    %v3589 = vrcp.pop %v3581
    %v3590 = vmul.f32 1.0, %v3589
    %v3591 = vrcp.pop %v3582
    %v3592 = vmul.f32 1.0, %v3591
    %v3593 = vrcp.pop %v3583
    %v3594 = vmul.f32 1.0, %v3593
    %v3595 = vrcp.pop %v3584
    %v3596 = vmul.f32 1.0, %v3595
    %v3597 = vrcp.pop %v3585
    %v3598 = vmul.f32 1.0, %v3597
    %v3599 = vrcp.pop %v3586
    %v3600 = vmul.f32 1.0, %v3599
    %v3601 = vrcp.pop %v3587
    %v3602 = vmul.f32 1.0, %v3601
    %v3603 = vrcp.pop %v3588
    %v3604 = vmul.f32 1.0, %v3603
    %v3613 = vrot.slane %v3129, 7
    %v3614 = vrot.slane %v3130, 7
    %v3615 = vrot.slane %v3131, 7
    %v3616 = vrot.slane %v3132, 7
    %v3617 = vrot.slane %v3133, 7
    %v3618 = vrot.slane %v3134, 7
    %v3619 = vrot.slane %v3135, 7
    %v3620 = vrot.slane %v3136, 7
    %v3629 = vmul.f32 %v3534, %v3613
    %v3630 = vmul.f32 %v3536, %v3614
    %v3631 = vmul.f32 %v3538, %v3615
    %v3632 = vmul.f32 %v3540, %v3616
    %v3633 = vmul.f32 %v3542, %v3617
    %v3634 = vmul.f32 %v3544, %v3618
    %v3635 = vmul.f32 %v3546, %v3619
    %v3636 = vmul.f32 %v3548, %v3620
    %v3637 = vmul.f32 %v3486, %v3549
    %v3638 = vmul.f32 %v3488, %v3550
    %v3639 = vmul.f32 %v3490, %v3551
    %v3640 = vmul.f32 %v3492, %v3552
    %v3641 = vmul.f32 %v3494, %v3553
    %v3642 = vmul.f32 %v3496, %v3554
    %v3643 = vmul.f32 %v3498, %v3555
    %v3644 = vmul.f32 %v3500, %v3556
    %v3645 = vadd.f32 %v3629, %v3637
    %v3646 = vadd.f32 %v3630, %v3638
    %v3647 = vadd.f32 %v3631, %v3639
    %v3648 = vadd.f32 %v3632, %v3640
    %v3649 = vadd.f32 %v3633, %v3641
    %v3650 = vadd.f32 %v3634, %v3642
    %v3651 = vadd.f32 %v3635, %v3643
    %v3652 = vadd.f32 %v3636, %v3644
    %v3653 = vtanh.pop %v3645
    %v3654 = vtanh.pop %v3646
    %v3655 = vtanh.pop %v3647
    %v3656 = vtanh.pop %v3648
    %v3657 = vtanh.pop %v3649
    %v3658 = vtanh.pop %v3650
    %v3659 = vtanh.pop %v3651
    %v3660 = vtanh.pop %v3652
    %v3661 = vmul.f32 %v3590, %v3653
    %v3662 = vmul.f32 %v3592, %v3654
    %v3663 = vmul.f32 %v3594, %v3655
    %v3664 = vmul.f32 %v3596, %v3656
    %v3665 = vmul.f32 %v3598, %v3657
    %v3666 = vmul.f32 %v3600, %v3658
    %v3667 = vmul.f32 %v3602, %v3659
    %v3668 = vmul.f32 %v3604, %v3660
    %v3669 = vpack.c.bf16 %v3661, %v3661
    %v3670 = vpack.c.bf16 %v3662, %v3662
    %v3671 = vpack.c.bf16 %v3663, %v3663
    %v3672 = vpack.c.bf16 %v3664, %v3664
    %v3673 = vpack.c.bf16 %v3665, %v3665
    %v3674 = vpack.c.bf16 %v3666, %v3666
    %v3675 = vpack.c.bf16 %v3667, %v3667
    %v3676 = vpack.c.bf16 %v3668, %v3668
    %v3685 = vunpack.c.l.b16 %v3669
    %v3686 = vunpack.c.l.b16 %v3670
    %v3687 = vunpack.c.l.b16 %v3671
    %v3688 = vunpack.c.l.b16 %v3672
    %v3689 = vunpack.c.l.b16 %v3673
    %v3690 = vunpack.c.l.b16 %v3674
    %v3691 = vunpack.c.l.b16 %v3675
    %v3692 = vunpack.c.l.b16 %v3676
    %v3693 = vpack.c.b16 %v3685, %v3685
    %v3694 = vpack.c.b16 %v3686, %v3686
    %v3695 = vpack.c.b16 %v3687, %v3687
    %v3696 = vpack.c.b16 %v3688, %v3688
    %v3697 = vpack.c.b16 %v3689, %v3689
    %v3698 = vpack.c.b16 %v3690, %v3690
    %v3699 = vpack.c.b16 %v3691, %v3691
    %v3700 = vpack.c.b16 %v3692, %v3692
    %v3701 = vunpack.c.l.b16 %v3693
    %v3702 = vunpack.c.l.b16 %v3694
    %v3703 = vunpack.c.l.b16 %v3695
    %v3704 = vunpack.c.l.b16 %v3696
    %v3705 = vunpack.c.l.b16 %v3697
    %v3706 = vunpack.c.l.b16 %v3698
    %v3707 = vunpack.c.l.b16 %v3699
    %v3708 = vunpack.c.l.b16 %v3700
    %v3709 = vrot.slane %v3701, 5
    %v3710 = vrot.slane %v3702, 4
    %v3711 = vsel %vm1124, %v3710, %v3709
    %v3712 = vrot.slane %v3703, 3
    %v3713 = vsel %vm1127, %v3712, %v3711
    %v3714 = vrot.slane %v3704, 2
    %v3715 = vsel %vm1130, %v3714, %v3713
    %v3716 = vrot.slane %v3705, 1
    %v3717 = vsel %vm1133, %v3716, %v3715
    %v3718 = vsel %vm1136, %v3706, %v3717
    %v3719 = vrot.slane %v3707, 7
    %v3720 = vsel %vm1139, %v3719, %v3718
    %v3721 = vrot.slane %v3708, 6
    %v3722 = vsel %vm1142, %v3721, %v3720
    %v3723 = vpack.c.b16 %v3722, %v3722
    %s3725 = scalar_lea.vmem [#allocation3], 20
    %3726 = vst [vmem:[%s3725] sm:$0xf] %v3723
    %v3727 = vld [vmem:[#allocation2] sm:$0x88]
    %v3728 = vld [vmem:[#allocation2 + $0x8] sm:$0x88]
    %v3729 = vld [vmem:[#allocation2 + $0x10] sm:$0x88]
    %v3730 = vld [vmem:[#allocation2 + $0x18] sm:$0x88]
    %v3731 = vld [vmem:[#allocation2 + $0x20] sm:$0x88]
    %v3732 = vld [vmem:[#allocation2 + $0x28] sm:$0x88]
    %v3733 = vld [vmem:[#allocation2 + $0x30] sm:$0x88]
    %v3734 = vld [vmem:[#allocation2 + $0x38] sm:$0x88]
    %v3735 = vld [vmem:[#allocation2 + $0x40] sm:$0x88]
    %v3736 = vld [vmem:[#allocation2 + $0x48] sm:$0x88]
    %v3737 = vld [vmem:[#allocation2 + $0x50] sm:$0x88]
    %v3738 = vld [vmem:[#allocation2 + $0x58] sm:$0x88]
    %v3739 = vld [vmem:[#allocation2 + $0x60] sm:$0x88]
    %v3740 = vld [vmem:[#allocation2 + $0x68] sm:$0x88]
    %v3741 = vld [vmem:[#allocation2 + $0x70] sm:$0x88]
    %v3742 = vld [vmem:[#allocation2 + $0x78] sm:$0x88]
    %v3743 = vunpack.c.l.bf16 %v3727
    %v3744 = vunpack.c.h.bf16 %v3727
    %v3745 = vunpack.c.l.bf16 %v3728
    %v3746 = vunpack.c.h.bf16 %v3728
    %v3747 = vunpack.c.l.bf16 %v3729
    %v3748 = vunpack.c.h.bf16 %v3729
    %v3749 = vunpack.c.l.bf16 %v3730
    %v3750 = vunpack.c.h.bf16 %v3730
    %v3751 = vunpack.c.l.bf16 %v3731
    %v3752 = vunpack.c.h.bf16 %v3731
    %v3753 = vunpack.c.l.bf16 %v3732
    %v3754 = vunpack.c.h.bf16 %v3732
    %v3755 = vunpack.c.l.bf16 %v3733
    %v3756 = vunpack.c.h.bf16 %v3733
    %v3757 = vunpack.c.l.bf16 %v3734
    %v3758 = vunpack.c.h.bf16 %v3734
    %v3759 = vunpack.c.l.bf16 %v3735
    %v3760 = vunpack.c.h.bf16 %v3735
    %v3761 = vunpack.c.l.bf16 %v3736
    %v3762 = vunpack.c.h.bf16 %v3736
    %v3763 = vunpack.c.l.bf16 %v3737
    %v3764 = vunpack.c.h.bf16 %v3737
    %v3765 = vunpack.c.l.bf16 %v3738
    %v3766 = vunpack.c.h.bf16 %v3738
    %v3767 = vunpack.c.l.bf16 %v3739
    %v3768 = vunpack.c.h.bf16 %v3739
    %v3769 = vunpack.c.l.bf16 %v3740
    %v3770 = vunpack.c.h.bf16 %v3740
    %v3771 = vunpack.c.l.bf16 %v3741
    %v3772 = vunpack.c.h.bf16 %v3741
    %v3773 = vunpack.c.l.bf16 %v3742
    %v3774 = vunpack.c.h.bf16 %v3742
    %v3775 = vrot.slane %v3685, 5
    %v3776 = vrot.slane %v3686, 4
    %v3777 = vsel %vm1124, %v3776, %v3775
    %v3778 = vrot.slane %v3687, 3
    %v3779 = vsel %vm1127, %v3778, %v3777
    %v3780 = vrot.slane %v3688, 2
    %v3781 = vsel %vm1130, %v3780, %v3779
    %v3782 = vrot.slane %v3689, 1
    %v3783 = vsel %vm1133, %v3782, %v3781
    %v3784 = vsel %vm1136, %v3690, %v3783
    %v3785 = vrot.slane %v3691, 7
    %v3786 = vsel %vm1139, %v3785, %v3784
    %v3787 = vrot.slane %v3692, 6
    %v3788 = vsel %vm1142, %v3787, %v3786
    %v3789 = vpack.c.b16 %v3788, %v3788
    %3791 = vmatprep.subr.bf16.mxu0 %v650
    %3792 = vmatpush1.bf16.msra.mxu0 %v649
    %3793 = vmatprep.subr.bf16.mxu0 %v654
    %3794 = vmatpush1.bf16.msra.mxu0 %v653
    %3795 = vmatprep.subr.bf16.mxu0 %v658
    %3796 = vmatpush1.bf16.msra.mxu0 %v657
    %3797 = vmatprep.subr.bf16.mxu0 %v662
    %3798 = vmatpush1.bf16.msra.mxu0 %v661
    %3799 = vmatprep.subr.bf16.mxu0 %v666
    %3800 = vmatpush1.bf16.msra.mxu0 %v665
    %3801 = vmatprep.subr.bf16.mxu0 %v670
    %3802 = vmatpush1.bf16.msra.mxu0 %v669
    %3803 = vmatprep.subr.bf16.mxu0 %v674
    %3804 = vmatpush1.bf16.msra.mxu0 %v673
    %3805 = vmatprep.subr.bf16.mxu0 %v678
    %3806 = vmatpush1.bf16.msra.mxu0 %v677
    %3807 = vmatprep.subr.bf16.mxu0 0
    %3808 = vmatpush1.bf16.msra.mxu0 0
    %3809 = vmatprep.subr.bf16.mxu0 0
    %3810 = vmatpush1.bf16.msra.mxu0 0
    %3811 = vmatprep.subr.bf16.mxu0 0
    %3812 = vmatpush1.bf16.msra.mxu0 0
    %3813 = vmatprep.subr.bf16.mxu0 0
    %3814 = vmatpush1.bf16.msra.mxu0 0
    %3815 = vmatprep.subr.bf16.mxu0 0
    %3816 = vmatpush1.bf16.msra.mxu0 0
    %3817 = vmatprep.subr.bf16.mxu0 0
    %3818 = vmatpush1.bf16.msra.mxu0 0
    %3819 = vmatprep.subr.bf16.mxu0 0
    %3820 = vmatpush1.bf16.msra.mxu0 0
    %3821 = vmatprep.subr.bf16.mxu0 0
    %3822 = vmatpush1.bf16.msra.mxu0 0
    %3823 = vmatprep.mubr.bf16.mxu0 0
    %3824 = vmatmul.mubr.bf16.gmra.mrb[0].mxu0 %v3789
    %v3825 = vpop.f32.mrb[0].mxu0
    %v3826 = vadd.f32 0.0, %v3825
    %v3827 = vpop.f32.mrb[0].mxu0
    %v3828 = vadd.f32 0.0, %v3827
    %v3829 = vpop.f32.mrb[0].mxu0
    %v3830 = vpop.f32.mrb[0].mxu0
    %3831 = vdwg.mxu0
    %3832 = vmatprep.subr.bf16.mxu0 %v652
    %3833 = vmatpush1.bf16.msra.mxu0 %v651
    %3834 = vmatprep.subr.bf16.mxu0 %v656
    %3835 = vmatpush1.bf16.msra.mxu0 %v655
    %3836 = vmatprep.subr.bf16.mxu0 %v660
    %3837 = vmatpush1.bf16.msra.mxu0 %v659
    %3838 = vmatprep.subr.bf16.mxu0 %v664
    %3839 = vmatpush1.bf16.msra.mxu0 %v663
    %3840 = vmatprep.subr.bf16.mxu0 %v668
    %3841 = vmatpush1.bf16.msra.mxu0 %v667
    %3842 = vmatprep.subr.bf16.mxu0 %v672
    %3843 = vmatpush1.bf16.msra.mxu0 %v671
    %3844 = vmatprep.subr.bf16.mxu0 %v676
    %3845 = vmatpush1.bf16.msra.mxu0 %v675
    %3846 = vmatprep.subr.bf16.mxu0 %v680
    %3847 = vmatpush1.bf16.msra.mxu0 %v679
    %3848 = vmatprep.subr.bf16.mxu0 0
    %3849 = vmatpush1.bf16.msra.mxu0 0
    %3850 = vmatprep.subr.bf16.mxu0 0
    %3851 = vmatpush1.bf16.msra.mxu0 0
    %3852 = vmatprep.subr.bf16.mxu0 0
    %3853 = vmatpush1.bf16.msra.mxu0 0
    %3854 = vmatprep.subr.bf16.mxu0 0
    %3855 = vmatpush1.bf16.msra.mxu0 0
    %3856 = vmatprep.subr.bf16.mxu0 0
    %3857 = vmatpush1.bf16.msra.mxu0 0
    %3858 = vmatprep.subr.bf16.mxu0 0
    %3859 = vmatpush1.bf16.msra.mxu0 0
    %3860 = vmatprep.subr.bf16.mxu0 0
    %3861 = vmatpush1.bf16.msra.mxu0 0
    %3862 = vmatprep.subr.bf16.mxu0 0
    %3863 = vmatpush1.bf16.msra.mxu0 0
    %3864 = vmatprep.mubr.bf16.mxu0 0
    %3865 = vmatmul.mubr.bf16.gmra.mrb[0].mxu0 %v3789
    %v3866 = vpop.f32.mrb[0].mxu0
    %v3867 = vadd.f32 0.0, %v3866
    %v3868 = vpop.f32.mrb[0].mxu0
    %v3869 = vadd.f32 0.0, %v3868
    %v3870 = vpop.f32.mrb[0].mxu0
    %v3871 = vpop.f32.mrb[0].mxu0
    %3872 = vdwg.mxu0
    %v3877 = vrot.slane %v3826, 2
    %v3878 = vrot.slane %v3828, 2
    %v3879 = vrot.slane %v3867, 2
    %v3880 = vrot.slane %v3869, 2
    %v3881 = vrot.slane %v3826, 3
    %v3882 = vrot.slane %v3828, 3
    %v3883 = vrot.slane %v3867, 3
    %v3884 = vrot.slane %v3869, 3
    %v3885 = vrot.slane %v3826, 4
    %v3886 = vrot.slane %v3828, 4
    %v3887 = vrot.slane %v3867, 4
    %v3888 = vrot.slane %v3869, 4
    %v3889 = vrot.slane %v3826, 5
    %v3890 = vrot.slane %v3828, 5
    %v3891 = vrot.slane %v3867, 5
    %v3892 = vrot.slane %v3869, 5
    %v3893 = vrot.slane %v3826, 6
    %v3894 = vrot.slane %v3828, 6
    %v3895 = vrot.slane %v3867, 6
    %v3896 = vrot.slane %v3869, 6
    %v3897 = vrot.slane %v3826, 7
    %v3898 = vrot.slane %v3828, 7
    %v3899 = vrot.slane %v3867, 7
    %v3900 = vrot.slane %v3869, 7
    %v3901 = vrot.slane %v3826, 1
    %v3902 = vrot.slane %v3828, 1
    %v3903 = vrot.slane %v3867, 1
    %v3904 = vrot.slane %v3869, 1
    %v3937 = vadd.f32 %v3743, %v3877
    %v3938 = vadd.f32 %v3744, %v3878
    %v3939 = vadd.f32 %v3745, %v3879
    %v3940 = vadd.f32 %v3746, %v3880
    %v3941 = vadd.f32 %v3747, %v3881
    %v3942 = vadd.f32 %v3748, %v3882
    %v3943 = vadd.f32 %v3749, %v3883
    %v3944 = vadd.f32 %v3750, %v3884
    %v3945 = vadd.f32 %v3751, %v3885
    %v3946 = vadd.f32 %v3752, %v3886
    %v3947 = vadd.f32 %v3753, %v3887
    %v3948 = vadd.f32 %v3754, %v3888
    %v3949 = vadd.f32 %v3755, %v3889
    %v3950 = vadd.f32 %v3756, %v3890
    %v3951 = vadd.f32 %v3757, %v3891
    %v3952 = vadd.f32 %v3758, %v3892
    %v3953 = vadd.f32 %v3759, %v3893
    %v3954 = vadd.f32 %v3760, %v3894
    %v3955 = vadd.f32 %v3761, %v3895
    %v3956 = vadd.f32 %v3762, %v3896
    %v3957 = vadd.f32 %v3763, %v3897
    %v3958 = vadd.f32 %v3764, %v3898
    %v3959 = vadd.f32 %v3765, %v3899
    %v3960 = vadd.f32 %v3766, %v3900
    %v3961 = vadd.f32 %v3767, %v3826
    %v3962 = vadd.f32 %v3768, %v3828
    %v3963 = vadd.f32 %v3769, %v3867
    %v3964 = vadd.f32 %v3770, %v3869
    %v3965 = vadd.f32 %v3771, %v3901
    %v3966 = vadd.f32 %v3772, %v3902
    %v3967 = vadd.f32 %v3773, %v3903
    %v3968 = vadd.f32 %v3774, %v3904
    %v3969 = vxor.u32 %v3937, 2147483648
    %v3970 = vxor.u32 %v3941, 2147483648
    %v3971 = vxor.u32 %v3945, 2147483648
    %v3972 = vxor.u32 %v3949, 2147483648
    %v3973 = vxor.u32 %v3953, 2147483648
    %v3974 = vxor.u32 %v3957, 2147483648
    %v3975 = vxor.u32 %v3961, 2147483648
    %v3976 = vxor.u32 %v3965, 2147483648
    %v3977 = vmul.f32 %v3969, 1.442695
    %v3978 = vpow.pop %v3977
    %v3979 = vmul.f32 %v3970, 1.442695
    %v3980 = vpow.pop %v3979
    %v3981 = vmul.f32 %v3971, 1.442695
    %v3982 = vpow.pop %v3981
    %v3983 = vmul.f32 %v3972, 1.442695
    %v3984 = vpow.pop %v3983
    %v3985 = vmul.f32 %v3973, 1.442695
    %v3986 = vpow.pop %v3985
    %v3987 = vmul.f32 %v3974, 1.442695
    %v3988 = vpow.pop %v3987
    %v3989 = vmul.f32 %v3975, 1.442695
    %v3990 = vpow.pop %v3989
    %v3991 = vmul.f32 %v3976, 1.442695
    %v3992 = vpow.pop %v3991
    %v3993 = vadd.f32 %v3978, 1.0
    %v3994 = vadd.f32 %v3980, 1.0
    %v3995 = vadd.f32 %v3982, 1.0
    %v3996 = vadd.f32 %v3984, 1.0
    %v3997 = vadd.f32 %v3986, 1.0
    %v3998 = vadd.f32 %v3988, 1.0
    %v3999 = vadd.f32 %v3990, 1.0
    %v4000 = vadd.f32 %v3992, 1.0
    %v4001 = vrcp.pop %v3993
    %v4002 = vmul.f32 1.0, %v4001
    %v4003 = vrcp.pop %v3994
    %v4004 = vmul.f32 1.0, %v4003
    %v4005 = vrcp.pop %v3995
    %v4006 = vmul.f32 1.0, %v4005
    %v4007 = vrcp.pop %v3996
    %v4008 = vmul.f32 1.0, %v4007
    %v4009 = vrcp.pop %v3997
    %v4010 = vmul.f32 1.0, %v4009
    %v4011 = vrcp.pop %v3998
    %v4012 = vmul.f32 1.0, %v4011
    %v4013 = vrcp.pop %v3999
    %v4014 = vmul.f32 1.0, %v4013
    %v4015 = vrcp.pop %v4000
    %v4016 = vmul.f32 1.0, %v4015
    %v4017 = vxor.u32 %v3938, 2147483648
    %v4018 = vxor.u32 %v3942, 2147483648
    %v4019 = vxor.u32 %v3946, 2147483648
    %v4020 = vxor.u32 %v3950, 2147483648
    %v4021 = vxor.u32 %v3954, 2147483648
    %v4022 = vxor.u32 %v3958, 2147483648
    %v4023 = vxor.u32 %v3962, 2147483648
    %v4024 = vxor.u32 %v3966, 2147483648
    %v4025 = vmul.f32 %v4017, 1.442695
    %v4026 = vpow.pop %v4025
    %v4027 = vmul.f32 %v4018, 1.442695
    %v4028 = vpow.pop %v4027
    %v4029 = vmul.f32 %v4019, 1.442695
    %v4030 = vpow.pop %v4029
    %v4031 = vmul.f32 %v4020, 1.442695
    %v4032 = vpow.pop %v4031
    %v4033 = vmul.f32 %v4021, 1.442695
    %v4034 = vpow.pop %v4033
    %v4035 = vmul.f32 %v4022, 1.442695
    %v4036 = vpow.pop %v4035
    %v4037 = vmul.f32 %v4023, 1.442695
    %v4038 = vpow.pop %v4037
    %v4039 = vmul.f32 %v4024, 1.442695
    %v4040 = vpow.pop %v4039
    %v4041 = vadd.f32 %v4026, 1.0
    %v4042 = vadd.f32 %v4028, 1.0
    %v4043 = vadd.f32 %v4030, 1.0
    %v4044 = vadd.f32 %v4032, 1.0
    %v4045 = vadd.f32 %v4034, 1.0
    %v4046 = vadd.f32 %v4036, 1.0
    %v4047 = vadd.f32 %v4038, 1.0
    %v4048 = vadd.f32 %v4040, 1.0
    %v4049 = vrcp.pop %v4041
    %v4050 = vmul.f32 1.0, %v4049
    %v4051 = vrcp.pop %v4042
    %v4052 = vmul.f32 1.0, %v4051
    %v4053 = vrcp.pop %v4043
    %v4054 = vmul.f32 1.0, %v4053
    %v4055 = vrcp.pop %v4044
    %v4056 = vmul.f32 1.0, %v4055
    %v4057 = vrcp.pop %v4045
    %v4058 = vmul.f32 1.0, %v4057
    %v4059 = vrcp.pop %v4046
    %v4060 = vmul.f32 1.0, %v4059
    %v4061 = vrcp.pop %v4047
    %v4062 = vmul.f32 1.0, %v4061
    %v4063 = vrcp.pop %v4048
    %v4064 = vmul.f32 1.0, %v4063
    %v4065 = vtanh.pop %v3939
    %v4066 = vtanh.pop %v3943
    %v4067 = vtanh.pop %v3947
    %v4068 = vtanh.pop %v3951
    %v4069 = vtanh.pop %v3955
    %v4070 = vtanh.pop %v3959
    %v4071 = vtanh.pop %v3963
    %v4072 = vtanh.pop %v3967
    %v4073 = vxor.u32 %v3940, 2147483648
    %v4074 = vxor.u32 %v3944, 2147483648
    %v4075 = vxor.u32 %v3948, 2147483648
    %v4076 = vxor.u32 %v3952, 2147483648
    %v4077 = vxor.u32 %v3956, 2147483648
    %v4078 = vxor.u32 %v3960, 2147483648
    %v4079 = vxor.u32 %v3964, 2147483648
    %v4080 = vxor.u32 %v3968, 2147483648
    %v4081 = vmul.f32 %v4073, 1.442695
    %v4082 = vpow.pop %v4081
    %v4083 = vmul.f32 %v4074, 1.442695
    %v4084 = vpow.pop %v4083
    %v4085 = vmul.f32 %v4075, 1.442695
    %v4086 = vpow.pop %v4085
    %v4087 = vmul.f32 %v4076, 1.442695
    %v4088 = vpow.pop %v4087
    %v4089 = vmul.f32 %v4077, 1.442695
    %v4090 = vpow.pop %v4089
    %v4091 = vmul.f32 %v4078, 1.442695
    %v4092 = vpow.pop %v4091
    %v4093 = vmul.f32 %v4079, 1.442695
    %v4094 = vpow.pop %v4093
    %v4095 = vmul.f32 %v4080, 1.442695
    %v4096 = vpow.pop %v4095
    %v4097 = vadd.f32 %v4082, 1.0
    %v4098 = vadd.f32 %v4084, 1.0
    %v4099 = vadd.f32 %v4086, 1.0
    %v4100 = vadd.f32 %v4088, 1.0
    %v4101 = vadd.f32 %v4090, 1.0
    %v4102 = vadd.f32 %v4092, 1.0
    %v4103 = vadd.f32 %v4094, 1.0
    %v4104 = vadd.f32 %v4096, 1.0
    %v4105 = vrcp.pop %v4097
    %v4106 = vmul.f32 1.0, %v4105
    %v4107 = vrcp.pop %v4098
    %v4108 = vmul.f32 1.0, %v4107
    %v4109 = vrcp.pop %v4099
    %v4110 = vmul.f32 1.0, %v4109
    %v4111 = vrcp.pop %v4100
    %v4112 = vmul.f32 1.0, %v4111
    %v4113 = vrcp.pop %v4101
    %v4114 = vmul.f32 1.0, %v4113
    %v4115 = vrcp.pop %v4102
    %v4116 = vmul.f32 1.0, %v4115
    %v4117 = vrcp.pop %v4103
    %v4118 = vmul.f32 1.0, %v4117
    %v4119 = vrcp.pop %v4104
    %v4120 = vmul.f32 1.0, %v4119
    %v4129 = vrot.slane %v3645, 7
    %v4130 = vrot.slane %v3646, 7
    %v4131 = vrot.slane %v3647, 7
    %v4132 = vrot.slane %v3648, 7
    %v4133 = vrot.slane %v3649, 7
    %v4134 = vrot.slane %v3650, 7
    %v4135 = vrot.slane %v3651, 7
    %v4136 = vrot.slane %v3652, 7
    %v4145 = vmul.f32 %v4050, %v4129
    %v4146 = vmul.f32 %v4052, %v4130
    %v4147 = vmul.f32 %v4054, %v4131
    %v4148 = vmul.f32 %v4056, %v4132
    %v4149 = vmul.f32 %v4058, %v4133
    %v4150 = vmul.f32 %v4060, %v4134
    %v4151 = vmul.f32 %v4062, %v4135
    %v4152 = vmul.f32 %v4064, %v4136
    %v4153 = vmul.f32 %v4002, %v4065
    %v4154 = vmul.f32 %v4004, %v4066
    %v4155 = vmul.f32 %v4006, %v4067
    %v4156 = vmul.f32 %v4008, %v4068
    %v4157 = vmul.f32 %v4010, %v4069
    %v4158 = vmul.f32 %v4012, %v4070
    %v4159 = vmul.f32 %v4014, %v4071
    %v4160 = vmul.f32 %v4016, %v4072
    %v4161 = vadd.f32 %v4145, %v4153
    %v4162 = vadd.f32 %v4146, %v4154
    %v4163 = vadd.f32 %v4147, %v4155
    %v4164 = vadd.f32 %v4148, %v4156
    %v4165 = vadd.f32 %v4149, %v4157
    %v4166 = vadd.f32 %v4150, %v4158
    %v4167 = vadd.f32 %v4151, %v4159
    %v4168 = vadd.f32 %v4152, %v4160
    %v4169 = vtanh.pop %v4161
    %v4170 = vtanh.pop %v4162
    %v4171 = vtanh.pop %v4163
    %v4172 = vtanh.pop %v4164
    %v4173 = vtanh.pop %v4165
    %v4174 = vtanh.pop %v4166
    %v4175 = vtanh.pop %v4167
    %v4176 = vtanh.pop %v4168
    %v4177 = vmul.f32 %v4106, %v4169
    %v4178 = vmul.f32 %v4108, %v4170
    %v4179 = vmul.f32 %v4110, %v4171
    %v4180 = vmul.f32 %v4112, %v4172
    %v4181 = vmul.f32 %v4114, %v4173
    %v4182 = vmul.f32 %v4116, %v4174
    %v4183 = vmul.f32 %v4118, %v4175
    %v4184 = vmul.f32 %v4120, %v4176
    %v4185 = vpack.c.bf16 %v4177, %v4177
    %v4186 = vpack.c.bf16 %v4178, %v4178
    %v4187 = vpack.c.bf16 %v4179, %v4179
    %v4188 = vpack.c.bf16 %v4180, %v4180
    %v4189 = vpack.c.bf16 %v4181, %v4181
    %v4190 = vpack.c.bf16 %v4182, %v4182
    %v4191 = vpack.c.bf16 %v4183, %v4183
    %v4192 = vpack.c.bf16 %v4184, %v4184
    %v4201 = vunpack.c.l.b16 %v4185
    %v4202 = vunpack.c.l.b16 %v4186
    %v4203 = vunpack.c.l.b16 %v4187
    %v4204 = vunpack.c.l.b16 %v4188
    %v4205 = vunpack.c.l.b16 %v4189
    %v4206 = vunpack.c.l.b16 %v4190
    %v4207 = vunpack.c.l.b16 %v4191
    %v4208 = vunpack.c.l.b16 %v4192
    %v4209 = vpack.c.b16 %v4201, %v4201
    %v4210 = vpack.c.b16 %v4202, %v4202
    %v4211 = vpack.c.b16 %v4203, %v4203
    %v4212 = vpack.c.b16 %v4204, %v4204
    %v4213 = vpack.c.b16 %v4205, %v4205
    %v4214 = vpack.c.b16 %v4206, %v4206
    %v4215 = vpack.c.b16 %v4207, %v4207
    %v4216 = vpack.c.b16 %v4208, %v4208
    %v4217 = vunpack.c.l.b16 %v4209
    %v4218 = vunpack.c.l.b16 %v4210
    %v4219 = vunpack.c.l.b16 %v4211
    %v4220 = vunpack.c.l.b16 %v4212
    %v4221 = vunpack.c.l.b16 %v4213
    %v4222 = vunpack.c.l.b16 %v4214
    %v4223 = vunpack.c.l.b16 %v4215
    %v4224 = vunpack.c.l.b16 %v4216
    %v4225 = vrot.slane %v4217, 6
    %v4226 = vrot.slane %v4218, 5
    %v4227 = vsel %vm1124, %v4226, %v4225
    %v4228 = vrot.slane %v4219, 4
    %v4229 = vsel %vm1127, %v4228, %v4227
    %v4230 = vrot.slane %v4220, 3
    %v4231 = vsel %vm1130, %v4230, %v4229
    %v4232 = vrot.slane %v4221, 2
    %v4233 = vsel %vm1133, %v4232, %v4231
    %v4234 = vrot.slane %v4222, 1
    %v4235 = vsel %vm1136, %v4234, %v4233
    %v4236 = vsel %vm1139, %v4223, %v4235
    %v4237 = vrot.slane %v4224, 7
    %v4238 = vsel %vm1142, %v4237, %v4236
    %v4239 = vpack.c.b16 %v4238, %v4238
    %s4241 = scalar_lea.vmem [#allocation3], 24
    %4242 = vst [vmem:[%s4241] sm:$0xf] %v4239
    %v4243 = vld [vmem:[#allocation2] sm:$0x88]
    %v4244 = vld [vmem:[#allocation2 + $0x8] sm:$0x88]
    %v4245 = vld [vmem:[#allocation2 + $0x10] sm:$0x88]
    %v4246 = vld [vmem:[#allocation2 + $0x18] sm:$0x88]
    %v4247 = vld [vmem:[#allocation2 + $0x20] sm:$0x88]
    %v4248 = vld [vmem:[#allocation2 + $0x28] sm:$0x88]
    %v4249 = vld [vmem:[#allocation2 + $0x30] sm:$0x88]
    %v4250 = vld [vmem:[#allocation2 + $0x38] sm:$0x88]
    %v4251 = vld [vmem:[#allocation2 + $0x40] sm:$0x88]
    %v4252 = vld [vmem:[#allocation2 + $0x48] sm:$0x88]
    %v4253 = vld [vmem:[#allocation2 + $0x50] sm:$0x88]
    %v4254 = vld [vmem:[#allocation2 + $0x58] sm:$0x88]
    %v4255 = vld [vmem:[#allocation2 + $0x60] sm:$0x88]
    %v4256 = vld [vmem:[#allocation2 + $0x68] sm:$0x88]
    %v4257 = vld [vmem:[#allocation2 + $0x70] sm:$0x88]
    %v4258 = vld [vmem:[#allocation2 + $0x78] sm:$0x88]
    %v4259 = vunpack.c.l.bf16 %v4243
    %v4260 = vunpack.c.h.bf16 %v4243
    %v4261 = vunpack.c.l.bf16 %v4244
    %v4262 = vunpack.c.h.bf16 %v4244
    %v4263 = vunpack.c.l.bf16 %v4245
    %v4264 = vunpack.c.h.bf16 %v4245
    %v4265 = vunpack.c.l.bf16 %v4246
    %v4266 = vunpack.c.h.bf16 %v4246
    %v4267 = vunpack.c.l.bf16 %v4247
    %v4268 = vunpack.c.h.bf16 %v4247
    %v4269 = vunpack.c.l.bf16 %v4248
    %v4270 = vunpack.c.h.bf16 %v4248
    %v4271 = vunpack.c.l.bf16 %v4249
    %v4272 = vunpack.c.h.bf16 %v4249
    %v4273 = vunpack.c.l.bf16 %v4250
    %v4274 = vunpack.c.h.bf16 %v4250
    %v4275 = vunpack.c.l.bf16 %v4251
    %v4276 = vunpack.c.h.bf16 %v4251
    %v4277 = vunpack.c.l.bf16 %v4252
    %v4278 = vunpack.c.h.bf16 %v4252
    %v4279 = vunpack.c.l.bf16 %v4253
    %v4280 = vunpack.c.h.bf16 %v4253
    %v4281 = vunpack.c.l.bf16 %v4254
    %v4282 = vunpack.c.h.bf16 %v4254
    %v4283 = vunpack.c.l.bf16 %v4255
    %v4284 = vunpack.c.h.bf16 %v4255
    %v4285 = vunpack.c.l.bf16 %v4256
    %v4286 = vunpack.c.h.bf16 %v4256
    %v4287 = vunpack.c.l.bf16 %v4257
    %v4288 = vunpack.c.h.bf16 %v4257
    %v4289 = vunpack.c.l.bf16 %v4258
    %v4290 = vunpack.c.h.bf16 %v4258
    %v4291 = vrot.slane %v4201, 6
    %v4292 = vrot.slane %v4202, 5
    %v4293 = vsel %vm1124, %v4292, %v4291
    %v4294 = vrot.slane %v4203, 4
    %v4295 = vsel %vm1127, %v4294, %v4293
    %v4296 = vrot.slane %v4204, 3
    %v4297 = vsel %vm1130, %v4296, %v4295
    %v4298 = vrot.slane %v4205, 2
    %v4299 = vsel %vm1133, %v4298, %v4297
    %v4300 = vrot.slane %v4206, 1
    %v4301 = vsel %vm1136, %v4300, %v4299
    %v4302 = vsel %vm1139, %v4207, %v4301
    %v4303 = vrot.slane %v4208, 7
    %v4304 = vsel %vm1142, %v4303, %v4302
    %v4305 = vpack.c.b16 %v4304, %v4304
    %4307 = vmatprep.subr.bf16.mxu0 %v650
    %4308 = vmatpush1.bf16.msra.mxu0 %v649
    %4309 = vmatprep.subr.bf16.mxu0 %v654
    %4310 = vmatpush1.bf16.msra.mxu0 %v653
    %4311 = vmatprep.subr.bf16.mxu0 %v658
    %4312 = vmatpush1.bf16.msra.mxu0 %v657
    %4313 = vmatprep.subr.bf16.mxu0 %v662
    %4314 = vmatpush1.bf16.msra.mxu0 %v661
    %4315 = vmatprep.subr.bf16.mxu0 %v666
    %4316 = vmatpush1.bf16.msra.mxu0 %v665
    %4317 = vmatprep.subr.bf16.mxu0 %v670
    %4318 = vmatpush1.bf16.msra.mxu0 %v669
    %4319 = vmatprep.subr.bf16.mxu0 %v674
    %4320 = vmatpush1.bf16.msra.mxu0 %v673
    %4321 = vmatprep.subr.bf16.mxu0 %v678
    %4322 = vmatpush1.bf16.msra.mxu0 %v677
    %4323 = vmatprep.subr.bf16.mxu0 0
    %4324 = vmatpush1.bf16.msra.mxu0 0
    %4325 = vmatprep.subr.bf16.mxu0 0
    %4326 = vmatpush1.bf16.msra.mxu0 0
    %4327 = vmatprep.subr.bf16.mxu0 0
    %4328 = vmatpush1.bf16.msra.mxu0 0
    %4329 = vmatprep.subr.bf16.mxu0 0
    %4330 = vmatpush1.bf16.msra.mxu0 0
    %4331 = vmatprep.subr.bf16.mxu0 0
    %4332 = vmatpush1.bf16.msra.mxu0 0
    %4333 = vmatprep.subr.bf16.mxu0 0
    %4334 = vmatpush1.bf16.msra.mxu0 0
    %4335 = vmatprep.subr.bf16.mxu0 0
    %4336 = vmatpush1.bf16.msra.mxu0 0
    %4337 = vmatprep.subr.bf16.mxu0 0
    %4338 = vmatpush1.bf16.msra.mxu0 0
    %4339 = vmatprep.mubr.bf16.mxu0 0
    %4340 = vmatmul.mubr.bf16.gmra.mrb[0].mxu0 %v4305
    %v4341 = vpop.f32.mrb[0].mxu0
    %v4342 = vadd.f32 0.0, %v4341
    %v4343 = vpop.f32.mrb[0].mxu0
    %v4344 = vadd.f32 0.0, %v4343
    %v4345 = vpop.f32.mrb[0].mxu0
    %v4346 = vpop.f32.mrb[0].mxu0
    %4347 = vdwg.mxu0
    %4348 = vmatprep.subr.bf16.mxu0 %v652
    %4349 = vmatpush1.bf16.msra.mxu0 %v651
    %4350 = vmatprep.subr.bf16.mxu0 %v656
    %4351 = vmatpush1.bf16.msra.mxu0 %v655
    %4352 = vmatprep.subr.bf16.mxu0 %v660
    %4353 = vmatpush1.bf16.msra.mxu0 %v659
    %4354 = vmatprep.subr.bf16.mxu0 %v664
    %4355 = vmatpush1.bf16.msra.mxu0 %v663
    %4356 = vmatprep.subr.bf16.mxu0 %v668
    %4357 = vmatpush1.bf16.msra.mxu0 %v667
    %4358 = vmatprep.subr.bf16.mxu0 %v672
    %4359 = vmatpush1.bf16.msra.mxu0 %v671
    %4360 = vmatprep.subr.bf16.mxu0 %v676
    %4361 = vmatpush1.bf16.msra.mxu0 %v675
    %4362 = vmatprep.subr.bf16.mxu0 %v680
    %4363 = vmatpush1.bf16.msra.mxu0 %v679
    %4364 = vmatprep.subr.bf16.mxu0 0
    %4365 = vmatpush1.bf16.msra.mxu0 0
    %4366 = vmatprep.subr.bf16.mxu0 0
    %4367 = vmatpush1.bf16.msra.mxu0 0
    %4368 = vmatprep.subr.bf16.mxu0 0
    %4369 = vmatpush1.bf16.msra.mxu0 0
    %4370 = vmatprep.subr.bf16.mxu0 0
    %4371 = vmatpush1.bf16.msra.mxu0 0
    %4372 = vmatprep.subr.bf16.mxu0 0
    %4373 = vmatpush1.bf16.msra.mxu0 0
    %4374 = vmatprep.subr.bf16.mxu0 0
    %4375 = vmatpush1.bf16.msra.mxu0 0
    %4376 = vmatprep.subr.bf16.mxu0 0
    %4377 = vmatpush1.bf16.msra.mxu0 0
    %4378 = vmatprep.subr.bf16.mxu0 0
    %4379 = vmatpush1.bf16.msra.mxu0 0
    %4380 = vmatprep.mubr.bf16.mxu0 0
    %4381 = vmatmul.mubr.bf16.gmra.mrb[0].mxu0 %v4305
    %v4382 = vpop.f32.mrb[0].mxu0
    %v4383 = vadd.f32 0.0, %v4382
    %v4384 = vpop.f32.mrb[0].mxu0
    %v4385 = vadd.f32 0.0, %v4384
    %v4386 = vpop.f32.mrb[0].mxu0
    %v4387 = vpop.f32.mrb[0].mxu0
    %4388 = vdwg.mxu0
    %v4393 = vrot.slane %v4342, 1
    %v4394 = vrot.slane %v4344, 1
    %v4395 = vrot.slane %v4383, 1
    %v4396 = vrot.slane %v4385, 1
    %v4397 = vrot.slane %v4342, 2
    %v4398 = vrot.slane %v4344, 2
    %v4399 = vrot.slane %v4383, 2
    %v4400 = vrot.slane %v4385, 2
    %v4401 = vrot.slane %v4342, 3
    %v4402 = vrot.slane %v4344, 3
    %v4403 = vrot.slane %v4383, 3
    %v4404 = vrot.slane %v4385, 3
    %v4405 = vrot.slane %v4342, 4
    %v4406 = vrot.slane %v4344, 4
    %v4407 = vrot.slane %v4383, 4
    %v4408 = vrot.slane %v4385, 4
    %v4409 = vrot.slane %v4342, 5
    %v4410 = vrot.slane %v4344, 5
    %v4411 = vrot.slane %v4383, 5
    %v4412 = vrot.slane %v4385, 5
    %v4413 = vrot.slane %v4342, 6
    %v4414 = vrot.slane %v4344, 6
    %v4415 = vrot.slane %v4383, 6
    %v4416 = vrot.slane %v4385, 6
    %v4417 = vrot.slane %v4342, 7
    %v4418 = vrot.slane %v4344, 7
    %v4419 = vrot.slane %v4383, 7
    %v4420 = vrot.slane %v4385, 7
    %v4453 = vadd.f32 %v4259, %v4393
    %v4454 = vadd.f32 %v4260, %v4394
    %v4455 = vadd.f32 %v4261, %v4395
    %v4456 = vadd.f32 %v4262, %v4396
    %v4457 = vadd.f32 %v4263, %v4397
    %v4458 = vadd.f32 %v4264, %v4398
    %v4459 = vadd.f32 %v4265, %v4399
    %v4460 = vadd.f32 %v4266, %v4400
    %v4461 = vadd.f32 %v4267, %v4401
    %v4462 = vadd.f32 %v4268, %v4402
    %v4463 = vadd.f32 %v4269, %v4403
    %v4464 = vadd.f32 %v4270, %v4404
    %v4465 = vadd.f32 %v4271, %v4405
    %v4466 = vadd.f32 %v4272, %v4406
    %v4467 = vadd.f32 %v4273, %v4407
    %v4468 = vadd.f32 %v4274, %v4408
    %v4469 = vadd.f32 %v4275, %v4409
    %v4470 = vadd.f32 %v4276, %v4410
    %v4471 = vadd.f32 %v4277, %v4411
    %v4472 = vadd.f32 %v4278, %v4412
    %v4473 = vadd.f32 %v4279, %v4413
    %v4474 = vadd.f32 %v4280, %v4414
    %v4475 = vadd.f32 %v4281, %v4415
    %v4476 = vadd.f32 %v4282, %v4416
    %v4477 = vadd.f32 %v4283, %v4417
    %v4478 = vadd.f32 %v4284, %v4418
    %v4479 = vadd.f32 %v4285, %v4419
    %v4480 = vadd.f32 %v4286, %v4420
    %v4481 = vadd.f32 %v4287, %v4342
    %v4482 = vadd.f32 %v4288, %v4344
    %v4483 = vadd.f32 %v4289, %v4383
    %v4484 = vadd.f32 %v4290, %v4385
    %v4485 = vxor.u32 %v4453, 2147483648
    %v4486 = vxor.u32 %v4457, 2147483648
    %v4487 = vxor.u32 %v4461, 2147483648
    %v4488 = vxor.u32 %v4465, 2147483648
    %v4489 = vxor.u32 %v4469, 2147483648
    %v4490 = vxor.u32 %v4473, 2147483648
    %v4491 = vxor.u32 %v4477, 2147483648
    %v4492 = vxor.u32 %v4481, 2147483648
    %v4493 = vmul.f32 %v4485, 1.442695
    %v4494 = vpow.pop %v4493
    %v4495 = vmul.f32 %v4486, 1.442695
    %v4496 = vpow.pop %v4495
    %v4497 = vmul.f32 %v4487, 1.442695
    %v4498 = vpow.pop %v4497
    %v4499 = vmul.f32 %v4488, 1.442695
    %v4500 = vpow.pop %v4499
    %v4501 = vmul.f32 %v4489, 1.442695
    %v4502 = vpow.pop %v4501
    %v4503 = vmul.f32 %v4490, 1.442695
    %v4504 = vpow.pop %v4503
    %v4505 = vmul.f32 %v4491, 1.442695
    %v4506 = vpow.pop %v4505
    %v4507 = vmul.f32 %v4492, 1.442695
    %v4508 = vpow.pop %v4507
    %v4509 = vadd.f32 %v4494, 1.0
    %v4510 = vadd.f32 %v4496, 1.0
    %v4511 = vadd.f32 %v4498, 1.0
    %v4512 = vadd.f32 %v4500, 1.0
    %v4513 = vadd.f32 %v4502, 1.0
    %v4514 = vadd.f32 %v4504, 1.0
    %v4515 = vadd.f32 %v4506, 1.0
    %v4516 = vadd.f32 %v4508, 1.0
    %v4517 = vrcp.pop %v4509
    %v4518 = vmul.f32 1.0, %v4517
    %v4519 = vrcp.pop %v4510
    %v4520 = vmul.f32 1.0, %v4519
    %v4521 = vrcp.pop %v4511
    %v4522 = vmul.f32 1.0, %v4521
    %v4523 = vrcp.pop %v4512
    %v4524 = vmul.f32 1.0, %v4523
    %v4525 = vrcp.pop %v4513
    %v4526 = vmul.f32 1.0, %v4525
    %v4527 = vrcp.pop %v4514
    %v4528 = vmul.f32 1.0, %v4527
    %v4529 = vrcp.pop %v4515
    %v4530 = vmul.f32 1.0, %v4529
    %v4531 = vrcp.pop %v4516
    %v4532 = vmul.f32 1.0, %v4531
    %v4533 = vxor.u32 %v4454, 2147483648
    %v4534 = vxor.u32 %v4458, 2147483648
    %v4535 = vxor.u32 %v4462, 2147483648
    %v4536 = vxor.u32 %v4466, 2147483648
    %v4537 = vxor.u32 %v4470, 2147483648
    %v4538 = vxor.u32 %v4474, 2147483648
    %v4539 = vxor.u32 %v4478, 2147483648
    %v4540 = vxor.u32 %v4482, 2147483648
    %v4541 = vmul.f32 %v4533, 1.442695
    %v4542 = vpow.pop %v4541
    %v4543 = vmul.f32 %v4534, 1.442695
    %v4544 = vpow.pop %v4543
    %v4545 = vmul.f32 %v4535, 1.442695
    %v4546 = vpow.pop %v4545
    %v4547 = vmul.f32 %v4536, 1.442695
    %v4548 = vpow.pop %v4547
    %v4549 = vmul.f32 %v4537, 1.442695
    %v4550 = vpow.pop %v4549
    %v4551 = vmul.f32 %v4538, 1.442695
    %v4552 = vpow.pop %v4551
    %v4553 = vmul.f32 %v4539, 1.442695
    %v4554 = vpow.pop %v4553
    %v4555 = vmul.f32 %v4540, 1.442695
    %v4556 = vpow.pop %v4555
    %v4557 = vadd.f32 %v4542, 1.0
    %v4558 = vadd.f32 %v4544, 1.0
    %v4559 = vadd.f32 %v4546, 1.0
    %v4560 = vadd.f32 %v4548, 1.0
    %v4561 = vadd.f32 %v4550, 1.0
    %v4562 = vadd.f32 %v4552, 1.0
    %v4563 = vadd.f32 %v4554, 1.0
    %v4564 = vadd.f32 %v4556, 1.0
    %v4565 = vrcp.pop %v4557
    %v4566 = vmul.f32 1.0, %v4565
    %v4567 = vrcp.pop %v4558
    %v4568 = vmul.f32 1.0, %v4567
    %v4569 = vrcp.pop %v4559
    %v4570 = vmul.f32 1.0, %v4569
    %v4571 = vrcp.pop %v4560
    %v4572 = vmul.f32 1.0, %v4571
    %v4573 = vrcp.pop %v4561
    %v4574 = vmul.f32 1.0, %v4573
    %v4575 = vrcp.pop %v4562
    %v4576 = vmul.f32 1.0, %v4575
    %v4577 = vrcp.pop %v4563
    %v4578 = vmul.f32 1.0, %v4577
    %v4579 = vrcp.pop %v4564
    %v4580 = vmul.f32 1.0, %v4579
    %v4581 = vtanh.pop %v4455
    %v4582 = vtanh.pop %v4459
    %v4583 = vtanh.pop %v4463
    %v4584 = vtanh.pop %v4467
    %v4585 = vtanh.pop %v4471
    %v4586 = vtanh.pop %v4475
    %v4587 = vtanh.pop %v4479
    %v4588 = vtanh.pop %v4483
    %v4589 = vxor.u32 %v4456, 2147483648
    %v4590 = vxor.u32 %v4460, 2147483648
    %v4591 = vxor.u32 %v4464, 2147483648
    %v4592 = vxor.u32 %v4468, 2147483648
    %v4593 = vxor.u32 %v4472, 2147483648
    %v4594 = vxor.u32 %v4476, 2147483648
    %v4595 = vxor.u32 %v4480, 2147483648
    %v4596 = vxor.u32 %v4484, 2147483648
    %v4597 = vmul.f32 %v4589, 1.442695
    %v4598 = vpow.pop %v4597
    %v4599 = vmul.f32 %v4590, 1.442695
    %v4600 = vpow.pop %v4599
    %v4601 = vmul.f32 %v4591, 1.442695
    %v4602 = vpow.pop %v4601
    %v4603 = vmul.f32 %v4592, 1.442695
    %v4604 = vpow.pop %v4603
    %v4605 = vmul.f32 %v4593, 1.442695
    %v4606 = vpow.pop %v4605
    %v4607 = vmul.f32 %v4594, 1.442695
    %v4608 = vpow.pop %v4607
    %v4609 = vmul.f32 %v4595, 1.442695
    %v4610 = vpow.pop %v4609
    %v4611 = vmul.f32 %v4596, 1.442695
    %v4612 = vpow.pop %v4611
    %v4613 = vadd.f32 %v4598, 1.0
    %v4614 = vadd.f32 %v4600, 1.0
    %v4615 = vadd.f32 %v4602, 1.0
    %v4616 = vadd.f32 %v4604, 1.0
    %v4617 = vadd.f32 %v4606, 1.0
    %v4618 = vadd.f32 %v4608, 1.0
    %v4619 = vadd.f32 %v4610, 1.0
    %v4620 = vadd.f32 %v4612, 1.0
    %v4621 = vrcp.pop %v4613
    %v4622 = vmul.f32 1.0, %v4621
    %v4623 = vrcp.pop %v4614
    %v4624 = vmul.f32 1.0, %v4623
    %v4625 = vrcp.pop %v4615
    %v4626 = vmul.f32 1.0, %v4625
    %v4627 = vrcp.pop %v4616
    %v4628 = vmul.f32 1.0, %v4627
    %v4629 = vrcp.pop %v4617
    %v4630 = vmul.f32 1.0, %v4629
    %v4631 = vrcp.pop %v4618
    %v4632 = vmul.f32 1.0, %v4631
    %v4633 = vrcp.pop %v4619
    %v4634 = vmul.f32 1.0, %v4633
    %v4635 = vrcp.pop %v4620
    %v4636 = vmul.f32 1.0, %v4635
    %v4645 = vrot.slane %v4161, 7
    %v4646 = vrot.slane %v4162, 7
    %v4647 = vrot.slane %v4163, 7
    %v4648 = vrot.slane %v4164, 7
    %v4649 = vrot.slane %v4165, 7
    %v4650 = vrot.slane %v4166, 7
    %v4651 = vrot.slane %v4167, 7
    %v4652 = vrot.slane %v4168, 7
    %v4661 = vmul.f32 %v4566, %v4645
    %v4662 = vmul.f32 %v4568, %v4646
    %v4663 = vmul.f32 %v4570, %v4647
    %v4664 = vmul.f32 %v4572, %v4648
    %v4665 = vmul.f32 %v4574, %v4649
    %v4666 = vmul.f32 %v4576, %v4650
    %v4667 = vmul.f32 %v4578, %v4651
    %v4668 = vmul.f32 %v4580, %v4652
    %v4669 = vmul.f32 %v4518, %v4581
    %v4670 = vmul.f32 %v4520, %v4582
    %v4671 = vmul.f32 %v4522, %v4583
    %v4672 = vmul.f32 %v4524, %v4584
    %v4673 = vmul.f32 %v4526, %v4585
    %v4674 = vmul.f32 %v4528, %v4586
    %v4675 = vmul.f32 %v4530, %v4587
    %v4676 = vmul.f32 %v4532, %v4588
    %v4677 = vadd.f32 %v4661, %v4669
    %v4678 = vadd.f32 %v4662, %v4670
    %v4679 = vadd.f32 %v4663, %v4671
    %v4680 = vadd.f32 %v4664, %v4672
    %v4681 = vadd.f32 %v4665, %v4673
    %v4682 = vadd.f32 %v4666, %v4674
    %v4683 = vadd.f32 %v4667, %v4675
    %v4684 = vadd.f32 %v4668, %v4676
    %v4685 = vtanh.pop %v4677
    %v4686 = vtanh.pop %v4678
    %v4687 = vtanh.pop %v4679
    %v4688 = vtanh.pop %v4680
    %v4689 = vtanh.pop %v4681
    %v4690 = vtanh.pop %v4682
    %v4691 = vtanh.pop %v4683
    %v4692 = vtanh.pop %v4684
    %v4693 = vmul.f32 %v4622, %v4685
    %v4694 = vmul.f32 %v4624, %v4686
    %v4695 = vmul.f32 %v4626, %v4687
    %v4696 = vmul.f32 %v4628, %v4688
    %v4697 = vmul.f32 %v4630, %v4689
    %v4698 = vmul.f32 %v4632, %v4690
    %v4699 = vmul.f32 %v4634, %v4691
    %v4700 = vmul.f32 %v4636, %v4692
    %v4701 = vpack.c.bf16 %v4693, %v4693
    %v4702 = vpack.c.bf16 %v4694, %v4694
    %v4703 = vpack.c.bf16 %v4695, %v4695
    %v4704 = vpack.c.bf16 %v4696, %v4696
    %v4705 = vpack.c.bf16 %v4697, %v4697
    %v4706 = vpack.c.bf16 %v4698, %v4698
    %v4707 = vpack.c.bf16 %v4699, %v4699
    %v4708 = vpack.c.bf16 %v4700, %v4700
    %v4717 = vunpack.c.l.b16 %v4701
    %v4718 = vunpack.c.l.b16 %v4702
    %v4719 = vunpack.c.l.b16 %v4703
    %v4720 = vunpack.c.l.b16 %v4704
    %v4721 = vunpack.c.l.b16 %v4705
    %v4722 = vunpack.c.l.b16 %v4706
    %v4723 = vunpack.c.l.b16 %v4707
    %v4724 = vunpack.c.l.b16 %v4708
    %v4725 = vpack.c.b16 %v4717, %v4717
    %v4726 = vpack.c.b16 %v4718, %v4718
    %v4727 = vpack.c.b16 %v4719, %v4719
    %v4728 = vpack.c.b16 %v4720, %v4720
    %v4729 = vpack.c.b16 %v4721, %v4721
    %v4730 = vpack.c.b16 %v4722, %v4722
    %v4731 = vpack.c.b16 %v4723, %v4723
    %v4732 = vpack.c.b16 %v4724, %v4724
    %v4733 = vunpack.c.l.b16 %v4725
    %v4734 = vunpack.c.l.b16 %v4726
    %v4735 = vunpack.c.l.b16 %v4727
    %v4736 = vunpack.c.l.b16 %v4728
    %v4737 = vunpack.c.l.b16 %v4729
    %v4738 = vunpack.c.l.b16 %v4730
    %v4739 = vunpack.c.l.b16 %v4731
    %v4740 = vunpack.c.l.b16 %v4732
    %v4741 = vrot.slane %v4733, 7
    %v4742 = vrot.slane %v4734, 6
    %v4743 = vsel %vm1124, %v4742, %v4741
    %v4744 = vrot.slane %v4735, 5
    %v4745 = vsel %vm1127, %v4744, %v4743
    %v4746 = vrot.slane %v4736, 4
    %v4747 = vsel %vm1130, %v4746, %v4745
    %v4748 = vrot.slane %v4737, 3
    %v4749 = vsel %vm1133, %v4748, %v4747
    %v4750 = vrot.slane %v4738, 2
    %v4751 = vsel %vm1136, %v4750, %v4749
    %v4752 = vrot.slane %v4739, 1
    %v4753 = vsel %vm1139, %v4752, %v4751
    %v4754 = vsel %vm1142, %v4740, %v4753
    %v4755 = vpack.c.b16 %v4754, %v4754
    %s4757 = scalar_lea.vmem [#allocation3], 28
    %4758 = vst [vmem:[%s4757] sm:$0xf] %v4755
    %v4759 = vld [vmem:[#allocation3] sm:$0xf]
    %v4760 = vld [vmem:[#allocation3 + $0x4] sm:$0xf]
    %v4761 = vld [vmem:[#allocation3 + $0x8] sm:$0xf]
    %v4762 = vld [vmem:[#allocation3 + $0xc] sm:$0xf]
    %v4763 = vld [vmem:[#allocation3 + $0x10] sm:$0xf]
    %v4764 = vld [vmem:[#allocation3 + $0x14] sm:$0xf]
    %v4765 = vld [vmem:[#allocation3 + $0x18] sm:$0xf]
    %v4766 = vld [vmem:[#allocation3 + $0x1c] sm:$0xf]
    %v4767 = vld [vmem:[%s1] sm:$0x1]
    %v4768 = vlaneseq
    %v4769 = vshrl.u32 %v4768, 7
    %v4770 = vlaneseq
    %v4771 = vshrl.u32 %v4770, 7
    %v4772 = vsub.s32 0, %v4771
    %v4773 = vrot.slane %v4767, %v4772
    %vm4774 = vcmp.lt.s32.totalorder %v4769, %v4773
    %v4775 = vsel %vm4774, 1, 0
    %v4776 = vcvt.s32.f32 %v4775
    %v4777 = vld [vmem:[#allocation11] sm:$0xf]
    %v4778 = vld [vmem:[#allocation11 + $0x4] sm:$0xf]
    %v4779 = vld [vmem:[#allocation11 + $0x8] sm:$0xf]
    %v4780 = vld [vmem:[#allocation11 + $0xc] sm:$0xf]
    %v4781 = vld [vmem:[#allocation11 + $0x10] sm:$0xf]
    %v4782 = vld [vmem:[#allocation11 + $0x14] sm:$0xf]
    %v4783 = vld [vmem:[#allocation11 + $0x18] sm:$0xf]
    %v4784 = vld [vmem:[#allocation11 + $0x1c] sm:$0xf]
    %v4785 = vld [vmem:[#allocation11 + $0x20] sm:$0xf]
    %v4786 = vld [vmem:[#allocation11 + $0x24] sm:$0xf]
    %v4787 = vld [vmem:[#allocation11 + $0x28] sm:$0xf]
    %v4788 = vld [vmem:[#allocation11 + $0x2c] sm:$0xf]
    %v4789 = vld [vmem:[#allocation11 + $0x30] sm:$0xf]
    %v4790 = vld [vmem:[#allocation11 + $0x34] sm:$0xf]
    %v4791 = vld [vmem:[#allocation11 + $0x38] sm:$0xf]
    %v4792 = vld [vmem:[#allocation11 + $0x3c] sm:$0xf]
    %v4793 = vld [vmem:[%s6] sm:$0x1]
    %v4795 = vlaneseq
    %v4796 = vshrl.u32 %v4795, 7
    %v4797 = vsub.s32 0, %v4796
    %v4798 = vrot.slane %v4793, %v4797
    %v4808 = vunpack.c.l.b16 %v4759
    %v4809 = vunpack.c.l.b16 %v4760
    %v4810 = vunpack.c.l.b16 %v4761
    %v4811 = vunpack.c.l.b16 %v4762
    %v4812 = vunpack.c.l.b16 %v4763
    %v4813 = vunpack.c.l.b16 %v4764
    %v4814 = vunpack.c.l.b16 %v4765
    %v4815 = vunpack.c.l.b16 %v4766
    %v4816 = vpack.c.b16 %v4809, %v4808
    %v4817 = vpack.c.b16 %v4811, %v4810
    %v4818 = vpack.c.b16 %v4813, %v4812
    %v4819 = vpack.c.b16 %v4815, %v4814
    %v4840 = vunpack.c.l.b16 %v4777
    %v4841 = vunpack.c.l.b16 %v4778
    %v4842 = vunpack.c.l.b16 %v4779
    %v4843 = vunpack.c.l.b16 %v4780
    %v4844 = vunpack.c.l.b16 %v4781
    %v4845 = vunpack.c.l.b16 %v4782
    %v4846 = vunpack.c.l.b16 %v4783
    %v4847 = vunpack.c.l.b16 %v4784
    %v4848 = vunpack.c.l.b16 %v4785
    %v4849 = vunpack.c.l.b16 %v4786
    %v4850 = vunpack.c.l.b16 %v4787
    %v4851 = vunpack.c.l.b16 %v4788
    %v4852 = vunpack.c.l.b16 %v4789
    %v4853 = vunpack.c.l.b16 %v4790
    %v4854 = vunpack.c.l.b16 %v4791
    %v4855 = vunpack.c.l.b16 %v4792
    %v4856 = vpack.c.b16 %v4841, %v4840
    %v4857 = vpack.c.b16 %v4843, %v4842
    %v4858 = vpack.c.b16 %v4845, %v4844
    %v4859 = vpack.c.b16 %v4847, %v4846
    %v4860 = vpack.c.b16 %v4849, %v4848
    %v4861 = vpack.c.b16 %v4851, %v4850
    %v4862 = vpack.c.b16 %v4853, %v4852
    %v4863 = vpack.c.b16 %v4855, %v4854
    %4872 = vmatprep.subr.bf16.mxu0 0
    %4873 = vmatpush1.bf16.msra.mxu0 %v4856
    %4874 = vmatprep.subr.bf16.mxu0 0
    %4875 = vmatpush1.bf16.msra.mxu0 %v4857
    %4876 = vmatprep.subr.bf16.mxu0 0
    %4877 = vmatpush1.bf16.msra.mxu0 %v4858
    %4878 = vmatprep.subr.bf16.mxu0 0
    %4879 = vmatpush1.bf16.msra.mxu0 %v4859
    %4880 = vmatprep.subr.bf16.mxu0 0
    %4881 = vmatpush1.bf16.msra.mxu0 %v4860
    %4882 = vmatprep.subr.bf16.mxu0 0
    %4883 = vmatpush1.bf16.msra.mxu0 %v4861
    %4884 = vmatprep.subr.bf16.mxu0 0
    %4885 = vmatpush1.bf16.msra.mxu0 %v4862
    %4886 = vmatprep.subr.bf16.mxu0 0
    %4887 = vmatpush1.bf16.msra.mxu0 %v4863
    %4888 = vmatprep.subr.bf16.mxu0 0
    %4889 = vmatpush1.bf16.msra.mxu0 0
    %4890 = vmatprep.subr.bf16.mxu0 0
    %4891 = vmatpush1.bf16.msra.mxu0 0
    %4892 = vmatprep.subr.bf16.mxu0 0
    %4893 = vmatpush1.bf16.msra.mxu0 0
    %4894 = vmatprep.subr.bf16.mxu0 0
    %4895 = vmatpush1.bf16.msra.mxu0 0
    %4896 = vmatprep.subr.bf16.mxu0 0
    %4897 = vmatpush1.bf16.msra.mxu0 0
    %4898 = vmatprep.subr.bf16.mxu0 0
    %4899 = vmatpush1.bf16.msra.mxu0 0
    %4900 = vmatprep.subr.bf16.mxu0 0
    %4901 = vmatpush1.bf16.msra.mxu0 0
    %4902 = vmatprep.subr.bf16.mxu0 0
    %4903 = vmatpush1.bf16.msra.mxu0 0
    %4904 = vmatprep.mubr.bf16.mxu0 0
    %4905 = vmatmul.mubr.bf16.gmra.mrb[0].mxu0 %v4816
    %v4906 = vpop.f32.mrb[0].mxu0
    %v4907 = vadd.f32 %v4798, %v4906
    %v4908 = vpop.f32.mrb[0].mxu0
    %v4909 = vpop.f32.mrb[0].mxu0
    %v4910 = vadd.f32 %v4798, %v4909
    %v4911 = vpop.f32.mrb[0].mxu0
    %4912 = vmatprep.mubr.bf16.mxu0 0
    %4913 = vmatmul.mubr.bf16.gmra.mrb[0].mxu0 %v4817
    %v4914 = vpop.f32.mrb[0].mxu0
    %v4915 = vadd.f32 %v4798, %v4914
    %v4916 = vpop.f32.mrb[0].mxu0
    %v4917 = vpop.f32.mrb[0].mxu0
    %v4918 = vadd.f32 %v4798, %v4917
    %v4919 = vpop.f32.mrb[0].mxu0
    %4920 = vmatprep.mubr.bf16.mxu0 0
    %4921 = vmatmul.mubr.bf16.gmra.mrb[0].mxu0 %v4818
    %v4922 = vpop.f32.mrb[0].mxu0
    %v4923 = vadd.f32 %v4798, %v4922
    %v4924 = vpop.f32.mrb[0].mxu0
    %v4925 = vpop.f32.mrb[0].mxu0
    %v4926 = vadd.f32 %v4798, %v4925
    %v4927 = vpop.f32.mrb[0].mxu0
    %4928 = vmatprep.mubr.bf16.mxu0 0
    %4929 = vmatmul.mubr.bf16.gmra.mrb[0].mxu0 %v4819
    %v4930 = vpop.f32.mrb[0].mxu0
    %v4931 = vadd.f32 %v4798, %v4930
    %v4932 = vpop.f32.mrb[0].mxu0
    %v4933 = vpop.f32.mrb[0].mxu0
    %v4934 = vadd.f32 %v4798, %v4933
    %v4935 = vpop.f32.mrb[0].mxu0
    %4936 = vdwg.mxu0
    %v4937 = vtanh.pop %v4907
    %v4938 = vtanh.pop %v4910
    %v4939 = vtanh.pop %v4915
    %v4940 = vtanh.pop %v4918
    %v4941 = vtanh.pop %v4923
    %v4942 = vtanh.pop %v4926
    %v4943 = vtanh.pop %v4931
    %v4944 = vtanh.pop %v4934
    %v4945 = vld [vmem:[%s7] sm:$0x1]
    %v4947 = vlaneseq
    %v4948 = vshrl.u32 %v4947, 7
    %v4949 = vsub.s32 0, %v4948
    %v4950 = vrot.slane %v4945, %v4949
    %v4952 = vmul.f32 %v4937, %v4950
    %v4953 = vmul.f32 %v4938, %v4950
    %v4954 = vmul.f32 %v4939, %v4950
    %v4955 = vmul.f32 %v4940, %v4950
    %v4956 = vmul.f32 %v4941, %v4950
    %v4957 = vmul.f32 %v4942, %v4950
    %v4958 = vmul.f32 %v4943, %v4950
    %v4959 = vmul.f32 %v4944, %v4950
    %4960 = vadd.xlane.f32.xlu0 %v4952
    %v4961 = vpop.xlane.xlu0 %4960
    %4962 = vadd.xlane.f32.xlu0 %v4953
    %v4963 = vpop.xlane.xlu0 %4962
    %4964 = vadd.xlane.f32.xlu0 %v4954
    %v4965 = vpop.xlane.xlu0 %4964
    %4966 = vadd.xlane.f32.xlu0 %v4955
    %v4967 = vpop.xlane.xlu0 %4966
    %4968 = vadd.xlane.f32.xlu0 %v4956
    %v4969 = vpop.xlane.xlu0 %4968
    %4970 = vadd.xlane.f32.xlu0 %v4957
    %v4971 = vpop.xlane.xlu0 %4970
    %4972 = vadd.xlane.f32.xlu0 %v4958
    %v4973 = vpop.xlane.xlu0 %4972
    %4974 = vadd.xlane.f32.xlu0 %v4959
    %v4975 = vpop.xlane.xlu0 %4974
    %v4984 = vlaneseq
    %v4985 = vand.u32 %v4984, 127
    %v4986 = vlaneseq
    %v4987 = vshrl.u32 %v4986, 7
    %v4988 = vsub.s32 %v4985, %v4987
    %v4989 = vrot.slane %v4961, %v4988
    %v4990 = vlaneseq
    %v4991 = vshrl.u32 %v4990, 7
    %v4992 = vsub.s32 %v4985, %v4991
    %v4993 = vrot.slane %v4963, %v4992
    %v4994 = vlaneseq
    %v4995 = vshrl.u32 %v4994, 7
    %v4996 = vsub.s32 %v4985, %v4995
    %v4997 = vrot.slane %v4965, %v4996
    %v4998 = vlaneseq
    %v4999 = vshrl.u32 %v4998, 7
    %v5000 = vsub.s32 %v4985, %v4999
    %v5001 = vrot.slane %v4967, %v5000
    %v5002 = vlaneseq
    %v5003 = vshrl.u32 %v5002, 7
    %v5004 = vsub.s32 %v4985, %v5003
    %v5005 = vrot.slane %v4969, %v5004
    %v5006 = vlaneseq
    %v5007 = vshrl.u32 %v5006, 7
    %v5008 = vsub.s32 %v4985, %v5007
    %v5009 = vrot.slane %v4971, %v5008
    %v5010 = vlaneseq
    %v5011 = vshrl.u32 %v5010, 7
    %v5012 = vsub.s32 %v4985, %v5011
    %v5013 = vrot.slane %v4973, %v5012
    %v5014 = vlaneseq
    %v5015 = vshrl.u32 %v5014, 7
    %v5016 = vsub.s32 %v4985, %v5015
    %v5017 = vrot.slane %v4975, %v5016
    %v5018 = vsel %vm1124, %v4993, %v4989
    %v5019 = vsel %vm1127, %v4997, %v5018
    %v5020 = vsel %vm1130, %v5001, %v5019
    %v5021 = vsel %vm1133, %v5005, %v5020
    %v5022 = vsel %vm1136, %v5009, %v5021
    %v5023 = vsel %vm1139, %v5013, %v5022
    %v5024 = vsel %vm1142, %v5017, %v5023
    %v5026 = vsel %vm4774, %v5024, -1e+30
    %vm5027 = vcmask 64512
    %v5028 = vsel %vm5027, %v5026, -inf
    %v5029 = vrot.slane %v5028, 4
    %v5030 = vmax.f32 %v5028, %v5029
    %v5031 = vrot.slane %v5030, 2
    %v5032 = vmax.f32 %v5030, %v5031
    %v5033 = vrot.slane %v5032, 1
    %v5034 = vmax.f32 %v5032, %v5033
    %v5035 = vsub.f32 %v5026, %v5034
    %v5036 = vmul.f32 %v5035, 1.442695
    %v5037 = vpow.pop %v5036
    %v5038 = vmul.f32 %v5037, %v4776
    %v5039 = vsel %vm5027, %v5038, 0.0
    %v5040 = vrot.slane %v5039, 4
    %v5041 = vadd.f32 %v5039, %v5040
    %v5042 = vrot.slane %v5041, 2
    %v5043 = vadd.f32 %v5041, %v5042
    %v5044 = vrot.slane %v5043, 1
    %v5045 = vadd.f32 %v5043, %v5044
    %v5046 = vmax.f32 %v5045, 1e-20
    %v5047 = vrcp.pop %v5046
    %v5048 = vmul.f32 %v5038, %v5047
    %v5049 = vlaneseq
    %v5050 = vshrl.u32 %v5049, 7
    %v5051 = vsub.s32 0, %v5050
    %v5052 = vrot.slane %v5048, %v5051
    %5054 = vbcast.lane.b32.xlu0 %v5052, 256
    %v5055 = vpop.permute.xlu0 %5054
    %v5056 = vlaneseq
    %v5057 = vshrl.u32 %v5056, 7
    %v5058 = vsub.s32 1, %v5057
    %v5059 = vrot.slane %v5048, %v5058
    %5061 = vbcast.lane.b32.xlu0 %v5059, 256
    %v5062 = vpop.permute.xlu0 %5061
    %v5063 = vlaneseq
    %v5064 = vshrl.u32 %v5063, 7
    %v5065 = vsub.s32 2, %v5064
    %v5066 = vrot.slane %v5048, %v5065
    %5068 = vbcast.lane.b32.xlu0 %v5066, 256
    %v5069 = vpop.permute.xlu0 %5068
    %v5070 = vlaneseq
    %v5071 = vshrl.u32 %v5070, 7
    %v5072 = vsub.s32 3, %v5071
    %v5073 = vrot.slane %v5048, %v5072
    %5075 = vbcast.lane.b32.xlu0 %v5073, 256
    %v5076 = vpop.permute.xlu0 %5075
    %v5077 = vlaneseq
    %v5078 = vshrl.u32 %v5077, 7
    %v5079 = vsub.s32 4, %v5078
    %v5080 = vrot.slane %v5048, %v5079
    %5082 = vbcast.lane.b32.xlu0 %v5080, 256
    %v5083 = vpop.permute.xlu0 %5082
    %v5084 = vlaneseq
    %v5085 = vshrl.u32 %v5084, 7
    %v5086 = vsub.s32 5, %v5085
    %v5087 = vrot.slane %v5048, %v5086
    %5089 = vbcast.lane.b32.xlu0 %v5087, 256
    %v5090 = vpop.permute.xlu0 %5089
    %v5091 = vlaneseq
    %v5092 = vshrl.u32 %v5091, 7
    %v5093 = vsub.s32 6, %v5092
    %v5094 = vrot.slane %v5048, %v5093
    %5096 = vbcast.lane.b32.xlu0 %v5094, 256
    %v5097 = vpop.permute.xlu0 %5096
    %v5098 = vlaneseq
    %v5099 = vshrl.u32 %v5098, 7
    %v5100 = vsub.s32 7, %v5099
    %v5101 = vrot.slane %v5048, %v5100
    %5103 = vbcast.lane.b32.xlu0 %v5101, 256
    %v5104 = vpop.permute.xlu0 %5103
    %v5105 = vunpack.c.l.bf16 %v4759
    %v5106 = vunpack.c.l.bf16 %v4760
    %v5107 = vunpack.c.l.bf16 %v4761
    %v5108 = vunpack.c.l.bf16 %v4762
    %v5109 = vunpack.c.l.bf16 %v4763
    %v5110 = vunpack.c.l.bf16 %v4764
    %v5111 = vunpack.c.l.bf16 %v4765
    %v5112 = vunpack.c.l.bf16 %v4766
    %v5113 = vmul.f32 %v5055, %v5105
    %v5114 = vmul.f32 %v5062, %v5106
    %v5115 = vmul.f32 %v5069, %v5107
    %v5116 = vmul.f32 %v5076, %v5108
    %v5117 = vmul.f32 %v5083, %v5109
    %v5118 = vmul.f32 %v5090, %v5110
    %v5119 = vmul.f32 %v5097, %v5111
    %v5120 = vmul.f32 %v5104, %v5112
    %v5121 = vadd.f32 %v5113, %v5114
    %v5122 = vadd.f32 %v5121, %v5115
    %v5123 = vadd.f32 %v5122, %v5116
    %v5124 = vadd.f32 %v5123, %v5117
    %v5125 = vadd.f32 %v5124, %v5118
    %v5126 = vadd.f32 %v5125, %v5119
    %v5127 = vadd.f32 %v5126, %v5120
    %5128 = vst [vmem:[#allocation13] sm:$0xff] %v5127
    %v5129 = vld [vmem:[%s8] sm:$0x1]
    %v5130 = vld [vmem:[#allocation4] sm:$0x1]
    %v5132 = vlaneseq
    %v5133 = vshrl.u32 %v5132, 7
    %v5134 = vsub.s32 0, %v5133
    %v5135 = vrot.slane %v5129, %v5134
    %v5137 = vmul.f32 %v5127, %v5135
    %5138 = vadd.xlane.f32.xlu0 %v5137
    %v5139 = vpop.xlane.xlu0 %5138
    %v5141 = vlaneseq
    %v5142 = vshrl.u32 %v5141, 7
    %v5143 = vsub.s32 0, %v5142
    %v5144 = vrot.slane %v5130, %v5143
    %v5146 = vadd.f32 %v5139, %v5144
    %v5147 = vxor.u32 %v5146, 2147483648
    %v5148 = vmul.f32 %v5147, 1.442695
    %v5149 = vpow.pop %v5148
    %v5150 = vadd.f32 %v5149, 1.0
    %v5151 = vrcp.pop %v5150
    %v5152 = vmul.f32 1.0, %v5151
    %vm5153 = vcmask 7168
    %5154 = vst.msk [vmem:[%s11] sm:$0xff] %vm5153, %v5152
    // Predicated region
    $region58: #{tpu_custom_call.1} parent=1 // pred_check
      _
    $region59: #{tpu_custom_call.1} parent=1 // pred_check_branch
      %5156 = sbr.rel (0) target = $region61
    $region60: #{tpu_custom_call.1} parent=1 // pred_region
      %s5158 = ssub.s32 128, 128
      %5159 = vsyncadd [#allocation7], %s5158
      %s5161 = sshll.u32 [#allocation13], 4
      %s5162 = int_to_ptr.vmem [resolvable:$true] %s5161
      %5164 = dma.vmem_to_hbm [thread:$0]  %s5162, 128, %s10, [#allocation7]
    $region61: #{tpu_custom_call.1} parent=1 // pred_fallthru
      _
    // Predicated region
    $region62: #{tpu_custom_call.1} parent=1 // pred_check
      _
    $region63: #{tpu_custom_call.1} parent=1 // pred_check_branch
      %5166 = sbr.rel (0) target = $region65
    $region64: #{tpu_custom_call.1} parent=1 // pred_region
      _
    $region65: #{tpu_custom_call.1} parent=1 // pred_fallthru
      _
    // Predicated region
    $region66: #{tpu_custom_call.1} parent=1 // pred_check
      _
    $region67: #{tpu_custom_call.1} parent=1 // pred_check_branch
      %5168 = sbr.rel (0) target = $region69
    $region68: #{tpu_custom_call.1} parent=1 // pred_region
      %5169 = dma.done [#allocation7], 128
    $region69: #{tpu_custom_call.1} parent=1 // pred_fallthru
      _
    // Predicated region
    $region70: #{tpu_custom_call.1} parent=1 // pred_check
      _
    $region71: #{tpu_custom_call.1} parent=1 // pred_check_branch
      %5171 = sbr.rel (0) target = $region73
    $region72: #{tpu_custom_call.1} parent=1 // pred_region
      _
    $region73: #{tpu_custom_call.1} parent=1 // pred_fallthru
      _
    %5172 = vsyncpa [#allocation6], 1
    %5173 = vsyncpa [#allocation9], 1
    %5174 = vsyncpa [#allocation12], 1
    %5175 = vsyncpa [#allocation7], 1

// kernel: tpu_custom_call.1
$region0: #{tpu_custom_call.1}
  #allocation0 [shape = 'u32[]', space=smem, size = 0x4, offset = 0x4, fixed_abs, tag = 'smem constant byte address 0x4 - core index']
  #allocation1 [shape = 'u32[144,128]{1,0:T(1,128)}', space=vmem, size = 0x12000, scoped, tag = 'internal scratch']
  #allocation2 [shape = 'bf16[8,8,512]{2,1,0:T(8,128)(2,1)}', space=vmem, size = 0x10000, scoped, tag = 'scratch operand']
  #allocation3 [shape = 'bf16[8,8,128]{2,1,0:T(8,128)(2,1)}', space=vmem, size = 0x4000, scoped, tag = 'scratch operand']
  #allocation4 [shape = 'f32[1,1]{1,0:T(1,128)S(1)}', space=vmem, size = 0x200, scoped, tag = 'scoped memory for tpu_custom_call.1']
  %s0 = inlined_call_operand.hbm [shape: bf16[8,8,16], index: 0, kind: input, shape index: {}]
  %s1 = inlined_call_operand.vmem [shape: s32[1,8], index: 1, kind: input, shape index: {}]
  %s2 = inlined_call_operand.hbm [shape: bf16[16,512], index: 2, kind: input, shape index: {}]
  %s3 = inlined_call_operand.hbm [shape: bf16[128,512], index: 3, kind: input, shape index: {}]
  %s4 = inlined_call_operand.vmem [shape: f32[1,512], index: 4, kind: input, shape index: {}]
  %s5 = inlined_call_operand.hbm [shape: bf16[128,128], index: 5, kind: input, shape index: {}]
  %s6 = inlined_call_operand.vmem [shape: f32[1,128], index: 6, kind: input, shape index: {}]
  %s7 = inlined_call_operand.vmem [shape: f32[1,128], index: 7, kind: input, shape index: {}]
  %s8 = inlined_call_operand.vmem [shape: f32[1,128], index: 8, kind: input, shape index: {}]
  %s9 = inlined_call_operand.<no memory space> [shape: f32[1,1], index: 9, kind: input, shape index: {}]
  %s10 = inlined_call_operand.hbm [shape: f32[8,128], index: 10, kind: output, shape index: {0}]
  %s11 = inlined_call_operand.vmem [shape: f32[8,1], index: 11, kind: output, shape index: {1}]
  %12 = xla_tuple %s10, %s11
  %s13 = sld [smem:[#allocation0]]
  $region74: #{tpu_custom_call.1} parent=0
    _
  %s15 = ssub.s32 1, %s13
  %s16 = scalar_select 0, %s15, %s13
  %v17 = vstv %s9
  %18 = vst [vmem:[#allocation4] sm:$0x1] %v17
  $region1: #{tpu_custom_call.1} parent=0
    #allocation5 [shape = 'u8[16384]{0}', space=vmem, size = 0x4000, scoped, tag = 'input window, operand 0, single buffered']
    #allocation6 [shape = 's32[1]{0}', space=sflag, size = 0x4, scoped, tag = 'scoped memory for tpu_custom_call.1']
    #allocation7 [shape = 's32[1]{0}', space=sflag, size = 0x4, scoped, tag = 'scoped memory for tpu_custom_call.1']
    #allocation8 [shape = 'u8[16384]{0}', space=vmem, size = 0x4000, scoped, tag = 'input window, operand 2, single buffered']
    #allocation9 [shape = 's32[1]{0}', space=sflag, size = 0x4, scoped, tag = 'scoped memory for tpu_custom_call.1']
    #allocation10 [shape = 'u8[131072]{0}', space=vmem, size = 0x20000, scoped, tag = 'input window, operand 3, single buffered']
    #allocation11 [shape = 'u8[32768]{0}', space=vmem, size = 0x8000, scoped, tag = 'input window, operand 5, single buffered']
    #allocation12 [shape = 's32[1]{0}', space=sflag, size = 0x4, scoped, tag = 'scoped memory for tpu_custom_call.1']
    #allocation13 [shape = 'u8[4096]{0}', space=vmem, size = 0x1000, scoped, tag = 'output window, operand 0, single buffered']
    %19 = vsyncpa [#allocation6], 0
    %20 = vsyncpa [#allocation9], 0
    %21 = vsyncpa [#allocation12], 0
    %22 = vsyncpa [#allocation7], 0
    // Predicated region
    $region2: #{tpu_custom_call.1} parent=1 // pred_check
      _
    $region3: #{tpu_custom_call.1} parent=1 // pred_check_branch
      %24 = sbr.rel (0) target = $region5
    $region4: #{tpu_custom_call.1} parent=1 // pred_region
      %s26 = ssub.s32 512, 512
      %27 = vsyncadd [#allocation6], %s26
      %s28 = sshll.u32 [#allocation5], 4
      %s29 = int_to_ptr.vmem [resolvable:$true] %s28
      %34 = dma.hbm_to_vmem [thread:$0]  %s0, 512, %s29, [#allocation6], 64, 64, 4
    $region5: #{tpu_custom_call.1} parent=1 // pred_fallthru
      _
    // Predicated region
    $region6: #{tpu_custom_call.1} parent=1 // pred_check
      _
    $region7: #{tpu_custom_call.1} parent=1 // pred_check_branch
      %36 = sbr.rel (0) target = $region9
    $region8: #{tpu_custom_call.1} parent=1 // pred_region
      _
    $region9: #{tpu_custom_call.1} parent=1 // pred_fallthru
      _
    // Predicated region
    $region10: #{tpu_custom_call.1} parent=1 // pred_check
      _
    $region11: #{tpu_custom_call.1} parent=1 // pred_check_branch
      %38 = sbr.rel (0) target = $region13
    $region12: #{tpu_custom_call.1} parent=1 // pred_region
      %s40 = ssub.s32 512, 512
      %41 = vsyncadd [#allocation9], %s40
      %s42 = sshll.u32 [#allocation8], 4
      %s43 = int_to_ptr.vmem [resolvable:$true] %s42
      %48 = dma.hbm_to_vmem [thread:$0]  %s2, 512, %s43, [#allocation9], 256, 256, 16
    $region13: #{tpu_custom_call.1} parent=1 // pred_fallthru
      _
    // Predicated region
    $region14: #{tpu_custom_call.1} parent=1 // pred_check
      _
    $region15: #{tpu_custom_call.1} parent=1 // pred_check_branch
      %50 = sbr.rel (0) target = $region17
    $region16: #{tpu_custom_call.1} parent=1 // pred_region
      %s52 = ssub.s32 4096, 4096
      %53 = vsyncadd [#allocation9], %s52
      %s54 = sshll.u32 [#allocation10], 4
      %s55 = int_to_ptr.vmem [resolvable:$true] %s54
      %60 = dma.hbm_to_vmem [thread:$0]  %s3, 4096, %s55, [#allocation9], 256, 256, 16
    $region17: #{tpu_custom_call.1} parent=1 // pred_fallthru
      _
    // Predicated region
    $region18: #{tpu_custom_call.1} parent=1 // pred_check
      _
    $region19: #{tpu_custom_call.1} parent=1 // pred_check_branch
      %62 = sbr.rel (0) target = $region21
    $region20: #{tpu_custom_call.1} parent=1 // pred_region
      _
    $region21: #{tpu_custom_call.1} parent=1 // pred_fallthru
      _
    // Predicated region
    $region22: #{tpu_custom_call.1} parent=1 // pred_check
      _
    $region23: #{tpu_custom_call.1} parent=1 // pred_check_branch
      %64 = sbr.rel (0) target = $region25
    $region24: #{tpu_custom_call.1} parent=1 // pred_region
      %s66 = ssub.s32 1024, 1024
      %67 = vsyncadd [#allocation12], %s66
      %s68 = sshll.u32 [#allocation11], 4
      %s69 = int_to_ptr.vmem [resolvable:$true] %s68
      %74 = dma.hbm_to_vmem [thread:$0]  %s5, 1024, %s69, [#allocation12], 64, 64, 4
    $region25: #{tpu_custom_call.1} parent=1 // pred_fallthru
      _
    // Predicated region
    $region26: #{tpu_custom_call.1} parent=1 // pred_check
      _
    $region27: #{tpu_custom_call.1} parent=1 // pred_check_branch
      %76 = sbr.rel (0) target = $region29
    $region28: #{tpu_custom_call.1} parent=1 // pred_region
      _
    $region29: #{tpu_custom_call.1} parent=1 // pred_fallthru
      _
    // Predicated region
    $region30: #{tpu_custom_call.1} parent=1 // pred_check
      _
    $region31: #{tpu_custom_call.1} parent=1 // pred_check_branch
      %78 = sbr.rel (0) target = $region33
    $region32: #{tpu_custom_call.1} parent=1 // pred_region
      _
    $region33: #{tpu_custom_call.1} parent=1 // pred_fallthru
      _
    // Predicated region
    $region34: #{tpu_custom_call.1} parent=1 // pred_check
      _
    $region35: #{tpu_custom_call.1} parent=1 // pred_check_branch
      %80 = sbr.rel (0) target = $region37
    $region36: #{tpu_custom_call.1} parent=1 // pred_region
      _
    $region37: #{tpu_custom_call.1} parent=1 // pred_fallthru
      _
    // Predicated region
    $region38: #{tpu_custom_call.1} parent=1 // pred_check
      _
    $region39: #{tpu_custom_call.1} parent=1 // pred_check_branch
      %82 = sbr.rel (0) target = $region41
    $region40: #{tpu_custom_call.1} parent=1 // pred_region
      _
    $region41: #{tpu_custom_call.1} parent=1 // pred_fallthru
      _
    // Predicated region
    $region42: #{tpu_custom_call.1} parent=1 // pred_check
      _
    $region43: #{tpu_custom_call.1} parent=1 // pred_check_branch
      %84 = sbr.rel (0) target = $region45
    $region44: #{tpu_custom_call.1} parent=1 // pred_region
      %85 = dma.done [#allocation6], 512
    $region45: #{tpu_custom_call.1} parent=1 // pred_fallthru
      _
    // Predicated region
    $region46: #{tpu_custom_call.1} parent=1 // pred_check
      _
    $region47: #{tpu_custom_call.1} parent=1 // pred_check_branch
      %87 = sbr.rel (0) target = $region49
    $region48: #{tpu_custom_call.1} parent=1 // pred_region
      %88 = dma.done [#allocation9], 512
    $region49: #{tpu_custom_call.1} parent=1 // pred_fallthru
      _
    // Predicated region
    $region50: #{tpu_custom_call.1} parent=1 // pred_check
      _
    $region51: #{tpu_custom_call.1} parent=1 // pred_check_branch
      %90 = sbr.rel (0) target = $region53
    $region52: #{tpu_custom_call.1} parent=1 // pred_region
      %91 = dma.done [#allocation9], 4096
    $region53: #{tpu_custom_call.1} parent=1 // pred_fallthru
      _
    // Predicated region
    $region54: #{tpu_custom_call.1} parent=1 // pred_check
      _
    $region55: #{tpu_custom_call.1} parent=1 // pred_check_branch
      %93 = sbr.rel (0) target = $region57
    $region56: #{tpu_custom_call.1} parent=1 // pred_region
      %94 = dma.done [#allocation12], 1024
    $region57: #{tpu_custom_call.1} parent=1 // pred_fallthru
      _
    %v96 = vld [vmem:[#allocation5] sm:$0xf]
    %v97 = vld [vmem:[#allocation5 + $0x4] sm:$0xf]
    %v98 = vld [vmem:[#allocation5 + $0x8] sm:$0xf]
    %v99 = vld [vmem:[#allocation5 + $0xc] sm:$0xf]
    %v100 = vld [vmem:[#allocation5 + $0x10] sm:$0xf]
    %v101 = vld [vmem:[#allocation5 + $0x14] sm:$0xf]
    %v102 = vld [vmem:[#allocation5 + $0x18] sm:$0xf]
    %v103 = vld [vmem:[#allocation5 + $0x1c] sm:$0xf]
    %v104 = vld [vmem:[#allocation8] sm:$0xff]
    %v105 = vld [vmem:[#allocation8 + $0x8] sm:$0xff]
    %v106 = vld [vmem:[#allocation8 + $0x10] sm:$0xff]
    %v107 = vld [vmem:[#allocation8 + $0x18] sm:$0xff]
    %v108 = vld [vmem:[%s4] sm:$0xf]
    %v110 = vlaneseq
    %v111 = vshrl.u32 %v110, 7
    %v112 = vsub.s32 0, %v111
    %v113 = vrot.slane %v108, %v112
    %v114 = vlaneseq
    %v115 = vshrl.u32 %v114, 7
    %v116 = vsub.s32 1, %v115
    %v117 = vrot.slane %v108, %v116
    %v118 = vlaneseq
    %v119 = vshrl.u32 %v118, 7
    %v120 = vsub.s32 2, %v119
    %v121 = vrot.slane %v108, %v120
    %v122 = vlaneseq
    %v123 = vshrl.u32 %v122, 7
    %v124 = vsub.s32 3, %v123
    %v125 = vrot.slane %v108, %v124
    %v138 = vunpack.c.l.b16 %v96
    %v139 = vunpack.c.l.b16 %v97
    %v140 = vunpack.c.l.b16 %v98
    %v141 = vunpack.c.l.b16 %v99
    %v142 = vunpack.c.l.b16 %v100
    %v143 = vunpack.c.l.b16 %v101
    %v144 = vunpack.c.l.b16 %v102
    %v145 = vunpack.c.l.b16 %v103
    %v146 = vpack.c.b16 %v139, %v138
    %v147 = vpack.c.b16 %v141, %v140
    %v148 = vpack.c.b16 %v143, %v142
    %v149 = vpack.c.b16 %v145, %v144
    %v154 = vunpack.c.l.b16 %v104
    %v155 = vunpack.c.h.b16 %v104
    %v156 = vunpack.c.l.b16 %v105
    %v157 = vunpack.c.h.b16 %v105
    %v158 = vunpack.c.l.b16 %v106
    %v159 = vunpack.c.h.b16 %v106
    %v160 = vunpack.c.l.b16 %v107
    %v161 = vunpack.c.h.b16 %v107
    %v162 = vpack.c.b16 %v158, %v154
    %v163 = vpack.c.b16 %v159, %v155
    %v164 = vpack.c.b16 %v160, %v156
    %v165 = vpack.c.b16 %v161, %v157
    %vm170 = vcmask 130048
    %v172 = vsel %vm170, %v146, 0
    %v175 = vsel %vm170, %v147, 0
    %v178 = vsel %vm170, %v148, 0
    %v181 = vsel %vm170, %v149, 0
    %183 = vmatprep.subr.bf16.mxu0 %v163
    %184 = vmatpush1.bf16.msra.mxu0 %v162
    %185 = vmatprep.subr.bf16.mxu0 0
    %186 = vmatpush1.bf16.msra.mxu0 0
    %187 = vmatprep.subr.bf16.mxu0 0
    %188 = vmatpush1.bf16.msra.mxu0 0
    %189 = vmatprep.subr.bf16.mxu0 0
    %190 = vmatpush1.bf16.msra.mxu0 0
    %191 = vmatprep.subr.bf16.mxu0 0
    %192 = vmatpush1.bf16.msra.mxu0 0
    %193 = vmatprep.subr.bf16.mxu0 0
    %194 = vmatpush1.bf16.msra.mxu0 0
    %195 = vmatprep.subr.bf16.mxu0 0
    %196 = vmatpush1.bf16.msra.mxu0 0
    %197 = vmatprep.subr.bf16.mxu0 0
    %198 = vmatpush1.bf16.msra.mxu0 0
    %199 = vmatprep.subr.bf16.mxu0 0
    %200 = vmatpush1.bf16.msra.mxu0 0
    %201 = vmatprep.subr.bf16.mxu0 0
    %202 = vmatpush1.bf16.msra.mxu0 0
    %203 = vmatprep.subr.bf16.mxu0 0
    %204 = vmatpush1.bf16.msra.mxu0 0
    %205 = vmatprep.subr.bf16.mxu0 0
    %206 = vmatpush1.bf16.msra.mxu0 0
    %207 = vmatprep.subr.bf16.mxu0 0
    %208 = vmatpush1.bf16.msra.mxu0 0
    %209 = vmatprep.subr.bf16.mxu0 0
    %210 = vmatpush1.bf16.msra.mxu0 0
    %211 = vmatprep.subr.bf16.mxu0 0
    %212 = vmatpush1.bf16.msra.mxu0 0
    %213 = vmatprep.subr.bf16.mxu0 0
    %214 = vmatpush1.bf16.msra.mxu0 0
    %215 = vmatprep.mubr.bf16.mxu0 0
    %216 = vmatmul.mubr.bf16.gmra.mrb[0].mxu0 %v172
    %v217 = vpop.f32.mrb[0].mxu0
    %v218 = vadd.f32 %v113, %v217
    %v219 = vpop.f32.mrb[0].mxu0
    %v220 = vadd.f32 %v117, %v219
    %v221 = vpop.f32.mrb[0].mxu0
    %v222 = vadd.f32 %v113, %v221
    %v223 = vpop.f32.mrb[0].mxu0
    %v224 = vadd.f32 %v117, %v223
    %225 = vmatprep.mubr.bf16.mxu0 0
    %226 = vmatmul.mubr.bf16.gmra.mrb[0].mxu0 %v175
    %v227 = vpop.f32.mrb[0].mxu0
    %v228 = vadd.f32 %v113, %v227
    %v229 = vpop.f32.mrb[0].mxu0
    %v230 = vadd.f32 %v117, %v229
    %v231 = vpop.f32.mrb[0].mxu0
    %v232 = vadd.f32 %v113, %v231
    %v233 = vpop.f32.mrb[0].mxu0
    %v234 = vadd.f32 %v117, %v233
    %235 = vmatprep.mubr.bf16.mxu0 0
    %236 = vmatmul.mubr.bf16.gmra.mrb[0].mxu0 %v178
    %v237 = vpop.f32.mrb[0].mxu0
    %v238 = vadd.f32 %v113, %v237
    %v239 = vpop.f32.mrb[0].mxu0
    %v240 = vadd.f32 %v117, %v239
    %v241 = vpop.f32.mrb[0].mxu0
    %v242 = vadd.f32 %v113, %v241
    %v243 = vpop.f32.mrb[0].mxu0
    %v244 = vadd.f32 %v117, %v243
    %245 = vmatprep.mubr.bf16.mxu0 0
    %246 = vmatmul.mubr.bf16.gmra.mrb[0].mxu0 %v181
    %v247 = vpop.f32.mrb[0].mxu0
    %v248 = vadd.f32 %v113, %v247
    %v249 = vpop.f32.mrb[0].mxu0
    %v250 = vadd.f32 %v117, %v249
    %v251 = vpop.f32.mrb[0].mxu0
    %v252 = vadd.f32 %v113, %v251
    %v253 = vpop.f32.mrb[0].mxu0
    %v254 = vadd.f32 %v117, %v253
    %255 = vdwg.mxu0
    %256 = vmatprep.subr.bf16.mxu0 %v165
    %257 = vmatpush1.bf16.msra.mxu0 %v164
    %258 = vmatprep.subr.bf16.mxu0 0
    %259 = vmatpush1.bf16.msra.mxu0 0
    %260 = vmatprep.subr.bf16.mxu0 0
    %261 = vmatpush1.bf16.msra.mxu0 0
    %262 = vmatprep.subr.bf16.mxu0 0
    %263 = vmatpush1.bf16.msra.mxu0 0
    %264 = vmatprep.subr.bf16.mxu0 0
    %265 = vmatpush1.bf16.msra.mxu0 0
    %266 = vmatprep.subr.bf16.mxu0 0
    %267 = vmatpush1.bf16.msra.mxu0 0
    %268 = vmatprep.subr.bf16.mxu0 0
    %269 = vmatpush1.bf16.msra.mxu0 0
    %270 = vmatprep.subr.bf16.mxu0 0
    %271 = vmatpush1.bf16.msra.mxu0 0
    %272 = vmatprep.subr.bf16.mxu0 0
    %273 = vmatpush1.bf16.msra.mxu0 0
    %274 = vmatprep.subr.bf16.mxu0 0
    %275 = vmatpush1.bf16.msra.mxu0 0
    %276 = vmatprep.subr.bf16.mxu0 0
    %277 = vmatpush1.bf16.msra.mxu0 0
    %278 = vmatprep.subr.bf16.mxu0 0
    %279 = vmatpush1.bf16.msra.mxu0 0
    %280 = vmatprep.subr.bf16.mxu0 0
    %281 = vmatpush1.bf16.msra.mxu0 0
    %282 = vmatprep.subr.bf16.mxu0 0
    %283 = vmatpush1.bf16.msra.mxu0 0
    %284 = vmatprep.subr.bf16.mxu0 0
    %285 = vmatpush1.bf16.msra.mxu0 0
    %286 = vmatprep.subr.bf16.mxu0 0
    %287 = vmatpush1.bf16.msra.mxu0 0
    %288 = vmatprep.mubr.bf16.mxu0 0
    %289 = vmatmul.mubr.bf16.gmra.mrb[0].mxu0 %v172
    %v290 = vpop.f32.mrb[0].mxu0
    %v291 = vadd.f32 %v121, %v290
    %v292 = vpop.f32.mrb[0].mxu0
    %v293 = vadd.f32 %v125, %v292
    %v294 = vpop.f32.mrb[0].mxu0
    %v295 = vadd.f32 %v121, %v294
    %v296 = vpop.f32.mrb[0].mxu0
    %v297 = vadd.f32 %v125, %v296
    %298 = vmatprep.mubr.bf16.mxu0 0
    %299 = vmatmul.mubr.bf16.gmra.mrb[0].mxu0 %v175
    %v300 = vpop.f32.mrb[0].mxu0
    %v301 = vadd.f32 %v121, %v300
    %v302 = vpop.f32.mrb[0].mxu0
    %v303 = vadd.f32 %v125, %v302
    %v304 = vpop.f32.mrb[0].mxu0
    %v305 = vadd.f32 %v121, %v304
    %v306 = vpop.f32.mrb[0].mxu0
    %v307 = vadd.f32 %v125, %v306
    %308 = vmatprep.mubr.bf16.mxu0 0
    %309 = vmatmul.mubr.bf16.gmra.mrb[0].mxu0 %v178
    %v310 = vpop.f32.mrb[0].mxu0
    %v311 = vadd.f32 %v121, %v310
    %v312 = vpop.f32.mrb[0].mxu0
    %v313 = vadd.f32 %v125, %v312
    %v314 = vpop.f32.mrb[0].mxu0
    %v315 = vadd.f32 %v121, %v314
    %v316 = vpop.f32.mrb[0].mxu0
    %v317 = vadd.f32 %v125, %v316
    %318 = vmatprep.mubr.bf16.mxu0 0
    %319 = vmatmul.mubr.bf16.gmra.mrb[0].mxu0 %v181
    %v320 = vpop.f32.mrb[0].mxu0
    %v321 = vadd.f32 %v121, %v320
    %v322 = vpop.f32.mrb[0].mxu0
    %v323 = vadd.f32 %v125, %v322
    %v324 = vpop.f32.mrb[0].mxu0
    %v325 = vadd.f32 %v121, %v324
    %v326 = vpop.f32.mrb[0].mxu0
    %v327 = vadd.f32 %v125, %v326
    %328 = vdwg.mxu0
    %v329 = vpack.c.bf16 %v218, %v218
    %v330 = vpack.c.bf16 %v220, %v220
    %v331 = vpack.c.bf16 %v291, %v291
    %v332 = vpack.c.bf16 %v293, %v293
    %v333 = vpack.c.bf16 %v222, %v222
    %v334 = vpack.c.bf16 %v224, %v224
    %v335 = vpack.c.bf16 %v295, %v295
    %v336 = vpack.c.bf16 %v297, %v297
    %v337 = vpack.c.bf16 %v228, %v228
    %v338 = vpack.c.bf16 %v230, %v230
    %v339 = vpack.c.bf16 %v301, %v301
    %v340 = vpack.c.bf16 %v303, %v303
    %v341 = vpack.c.bf16 %v232, %v232
    %v342 = vpack.c.bf16 %v234, %v234
    %v343 = vpack.c.bf16 %v305, %v305
    %v344 = vpack.c.bf16 %v307, %v307
    %v345 = vpack.c.bf16 %v238, %v238
    %v346 = vpack.c.bf16 %v240, %v240
    %v347 = vpack.c.bf16 %v311, %v311
    %v348 = vpack.c.bf16 %v313, %v313
    %v349 = vpack.c.bf16 %v242, %v242
    %v350 = vpack.c.bf16 %v244, %v244
    %v351 = vpack.c.bf16 %v315, %v315
    %v352 = vpack.c.bf16 %v317, %v317
    %v353 = vpack.c.bf16 %v248, %v248
    %v354 = vpack.c.bf16 %v250, %v250
    %v355 = vpack.c.bf16 %v321, %v321
    %v356 = vpack.c.bf16 %v323, %v323
    %v357 = vpack.c.bf16 %v252, %v252
    %v358 = vpack.c.bf16 %v254, %v254
    %v359 = vpack.c.bf16 %v325, %v325
    %v360 = vpack.c.bf16 %v327, %v327
    %v393 = vunpack.c.l.b16 %v329
    %v394 = vunpack.c.l.b16 %v330
    %v395 = vunpack.c.l.b16 %v331
    %v396 = vunpack.c.l.b16 %v332
    %v397 = vunpack.c.l.b16 %v333
    %v398 = vunpack.c.l.b16 %v334
    %v399 = vunpack.c.l.b16 %v335
    %v400 = vunpack.c.l.b16 %v336
    %v401 = vunpack.c.l.b16 %v337
    %v402 = vunpack.c.l.b16 %v338
    %v403 = vunpack.c.l.b16 %v339
    %v404 = vunpack.c.l.b16 %v340
    %v405 = vunpack.c.l.b16 %v341
    %v406 = vunpack.c.l.b16 %v342
    %v407 = vunpack.c.l.b16 %v343
    %v408 = vunpack.c.l.b16 %v344
    %v409 = vunpack.c.l.b16 %v345
    %v410 = vunpack.c.l.b16 %v346
    %v411 = vunpack.c.l.b16 %v347
    %v412 = vunpack.c.l.b16 %v348
    %v413 = vunpack.c.l.b16 %v349
    %v414 = vunpack.c.l.b16 %v350
    %v415 = vunpack.c.l.b16 %v351
    %v416 = vunpack.c.l.b16 %v352
    %v417 = vunpack.c.l.b16 %v353
    %v418 = vunpack.c.l.b16 %v354
    %v419 = vunpack.c.l.b16 %v355
    %v420 = vunpack.c.l.b16 %v356
    %v421 = vunpack.c.l.b16 %v357
    %v422 = vunpack.c.l.b16 %v358
    %v423 = vunpack.c.l.b16 %v359
    %v424 = vunpack.c.l.b16 %v360
    %v425 = vpack.c.b16 %v394, %v393
    %v426 = vpack.c.b16 %v396, %v395
    %v427 = vpack.c.b16 %v398, %v397
    %v428 = vpack.c.b16 %v400, %v399
    %v429 = vpack.c.b16 %v402, %v401
    %v430 = vpack.c.b16 %v404, %v403
    %v431 = vpack.c.b16 %v406, %v405
    %v432 = vpack.c.b16 %v408, %v407
    %v433 = vpack.c.b16 %v410, %v409
    %v434 = vpack.c.b16 %v412, %v411
    %v435 = vpack.c.b16 %v414, %v413
    %v436 = vpack.c.b16 %v416, %v415
    %v437 = vpack.c.b16 %v418, %v417
    %v438 = vpack.c.b16 %v420, %v419
    %v439 = vpack.c.b16 %v422, %v421
    %v440 = vpack.c.b16 %v424, %v423
    %457 = vst [vmem:[#allocation2] sm:$0xff] %v425
    %458 = vst [vmem:[#allocation2 + $0x8] sm:$0xff] %v426
    %459 = vst [vmem:[#allocation2 + $0x10] sm:$0xff] %v427
    %460 = vst [vmem:[#allocation2 + $0x18] sm:$0xff] %v428
    %461 = vst [vmem:[#allocation2 + $0x20] sm:$0xff] %v429
    %462 = vst [vmem:[#allocation2 + $0x28] sm:$0xff] %v430
    %463 = vst [vmem:[#allocation2 + $0x30] sm:$0xff] %v431
    %464 = vst [vmem:[#allocation2 + $0x38] sm:$0xff] %v432
    %465 = vst [vmem:[#allocation2 + $0x40] sm:$0xff] %v433
    %466 = vst [vmem:[#allocation2 + $0x48] sm:$0xff] %v434
    %467 = vst [vmem:[#allocation2 + $0x50] sm:$0xff] %v435
    %468 = vst [vmem:[#allocation2 + $0x58] sm:$0xff] %v436
    %469 = vst [vmem:[#allocation2 + $0x60] sm:$0xff] %v437
    %470 = vst [vmem:[#allocation2 + $0x68] sm:$0xff] %v438
    %471 = vst [vmem:[#allocation2 + $0x70] sm:$0xff] %v439
    %472 = vst [vmem:[#allocation2 + $0x78] sm:$0xff] %v440
    %v473 = vld [vmem:[#allocation10] sm:$0xff]
    %v474 = vld [vmem:[#allocation10 + $0x8] sm:$0xff]
    %v475 = vld [vmem:[#allocation10 + $0x10] sm:$0xff]
    %v476 = vld [vmem:[#allocation10 + $0x18] sm:$0xff]
    %v477 = vld [vmem:[#allocation10 + $0x20] sm:$0xff]
    %v478 = vld [vmem:[#allocation10 + $0x28] sm:$0xff]
    %v479 = vld [vmem:[#allocation10 + $0x30] sm:$0xff]
    %v480 = vld [vmem:[#allocation10 + $0x38] sm:$0xff]
    %v481 = vld [vmem:[#allocation10 + $0x40] sm:$0xff]
    %v482 = vld [vmem:[#allocation10 + $0x48] sm:$0xff]
    %v483 = vld [vmem:[#allocation10 + $0x50] sm:$0xff]
    %v484 = vld [vmem:[#allocation10 + $0x58] sm:$0xff]
    %v485 = vld [vmem:[#allocation10 + $0x60] sm:$0xff]
    %v486 = vld [vmem:[#allocation10 + $0x68] sm:$0xff]
    %v487 = vld [vmem:[#allocation10 + $0x70] sm:$0xff]
    %v488 = vld [vmem:[#allocation10 + $0x78] sm:$0xff]
    %v489 = vld [vmem:[#allocation10 + $0x80] sm:$0xff]
    %v490 = vld [vmem:[#allocation10 + $0x88] sm:$0xff]
    %v491 = vld [vmem:[#allocation10 + $0x90] sm:$0xff]
    %v492 = vld [vmem:[#allocation10 + $0x98] sm:$0xff]
    %v493 = vld [vmem:[#allocation10 + $0xa0] sm:$0xff]
    %v494 = vld [vmem:[#allocation10 + $0xa8] sm:$0xff]
    %v495 = vld [vmem:[#allocation10 + $0xb0] sm:$0xff]
    %v496 = vld [vmem:[#allocation10 + $0xb8] sm:$0xff]
    %v497 = vld [vmem:[#allocation10 + $0xc0] sm:$0xff]
    %v498 = vld [vmem:[#allocation10 + $0xc8] sm:$0xff]
    %v499 = vld [vmem:[#allocation10 + $0xd0] sm:$0xff]
    %v500 = vld [vmem:[#allocation10 + $0xd8] sm:$0xff]
    %v501 = vld [vmem:[#allocation10 + $0xe0] sm:$0xff]
    %v502 = vld [vmem:[#allocation10 + $0xe8] sm:$0xff]
    %v503 = vld [vmem:[#allocation10 + $0xf0] sm:$0xff]
    %v504 = vld [vmem:[#allocation10 + $0xf8] sm:$0xff]
    %v505 = vld [vmem:[#allocation2] sm:$0x11]
    %v506 = vld [vmem:[#allocation2 + $0x8] sm:$0x11]
    %v507 = vld [vmem:[#allocation2 + $0x10] sm:$0x11]
    %v508 = vld [vmem:[#allocation2 + $0x18] sm:$0x11]
    %v509 = vld [vmem:[#allocation2 + $0x20] sm:$0x11]
    %v510 = vld [vmem:[#allocation2 + $0x28] sm:$0x11]
    %v511 = vld [vmem:[#allocation2 + $0x30] sm:$0x11]
    %v512 = vld [vmem:[#allocation2 + $0x38] sm:$0x11]
    %v513 = vld [vmem:[#allocation2 + $0x40] sm:$0x11]
    %v514 = vld [vmem:[#allocation2 + $0x48] sm:$0x11]
    %v515 = vld [vmem:[#allocation2 + $0x50] sm:$0x11]
    %v516 = vld [vmem:[#allocation2 + $0x58] sm:$0x11]
    %v517 = vld [vmem:[#allocation2 + $0x60] sm:$0x11]
    %v518 = vld [vmem:[#allocation2 + $0x68] sm:$0x11]
    %v519 = vld [vmem:[#allocation2 + $0x70] sm:$0x11]
    %v520 = vld [vmem:[#allocation2 + $0x78] sm:$0x11]
    %v521 = vunpack.c.l.bf16 %v505
    %v522 = vunpack.c.h.bf16 %v505
    %v523 = vunpack.c.l.bf16 %v506
    %v524 = vunpack.c.h.bf16 %v506
    %v525 = vunpack.c.l.bf16 %v507
    %v526 = vunpack.c.h.bf16 %v507
    %v527 = vunpack.c.l.bf16 %v508
    %v528 = vunpack.c.h.bf16 %v508
    %v529 = vunpack.c.l.bf16 %v509
    %v530 = vunpack.c.h.bf16 %v509
    %v531 = vunpack.c.l.bf16 %v510
    %v532 = vunpack.c.h.bf16 %v510
    %v533 = vunpack.c.l.bf16 %v511
    %v534 = vunpack.c.h.bf16 %v511
    %v535 = vunpack.c.l.bf16 %v512
    %v536 = vunpack.c.h.bf16 %v512
    %v537 = vunpack.c.l.bf16 %v513
    %v538 = vunpack.c.h.bf16 %v513
    %v539 = vunpack.c.l.bf16 %v514
    %v540 = vunpack.c.h.bf16 %v514
    %v541 = vunpack.c.l.bf16 %v515
    %v542 = vunpack.c.h.bf16 %v515
    %v543 = vunpack.c.l.bf16 %v516
    %v544 = vunpack.c.h.bf16 %v516
    %v545 = vunpack.c.l.bf16 %v517
    %v546 = vunpack.c.h.bf16 %v517
    %v547 = vunpack.c.l.bf16 %v518
    %v548 = vunpack.c.h.bf16 %v518
    %v549 = vunpack.c.l.bf16 %v519
    %v550 = vunpack.c.h.bf16 %v519
    %v551 = vunpack.c.l.bf16 %v520
    %v552 = vunpack.c.h.bf16 %v520
    %v585 = vunpack.c.l.b16 %v473
    %v586 = vunpack.c.h.b16 %v473
    %v587 = vunpack.c.l.b16 %v474
    %v588 = vunpack.c.h.b16 %v474
    %v589 = vunpack.c.l.b16 %v475
    %v590 = vunpack.c.h.b16 %v475
    %v591 = vunpack.c.l.b16 %v476
    %v592 = vunpack.c.h.b16 %v476
    %v593 = vunpack.c.l.b16 %v477
    %v594 = vunpack.c.h.b16 %v477
    %v595 = vunpack.c.l.b16 %v478
    %v596 = vunpack.c.h.b16 %v478
    %v597 = vunpack.c.l.b16 %v479
    %v598 = vunpack.c.h.b16 %v479
    %v599 = vunpack.c.l.b16 %v480
    %v600 = vunpack.c.h.b16 %v480
    %v601 = vunpack.c.l.b16 %v481
    %v602 = vunpack.c.h.b16 %v481
    %v603 = vunpack.c.l.b16 %v482
    %v604 = vunpack.c.h.b16 %v482
    %v605 = vunpack.c.l.b16 %v483
    %v606 = vunpack.c.h.b16 %v483
    %v607 = vunpack.c.l.b16 %v484
    %v608 = vunpack.c.h.b16 %v484
    %v609 = vunpack.c.l.b16 %v485
    %v610 = vunpack.c.h.b16 %v485
    %v611 = vunpack.c.l.b16 %v486
    %v612 = vunpack.c.h.b16 %v486
    %v613 = vunpack.c.l.b16 %v487
    %v614 = vunpack.c.h.b16 %v487
    %v615 = vunpack.c.l.b16 %v488
    %v616 = vunpack.c.h.b16 %v488
    %v617 = vunpack.c.l.b16 %v489
    %v618 = vunpack.c.h.b16 %v489
    %v619 = vunpack.c.l.b16 %v490
    %v620 = vunpack.c.h.b16 %v490
    %v621 = vunpack.c.l.b16 %v491
    %v622 = vunpack.c.h.b16 %v491
    %v623 = vunpack.c.l.b16 %v492
    %v624 = vunpack.c.h.b16 %v492
    %v625 = vunpack.c.l.b16 %v493
    %v626 = vunpack.c.h.b16 %v493
    %v627 = vunpack.c.l.b16 %v494
    %v628 = vunpack.c.h.b16 %v494
    %v629 = vunpack.c.l.b16 %v495
    %v630 = vunpack.c.h.b16 %v495
    %v631 = vunpack.c.l.b16 %v496
    %v632 = vunpack.c.h.b16 %v496
    %v633 = vunpack.c.l.b16 %v497
    %v634 = vunpack.c.h.b16 %v497
    %v635 = vunpack.c.l.b16 %v498
    %v636 = vunpack.c.h.b16 %v498
    %v637 = vunpack.c.l.b16 %v499
    %v638 = vunpack.c.h.b16 %v499
    %v639 = vunpack.c.l.b16 %v500
    %v640 = vunpack.c.h.b16 %v500
    %v641 = vunpack.c.l.b16 %v501
    %v642 = vunpack.c.h.b16 %v501
    %v643 = vunpack.c.l.b16 %v502
    %v644 = vunpack.c.h.b16 %v502
    %v645 = vunpack.c.l.b16 %v503
    %v646 = vunpack.c.h.b16 %v503
    %v647 = vunpack.c.l.b16 %v504
    %v648 = vunpack.c.h.b16 %v504
    %v649 = vpack.c.b16 %v589, %v585
    %v650 = vpack.c.b16 %v590, %v586
    %v651 = vpack.c.b16 %v591, %v587
    %v652 = vpack.c.b16 %v592, %v588
    %v653 = vpack.c.b16 %v597, %v593
    %v654 = vpack.c.b16 %v598, %v594
    %v655 = vpack.c.b16 %v599, %v595
    %v656 = vpack.c.b16 %v600, %v596
    %v657 = vpack.c.b16 %v605, %v601
    %v658 = vpack.c.b16 %v606, %v602
    %v659 = vpack.c.b16 %v607, %v603
    %v660 = vpack.c.b16 %v608, %v604
    %v661 = vpack.c.b16 %v613, %v609
    %v662 = vpack.c.b16 %v614, %v610
    %v663 = vpack.c.b16 %v615, %v611
    %v664 = vpack.c.b16 %v616, %v612
    %v665 = vpack.c.b16 %v621, %v617
    %v666 = vpack.c.b16 %v622, %v618
    %v667 = vpack.c.b16 %v623, %v619
    %v668 = vpack.c.b16 %v624, %v620
    %v669 = vpack.c.b16 %v629, %v625
    %v670 = vpack.c.b16 %v630, %v626
    %v671 = vpack.c.b16 %v631, %v627
    %v672 = vpack.c.b16 %v632, %v628
    %v673 = vpack.c.b16 %v637, %v633
    %v674 = vpack.c.b16 %v638, %v634
    %v675 = vpack.c.b16 %v639, %v635
    %v676 = vpack.c.b16 %v640, %v636
    %v677 = vpack.c.b16 %v645, %v641
    %v678 = vpack.c.b16 %v646, %v642
    %v679 = vpack.c.b16 %v647, %v643
    %v680 = vpack.c.b16 %v648, %v644
    %713 = vmatprep.subr.bf16.mxu0 %v650
    %714 = vmatpush1.bf16.msra.mxu0 %v649
    %715 = vmatprep.subr.bf16.mxu0 %v654
    %716 = vmatpush1.bf16.msra.mxu0 %v653
    %717 = vmatprep.subr.bf16.mxu0 %v658
    %718 = vmatpush1.bf16.msra.mxu0 %v657
    %719 = vmatprep.subr.bf16.mxu0 %v662
    %720 = vmatpush1.bf16.msra.mxu0 %v661
    %721 = vmatprep.subr.bf16.mxu0 %v666
    %722 = vmatpush1.bf16.msra.mxu0 %v665
    %723 = vmatprep.subr.bf16.mxu0 %v670
    %724 = vmatpush1.bf16.msra.mxu0 %v669
    %725 = vmatprep.subr.bf16.mxu0 %v674
    %726 = vmatpush1.bf16.msra.mxu0 %v673
    %727 = vmatprep.subr.bf16.mxu0 %v678
    %728 = vmatpush1.bf16.msra.mxu0 %v677
    %729 = vmatprep.subr.bf16.mxu0 0
    %730 = vmatpush1.bf16.msra.mxu0 0
    %731 = vmatprep.subr.bf16.mxu0 0
    %732 = vmatpush1.bf16.msra.mxu0 0
    %733 = vmatprep.subr.bf16.mxu0 0
    %734 = vmatpush1.bf16.msra.mxu0 0
    %735 = vmatprep.subr.bf16.mxu0 0
    %736 = vmatpush1.bf16.msra.mxu0 0
    %737 = vmatprep.subr.bf16.mxu0 0
    %738 = vmatpush1.bf16.msra.mxu0 0
    %739 = vmatprep.subr.bf16.mxu0 0
    %740 = vmatpush1.bf16.msra.mxu0 0
    %741 = vmatprep.subr.bf16.mxu0 0
    %742 = vmatpush1.bf16.msra.mxu0 0
    %743 = vmatprep.subr.bf16.mxu0 0
    %744 = vmatpush1.bf16.msra.mxu0 0
    %745 = vmatprep.mubr.bf16.mxu0 0
    %746 = vmatmul.mubr.bf16.gmra.mrb[0].mxu0 0
    %v747 = vpop.f32.mrb[0].mxu0
    %v748 = vadd.f32 0.0, %v747
    %v749 = vpop.f32.mrb[0].mxu0
    %v750 = vadd.f32 0.0, %v749
    %v751 = vpop.f32.mrb[0].mxu0
    %v752 = vpop.f32.mrb[0].mxu0
    %753 = vdwg.mxu0
    %754 = vmatprep.subr.bf16.mxu0 %v652
    %755 = vmatpush1.bf16.msra.mxu0 %v651
    %756 = vmatprep.subr.bf16.mxu0 %v656
    %757 = vmatpush1.bf16.msra.mxu0 %v655
    %758 = vmatprep.subr.bf16.mxu0 %v660
    %759 = vmatpush1.bf16.msra.mxu0 %v659
    %760 = vmatprep.subr.bf16.mxu0 %v664
    %761 = vmatpush1.bf16.msra.mxu0 %v663
    %762 = vmatprep.subr.bf16.mxu0 %v668
    %763 = vmatpush1.bf16.msra.mxu0 %v667
    %764 = vmatprep.subr.bf16.mxu0 %v672
    %765 = vmatpush1.bf16.msra.mxu0 %v671
    %766 = vmatprep.subr.bf16.mxu0 %v676
    %767 = vmatpush1.bf16.msra.mxu0 %v675
    %768 = vmatprep.subr.bf16.mxu0 %v680
    %769 = vmatpush1.bf16.msra.mxu0 %v679
    %770 = vmatprep.subr.bf16.mxu0 0
    %771 = vmatpush1.bf16.msra.mxu0 0
    %772 = vmatprep.subr.bf16.mxu0 0
    %773 = vmatpush1.bf16.msra.mxu0 0
    %774 = vmatprep.subr.bf16.mxu0 0
    %775 = vmatpush1.bf16.msra.mxu0 0
    %776 = vmatprep.subr.bf16.mxu0 0
    %777 = vmatpush1.bf16.msra.mxu0 0
    %778 = vmatprep.subr.bf16.mxu0 0
    %779 = vmatpush1.bf16.msra.mxu0 0
    %780 = vmatprep.subr.bf16.mxu0 0
    %781 = vmatpush1.bf16.msra.mxu0 0
    %782 = vmatprep.subr.bf16.mxu0 0
    %783 = vmatpush1.bf16.msra.mxu0 0
    %784 = vmatprep.subr.bf16.mxu0 0
    %785 = vmatpush1.bf16.msra.mxu0 0
    %786 = vmatprep.mubr.bf16.mxu0 0
    %787 = vmatmul.mubr.bf16.gmra.mrb[0].mxu0 0
    %v788 = vpop.f32.mrb[0].mxu0
    %v789 = vadd.f32 0.0, %v788
    %v790 = vpop.f32.mrb[0].mxu0
    %v791 = vadd.f32 0.0, %v790
    %v792 = vpop.f32.mrb[0].mxu0
    %v793 = vpop.f32.mrb[0].mxu0
    %794 = vdwg.mxu0
    %v799 = vrot.slane %v748, 1
    %v800 = vrot.slane %v750, 1
    %v801 = vrot.slane %v789, 1
    %v802 = vrot.slane %v791, 1
    %v803 = vrot.slane %v748, 2
    %v804 = vrot.slane %v750, 2
    %v805 = vrot.slane %v789, 2
    %v806 = vrot.slane %v791, 2
    %v807 = vrot.slane %v748, 3
    %v808 = vrot.slane %v750, 3
    %v809 = vrot.slane %v789, 3
    %v810 = vrot.slane %v791, 3
    %v811 = vrot.slane %v748, 4
    %v812 = vrot.slane %v750, 4
    %v813 = vrot.slane %v789, 4
    %v814 = vrot.slane %v791, 4
    %v815 = vrot.slane %v748, 5
    %v816 = vrot.slane %v750, 5
    %v817 = vrot.slane %v789, 5
    %v818 = vrot.slane %v791, 5
    %v819 = vrot.slane %v748, 6
    %v820 = vrot.slane %v750, 6
    %v821 = vrot.slane %v789, 6
    %v822 = vrot.slane %v791, 6
    %v823 = vrot.slane %v748, 7
    %v824 = vrot.slane %v750, 7
    %v825 = vrot.slane %v789, 7
    %v826 = vrot.slane %v791, 7
    %v859 = vadd.f32 %v521, %v748
    %v860 = vadd.f32 %v522, %v750
    %v861 = vadd.f32 %v523, %v789
    %v862 = vadd.f32 %v524, %v791
    %v863 = vadd.f32 %v525, %v799
    %v864 = vadd.f32 %v526, %v800
    %v865 = vadd.f32 %v527, %v801
    %v866 = vadd.f32 %v528, %v802
    %v867 = vadd.f32 %v529, %v803
    %v868 = vadd.f32 %v530, %v804
    %v869 = vadd.f32 %v531, %v805
    %v870 = vadd.f32 %v532, %v806
    %v871 = vadd.f32 %v533, %v807
    %v872 = vadd.f32 %v534, %v808
    %v873 = vadd.f32 %v535, %v809
    %v874 = vadd.f32 %v536, %v810
    %v875 = vadd.f32 %v537, %v811
    %v876 = vadd.f32 %v538, %v812
    %v877 = vadd.f32 %v539, %v813
    %v878 = vadd.f32 %v540, %v814
    %v879 = vadd.f32 %v541, %v815
    %v880 = vadd.f32 %v542, %v816
    %v881 = vadd.f32 %v543, %v817
    %v882 = vadd.f32 %v544, %v818
    %v883 = vadd.f32 %v545, %v819
    %v884 = vadd.f32 %v546, %v820
    %v885 = vadd.f32 %v547, %v821
    %v886 = vadd.f32 %v548, %v822
    %v887 = vadd.f32 %v549, %v823
    %v888 = vadd.f32 %v550, %v824
    %v889 = vadd.f32 %v551, %v825
    %v890 = vadd.f32 %v552, %v826
    %v891 = vxor.u32 %v859, 2147483648
    %v892 = vxor.u32 %v863, 2147483648
    %v893 = vxor.u32 %v867, 2147483648
    %v894 = vxor.u32 %v871, 2147483648
    %v895 = vxor.u32 %v875, 2147483648
    %v896 = vxor.u32 %v879, 2147483648
    %v897 = vxor.u32 %v883, 2147483648
    %v898 = vxor.u32 %v887, 2147483648
    %v899 = vmul.f32 %v891, 1.442695
    %v900 = vpow.pop %v899
    %v901 = vmul.f32 %v892, 1.442695
    %v902 = vpow.pop %v901
    %v903 = vmul.f32 %v893, 1.442695
    %v904 = vpow.pop %v903
    %v905 = vmul.f32 %v894, 1.442695
    %v906 = vpow.pop %v905
    %v907 = vmul.f32 %v895, 1.442695
    %v908 = vpow.pop %v907
    %v909 = vmul.f32 %v896, 1.442695
    %v910 = vpow.pop %v909
    %v911 = vmul.f32 %v897, 1.442695
    %v912 = vpow.pop %v911
    %v913 = vmul.f32 %v898, 1.442695
    %v914 = vpow.pop %v913
    %v915 = vadd.f32 %v900, 1.0
    %v916 = vadd.f32 %v902, 1.0
    %v917 = vadd.f32 %v904, 1.0
    %v918 = vadd.f32 %v906, 1.0
    %v919 = vadd.f32 %v908, 1.0
    %v920 = vadd.f32 %v910, 1.0
    %v921 = vadd.f32 %v912, 1.0
    %v922 = vadd.f32 %v914, 1.0
    %v923 = vrcp.pop %v915
    %v924 = vmul.f32 1.0, %v923
    %v925 = vrcp.pop %v916
    %v926 = vmul.f32 1.0, %v925
    %v927 = vrcp.pop %v917
    %v928 = vmul.f32 1.0, %v927
    %v929 = vrcp.pop %v918
    %v930 = vmul.f32 1.0, %v929
    %v931 = vrcp.pop %v919
    %v932 = vmul.f32 1.0, %v931
    %v933 = vrcp.pop %v920
    %v934 = vmul.f32 1.0, %v933
    %v935 = vrcp.pop %v921
    %v936 = vmul.f32 1.0, %v935
    %v937 = vrcp.pop %v922
    %v938 = vmul.f32 1.0, %v937
    %v939 = vxor.u32 %v860, 2147483648
    %v940 = vxor.u32 %v864, 2147483648
    %v941 = vxor.u32 %v868, 2147483648
    %v942 = vxor.u32 %v872, 2147483648
    %v943 = vxor.u32 %v876, 2147483648
    %v944 = vxor.u32 %v880, 2147483648
    %v945 = vxor.u32 %v884, 2147483648
    %v946 = vxor.u32 %v888, 2147483648
    %v947 = vmul.f32 %v939, 1.442695
    %v948 = vpow.pop %v947
    %v949 = vmul.f32 %v940, 1.442695
    %v950 = vpow.pop %v949
    %v951 = vmul.f32 %v941, 1.442695
    %v952 = vpow.pop %v951
    %v953 = vmul.f32 %v942, 1.442695
    %v954 = vpow.pop %v953
    %v955 = vmul.f32 %v943, 1.442695
    %v956 = vpow.pop %v955
    %v957 = vmul.f32 %v944, 1.442695
    %v958 = vpow.pop %v957
    %v959 = vmul.f32 %v945, 1.442695
    %v960 = vpow.pop %v959
    %v961 = vmul.f32 %v946, 1.442695
    %v962 = vpow.pop %v961
    %v963 = vadd.f32 %v948, 1.0
    %v964 = vadd.f32 %v950, 1.0
    %v965 = vadd.f32 %v952, 1.0
    %v966 = vadd.f32 %v954, 1.0
    %v967 = vadd.f32 %v956, 1.0
    %v968 = vadd.f32 %v958, 1.0
    %v969 = vadd.f32 %v960, 1.0
    %v970 = vadd.f32 %v962, 1.0
    %v971 = vrcp.pop %v963
    %v972 = vmul.f32 1.0, %v971
    %v973 = vrcp.pop %v964
    %v974 = vmul.f32 1.0, %v973
    %v975 = vrcp.pop %v965
    %v976 = vmul.f32 1.0, %v975
    %v977 = vrcp.pop %v966
    %v978 = vmul.f32 1.0, %v977
    %v979 = vrcp.pop %v967
    %v980 = vmul.f32 1.0, %v979
    %v981 = vrcp.pop %v968
    %v982 = vmul.f32 1.0, %v981
    %v983 = vrcp.pop %v969
    %v984 = vmul.f32 1.0, %v983
    %v985 = vrcp.pop %v970
    %v986 = vmul.f32 1.0, %v985
    %v987 = vtanh.pop %v861
    %v988 = vtanh.pop %v865
    %v989 = vtanh.pop %v869
    %v990 = vtanh.pop %v873
    %v991 = vtanh.pop %v877
    %v992 = vtanh.pop %v881
    %v993 = vtanh.pop %v885
    %v994 = vtanh.pop %v889
    %v995 = vxor.u32 %v862, 2147483648
    %v996 = vxor.u32 %v866, 2147483648
    %v997 = vxor.u32 %v870, 2147483648
    %v998 = vxor.u32 %v874, 2147483648
    %v999 = vxor.u32 %v878, 2147483648
    %v1000 = vxor.u32 %v882, 2147483648
    %v1001 = vxor.u32 %v886, 2147483648
    %v1002 = vxor.u32 %v890, 2147483648
    %v1003 = vmul.f32 %v995, 1.442695
    %v1004 = vpow.pop %v1003
    %v1005 = vmul.f32 %v996, 1.442695
    %v1006 = vpow.pop %v1005
    %v1007 = vmul.f32 %v997, 1.442695
    %v1008 = vpow.pop %v1007
    %v1009 = vmul.f32 %v998, 1.442695
    %v1010 = vpow.pop %v1009
    %v1011 = vmul.f32 %v999, 1.442695
    %v1012 = vpow.pop %v1011
    %v1013 = vmul.f32 %v1000, 1.442695
    %v1014 = vpow.pop %v1013
    %v1015 = vmul.f32 %v1001, 1.442695
    %v1016 = vpow.pop %v1015
    %v1017 = vmul.f32 %v1002, 1.442695
    %v1018 = vpow.pop %v1017
    %v1019 = vadd.f32 %v1004, 1.0
    %v1020 = vadd.f32 %v1006, 1.0
    %v1021 = vadd.f32 %v1008, 1.0
    %v1022 = vadd.f32 %v1010, 1.0
    %v1023 = vadd.f32 %v1012, 1.0
    %v1024 = vadd.f32 %v1014, 1.0
    %v1025 = vadd.f32 %v1016, 1.0
    %v1026 = vadd.f32 %v1018, 1.0
    %v1027 = vrcp.pop %v1019
    %v1028 = vmul.f32 1.0, %v1027
    %v1029 = vrcp.pop %v1020
    %v1030 = vmul.f32 1.0, %v1029
    %v1031 = vrcp.pop %v1021
    %v1032 = vmul.f32 1.0, %v1031
    %v1033 = vrcp.pop %v1022
    %v1034 = vmul.f32 1.0, %v1033
    %v1035 = vrcp.pop %v1023
    %v1036 = vmul.f32 1.0, %v1035
    %v1037 = vrcp.pop %v1024
    %v1038 = vmul.f32 1.0, %v1037
    %v1039 = vrcp.pop %v1025
    %v1040 = vmul.f32 1.0, %v1039
    %v1041 = vrcp.pop %v1026
    %v1042 = vmul.f32 1.0, %v1041
    %v1043 = vmul.f32 %v972, 0.0
    %v1044 = vmul.f32 %v974, 0.0
    %v1045 = vmul.f32 %v976, 0.0
    %v1046 = vmul.f32 %v978, 0.0
    %v1047 = vmul.f32 %v980, 0.0
    %v1048 = vmul.f32 %v982, 0.0
    %v1049 = vmul.f32 %v984, 0.0
    %v1050 = vmul.f32 %v986, 0.0
    %v1051 = vmul.f32 %v924, %v987
    %v1052 = vmul.f32 %v926, %v988
    %v1053 = vmul.f32 %v928, %v989
    %v1054 = vmul.f32 %v930, %v990
    %v1055 = vmul.f32 %v932, %v991
    %v1056 = vmul.f32 %v934, %v992
    %v1057 = vmul.f32 %v936, %v993
    %v1058 = vmul.f32 %v938, %v994
    %v1059 = vadd.f32 %v1043, %v1051
    %v1060 = vadd.f32 %v1044, %v1052
    %v1061 = vadd.f32 %v1045, %v1053
    %v1062 = vadd.f32 %v1046, %v1054
    %v1063 = vadd.f32 %v1047, %v1055
    %v1064 = vadd.f32 %v1048, %v1056
    %v1065 = vadd.f32 %v1049, %v1057
    %v1066 = vadd.f32 %v1050, %v1058
    %v1067 = vtanh.pop %v1059
    %v1068 = vtanh.pop %v1060
    %v1069 = vtanh.pop %v1061
    %v1070 = vtanh.pop %v1062
    %v1071 = vtanh.pop %v1063
    %v1072 = vtanh.pop %v1064
    %v1073 = vtanh.pop %v1065
    %v1074 = vtanh.pop %v1066
    %v1075 = vmul.f32 %v1028, %v1067
    %v1076 = vmul.f32 %v1030, %v1068
    %v1077 = vmul.f32 %v1032, %v1069
    %v1078 = vmul.f32 %v1034, %v1070
    %v1079 = vmul.f32 %v1036, %v1071
    %v1080 = vmul.f32 %v1038, %v1072
    %v1081 = vmul.f32 %v1040, %v1073
    %v1082 = vmul.f32 %v1042, %v1074
    %v1083 = vpack.c.bf16 %v1075, %v1075
    %v1084 = vpack.c.bf16 %v1076, %v1076
    %v1085 = vpack.c.bf16 %v1077, %v1077
    %v1086 = vpack.c.bf16 %v1078, %v1078
    %v1087 = vpack.c.bf16 %v1079, %v1079
    %v1088 = vpack.c.bf16 %v1080, %v1080
    %v1089 = vpack.c.bf16 %v1081, %v1081
    %v1090 = vpack.c.bf16 %v1082, %v1082
    %v1099 = vunpack.c.l.b16 %v1083
    %v1100 = vunpack.c.l.b16 %v1084
    %v1101 = vunpack.c.l.b16 %v1085
    %v1102 = vunpack.c.l.b16 %v1086
    %v1103 = vunpack.c.l.b16 %v1087
    %v1104 = vunpack.c.l.b16 %v1088
    %v1105 = vunpack.c.l.b16 %v1089
    %v1106 = vunpack.c.l.b16 %v1090
    %v1107 = vpack.c.b16 %v1099, %v1099
    %v1108 = vpack.c.b16 %v1100, %v1100
    %v1109 = vpack.c.b16 %v1101, %v1101
    %v1110 = vpack.c.b16 %v1102, %v1102
    %v1111 = vpack.c.b16 %v1103, %v1103
    %v1112 = vpack.c.b16 %v1104, %v1104
    %v1113 = vpack.c.b16 %v1105, %v1105
    %v1114 = vpack.c.b16 %v1106, %v1106
    %v1115 = vunpack.c.l.b16 %v1107
    %v1116 = vunpack.c.l.b16 %v1108
    %v1117 = vunpack.c.l.b16 %v1109
    %v1118 = vunpack.c.l.b16 %v1110
    %v1119 = vunpack.c.l.b16 %v1111
    %v1120 = vunpack.c.l.b16 %v1112
    %v1121 = vunpack.c.l.b16 %v1113
    %v1122 = vunpack.c.l.b16 %v1114
    %v1123 = vrot.slane %v1116, 7
    %vm1124 = vcmask 1041409
    %v1125 = vsel %vm1124, %v1123, %v1115
    %v1126 = vrot.slane %v1117, 6
    %vm1127 = vcmask 1042434
    %v1128 = vsel %vm1127, %v1126, %v1125
    %v1129 = vrot.slane %v1118, 5
    %vm1130 = vcmask 1043459
    %v1131 = vsel %vm1130, %v1129, %v1128
    %v1132 = vrot.slane %v1119, 4
    %vm1133 = vcmask 1044484
    %v1134 = vsel %vm1133, %v1132, %v1131
    %v1135 = vrot.slane %v1120, 3
    %vm1136 = vcmask 1045509
    %v1137 = vsel %vm1136, %v1135, %v1134
    %v1138 = vrot.slane %v1121, 2
    %vm1139 = vcmask 1046534
    %v1140 = vsel %vm1139, %v1138, %v1137
    %v1141 = vrot.slane %v1122, 1
    %vm1142 = vcmask 1047559
    %v1143 = vsel %vm1142, %v1141, %v1140
    %v1144 = vpack.c.b16 %v1143, %v1143
    %1146 = vst [vmem:[#allocation3] sm:$0xf] %v1144
    %v1147 = vld [vmem:[#allocation2] sm:$0x11]
    %v1148 = vld [vmem:[#allocation2 + $0x8] sm:$0x11]
    %v1149 = vld [vmem:[#allocation2 + $0x10] sm:$0x11]
    %v1150 = vld [vmem:[#allocation2 + $0x18] sm:$0x11]
    %v1151 = vld [vmem:[#allocation2 + $0x20] sm:$0x11]
    %v1152 = vld [vmem:[#allocation2 + $0x28] sm:$0x11]
    %v1153 = vld [vmem:[#allocation2 + $0x30] sm:$0x11]
    %v1154 = vld [vmem:[#allocation2 + $0x38] sm:$0x11]
    %v1155 = vld [vmem:[#allocation2 + $0x40] sm:$0x11]
    %v1156 = vld [vmem:[#allocation2 + $0x48] sm:$0x11]
    %v1157 = vld [vmem:[#allocation2 + $0x50] sm:$0x11]
    %v1158 = vld [vmem:[#allocation2 + $0x58] sm:$0x11]
    %v1159 = vld [vmem:[#allocation2 + $0x60] sm:$0x11]
    %v1160 = vld [vmem:[#allocation2 + $0x68] sm:$0x11]
    %v1161 = vld [vmem:[#allocation2 + $0x70] sm:$0x11]
    %v1162 = vld [vmem:[#allocation2 + $0x78] sm:$0x11]
    %v1163 = vunpack.c.l.bf16 %v1147
    %v1164 = vunpack.c.h.bf16 %v1147
    %v1165 = vunpack.c.l.bf16 %v1148
    %v1166 = vunpack.c.h.bf16 %v1148
    %v1167 = vunpack.c.l.bf16 %v1149
    %v1168 = vunpack.c.h.bf16 %v1149
    %v1169 = vunpack.c.l.bf16 %v1150
    %v1170 = vunpack.c.h.bf16 %v1150
    %v1171 = vunpack.c.l.bf16 %v1151
    %v1172 = vunpack.c.h.bf16 %v1151
    %v1173 = vunpack.c.l.bf16 %v1152
    %v1174 = vunpack.c.h.bf16 %v1152
    %v1175 = vunpack.c.l.bf16 %v1153
    %v1176 = vunpack.c.h.bf16 %v1153
    %v1177 = vunpack.c.l.bf16 %v1154
    %v1178 = vunpack.c.h.bf16 %v1154
    %v1179 = vunpack.c.l.bf16 %v1155
    %v1180 = vunpack.c.h.bf16 %v1155
    %v1181 = vunpack.c.l.bf16 %v1156
    %v1182 = vunpack.c.h.bf16 %v1156
    %v1183 = vunpack.c.l.bf16 %v1157
    %v1184 = vunpack.c.h.bf16 %v1157
    %v1185 = vunpack.c.l.bf16 %v1158
    %v1186 = vunpack.c.h.bf16 %v1158
    %v1187 = vunpack.c.l.bf16 %v1159
    %v1188 = vunpack.c.h.bf16 %v1159
    %v1189 = vunpack.c.l.bf16 %v1160
    %v1190 = vunpack.c.h.bf16 %v1160
    %v1191 = vunpack.c.l.bf16 %v1161
    %v1192 = vunpack.c.h.bf16 %v1161
    %v1193 = vunpack.c.l.bf16 %v1162
    %v1194 = vunpack.c.h.bf16 %v1162
    %v1195 = vrot.slane %v1100, 7
    %v1196 = vsel %vm1124, %v1195, %v1099
    %v1197 = vrot.slane %v1101, 6
    %v1198 = vsel %vm1127, %v1197, %v1196
    %v1199 = vrot.slane %v1102, 5
    %v1200 = vsel %vm1130, %v1199, %v1198
    %v1201 = vrot.slane %v1103, 4
    %v1202 = vsel %vm1133, %v1201, %v1200
    %v1203 = vrot.slane %v1104, 3
    %v1204 = vsel %vm1136, %v1203, %v1202
    %v1205 = vrot.slane %v1105, 2
    %v1206 = vsel %vm1139, %v1205, %v1204
    %v1207 = vrot.slane %v1106, 1
    %v1208 = vsel %vm1142, %v1207, %v1206
    %v1209 = vpack.c.b16 %v1208, %v1208
    %1211 = vmatprep.subr.bf16.mxu0 %v650
    %1212 = vmatpush1.bf16.msra.mxu0 %v649
    %1213 = vmatprep.subr.bf16.mxu0 %v654
    %1214 = vmatpush1.bf16.msra.mxu0 %v653
    %1215 = vmatprep.subr.bf16.mxu0 %v658
    %1216 = vmatpush1.bf16.msra.mxu0 %v657
    %1217 = vmatprep.subr.bf16.mxu0 %v662
    %1218 = vmatpush1.bf16.msra.mxu0 %v661
    %1219 = vmatprep.subr.bf16.mxu0 %v666
    %1220 = vmatpush1.bf16.msra.mxu0 %v665
    %1221 = vmatprep.subr.bf16.mxu0 %v670
    %1222 = vmatpush1.bf16.msra.mxu0 %v669
    %1223 = vmatprep.subr.bf16.mxu0 %v674
    %1224 = vmatpush1.bf16.msra.mxu0 %v673
    %1225 = vmatprep.subr.bf16.mxu0 %v678
    %1226 = vmatpush1.bf16.msra.mxu0 %v677
    %1227 = vmatprep.subr.bf16.mxu0 0
    %1228 = vmatpush1.bf16.msra.mxu0 0
    %1229 = vmatprep.subr.bf16.mxu0 0
    %1230 = vmatpush1.bf16.msra.mxu0 0
    %1231 = vmatprep.subr.bf16.mxu0 0
    %1232 = vmatpush1.bf16.msra.mxu0 0
    %1233 = vmatprep.subr.bf16.mxu0 0
    %1234 = vmatpush1.bf16.msra.mxu0 0
    %1235 = vmatprep.subr.bf16.mxu0 0
    %1236 = vmatpush1.bf16.msra.mxu0 0
    %1237 = vmatprep.subr.bf16.mxu0 0
    %1238 = vmatpush1.bf16.msra.mxu0 0
    %1239 = vmatprep.subr.bf16.mxu0 0
    %1240 = vmatpush1.bf16.msra.mxu0 0
    %1241 = vmatprep.subr.bf16.mxu0 0
    %1242 = vmatpush1.bf16.msra.mxu0 0
    %1243 = vmatprep.mubr.bf16.mxu0 0
    %1244 = vmatmul.mubr.bf16.gmra.mrb[0].mxu0 %v1209
    %v1245 = vpop.f32.mrb[0].mxu0
    %v1246 = vadd.f32 0.0, %v1245
    %v1247 = vpop.f32.mrb[0].mxu0
    %v1248 = vadd.f32 0.0, %v1247
    %v1249 = vpop.f32.mrb[0].mxu0
    %v1250 = vpop.f32.mrb[0].mxu0
    %1251 = vdwg.mxu0
    %1252 = vmatprep.subr.bf16.mxu0 %v652
    %1253 = vmatpush1.bf16.msra.mxu0 %v651
    %1254 = vmatprep.subr.bf16.mxu0 %v656
    %1255 = vmatpush1.bf16.msra.mxu0 %v655
    %1256 = vmatprep.subr.bf16.mxu0 %v660
    %1257 = vmatpush1.bf16.msra.mxu0 %v659
    %1258 = vmatprep.subr.bf16.mxu0 %v664
    %1259 = vmatpush1.bf16.msra.mxu0 %v663
    %1260 = vmatprep.subr.bf16.mxu0 %v668
    %1261 = vmatpush1.bf16.msra.mxu0 %v667
    %1262 = vmatprep.subr.bf16.mxu0 %v672
    %1263 = vmatpush1.bf16.msra.mxu0 %v671
    %1264 = vmatprep.subr.bf16.mxu0 %v676
    %1265 = vmatpush1.bf16.msra.mxu0 %v675
    %1266 = vmatprep.subr.bf16.mxu0 %v680
    %1267 = vmatpush1.bf16.msra.mxu0 %v679
    %1268 = vmatprep.subr.bf16.mxu0 0
    %1269 = vmatpush1.bf16.msra.mxu0 0
    %1270 = vmatprep.subr.bf16.mxu0 0
    %1271 = vmatpush1.bf16.msra.mxu0 0
    %1272 = vmatprep.subr.bf16.mxu0 0
    %1273 = vmatpush1.bf16.msra.mxu0 0
    %1274 = vmatprep.subr.bf16.mxu0 0
    %1275 = vmatpush1.bf16.msra.mxu0 0
    %1276 = vmatprep.subr.bf16.mxu0 0
    %1277 = vmatpush1.bf16.msra.mxu0 0
    %1278 = vmatprep.subr.bf16.mxu0 0
    %1279 = vmatpush1.bf16.msra.mxu0 0
    %1280 = vmatprep.subr.bf16.mxu0 0
    %1281 = vmatpush1.bf16.msra.mxu0 0
    %1282 = vmatprep.subr.bf16.mxu0 0
    %1283 = vmatpush1.bf16.msra.mxu0 0
    %1284 = vmatprep.mubr.bf16.mxu0 0
    %1285 = vmatmul.mubr.bf16.gmra.mrb[0].mxu0 %v1209
    %v1286 = vpop.f32.mrb[0].mxu0
    %v1287 = vadd.f32 0.0, %v1286
    %v1288 = vpop.f32.mrb[0].mxu0
    %v1289 = vadd.f32 0.0, %v1288
    %v1290 = vpop.f32.mrb[0].mxu0
    %v1291 = vpop.f32.mrb[0].mxu0
    %1292 = vdwg.mxu0
    %v1297 = vrot.slane %v1246, 7
    %v1298 = vrot.slane %v1248, 7
    %v1299 = vrot.slane %v1287, 7
    %v1300 = vrot.slane %v1289, 7
    %v1301 = vrot.slane %v1246, 1
    %v1302 = vrot.slane %v1248, 1
    %v1303 = vrot.slane %v1287, 1
    %v1304 = vrot.slane %v1289, 1
    %v1305 = vrot.slane %v1246, 2
    %v1306 = vrot.slane %v1248, 2
    %v1307 = vrot.slane %v1287, 2
    %v1308 = vrot.slane %v1289, 2
    %v1309 = vrot.slane %v1246, 3
    %v1310 = vrot.slane %v1248, 3
    %v1311 = vrot.slane %v1287, 3
    %v1312 = vrot.slane %v1289, 3
    %v1313 = vrot.slane %v1246, 4
    %v1314 = vrot.slane %v1248, 4
    %v1315 = vrot.slane %v1287, 4
    %v1316 = vrot.slane %v1289, 4
    %v1317 = vrot.slane %v1246, 5
    %v1318 = vrot.slane %v1248, 5
    %v1319 = vrot.slane %v1287, 5
    %v1320 = vrot.slane %v1289, 5
    %v1321 = vrot.slane %v1246, 6
    %v1322 = vrot.slane %v1248, 6
    %v1323 = vrot.slane %v1287, 6
    %v1324 = vrot.slane %v1289, 6
    %v1357 = vadd.f32 %v1163, %v1297
    %v1358 = vadd.f32 %v1164, %v1298
    %v1359 = vadd.f32 %v1165, %v1299
    %v1360 = vadd.f32 %v1166, %v1300
    %v1361 = vadd.f32 %v1167, %v1246
    %v1362 = vadd.f32 %v1168, %v1248
    %v1363 = vadd.f32 %v1169, %v1287
    %v1364 = vadd.f32 %v1170, %v1289
    %v1365 = vadd.f32 %v1171, %v1301
    %v1366 = vadd.f32 %v1172, %v1302
    %v1367 = vadd.f32 %v1173, %v1303
    %v1368 = vadd.f32 %v1174, %v1304
    %v1369 = vadd.f32 %v1175, %v1305
    %v1370 = vadd.f32 %v1176, %v1306
    %v1371 = vadd.f32 %v1177, %v1307
    %v1372 = vadd.f32 %v1178, %v1308
    %v1373 = vadd.f32 %v1179, %v1309
    %v1374 = vadd.f32 %v1180, %v1310
    %v1375 = vadd.f32 %v1181, %v1311
    %v1376 = vadd.f32 %v1182, %v1312
    %v1377 = vadd.f32 %v1183, %v1313
    %v1378 = vadd.f32 %v1184, %v1314
    %v1379 = vadd.f32 %v1185, %v1315
    %v1380 = vadd.f32 %v1186, %v1316
    %v1381 = vadd.f32 %v1187, %v1317
    %v1382 = vadd.f32 %v1188, %v1318
    %v1383 = vadd.f32 %v1189, %v1319
    %v1384 = vadd.f32 %v1190, %v1320
    %v1385 = vadd.f32 %v1191, %v1321
    %v1386 = vadd.f32 %v1192, %v1322
    %v1387 = vadd.f32 %v1193, %v1323
    %v1388 = vadd.f32 %v1194, %v1324
    %v1389 = vxor.u32 %v1357, 2147483648
    %v1390 = vxor.u32 %v1361, 2147483648
    %v1391 = vxor.u32 %v1365, 2147483648
    %v1392 = vxor.u32 %v1369, 2147483648
    %v1393 = vxor.u32 %v1373, 2147483648
    %v1394 = vxor.u32 %v1377, 2147483648
    %v1395 = vxor.u32 %v1381, 2147483648
    %v1396 = vxor.u32 %v1385, 2147483648
    %v1397 = vmul.f32 %v1389, 1.442695
    %v1398 = vpow.pop %v1397
    %v1399 = vmul.f32 %v1390, 1.442695
    %v1400 = vpow.pop %v1399
    %v1401 = vmul.f32 %v1391, 1.442695
    %v1402 = vpow.pop %v1401
    %v1403 = vmul.f32 %v1392, 1.442695
    %v1404 = vpow.pop %v1403
    %v1405 = vmul.f32 %v1393, 1.442695
    %v1406 = vpow.pop %v1405
    %v1407 = vmul.f32 %v1394, 1.442695
    %v1408 = vpow.pop %v1407
    %v1409 = vmul.f32 %v1395, 1.442695
    %v1410 = vpow.pop %v1409
    %v1411 = vmul.f32 %v1396, 1.442695
    %v1412 = vpow.pop %v1411
    %v1413 = vadd.f32 %v1398, 1.0
    %v1414 = vadd.f32 %v1400, 1.0
    %v1415 = vadd.f32 %v1402, 1.0
    %v1416 = vadd.f32 %v1404, 1.0
    %v1417 = vadd.f32 %v1406, 1.0
    %v1418 = vadd.f32 %v1408, 1.0
    %v1419 = vadd.f32 %v1410, 1.0
    %v1420 = vadd.f32 %v1412, 1.0
    %v1421 = vrcp.pop %v1413
    %v1422 = vmul.f32 1.0, %v1421
    %v1423 = vrcp.pop %v1414
    %v1424 = vmul.f32 1.0, %v1423
    %v1425 = vrcp.pop %v1415
    %v1426 = vmul.f32 1.0, %v1425
    %v1427 = vrcp.pop %v1416
    %v1428 = vmul.f32 1.0, %v1427
    %v1429 = vrcp.pop %v1417
    %v1430 = vmul.f32 1.0, %v1429
    %v1431 = vrcp.pop %v1418
    %v1432 = vmul.f32 1.0, %v1431
    %v1433 = vrcp.pop %v1419
    %v1434 = vmul.f32 1.0, %v1433
    %v1435 = vrcp.pop %v1420
    %v1436 = vmul.f32 1.0, %v1435
    %v1437 = vxor.u32 %v1358, 2147483648
    %v1438 = vxor.u32 %v1362, 2147483648
    %v1439 = vxor.u32 %v1366, 2147483648
    %v1440 = vxor.u32 %v1370, 2147483648
    %v1441 = vxor.u32 %v1374, 2147483648
    %v1442 = vxor.u32 %v1378, 2147483648
    %v1443 = vxor.u32 %v1382, 2147483648
    %v1444 = vxor.u32 %v1386, 2147483648
    %v1445 = vmul.f32 %v1437, 1.442695
    %v1446 = vpow.pop %v1445
    %v1447 = vmul.f32 %v1438, 1.442695
    %v1448 = vpow.pop %v1447
    %v1449 = vmul.f32 %v1439, 1.442695
    %v1450 = vpow.pop %v1449
    %v1451 = vmul.f32 %v1440, 1.442695
    %v1452 = vpow.pop %v1451
    %v1453 = vmul.f32 %v1441, 1.442695
    %v1454 = vpow.pop %v1453
    %v1455 = vmul.f32 %v1442, 1.442695
    %v1456 = vpow.pop %v1455
    %v1457 = vmul.f32 %v1443, 1.442695
    %v1458 = vpow.pop %v1457
    %v1459 = vmul.f32 %v1444, 1.442695
    %v1460 = vpow.pop %v1459
    %v1461 = vadd.f32 %v1446, 1.0
    %v1462 = vadd.f32 %v1448, 1.0
    %v1463 = vadd.f32 %v1450, 1.0
    %v1464 = vadd.f32 %v1452, 1.0
    %v1465 = vadd.f32 %v1454, 1.0
    %v1466 = vadd.f32 %v1456, 1.0
    %v1467 = vadd.f32 %v1458, 1.0
    %v1468 = vadd.f32 %v1460, 1.0
    %v1469 = vrcp.pop %v1461
    %v1470 = vmul.f32 1.0, %v1469
    %v1471 = vrcp.pop %v1462
    %v1472 = vmul.f32 1.0, %v1471
    %v1473 = vrcp.pop %v1463
    %v1474 = vmul.f32 1.0, %v1473
    %v1475 = vrcp.pop %v1464
    %v1476 = vmul.f32 1.0, %v1475
    %v1477 = vrcp.pop %v1465
    %v1478 = vmul.f32 1.0, %v1477
    %v1479 = vrcp.pop %v1466
    %v1480 = vmul.f32 1.0, %v1479
    %v1481 = vrcp.pop %v1467
    %v1482 = vmul.f32 1.0, %v1481
    %v1483 = vrcp.pop %v1468
    %v1484 = vmul.f32 1.0, %v1483
    %v1485 = vtanh.pop %v1359
    %v1486 = vtanh.pop %v1363
    %v1487 = vtanh.pop %v1367
    %v1488 = vtanh.pop %v1371
    %v1489 = vtanh.pop %v1375
    %v1490 = vtanh.pop %v1379
    %v1491 = vtanh.pop %v1383
    %v1492 = vtanh.pop %v1387
    %v1493 = vxor.u32 %v1360, 2147483648
    %v1494 = vxor.u32 %v1364, 2147483648
    %v1495 = vxor.u32 %v1368, 2147483648
    %v1496 = vxor.u32 %v1372, 2147483648
    %v1497 = vxor.u32 %v1376, 2147483648
    %v1498 = vxor.u32 %v1380, 2147483648
    %v1499 = vxor.u32 %v1384, 2147483648
    %v1500 = vxor.u32 %v1388, 2147483648
    %v1501 = vmul.f32 %v1493, 1.442695
    %v1502 = vpow.pop %v1501
    %v1503 = vmul.f32 %v1494, 1.442695
    %v1504 = vpow.pop %v1503
    %v1505 = vmul.f32 %v1495, 1.442695
    %v1506 = vpow.pop %v1505
    %v1507 = vmul.f32 %v1496, 1.442695
    %v1508 = vpow.pop %v1507
    %v1509 = vmul.f32 %v1497, 1.442695
    %v1510 = vpow.pop %v1509
    %v1511 = vmul.f32 %v1498, 1.442695
    %v1512 = vpow.pop %v1511
    %v1513 = vmul.f32 %v1499, 1.442695
    %v1514 = vpow.pop %v1513
    %v1515 = vmul.f32 %v1500, 1.442695
    %v1516 = vpow.pop %v1515
    %v1517 = vadd.f32 %v1502, 1.0
    %v1518 = vadd.f32 %v1504, 1.0
    %v1519 = vadd.f32 %v1506, 1.0
    %v1520 = vadd.f32 %v1508, 1.0
    %v1521 = vadd.f32 %v1510, 1.0
    %v1522 = vadd.f32 %v1512, 1.0
    %v1523 = vadd.f32 %v1514, 1.0
    %v1524 = vadd.f32 %v1516, 1.0
    %v1525 = vrcp.pop %v1517
    %v1526 = vmul.f32 1.0, %v1525
    %v1527 = vrcp.pop %v1518
    %v1528 = vmul.f32 1.0, %v1527
    %v1529 = vrcp.pop %v1519
    %v1530 = vmul.f32 1.0, %v1529
    %v1531 = vrcp.pop %v1520
    %v1532 = vmul.f32 1.0, %v1531
    %v1533 = vrcp.pop %v1521
    %v1534 = vmul.f32 1.0, %v1533
    %v1535 = vrcp.pop %v1522
    %v1536 = vmul.f32 1.0, %v1535
    %v1537 = vrcp.pop %v1523
    %v1538 = vmul.f32 1.0, %v1537
    %v1539 = vrcp.pop %v1524
    %v1540 = vmul.f32 1.0, %v1539
    %v1549 = vrot.slane %v1059, 7
    %v1550 = vrot.slane %v1060, 7
    %v1551 = vrot.slane %v1061, 7
    %v1552 = vrot.slane %v1062, 7
    %v1553 = vrot.slane %v1063, 7
    %v1554 = vrot.slane %v1064, 7
    %v1555 = vrot.slane %v1065, 7
    %v1556 = vrot.slane %v1066, 7
    %v1565 = vmul.f32 %v1470, %v1549
    %v1566 = vmul.f32 %v1472, %v1550
    %v1567 = vmul.f32 %v1474, %v1551
    %v1568 = vmul.f32 %v1476, %v1552
    %v1569 = vmul.f32 %v1478, %v1553
    %v1570 = vmul.f32 %v1480, %v1554
    %v1571 = vmul.f32 %v1482, %v1555
    %v1572 = vmul.f32 %v1484, %v1556
    %v1573 = vmul.f32 %v1422, %v1485
    %v1574 = vmul.f32 %v1424, %v1486
    %v1575 = vmul.f32 %v1426, %v1487
    %v1576 = vmul.f32 %v1428, %v1488
    %v1577 = vmul.f32 %v1430, %v1489
    %v1578 = vmul.f32 %v1432, %v1490
    %v1579 = vmul.f32 %v1434, %v1491
    %v1580 = vmul.f32 %v1436, %v1492
    %v1581 = vadd.f32 %v1565, %v1573
    %v1582 = vadd.f32 %v1566, %v1574
    %v1583 = vadd.f32 %v1567, %v1575
    %v1584 = vadd.f32 %v1568, %v1576
    %v1585 = vadd.f32 %v1569, %v1577
    %v1586 = vadd.f32 %v1570, %v1578
    %v1587 = vadd.f32 %v1571, %v1579
    %v1588 = vadd.f32 %v1572, %v1580
    %v1589 = vtanh.pop %v1581
    %v1590 = vtanh.pop %v1582
    %v1591 = vtanh.pop %v1583
    %v1592 = vtanh.pop %v1584
    %v1593 = vtanh.pop %v1585
    %v1594 = vtanh.pop %v1586
    %v1595 = vtanh.pop %v1587
    %v1596 = vtanh.pop %v1588
    %v1597 = vmul.f32 %v1526, %v1589
    %v1598 = vmul.f32 %v1528, %v1590
    %v1599 = vmul.f32 %v1530, %v1591
    %v1600 = vmul.f32 %v1532, %v1592
    %v1601 = vmul.f32 %v1534, %v1593
    %v1602 = vmul.f32 %v1536, %v1594
    %v1603 = vmul.f32 %v1538, %v1595
    %v1604 = vmul.f32 %v1540, %v1596
    %v1605 = vpack.c.bf16 %v1597, %v1597
    %v1606 = vpack.c.bf16 %v1598, %v1598
    %v1607 = vpack.c.bf16 %v1599, %v1599
    %v1608 = vpack.c.bf16 %v1600, %v1600
    %v1609 = vpack.c.bf16 %v1601, %v1601
    %v1610 = vpack.c.bf16 %v1602, %v1602
    %v1611 = vpack.c.bf16 %v1603, %v1603
    %v1612 = vpack.c.bf16 %v1604, %v1604
    %v1621 = vunpack.c.l.b16 %v1605
    %v1622 = vunpack.c.l.b16 %v1606
    %v1623 = vunpack.c.l.b16 %v1607
    %v1624 = vunpack.c.l.b16 %v1608
    %v1625 = vunpack.c.l.b16 %v1609
    %v1626 = vunpack.c.l.b16 %v1610
    %v1627 = vunpack.c.l.b16 %v1611
    %v1628 = vunpack.c.l.b16 %v1612
    %v1629 = vpack.c.b16 %v1621, %v1621
    %v1630 = vpack.c.b16 %v1622, %v1622
    %v1631 = vpack.c.b16 %v1623, %v1623
    %v1632 = vpack.c.b16 %v1624, %v1624
    %v1633 = vpack.c.b16 %v1625, %v1625
    %v1634 = vpack.c.b16 %v1626, %v1626
    %v1635 = vpack.c.b16 %v1627, %v1627
    %v1636 = vpack.c.b16 %v1628, %v1628
    %v1637 = vunpack.c.l.b16 %v1629
    %v1638 = vunpack.c.l.b16 %v1630
    %v1639 = vunpack.c.l.b16 %v1631
    %v1640 = vunpack.c.l.b16 %v1632
    %v1641 = vunpack.c.l.b16 %v1633
    %v1642 = vunpack.c.l.b16 %v1634
    %v1643 = vunpack.c.l.b16 %v1635
    %v1644 = vunpack.c.l.b16 %v1636
    %v1645 = vrot.slane %v1637, 1
    %v1646 = vsel %vm1124, %v1638, %v1645
    %v1647 = vrot.slane %v1639, 7
    %v1648 = vsel %vm1127, %v1647, %v1646
    %v1649 = vrot.slane %v1640, 6
    %v1650 = vsel %vm1130, %v1649, %v1648
    %v1651 = vrot.slane %v1641, 5
    %v1652 = vsel %vm1133, %v1651, %v1650
    %v1653 = vrot.slane %v1642, 4
    %v1654 = vsel %vm1136, %v1653, %v1652
    %v1655 = vrot.slane %v1643, 3
    %v1656 = vsel %vm1139, %v1655, %v1654
    %v1657 = vrot.slane %v1644, 2
    %v1658 = vsel %vm1142, %v1657, %v1656
    %v1659 = vpack.c.b16 %v1658, %v1658
    %s1661 = scalar_lea.vmem [#allocation3], 4
    %1662 = vst [vmem:[%s1661] sm:$0xf] %v1659
    %v1663 = vld [vmem:[#allocation2] sm:$0x22]
    %v1664 = vld [vmem:[#allocation2 + $0x8] sm:$0x22]
    %v1665 = vld [vmem:[#allocation2 + $0x10] sm:$0x22]
    %v1666 = vld [vmem:[#allocation2 + $0x18] sm:$0x22]
    %v1667 = vld [vmem:[#allocation2 + $0x20] sm:$0x22]
    %v1668 = vld [vmem:[#allocation2 + $0x28] sm:$0x22]
    %v1669 = vld [vmem:[#allocation2 + $0x30] sm:$0x22]
    %v1670 = vld [vmem:[#allocation2 + $0x38] sm:$0x22]
    %v1671 = vld [vmem:[#allocation2 + $0x40] sm:$0x22]
    %v1672 = vld [vmem:[#allocation2 + $0x48] sm:$0x22]
    %v1673 = vld [vmem:[#allocation2 + $0x50] sm:$0x22]
    %v1674 = vld [vmem:[#allocation2 + $0x58] sm:$0x22]
    %v1675 = vld [vmem:[#allocation2 + $0x60] sm:$0x22]
    %v1676 = vld [vmem:[#allocation2 + $0x68] sm:$0x22]
    %v1677 = vld [vmem:[#allocation2 + $0x70] sm:$0x22]
    %v1678 = vld [vmem:[#allocation2 + $0x78] sm:$0x22]
    %v1679 = vunpack.c.l.bf16 %v1663
    %v1680 = vunpack.c.h.bf16 %v1663
    %v1681 = vunpack.c.l.bf16 %v1664
    %v1682 = vunpack.c.h.bf16 %v1664
    %v1683 = vunpack.c.l.bf16 %v1665
    %v1684 = vunpack.c.h.bf16 %v1665
    %v1685 = vunpack.c.l.bf16 %v1666
    %v1686 = vunpack.c.h.bf16 %v1666
    %v1687 = vunpack.c.l.bf16 %v1667
    %v1688 = vunpack.c.h.bf16 %v1667
    %v1689 = vunpack.c.l.bf16 %v1668
    %v1690 = vunpack.c.h.bf16 %v1668
    %v1691 = vunpack.c.l.bf16 %v1669
    %v1692 = vunpack.c.h.bf16 %v1669
    %v1693 = vunpack.c.l.bf16 %v1670
    %v1694 = vunpack.c.h.bf16 %v1670
    %v1695 = vunpack.c.l.bf16 %v1671
    %v1696 = vunpack.c.h.bf16 %v1671
    %v1697 = vunpack.c.l.bf16 %v1672
    %v1698 = vunpack.c.h.bf16 %v1672
    %v1699 = vunpack.c.l.bf16 %v1673
    %v1700 = vunpack.c.h.bf16 %v1673
    %v1701 = vunpack.c.l.bf16 %v1674
    %v1702 = vunpack.c.h.bf16 %v1674
    %v1703 = vunpack.c.l.bf16 %v1675
    %v1704 = vunpack.c.h.bf16 %v1675
    %v1705 = vunpack.c.l.bf16 %v1676
    %v1706 = vunpack.c.h.bf16 %v1676
    %v1707 = vunpack.c.l.bf16 %v1677
    %v1708 = vunpack.c.h.bf16 %v1677
    %v1709 = vunpack.c.l.bf16 %v1678
    %v1710 = vunpack.c.h.bf16 %v1678
    %v1711 = vrot.slane %v1621, 1
    %v1712 = vsel %vm1124, %v1622, %v1711
    %v1713 = vrot.slane %v1623, 7
    %v1714 = vsel %vm1127, %v1713, %v1712
    %v1715 = vrot.slane %v1624, 6
    %v1716 = vsel %vm1130, %v1715, %v1714
    %v1717 = vrot.slane %v1625, 5
    %v1718 = vsel %vm1133, %v1717, %v1716
    %v1719 = vrot.slane %v1626, 4
    %v1720 = vsel %vm1136, %v1719, %v1718
    %v1721 = vrot.slane %v1627, 3
    %v1722 = vsel %vm1139, %v1721, %v1720
    %v1723 = vrot.slane %v1628, 2
    %v1724 = vsel %vm1142, %v1723, %v1722
    %v1725 = vpack.c.b16 %v1724, %v1724
    %1727 = vmatprep.subr.bf16.mxu0 %v650
    %1728 = vmatpush1.bf16.msra.mxu0 %v649
    %1729 = vmatprep.subr.bf16.mxu0 %v654
    %1730 = vmatpush1.bf16.msra.mxu0 %v653
    %1731 = vmatprep.subr.bf16.mxu0 %v658
    %1732 = vmatpush1.bf16.msra.mxu0 %v657
    %1733 = vmatprep.subr.bf16.mxu0 %v662
    %1734 = vmatpush1.bf16.msra.mxu0 %v661
    %1735 = vmatprep.subr.bf16.mxu0 %v666
    %1736 = vmatpush1.bf16.msra.mxu0 %v665
    %1737 = vmatprep.subr.bf16.mxu0 %v670
    %1738 = vmatpush1.bf16.msra.mxu0 %v669
    %1739 = vmatprep.subr.bf16.mxu0 %v674
    %1740 = vmatpush1.bf16.msra.mxu0 %v673
    %1741 = vmatprep.subr.bf16.mxu0 %v678
    %1742 = vmatpush1.bf16.msra.mxu0 %v677
    %1743 = vmatprep.subr.bf16.mxu0 0
    %1744 = vmatpush1.bf16.msra.mxu0 0
    %1745 = vmatprep.subr.bf16.mxu0 0
    %1746 = vmatpush1.bf16.msra.mxu0 0
    %1747 = vmatprep.subr.bf16.mxu0 0
    %1748 = vmatpush1.bf16.msra.mxu0 0
    %1749 = vmatprep.subr.bf16.mxu0 0
    %1750 = vmatpush1.bf16.msra.mxu0 0
    %1751 = vmatprep.subr.bf16.mxu0 0
    %1752 = vmatpush1.bf16.msra.mxu0 0
    %1753 = vmatprep.subr.bf16.mxu0 0
    %1754 = vmatpush1.bf16.msra.mxu0 0
    %1755 = vmatprep.subr.bf16.mxu0 0
    %1756 = vmatpush1.bf16.msra.mxu0 0
    %1757 = vmatprep.subr.bf16.mxu0 0
    %1758 = vmatpush1.bf16.msra.mxu0 0
    %1759 = vmatprep.mubr.bf16.mxu0 0
    %1760 = vmatmul.mubr.bf16.gmra.mrb[0].mxu0 %v1725
    %v1761 = vpop.f32.mrb[0].mxu0
    %v1762 = vadd.f32 0.0, %v1761
    %v1763 = vpop.f32.mrb[0].mxu0
    %v1764 = vadd.f32 0.0, %v1763
    %v1765 = vpop.f32.mrb[0].mxu0
    %v1766 = vpop.f32.mrb[0].mxu0
    %1767 = vdwg.mxu0
    %1768 = vmatprep.subr.bf16.mxu0 %v652
    %1769 = vmatpush1.bf16.msra.mxu0 %v651
    %1770 = vmatprep.subr.bf16.mxu0 %v656
    %1771 = vmatpush1.bf16.msra.mxu0 %v655
    %1772 = vmatprep.subr.bf16.mxu0 %v660
    %1773 = vmatpush1.bf16.msra.mxu0 %v659
    %1774 = vmatprep.subr.bf16.mxu0 %v664
    %1775 = vmatpush1.bf16.msra.mxu0 %v663
    %1776 = vmatprep.subr.bf16.mxu0 %v668
    %1777 = vmatpush1.bf16.msra.mxu0 %v667
    %1778 = vmatprep.subr.bf16.mxu0 %v672
    %1779 = vmatpush1.bf16.msra.mxu0 %v671
    %1780 = vmatprep.subr.bf16.mxu0 %v676
    %1781 = vmatpush1.bf16.msra.mxu0 %v675
    %1782 = vmatprep.subr.bf16.mxu0 %v680
    %1783 = vmatpush1.bf16.msra.mxu0 %v679
    %1784 = vmatprep.subr.bf16.mxu0 0
    %1785 = vmatpush1.bf16.msra.mxu0 0
    %1786 = vmatprep.subr.bf16.mxu0 0
    %1787 = vmatpush1.bf16.msra.mxu0 0
    %1788 = vmatprep.subr.bf16.mxu0 0
    %1789 = vmatpush1.bf16.msra.mxu0 0
    %1790 = vmatprep.subr.bf16.mxu0 0
    %1791 = vmatpush1.bf16.msra.mxu0 0
    %1792 = vmatprep.subr.bf16.mxu0 0
    %1793 = vmatpush1.bf16.msra.mxu0 0
    %1794 = vmatprep.subr.bf16.mxu0 0
    %1795 = vmatpush1.bf16.msra.mxu0 0
    %1796 = vmatprep.subr.bf16.mxu0 0
    %1797 = vmatpush1.bf16.msra.mxu0 0
    %1798 = vmatprep.subr.bf16.mxu0 0
    %1799 = vmatpush1.bf16.msra.mxu0 0
    %1800 = vmatprep.mubr.bf16.mxu0 0
    %1801 = vmatmul.mubr.bf16.gmra.mrb[0].mxu0 %v1725
    %v1802 = vpop.f32.mrb[0].mxu0
    %v1803 = vadd.f32 0.0, %v1802
    %v1804 = vpop.f32.mrb[0].mxu0
    %v1805 = vadd.f32 0.0, %v1804
    %v1806 = vpop.f32.mrb[0].mxu0
    %v1807 = vpop.f32.mrb[0].mxu0
    %1808 = vdwg.mxu0
    %v1813 = vrot.slane %v1762, 6
    %v1814 = vrot.slane %v1764, 6
    %v1815 = vrot.slane %v1803, 6
    %v1816 = vrot.slane %v1805, 6
    %v1817 = vrot.slane %v1762, 7
    %v1818 = vrot.slane %v1764, 7
    %v1819 = vrot.slane %v1803, 7
    %v1820 = vrot.slane %v1805, 7
    %v1821 = vrot.slane %v1762, 1
    %v1822 = vrot.slane %v1764, 1
    %v1823 = vrot.slane %v1803, 1
    %v1824 = vrot.slane %v1805, 1
    %v1825 = vrot.slane %v1762, 2
    %v1826 = vrot.slane %v1764, 2
    %v1827 = vrot.slane %v1803, 2
    %v1828 = vrot.slane %v1805, 2
    %v1829 = vrot.slane %v1762, 3
    %v1830 = vrot.slane %v1764, 3
    %v1831 = vrot.slane %v1803, 3
    %v1832 = vrot.slane %v1805, 3
    %v1833 = vrot.slane %v1762, 4
    %v1834 = vrot.slane %v1764, 4
    %v1835 = vrot.slane %v1803, 4
    %v1836 = vrot.slane %v1805, 4
    %v1837 = vrot.slane %v1762, 5
    %v1838 = vrot.slane %v1764, 5
    %v1839 = vrot.slane %v1803, 5
    %v1840 = vrot.slane %v1805, 5
    %v1873 = vadd.f32 %v1679, %v1813
    %v1874 = vadd.f32 %v1680, %v1814
    %v1875 = vadd.f32 %v1681, %v1815
    %v1876 = vadd.f32 %v1682, %v1816
    %v1877 = vadd.f32 %v1683, %v1817
    %v1878 = vadd.f32 %v1684, %v1818
    %v1879 = vadd.f32 %v1685, %v1819
    %v1880 = vadd.f32 %v1686, %v1820
    %v1881 = vadd.f32 %v1687, %v1762
    %v1882 = vadd.f32 %v1688, %v1764
    %v1883 = vadd.f32 %v1689, %v1803
    %v1884 = vadd.f32 %v1690, %v1805
    %v1885 = vadd.f32 %v1691, %v1821
    %v1886 = vadd.f32 %v1692, %v1822
    %v1887 = vadd.f32 %v1693, %v1823
    %v1888 = vadd.f32 %v1694, %v1824
    %v1889 = vadd.f32 %v1695, %v1825
    %v1890 = vadd.f32 %v1696, %v1826
    %v1891 = vadd.f32 %v1697, %v1827
    %v1892 = vadd.f32 %v1698, %v1828
    %v1893 = vadd.f32 %v1699, %v1829
    %v1894 = vadd.f32 %v1700, %v1830
    %v1895 = vadd.f32 %v1701, %v1831
    %v1896 = vadd.f32 %v1702, %v1832
    %v1897 = vadd.f32 %v1703, %v1833
    %v1898 = vadd.f32 %v1704, %v1834
    %v1899 = vadd.f32 %v1705, %v1835
    %v1900 = vadd.f32 %v1706, %v1836
    %v1901 = vadd.f32 %v1707, %v1837
    %v1902 = vadd.f32 %v1708, %v1838
    %v1903 = vadd.f32 %v1709, %v1839
    %v1904 = vadd.f32 %v1710, %v1840
    %v1905 = vxor.u32 %v1873, 2147483648
    %v1906 = vxor.u32 %v1877, 2147483648
    %v1907 = vxor.u32 %v1881, 2147483648
    %v1908 = vxor.u32 %v1885, 2147483648
    %v1909 = vxor.u32 %v1889, 2147483648
    %v1910 = vxor.u32 %v1893, 2147483648
    %v1911 = vxor.u32 %v1897, 2147483648
    %v1912 = vxor.u32 %v1901, 2147483648
    %v1913 = vmul.f32 %v1905, 1.442695
    %v1914 = vpow.pop %v1913
    %v1915 = vmul.f32 %v1906, 1.442695
    %v1916 = vpow.pop %v1915
    %v1917 = vmul.f32 %v1907, 1.442695
    %v1918 = vpow.pop %v1917
    %v1919 = vmul.f32 %v1908, 1.442695
    %v1920 = vpow.pop %v1919
    %v1921 = vmul.f32 %v1909, 1.442695
    %v1922 = vpow.pop %v1921
    %v1923 = vmul.f32 %v1910, 1.442695
    %v1924 = vpow.pop %v1923
    %v1925 = vmul.f32 %v1911, 1.442695
    %v1926 = vpow.pop %v1925
    %v1927 = vmul.f32 %v1912, 1.442695
    %v1928 = vpow.pop %v1927
    %v1929 = vadd.f32 %v1914, 1.0
    %v1930 = vadd.f32 %v1916, 1.0
    %v1931 = vadd.f32 %v1918, 1.0
    %v1932 = vadd.f32 %v1920, 1.0
    %v1933 = vadd.f32 %v1922, 1.0
    %v1934 = vadd.f32 %v1924, 1.0
    %v1935 = vadd.f32 %v1926, 1.0
    %v1936 = vadd.f32 %v1928, 1.0
    %v1937 = vrcp.pop %v1929
    %v1938 = vmul.f32 1.0, %v1937
    %v1939 = vrcp.pop %v1930
    %v1940 = vmul.f32 1.0, %v1939
    %v1941 = vrcp.pop %v1931
    %v1942 = vmul.f32 1.0, %v1941
    %v1943 = vrcp.pop %v1932
    %v1944 = vmul.f32 1.0, %v1943
    %v1945 = vrcp.pop %v1933
    %v1946 = vmul.f32 1.0, %v1945
    %v1947 = vrcp.pop %v1934
    %v1948 = vmul.f32 1.0, %v1947
    %v1949 = vrcp.pop %v1935
    %v1950 = vmul.f32 1.0, %v1949
    %v1951 = vrcp.pop %v1936
    %v1952 = vmul.f32 1.0, %v1951
    %v1953 = vxor.u32 %v1874, 2147483648
    %v1954 = vxor.u32 %v1878, 2147483648
    %v1955 = vxor.u32 %v1882, 2147483648
    %v1956 = vxor.u32 %v1886, 2147483648
    %v1957 = vxor.u32 %v1890, 2147483648
    %v1958 = vxor.u32 %v1894, 2147483648
    %v1959 = vxor.u32 %v1898, 2147483648
    %v1960 = vxor.u32 %v1902, 2147483648
    %v1961 = vmul.f32 %v1953, 1.442695
    %v1962 = vpow.pop %v1961
    %v1963 = vmul.f32 %v1954, 1.442695
    %v1964 = vpow.pop %v1963
    %v1965 = vmul.f32 %v1955, 1.442695
    %v1966 = vpow.pop %v1965
    %v1967 = vmul.f32 %v1956, 1.442695
    %v1968 = vpow.pop %v1967
    %v1969 = vmul.f32 %v1957, 1.442695
    %v1970 = vpow.pop %v1969
    %v1971 = vmul.f32 %v1958, 1.442695
    %v1972 = vpow.pop %v1971
    %v1973 = vmul.f32 %v1959, 1.442695
    %v1974 = vpow.pop %v1973
    %v1975 = vmul.f32 %v1960, 1.442695
    %v1976 = vpow.pop %v1975
    %v1977 = vadd.f32 %v1962, 1.0
    %v1978 = vadd.f32 %v1964, 1.0
    %v1979 = vadd.f32 %v1966, 1.0
    %v1980 = vadd.f32 %v1968, 1.0
    %v1981 = vadd.f32 %v1970, 1.0
    %v1982 = vadd.f32 %v1972, 1.0
    %v1983 = vadd.f32 %v1974, 1.0
    %v1984 = vadd.f32 %v1976, 1.0
    %v1985 = vrcp.pop %v1977
    %v1986 = vmul.f32 1.0, %v1985
    %v1987 = vrcp.pop %v1978
    %v1988 = vmul.f32 1.0, %v1987
    %v1989 = vrcp.pop %v1979
    %v1990 = vmul.f32 1.0, %v1989
    %v1991 = vrcp.pop %v1980
    %v1992 = vmul.f32 1.0, %v1991
    %v1993 = vrcp.pop %v1981
    %v1994 = vmul.f32 1.0, %v1993
    %v1995 = vrcp.pop %v1982
    %v1996 = vmul.f32 1.0, %v1995
    %v1997 = vrcp.pop %v1983
    %v1998 = vmul.f32 1.0, %v1997
    %v1999 = vrcp.pop %v1984
    %v2000 = vmul.f32 1.0, %v1999
    %v2001 = vtanh.pop %v1875
    %v2002 = vtanh.pop %v1879
    %v2003 = vtanh.pop %v1883
    %v2004 = vtanh.pop %v1887
    %v2005 = vtanh.pop %v1891
    %v2006 = vtanh.pop %v1895
    %v2007 = vtanh.pop %v1899
    %v2008 = vtanh.pop %v1903
    %v2009 = vxor.u32 %v1876, 2147483648
    %v2010 = vxor.u32 %v1880, 2147483648
    %v2011 = vxor.u32 %v1884, 2147483648
    %v2012 = vxor.u32 %v1888, 2147483648
    %v2013 = vxor.u32 %v1892, 2147483648
    %v2014 = vxor.u32 %v1896, 2147483648
    %v2015 = vxor.u32 %v1900, 2147483648
    %v2016 = vxor.u32 %v1904, 2147483648
    %v2017 = vmul.f32 %v2009, 1.442695
    %v2018 = vpow.pop %v2017
    %v2019 = vmul.f32 %v2010, 1.442695
    %v2020 = vpow.pop %v2019
    %v2021 = vmul.f32 %v2011, 1.442695
    %v2022 = vpow.pop %v2021
    %v2023 = vmul.f32 %v2012, 1.442695
    %v2024 = vpow.pop %v2023
    %v2025 = vmul.f32 %v2013, 1.442695
    %v2026 = vpow.pop %v2025
    %v2027 = vmul.f32 %v2014, 1.442695
    %v2028 = vpow.pop %v2027
    %v2029 = vmul.f32 %v2015, 1.442695
    %v2030 = vpow.pop %v2029
    %v2031 = vmul.f32 %v2016, 1.442695
    %v2032 = vpow.pop %v2031
    %v2033 = vadd.f32 %v2018, 1.0
    %v2034 = vadd.f32 %v2020, 1.0
    %v2035 = vadd.f32 %v2022, 1.0
    %v2036 = vadd.f32 %v2024, 1.0
    %v2037 = vadd.f32 %v2026, 1.0
    %v2038 = vadd.f32 %v2028, 1.0
    %v2039 = vadd.f32 %v2030, 1.0
    %v2040 = vadd.f32 %v2032, 1.0
    %v2041 = vrcp.pop %v2033
    %v2042 = vmul.f32 1.0, %v2041
    %v2043 = vrcp.pop %v2034
    %v2044 = vmul.f32 1.0, %v2043
    %v2045 = vrcp.pop %v2035
    %v2046 = vmul.f32 1.0, %v2045
    %v2047 = vrcp.pop %v2036
    %v2048 = vmul.f32 1.0, %v2047
    %v2049 = vrcp.pop %v2037
    %v2050 = vmul.f32 1.0, %v2049
    %v2051 = vrcp.pop %v2038
    %v2052 = vmul.f32 1.0, %v2051
    %v2053 = vrcp.pop %v2039
    %v2054 = vmul.f32 1.0, %v2053
    %v2055 = vrcp.pop %v2040
    %v2056 = vmul.f32 1.0, %v2055
    %v2065 = vrot.slane %v1581, 7
    %v2066 = vrot.slane %v1582, 7
    %v2067 = vrot.slane %v1583, 7
    %v2068 = vrot.slane %v1584, 7
    %v2069 = vrot.slane %v1585, 7
    %v2070 = vrot.slane %v1586, 7
    %v2071 = vrot.slane %v1587, 7
    %v2072 = vrot.slane %v1588, 7
    %v2081 = vmul.f32 %v1986, %v2065
    %v2082 = vmul.f32 %v1988, %v2066
    %v2083 = vmul.f32 %v1990, %v2067
    %v2084 = vmul.f32 %v1992, %v2068
    %v2085 = vmul.f32 %v1994, %v2069
    %v2086 = vmul.f32 %v1996, %v2070
    %v2087 = vmul.f32 %v1998, %v2071
    %v2088 = vmul.f32 %v2000, %v2072
    %v2089 = vmul.f32 %v1938, %v2001
    %v2090 = vmul.f32 %v1940, %v2002
    %v2091 = vmul.f32 %v1942, %v2003
    %v2092 = vmul.f32 %v1944, %v2004
    %v2093 = vmul.f32 %v1946, %v2005
    %v2094 = vmul.f32 %v1948, %v2006
    %v2095 = vmul.f32 %v1950, %v2007
    %v2096 = vmul.f32 %v1952, %v2008
    %v2097 = vadd.f32 %v2081, %v2089
    %v2098 = vadd.f32 %v2082, %v2090
    %v2099 = vadd.f32 %v2083, %v2091
    %v2100 = vadd.f32 %v2084, %v2092
    %v2101 = vadd.f32 %v2085, %v2093
    %v2102 = vadd.f32 %v2086, %v2094
    %v2103 = vadd.f32 %v2087, %v2095
    %v2104 = vadd.f32 %v2088, %v2096
    %v2105 = vtanh.pop %v2097
    %v2106 = vtanh.pop %v2098
    %v2107 = vtanh.pop %v2099
    %v2108 = vtanh.pop %v2100
    %v2109 = vtanh.pop %v2101
    %v2110 = vtanh.pop %v2102
    %v2111 = vtanh.pop %v2103
    %v2112 = vtanh.pop %v2104
    %v2113 = vmul.f32 %v2042, %v2105
    %v2114 = vmul.f32 %v2044, %v2106
    %v2115 = vmul.f32 %v2046, %v2107
    %v2116 = vmul.f32 %v2048, %v2108
    %v2117 = vmul.f32 %v2050, %v2109
    %v2118 = vmul.f32 %v2052, %v2110
    %v2119 = vmul.f32 %v2054, %v2111
    %v2120 = vmul.f32 %v2056, %v2112
    %v2121 = vpack.c.bf16 %v2113, %v2113
    %v2122 = vpack.c.bf16 %v2114, %v2114
    %v2123 = vpack.c.bf16 %v2115, %v2115
    %v2124 = vpack.c.bf16 %v2116, %v2116
    %v2125 = vpack.c.bf16 %v2117, %v2117
    %v2126 = vpack.c.bf16 %v2118, %v2118
    %v2127 = vpack.c.bf16 %v2119, %v2119
    %v2128 = vpack.c.bf16 %v2120, %v2120
    %v2137 = vunpack.c.l.b16 %v2121
    %v2138 = vunpack.c.l.b16 %v2122
    %v2139 = vunpack.c.l.b16 %v2123
    %v2140 = vunpack.c.l.b16 %v2124
    %v2141 = vunpack.c.l.b16 %v2125
    %v2142 = vunpack.c.l.b16 %v2126
    %v2143 = vunpack.c.l.b16 %v2127
    %v2144 = vunpack.c.l.b16 %v2128
    %v2145 = vpack.c.b16 %v2137, %v2137
    %v2146 = vpack.c.b16 %v2138, %v2138
    %v2147 = vpack.c.b16 %v2139, %v2139
    %v2148 = vpack.c.b16 %v2140, %v2140
    %v2149 = vpack.c.b16 %v2141, %v2141
    %v2150 = vpack.c.b16 %v2142, %v2142
    %v2151 = vpack.c.b16 %v2143, %v2143
    %v2152 = vpack.c.b16 %v2144, %v2144
    %v2153 = vunpack.c.l.b16 %v2145
    %v2154 = vunpack.c.l.b16 %v2146
    %v2155 = vunpack.c.l.b16 %v2147
    %v2156 = vunpack.c.l.b16 %v2148
    %v2157 = vunpack.c.l.b16 %v2149
    %v2158 = vunpack.c.l.b16 %v2150
    %v2159 = vunpack.c.l.b16 %v2151
    %v2160 = vunpack.c.l.b16 %v2152
    %v2161 = vrot.slane %v2153, 2
    %v2162 = vrot.slane %v2154, 1
    %v2163 = vsel %vm1124, %v2162, %v2161
    %v2164 = vsel %vm1127, %v2155, %v2163
    %v2165 = vrot.slane %v2156, 7
    %v2166 = vsel %vm1130, %v2165, %v2164
    %v2167 = vrot.slane %v2157, 6
    %v2168 = vsel %vm1133, %v2167, %v2166
    %v2169 = vrot.slane %v2158, 5
    %v2170 = vsel %vm1136, %v2169, %v2168
    %v2171 = vrot.slane %v2159, 4
    %v2172 = vsel %vm1139, %v2171, %v2170
    %v2173 = vrot.slane %v2160, 3
    %v2174 = vsel %vm1142, %v2173, %v2172
    %v2175 = vpack.c.b16 %v2174, %v2174
    %s2177 = scalar_lea.vmem [#allocation3], 8
    %2178 = vst [vmem:[%s2177] sm:$0xf] %v2175
    %v2179 = vld [vmem:[#allocation2] sm:$0x22]
    %v2180 = vld [vmem:[#allocation2 + $0x8] sm:$0x22]
    %v2181 = vld [vmem:[#allocation2 + $0x10] sm:$0x22]
    %v2182 = vld [vmem:[#allocation2 + $0x18] sm:$0x22]
    %v2183 = vld [vmem:[#allocation2 + $0x20] sm:$0x22]
    %v2184 = vld [vmem:[#allocation2 + $0x28] sm:$0x22]
    %v2185 = vld [vmem:[#allocation2 + $0x30] sm:$0x22]
    %v2186 = vld [vmem:[#allocation2 + $0x38] sm:$0x22]
    %v2187 = vld [vmem:[#allocation2 + $0x40] sm:$0x22]
    %v2188 = vld [vmem:[#allocation2 + $0x48] sm:$0x22]
    %v2189 = vld [vmem:[#allocation2 + $0x50] sm:$0x22]
    %v2190 = vld [vmem:[#allocation2 + $0x58] sm:$0x22]
    %v2191 = vld [vmem:[#allocation2 + $0x60] sm:$0x22]
    %v2192 = vld [vmem:[#allocation2 + $0x68] sm:$0x22]
    %v2193 = vld [vmem:[#allocation2 + $0x70] sm:$0x22]
    %v2194 = vld [vmem:[#allocation2 + $0x78] sm:$0x22]
    %v2195 = vunpack.c.l.bf16 %v2179
    %v2196 = vunpack.c.h.bf16 %v2179
    %v2197 = vunpack.c.l.bf16 %v2180
    %v2198 = vunpack.c.h.bf16 %v2180
    %v2199 = vunpack.c.l.bf16 %v2181
    %v2200 = vunpack.c.h.bf16 %v2181
    %v2201 = vunpack.c.l.bf16 %v2182
    %v2202 = vunpack.c.h.bf16 %v2182
    %v2203 = vunpack.c.l.bf16 %v2183
    %v2204 = vunpack.c.h.bf16 %v2183
    %v2205 = vunpack.c.l.bf16 %v2184
    %v2206 = vunpack.c.h.bf16 %v2184
    %v2207 = vunpack.c.l.bf16 %v2185
    %v2208 = vunpack.c.h.bf16 %v2185
    %v2209 = vunpack.c.l.bf16 %v2186
    %v2210 = vunpack.c.h.bf16 %v2186
    %v2211 = vunpack.c.l.bf16 %v2187
    %v2212 = vunpack.c.h.bf16 %v2187
    %v2213 = vunpack.c.l.bf16 %v2188
    %v2214 = vunpack.c.h.bf16 %v2188
    %v2215 = vunpack.c.l.bf16 %v2189
    %v2216 = vunpack.c.h.bf16 %v2189
    %v2217 = vunpack.c.l.bf16 %v2190
    %v2218 = vunpack.c.h.bf16 %v2190
    %v2219 = vunpack.c.l.bf16 %v2191
    %v2220 = vunpack.c.h.bf16 %v2191
    %v2221 = vunpack.c.l.bf16 %v2192
    %v2222 = vunpack.c.h.bf16 %v2192
    %v2223 = vunpack.c.l.bf16 %v2193
    %v2224 = vunpack.c.h.bf16 %v2193
    %v2225 = vunpack.c.l.bf16 %v2194
    %v2226 = vunpack.c.h.bf16 %v2194
    %v2227 = vrot.slane %v2137, 2
    %v2228 = vrot.slane %v2138, 1
    %v2229 = vsel %vm1124, %v2228, %v2227
    %v2230 = vsel %vm1127, %v2139, %v2229
    %v2231 = vrot.slane %v2140, 7
    %v2232 = vsel %vm1130, %v2231, %v2230
    %v2233 = vrot.slane %v2141, 6
    %v2234 = vsel %vm1133, %v2233, %v2232
    %v2235 = vrot.slane %v2142, 5
    %v2236 = vsel %vm1136, %v2235, %v2234
    %v2237 = vrot.slane %v2143, 4
    %v2238 = vsel %vm1139, %v2237, %v2236
    %v2239 = vrot.slane %v2144, 3
    %v2240 = vsel %vm1142, %v2239, %v2238
    %v2241 = vpack.c.b16 %v2240, %v2240
    %2243 = vmatprep.subr.bf16.mxu0 %v650
    %2244 = vmatpush1.bf16.msra.mxu0 %v649
    %2245 = vmatprep.subr.bf16.mxu0 %v654
    %2246 = vmatpush1.bf16.msra.mxu0 %v653
    %2247 = vmatprep.subr.bf16.mxu0 %v658
    %2248 = vmatpush1.bf16.msra.mxu0 %v657
    %2249 = vmatprep.subr.bf16.mxu0 %v662
    %2250 = vmatpush1.bf16.msra.mxu0 %v661
    %2251 = vmatprep.subr.bf16.mxu0 %v666
    %2252 = vmatpush1.bf16.msra.mxu0 %v665
    %2253 = vmatprep.subr.bf16.mxu0 %v670
    %2254 = vmatpush1.bf16.msra.mxu0 %v669
    %2255 = vmatprep.subr.bf16.mxu0 %v674
    %2256 = vmatpush1.bf16.msra.mxu0 %v673
    %2257 = vmatprep.subr.bf16.mxu0 %v678
    %2258 = vmatpush1.bf16.msra.mxu0 %v677
    %2259 = vmatprep.subr.bf16.mxu0 0
    %2260 = vmatpush1.bf16.msra.mxu0 0
    %2261 = vmatprep.subr.bf16.mxu0 0
    %2262 = vmatpush1.bf16.msra.mxu0 0
    %2263 = vmatprep.subr.bf16.mxu0 0
    %2264 = vmatpush1.bf16.msra.mxu0 0
    %2265 = vmatprep.subr.bf16.mxu0 0
    %2266 = vmatpush1.bf16.msra.mxu0 0
    %2267 = vmatprep.subr.bf16.mxu0 0
    %2268 = vmatpush1.bf16.msra.mxu0 0
    %2269 = vmatprep.subr.bf16.mxu0 0
    %2270 = vmatpush1.bf16.msra.mxu0 0
    %2271 = vmatprep.subr.bf16.mxu0 0
    %2272 = vmatpush1.bf16.msra.mxu0 0
    %2273 = vmatprep.subr.bf16.mxu0 0
    %2274 = vmatpush1.bf16.msra.mxu0 0
    %2275 = vmatprep.mubr.bf16.mxu0 0
    %2276 = vmatmul.mubr.bf16.gmra.mrb[0].mxu0 %v2241
    %v2277 = vpop.f32.mrb[0].mxu0
    %v2278 = vadd.f32 0.0, %v2277
    %v2279 = vpop.f32.mrb[0].mxu0
    %v2280 = vadd.f32 0.0, %v2279
    %v2281 = vpop.f32.mrb[0].mxu0
    %v2282 = vpop.f32.mrb[0].mxu0
    %2283 = vdwg.mxu0
    %2284 = vmatprep.subr.bf16.mxu0 %v652
    %2285 = vmatpush1.bf16.msra.mxu0 %v651
    %2286 = vmatprep.subr.bf16.mxu0 %v656
    %2287 = vmatpush1.bf16.msra.mxu0 %v655
    %2288 = vmatprep.subr.bf16.mxu0 %v660
    %2289 = vmatpush1.bf16.msra.mxu0 %v659
    %2290 = vmatprep.subr.bf16.mxu0 %v664
    %2291 = vmatpush1.bf16.msra.mxu0 %v663
    %2292 = vmatprep.subr.bf16.mxu0 %v668
    %2293 = vmatpush1.bf16.msra.mxu0 %v667
    %2294 = vmatprep.subr.bf16.mxu0 %v672
    %2295 = vmatpush1.bf16.msra.mxu0 %v671
    %2296 = vmatprep.subr.bf16.mxu0 %v676
    %2297 = vmatpush1.bf16.msra.mxu0 %v675
    %2298 = vmatprep.subr.bf16.mxu0 %v680
    %2299 = vmatpush1.bf16.msra.mxu0 %v679
    %2300 = vmatprep.subr.bf16.mxu0 0
    %2301 = vmatpush1.bf16.msra.mxu0 0
    %2302 = vmatprep.subr.bf16.mxu0 0
    %2303 = vmatpush1.bf16.msra.mxu0 0
    %2304 = vmatprep.subr.bf16.mxu0 0
    %2305 = vmatpush1.bf16.msra.mxu0 0
    %2306 = vmatprep.subr.bf16.mxu0 0
    %2307 = vmatpush1.bf16.msra.mxu0 0
    %2308 = vmatprep.subr.bf16.mxu0 0
    %2309 = vmatpush1.bf16.msra.mxu0 0
    %2310 = vmatprep.subr.bf16.mxu0 0
    %2311 = vmatpush1.bf16.msra.mxu0 0
    %2312 = vmatprep.subr.bf16.mxu0 0
    %2313 = vmatpush1.bf16.msra.mxu0 0
    %2314 = vmatprep.subr.bf16.mxu0 0
    %2315 = vmatpush1.bf16.msra.mxu0 0
    %2316 = vmatprep.mubr.bf16.mxu0 0
    %2317 = vmatmul.mubr.bf16.gmra.mrb[0].mxu0 %v2241
    %v2318 = vpop.f32.mrb[0].mxu0
    %v2319 = vadd.f32 0.0, %v2318
    %v2320 = vpop.f32.mrb[0].mxu0
    %v2321 = vadd.f32 0.0, %v2320
    %v2322 = vpop.f32.mrb[0].mxu0
    %v2323 = vpop.f32.mrb[0].mxu0
    %2324 = vdwg.mxu0
    %v2329 = vrot.slane %v2278, 5
    %v2330 = vrot.slane %v2280, 5
    %v2331 = vrot.slane %v2319, 5
    %v2332 = vrot.slane %v2321, 5
    %v2333 = vrot.slane %v2278, 6
    %v2334 = vrot.slane %v2280, 6
    %v2335 = vrot.slane %v2319, 6
    %v2336 = vrot.slane %v2321, 6
    %v2337 = vrot.slane %v2278, 7
    %v2338 = vrot.slane %v2280, 7
    %v2339 = vrot.slane %v2319, 7
    %v2340 = vrot.slane %v2321, 7
    %v2341 = vrot.slane %v2278, 1
    %v2342 = vrot.slane %v2280, 1
    %v2343 = vrot.slane %v2319, 1
    %v2344 = vrot.slane %v2321, 1
    %v2345 = vrot.slane %v2278, 2
    %v2346 = vrot.slane %v2280, 2
    %v2347 = vrot.slane %v2319, 2
    %v2348 = vrot.slane %v2321, 2
    %v2349 = vrot.slane %v2278, 3
    %v2350 = vrot.slane %v2280, 3
    %v2351 = vrot.slane %v2319, 3
    %v2352 = vrot.slane %v2321, 3
    %v2353 = vrot.slane %v2278, 4
    %v2354 = vrot.slane %v2280, 4
    %v2355 = vrot.slane %v2319, 4
    %v2356 = vrot.slane %v2321, 4
    %v2389 = vadd.f32 %v2195, %v2329
    %v2390 = vadd.f32 %v2196, %v2330
    %v2391 = vadd.f32 %v2197, %v2331
    %v2392 = vadd.f32 %v2198, %v2332
    %v2393 = vadd.f32 %v2199, %v2333
    %v2394 = vadd.f32 %v2200, %v2334
    %v2395 = vadd.f32 %v2201, %v2335
    %v2396 = vadd.f32 %v2202, %v2336
    %v2397 = vadd.f32 %v2203, %v2337
    %v2398 = vadd.f32 %v2204, %v2338
    %v2399 = vadd.f32 %v2205, %v2339
    %v2400 = vadd.f32 %v2206, %v2340
    %v2401 = vadd.f32 %v2207, %v2278
    %v2402 = vadd.f32 %v2208, %v2280
    %v2403 = vadd.f32 %v2209, %v2319
    %v2404 = vadd.f32 %v2210, %v2321
    %v2405 = vadd.f32 %v2211, %v2341
    %v2406 = vadd.f32 %v2212, %v2342
    %v2407 = vadd.f32 %v2213, %v2343
    %v2408 = vadd.f32 %v2214, %v2344
    %v2409 = vadd.f32 %v2215, %v2345
    %v2410 = vadd.f32 %v2216, %v2346
    %v2411 = vadd.f32 %v2217, %v2347
    %v2412 = vadd.f32 %v2218, %v2348
    %v2413 = vadd.f32 %v2219, %v2349
    %v2414 = vadd.f32 %v2220, %v2350
    %v2415 = vadd.f32 %v2221, %v2351
    %v2416 = vadd.f32 %v2222, %v2352
    %v2417 = vadd.f32 %v2223, %v2353
    %v2418 = vadd.f32 %v2224, %v2354
    %v2419 = vadd.f32 %v2225, %v2355
    %v2420 = vadd.f32 %v2226, %v2356
    %v2421 = vxor.u32 %v2389, 2147483648
    %v2422 = vxor.u32 %v2393, 2147483648
    %v2423 = vxor.u32 %v2397, 2147483648
    %v2424 = vxor.u32 %v2401, 2147483648
    %v2425 = vxor.u32 %v2405, 2147483648
    %v2426 = vxor.u32 %v2409, 2147483648
    %v2427 = vxor.u32 %v2413, 2147483648
    %v2428 = vxor.u32 %v2417, 2147483648
    %v2429 = vmul.f32 %v2421, 1.442695
    %v2430 = vpow.pop %v2429
    %v2431 = vmul.f32 %v2422, 1.442695
    %v2432 = vpow.pop %v2431
    %v2433 = vmul.f32 %v2423, 1.442695
    %v2434 = vpow.pop %v2433
    %v2435 = vmul.f32 %v2424, 1.442695
    %v2436 = vpow.pop %v2435
    %v2437 = vmul.f32 %v2425, 1.442695
    %v2438 = vpow.pop %v2437
    %v2439 = vmul.f32 %v2426, 1.442695
    %v2440 = vpow.pop %v2439
    %v2441 = vmul.f32 %v2427, 1.442695
    %v2442 = vpow.pop %v2441
    %v2443 = vmul.f32 %v2428, 1.442695
    %v2444 = vpow.pop %v2443
    %v2445 = vadd.f32 %v2430, 1.0
    %v2446 = vadd.f32 %v2432, 1.0
    %v2447 = vadd.f32 %v2434, 1.0
    %v2448 = vadd.f32 %v2436, 1.0
    %v2449 = vadd.f32 %v2438, 1.0
    %v2450 = vadd.f32 %v2440, 1.0
    %v2451 = vadd.f32 %v2442, 1.0
    %v2452 = vadd.f32 %v2444, 1.0
    %v2453 = vrcp.pop %v2445
    %v2454 = vmul.f32 1.0, %v2453
    %v2455 = vrcp.pop %v2446
    %v2456 = vmul.f32 1.0, %v2455
    %v2457 = vrcp.pop %v2447
    %v2458 = vmul.f32 1.0, %v2457
    %v2459 = vrcp.pop %v2448
    %v2460 = vmul.f32 1.0, %v2459
    %v2461 = vrcp.pop %v2449
    %v2462 = vmul.f32 1.0, %v2461
    %v2463 = vrcp.pop %v2450
    %v2464 = vmul.f32 1.0, %v2463
    %v2465 = vrcp.pop %v2451
    %v2466 = vmul.f32 1.0, %v2465
    %v2467 = vrcp.pop %v2452
    %v2468 = vmul.f32 1.0, %v2467
    %v2469 = vxor.u32 %v2390, 2147483648
    %v2470 = vxor.u32 %v2394, 2147483648
    %v2471 = vxor.u32 %v2398, 2147483648
    %v2472 = vxor.u32 %v2402, 2147483648
    %v2473 = vxor.u32 %v2406, 2147483648
    %v2474 = vxor.u32 %v2410, 2147483648
    %v2475 = vxor.u32 %v2414, 2147483648
    %v2476 = vxor.u32 %v2418, 2147483648
    %v2477 = vmul.f32 %v2469, 1.442695
    %v2478 = vpow.pop %v2477
    %v2479 = vmul.f32 %v2470, 1.442695
    %v2480 = vpow.pop %v2479
    %v2481 = vmul.f32 %v2471, 1.442695
    %v2482 = vpow.pop %v2481
    %v2483 = vmul.f32 %v2472, 1.442695
    %v2484 = vpow.pop %v2483
    %v2485 = vmul.f32 %v2473, 1.442695
    %v2486 = vpow.pop %v2485
    %v2487 = vmul.f32 %v2474, 1.442695
    %v2488 = vpow.pop %v2487
    %v2489 = vmul.f32 %v2475, 1.442695
    %v2490 = vpow.pop %v2489
    %v2491 = vmul.f32 %v2476, 1.442695
    %v2492 = vpow.pop %v2491
    %v2493 = vadd.f32 %v2478, 1.0
    %v2494 = vadd.f32 %v2480, 1.0
    %v2495 = vadd.f32 %v2482, 1.0
    %v2496 = vadd.f32 %v2484, 1.0
    %v2497 = vadd.f32 %v2486, 1.0
    %v2498 = vadd.f32 %v2488, 1.0
    %v2499 = vadd.f32 %v2490, 1.0
    %v2500 = vadd.f32 %v2492, 1.0
    %v2501 = vrcp.pop %v2493
    %v2502 = vmul.f32 1.0, %v2501
    %v2503 = vrcp.pop %v2494
    %v2504 = vmul.f32 1.0, %v2503
    %v2505 = vrcp.pop %v2495
    %v2506 = vmul.f32 1.0, %v2505
    %v2507 = vrcp.pop %v2496
    %v2508 = vmul.f32 1.0, %v2507
    %v2509 = vrcp.pop %v2497
    %v2510 = vmul.f32 1.0, %v2509
    %v2511 = vrcp.pop %v2498
    %v2512 = vmul.f32 1.0, %v2511
    %v2513 = vrcp.pop %v2499
    %v2514 = vmul.f32 1.0, %v2513
    %v2515 = vrcp.pop %v2500
    %v2516 = vmul.f32 1.0, %v2515
    %v2517 = vtanh.pop %v2391
    %v2518 = vtanh.pop %v2395
    %v2519 = vtanh.pop %v2399
    %v2520 = vtanh.pop %v2403
    %v2521 = vtanh.pop %v2407
    %v2522 = vtanh.pop %v2411
    %v2523 = vtanh.pop %v2415
    %v2524 = vtanh.pop %v2419
    %v2525 = vxor.u32 %v2392, 2147483648
    %v2526 = vxor.u32 %v2396, 2147483648
    %v2527 = vxor.u32 %v2400, 2147483648
    %v2528 = vxor.u32 %v2404, 2147483648
    %v2529 = vxor.u32 %v2408, 2147483648
    %v2530 = vxor.u32 %v2412, 2147483648
    %v2531 = vxor.u32 %v2416, 2147483648
    %v2532 = vxor.u32 %v2420, 2147483648
    %v2533 = vmul.f32 %v2525, 1.442695
    %v2534 = vpow.pop %v2533
    %v2535 = vmul.f32 %v2526, 1.442695
    %v2536 = vpow.pop %v2535
    %v2537 = vmul.f32 %v2527, 1.442695
    %v2538 = vpow.pop %v2537
    %v2539 = vmul.f32 %v2528, 1.442695
    %v2540 = vpow.pop %v2539
    %v2541 = vmul.f32 %v2529, 1.442695
    %v2542 = vpow.pop %v2541
    %v2543 = vmul.f32 %v2530, 1.442695
    %v2544 = vpow.pop %v2543
    %v2545 = vmul.f32 %v2531, 1.442695
    %v2546 = vpow.pop %v2545
    %v2547 = vmul.f32 %v2532, 1.442695
    %v2548 = vpow.pop %v2547
    %v2549 = vadd.f32 %v2534, 1.0
    %v2550 = vadd.f32 %v2536, 1.0
    %v2551 = vadd.f32 %v2538, 1.0
    %v2552 = vadd.f32 %v2540, 1.0
    %v2553 = vadd.f32 %v2542, 1.0
    %v2554 = vadd.f32 %v2544, 1.0
    %v2555 = vadd.f32 %v2546, 1.0
    %v2556 = vadd.f32 %v2548, 1.0
    %v2557 = vrcp.pop %v2549
    %v2558 = vmul.f32 1.0, %v2557
    %v2559 = vrcp.pop %v2550
    %v2560 = vmul.f32 1.0, %v2559
    %v2561 = vrcp.pop %v2551
    %v2562 = vmul.f32 1.0, %v2561
    %v2563 = vrcp.pop %v2552
    %v2564 = vmul.f32 1.0, %v2563
    %v2565 = vrcp.pop %v2553
    %v2566 = vmul.f32 1.0, %v2565
    %v2567 = vrcp.pop %v2554
    %v2568 = vmul.f32 1.0, %v2567
    %v2569 = vrcp.pop %v2555
    %v2570 = vmul.f32 1.0, %v2569
    %v2571 = vrcp.pop %v2556
    %v2572 = vmul.f32 1.0, %v2571
    %v2581 = vrot.slane %v2097, 7
    %v2582 = vrot.slane %v2098, 7
    %v2583 = vrot.slane %v2099, 7
    %v2584 = vrot.slane %v2100, 7
    %v2585 = vrot.slane %v2101, 7
    %v2586 = vrot.slane %v2102, 7
    %v2587 = vrot.slane %v2103, 7
    %v2588 = vrot.slane %v2104, 7
    %v2597 = vmul.f32 %v2502, %v2581
    %v2598 = vmul.f32 %v2504, %v2582
    %v2599 = vmul.f32 %v2506, %v2583
    %v2600 = vmul.f32 %v2508, %v2584
    %v2601 = vmul.f32 %v2510, %v2585
    %v2602 = vmul.f32 %v2512, %v2586
    %v2603 = vmul.f32 %v2514, %v2587
    %v2604 = vmul.f32 %v2516, %v2588
    %v2605 = vmul.f32 %v2454, %v2517
    %v2606 = vmul.f32 %v2456, %v2518
    %v2607 = vmul.f32 %v2458, %v2519
    %v2608 = vmul.f32 %v2460, %v2520
    %v2609 = vmul.f32 %v2462, %v2521
    %v2610 = vmul.f32 %v2464, %v2522
    %v2611 = vmul.f32 %v2466, %v2523
    %v2612 = vmul.f32 %v2468, %v2524
    %v2613 = vadd.f32 %v2597, %v2605
    %v2614 = vadd.f32 %v2598, %v2606
    %v2615 = vadd.f32 %v2599, %v2607
    %v2616 = vadd.f32 %v2600, %v2608
    %v2617 = vadd.f32 %v2601, %v2609
    %v2618 = vadd.f32 %v2602, %v2610
    %v2619 = vadd.f32 %v2603, %v2611
    %v2620 = vadd.f32 %v2604, %v2612
    %v2621 = vtanh.pop %v2613
    %v2622 = vtanh.pop %v2614
    %v2623 = vtanh.pop %v2615
    %v2624 = vtanh.pop %v2616
    %v2625 = vtanh.pop %v2617
    %v2626 = vtanh.pop %v2618
    %v2627 = vtanh.pop %v2619
    %v2628 = vtanh.pop %v2620
    %v2629 = vmul.f32 %v2558, %v2621
    %v2630 = vmul.f32 %v2560, %v2622
    %v2631 = vmul.f32 %v2562, %v2623
    %v2632 = vmul.f32 %v2564, %v2624
    %v2633 = vmul.f32 %v2566, %v2625
    %v2634 = vmul.f32 %v2568, %v2626
    %v2635 = vmul.f32 %v2570, %v2627
    %v2636 = vmul.f32 %v2572, %v2628
    %v2637 = vpack.c.bf16 %v2629, %v2629
    %v2638 = vpack.c.bf16 %v2630, %v2630
    %v2639 = vpack.c.bf16 %v2631, %v2631
    %v2640 = vpack.c.bf16 %v2632, %v2632
    %v2641 = vpack.c.bf16 %v2633, %v2633
    %v2642 = vpack.c.bf16 %v2634, %v2634
    %v2643 = vpack.c.bf16 %v2635, %v2635
    %v2644 = vpack.c.bf16 %v2636, %v2636
    %v2653 = vunpack.c.l.b16 %v2637
    %v2654 = vunpack.c.l.b16 %v2638
    %v2655 = vunpack.c.l.b16 %v2639
    %v2656 = vunpack.c.l.b16 %v2640
    %v2657 = vunpack.c.l.b16 %v2641
    %v2658 = vunpack.c.l.b16 %v2642
    %v2659 = vunpack.c.l.b16 %v2643
    %v2660 = vunpack.c.l.b16 %v2644
    %v2661 = vpack.c.b16 %v2653, %v2653
    %v2662 = vpack.c.b16 %v2654, %v2654
    %v2663 = vpack.c.b16 %v2655, %v2655
    %v2664 = vpack.c.b16 %v2656, %v2656
    %v2665 = vpack.c.b16 %v2657, %v2657
    %v2666 = vpack.c.b16 %v2658, %v2658
    %v2667 = vpack.c.b16 %v2659, %v2659
    %v2668 = vpack.c.b16 %v2660, %v2660
    %v2669 = vunpack.c.l.b16 %v2661
    %v2670 = vunpack.c.l.b16 %v2662
    %v2671 = vunpack.c.l.b16 %v2663
    %v2672 = vunpack.c.l.b16 %v2664
    %v2673 = vunpack.c.l.b16 %v2665
    %v2674 = vunpack.c.l.b16 %v2666
    %v2675 = vunpack.c.l.b16 %v2667
    %v2676 = vunpack.c.l.b16 %v2668
    %v2677 = vrot.slane %v2669, 3
    %v2678 = vrot.slane %v2670, 2
    %v2679 = vsel %vm1124, %v2678, %v2677
    %v2680 = vrot.slane %v2671, 1
    %v2681 = vsel %vm1127, %v2680, %v2679
    %v2682 = vsel %vm1130, %v2672, %v2681
    %v2683 = vrot.slane %v2673, 7
    %v2684 = vsel %vm1133, %v2683, %v2682
    %v2685 = vrot.slane %v2674, 6
    %v2686 = vsel %vm1136, %v2685, %v2684
    %v2687 = vrot.slane %v2675, 5
    %v2688 = vsel %vm1139, %v2687, %v2686
    %v2689 = vrot.slane %v2676, 4
    %v2690 = vsel %vm1142, %v2689, %v2688
    %v2691 = vpack.c.b16 %v2690, %v2690
    %s2693 = scalar_lea.vmem [#allocation3], 12
    %2694 = vst [vmem:[%s2693] sm:$0xf] %v2691
    %v2695 = vld [vmem:[#allocation2] sm:$0x44]
    %v2696 = vld [vmem:[#allocation2 + $0x8] sm:$0x44]
    %v2697 = vld [vmem:[#allocation2 + $0x10] sm:$0x44]
    %v2698 = vld [vmem:[#allocation2 + $0x18] sm:$0x44]
    %v2699 = vld [vmem:[#allocation2 + $0x20] sm:$0x44]
    %v2700 = vld [vmem:[#allocation2 + $0x28] sm:$0x44]
    %v2701 = vld [vmem:[#allocation2 + $0x30] sm:$0x44]
    %v2702 = vld [vmem:[#allocation2 + $0x38] sm:$0x44]
    %v2703 = vld [vmem:[#allocation2 + $0x40] sm:$0x44]
    %v2704 = vld [vmem:[#allocation2 + $0x48] sm:$0x44]
    %v2705 = vld [vmem:[#allocation2 + $0x50] sm:$0x44]
    %v2706 = vld [vmem:[#allocation2 + $0x58] sm:$0x44]
    %v2707 = vld [vmem:[#allocation2 + $0x60] sm:$0x44]
    %v2708 = vld [vmem:[#allocation2 + $0x68] sm:$0x44]
    %v2709 = vld [vmem:[#allocation2 + $0x70] sm:$0x44]
    %v2710 = vld [vmem:[#allocation2 + $0x78] sm:$0x44]
    %v2711 = vunpack.c.l.bf16 %v2695
    %v2712 = vunpack.c.h.bf16 %v2695
    %v2713 = vunpack.c.l.bf16 %v2696
    %v2714 = vunpack.c.h.bf16 %v2696
    %v2715 = vunpack.c.l.bf16 %v2697
    %v2716 = vunpack.c.h.bf16 %v2697
    %v2717 = vunpack.c.l.bf16 %v2698
    %v2718 = vunpack.c.h.bf16 %v2698
    %v2719 = vunpack.c.l.bf16 %v2699
    %v2720 = vunpack.c.h.bf16 %v2699
    %v2721 = vunpack.c.l.bf16 %v2700
    %v2722 = vunpack.c.h.bf16 %v2700
    %v2723 = vunpack.c.l.bf16 %v2701
    %v2724 = vunpack.c.h.bf16 %v2701
    %v2725 = vunpack.c.l.bf16 %v2702
    %v2726 = vunpack.c.h.bf16 %v2702
    %v2727 = vunpack.c.l.bf16 %v2703
    %v2728 = vunpack.c.h.bf16 %v2703
    %v2729 = vunpack.c.l.bf16 %v2704
    %v2730 = vunpack.c.h.bf16 %v2704
    %v2731 = vunpack.c.l.bf16 %v2705
    %v2732 = vunpack.c.h.bf16 %v2705
    %v2733 = vunpack.c.l.bf16 %v2706
    %v2734 = vunpack.c.h.bf16 %v2706
    %v2735 = vunpack.c.l.bf16 %v2707
    %v2736 = vunpack.c.h.bf16 %v2707
    %v2737 = vunpack.c.l.bf16 %v2708
    %v2738 = vunpack.c.h.bf16 %v2708
    %v2739 = vunpack.c.l.bf16 %v2709
    %v2740 = vunpack.c.h.bf16 %v2709
    %v2741 = vunpack.c.l.bf16 %v2710
    %v2742 = vunpack.c.h.bf16 %v2710
    %v2743 = vrot.slane %v2653, 3
    %v2744 = vrot.slane %v2654, 2
    %v2745 = vsel %vm1124, %v2744, %v2743
    %v2746 = vrot.slane %v2655, 1
    %v2747 = vsel %vm1127, %v2746, %v2745
    %v2748 = vsel %vm1130, %v2656, %v2747
    %v2749 = vrot.slane %v2657, 7
    %v2750 = vsel %vm1133, %v2749, %v2748
    %v2751 = vrot.slane %v2658, 6
    %v2752 = vsel %vm1136, %v2751, %v2750
    %v2753 = vrot.slane %v2659, 5
    %v2754 = vsel %vm1139, %v2753, %v2752
    %v2755 = vrot.slane %v2660, 4
    %v2756 = vsel %vm1142, %v2755, %v2754
    %v2757 = vpack.c.b16 %v2756, %v2756
    %2759 = vmatprep.subr.bf16.mxu0 %v650
    %2760 = vmatpush1.bf16.msra.mxu0 %v649
    %2761 = vmatprep.subr.bf16.mxu0 %v654
    %2762 = vmatpush1.bf16.msra.mxu0 %v653
    %2763 = vmatprep.subr.bf16.mxu0 %v658
    %2764 = vmatpush1.bf16.msra.mxu0 %v657
    %2765 = vmatprep.subr.bf16.mxu0 %v662
    %2766 = vmatpush1.bf16.msra.mxu0 %v661
    %2767 = vmatprep.subr.bf16.mxu0 %v666
    %2768 = vmatpush1.bf16.msra.mxu0 %v665
    %2769 = vmatprep.subr.bf16.mxu0 %v670
    %2770 = vmatpush1.bf16.msra.mxu0 %v669
    %2771 = vmatprep.subr.bf16.mxu0 %v674
    %2772 = vmatpush1.bf16.msra.mxu0 %v673
    %2773 = vmatprep.subr.bf16.mxu0 %v678
    %2774 = vmatpush1.bf16.msra.mxu0 %v677
    %2775 = vmatprep.subr.bf16.mxu0 0
    %2776 = vmatpush1.bf16.msra.mxu0 0
    %2777 = vmatprep.subr.bf16.mxu0 0
    %2778 = vmatpush1.bf16.msra.mxu0 0
    %2779 = vmatprep.subr.bf16.mxu0 0
    %2780 = vmatpush1.bf16.msra.mxu0 0
    %2781 = vmatprep.subr.bf16.mxu0 0
    %2782 = vmatpush1.bf16.msra.mxu0 0
    %2783 = vmatprep.subr.bf16.mxu0 0
    %2784 = vmatpush1.bf16.msra.mxu0 0
    %2785 = vmatprep.subr.bf16.mxu0 0
    %2786 = vmatpush1.bf16.msra.mxu0 0
    %2787 = vmatprep.subr.bf16.mxu0 0
    %2788 = vmatpush1.bf16.msra.mxu0 0
    %2789 = vmatprep.subr.bf16.mxu0 0
    %2790 = vmatpush1.bf16.msra.mxu0 0
    %2791 = vmatprep.mubr.bf16.mxu0 0
    %2792 = vmatmul.mubr.bf16.gmra.mrb[0].mxu0 %v2757
    %v2793 = vpop.f32.mrb[0].mxu0
    %v2794 = vadd.f32 0.0, %v2793
    %v2795 = vpop.f32.mrb[0].mxu0
    %v2796 = vadd.f32 0.0, %v2795
    %v2797 = vpop.f32.mrb[0].mxu0
    %v2798 = vpop.f32.mrb[0].mxu0
    %2799 = vdwg.mxu0
    %2800 = vmatprep.subr.bf16.mxu0 %v652
    %2801 = vmatpush1.bf16.msra.mxu0 %v651
    %2802 = vmatprep.subr.bf16.mxu0 %v656
    %2803 = vmatpush1.bf16.msra.mxu0 %v655
    %2804 = vmatprep.subr.bf16.mxu0 %v660
    %2805 = vmatpush1.bf16.msra.mxu0 %v659
    %2806 = vmatprep.subr.bf16.mxu0 %v664
    %2807 = vmatpush1.bf16.msra.mxu0 %v663
    %2808 = vmatprep.subr.bf16.mxu0 %v668
    %2809 = vmatpush1.bf16.msra.mxu0 %v667
    %2810 = vmatprep.subr.bf16.mxu0 %v672
    %2811 = vmatpush1.bf16.msra.mxu0 %v671
    %2812 = vmatprep.subr.bf16.mxu0 %v676
    %2813 = vmatpush1.bf16.msra.mxu0 %v675
    %2814 = vmatprep.subr.bf16.mxu0 %v680
    %2815 = vmatpush1.bf16.msra.mxu0 %v679
    %2816 = vmatprep.subr.bf16.mxu0 0
    %2817 = vmatpush1.bf16.msra.mxu0 0
    %2818 = vmatprep.subr.bf16.mxu0 0
    %2819 = vmatpush1.bf16.msra.mxu0 0
    %2820 = vmatprep.subr.bf16.mxu0 0
    %2821 = vmatpush1.bf16.msra.mxu0 0
    %2822 = vmatprep.subr.bf16.mxu0 0
    %2823 = vmatpush1.bf16.msra.mxu0 0
    %2824 = vmatprep.subr.bf16.mxu0 0
    %2825 = vmatpush1.bf16.msra.mxu0 0
    %2826 = vmatprep.subr.bf16.mxu0 0
    %2827 = vmatpush1.bf16.msra.mxu0 0
    %2828 = vmatprep.subr.bf16.mxu0 0
    %2829 = vmatpush1.bf16.msra.mxu0 0
    %2830 = vmatprep.subr.bf16.mxu0 0
    %2831 = vmatpush1.bf16.msra.mxu0 0
    %2832 = vmatprep.mubr.bf16.mxu0 0
    %2833 = vmatmul.mubr.bf16.gmra.mrb[0].mxu0 %v2757
    %v2834 = vpop.f32.mrb[0].mxu0
    %v2835 = vadd.f32 0.0, %v2834
    %v2836 = vpop.f32.mrb[0].mxu0
    %v2837 = vadd.f32 0.0, %v2836
    %v2838 = vpop.f32.mrb[0].mxu0
    %v2839 = vpop.f32.mrb[0].mxu0
    %2840 = vdwg.mxu0
    %v2845 = vrot.slane %v2794, 4
    %v2846 = vrot.slane %v2796, 4
    %v2847 = vrot.slane %v2835, 4
    %v2848 = vrot.slane %v2837, 4
    %v2849 = vrot.slane %v2794, 5
    %v2850 = vrot.slane %v2796, 5
    %v2851 = vrot.slane %v2835, 5
    %v2852 = vrot.slane %v2837, 5
    %v2853 = vrot.slane %v2794, 6
    %v2854 = vrot.slane %v2796, 6
    %v2855 = vrot.slane %v2835, 6
    %v2856 = vrot.slane %v2837, 6
    %v2857 = vrot.slane %v2794, 7
    %v2858 = vrot.slane %v2796, 7
    %v2859 = vrot.slane %v2835, 7
    %v2860 = vrot.slane %v2837, 7
    %v2861 = vrot.slane %v2794, 1
    %v2862 = vrot.slane %v2796, 1
    %v2863 = vrot.slane %v2835, 1
    %v2864 = vrot.slane %v2837, 1
    %v2865 = vrot.slane %v2794, 2
    %v2866 = vrot.slane %v2796, 2
    %v2867 = vrot.slane %v2835, 2
    %v2868 = vrot.slane %v2837, 2
    %v2869 = vrot.slane %v2794, 3
    %v2870 = vrot.slane %v2796, 3
    %v2871 = vrot.slane %v2835, 3
    %v2872 = vrot.slane %v2837, 3
    %v2905 = vadd.f32 %v2711, %v2845
    %v2906 = vadd.f32 %v2712, %v2846
    %v2907 = vadd.f32 %v2713, %v2847
    %v2908 = vadd.f32 %v2714, %v2848
    %v2909 = vadd.f32 %v2715, %v2849
    %v2910 = vadd.f32 %v2716, %v2850
    %v2911 = vadd.f32 %v2717, %v2851
    %v2912 = vadd.f32 %v2718, %v2852
    %v2913 = vadd.f32 %v2719, %v2853
    %v2914 = vadd.f32 %v2720, %v2854
    %v2915 = vadd.f32 %v2721, %v2855
    %v2916 = vadd.f32 %v2722, %v2856
    %v2917 = vadd.f32 %v2723, %v2857
    %v2918 = vadd.f32 %v2724, %v2858
    %v2919 = vadd.f32 %v2725, %v2859
    %v2920 = vadd.f32 %v2726, %v2860
    %v2921 = vadd.f32 %v2727, %v2794
    %v2922 = vadd.f32 %v2728, %v2796
    %v2923 = vadd.f32 %v2729, %v2835
    %v2924 = vadd.f32 %v2730, %v2837
    %v2925 = vadd.f32 %v2731, %v2861
    %v2926 = vadd.f32 %v2732, %v2862
    %v2927 = vadd.f32 %v2733, %v2863
    %v2928 = vadd.f32 %v2734, %v2864
    %v2929 = vadd.f32 %v2735, %v2865
    %v2930 = vadd.f32 %v2736, %v2866
    %v2931 = vadd.f32 %v2737, %v2867
    %v2932 = vadd.f32 %v2738, %v2868
    %v2933 = vadd.f32 %v2739, %v2869
    %v2934 = vadd.f32 %v2740, %v2870
    %v2935 = vadd.f32 %v2741, %v2871
    %v2936 = vadd.f32 %v2742, %v2872
    %v2937 = vxor.u32 %v2905, 2147483648
    %v2938 = vxor.u32 %v2909, 2147483648
    %v2939 = vxor.u32 %v2913, 2147483648
    %v2940 = vxor.u32 %v2917, 2147483648
    %v2941 = vxor.u32 %v2921, 2147483648
    %v2942 = vxor.u32 %v2925, 2147483648
    %v2943 = vxor.u32 %v2929, 2147483648
    %v2944 = vxor.u32 %v2933, 2147483648
    %v2945 = vmul.f32 %v2937, 1.442695
    %v2946 = vpow.pop %v2945
    %v2947 = vmul.f32 %v2938, 1.442695
    %v2948 = vpow.pop %v2947
    %v2949 = vmul.f32 %v2939, 1.442695
    %v2950 = vpow.pop %v2949
    %v2951 = vmul.f32 %v2940, 1.442695
    %v2952 = vpow.pop %v2951
    %v2953 = vmul.f32 %v2941, 1.442695
    %v2954 = vpow.pop %v2953
    %v2955 = vmul.f32 %v2942, 1.442695
    %v2956 = vpow.pop %v2955
    %v2957 = vmul.f32 %v2943, 1.442695
    %v2958 = vpow.pop %v2957
    %v2959 = vmul.f32 %v2944, 1.442695
    %v2960 = vpow.pop %v2959
    %v2961 = vadd.f32 %v2946, 1.0
    %v2962 = vadd.f32 %v2948, 1.0
    %v2963 = vadd.f32 %v2950, 1.0
    %v2964 = vadd.f32 %v2952, 1.0
    %v2965 = vadd.f32 %v2954, 1.0
    %v2966 = vadd.f32 %v2956, 1.0
    %v2967 = vadd.f32 %v2958, 1.0
    %v2968 = vadd.f32 %v2960, 1.0
    %v2969 = vrcp.pop %v2961
    %v2970 = vmul.f32 1.0, %v2969
    %v2971 = vrcp.pop %v2962
    %v2972 = vmul.f32 1.0, %v2971
    %v2973 = vrcp.pop %v2963
    %v2974 = vmul.f32 1.0, %v2973
    %v2975 = vrcp.pop %v2964
    %v2976 = vmul.f32 1.0, %v2975
    %v2977 = vrcp.pop %v2965
    %v2978 = vmul.f32 1.0, %v2977
    %v2979 = vrcp.pop %v2966
    %v2980 = vmul.f32 1.0, %v2979
    %v2981 = vrcp.pop %v2967
    %v2982 = vmul.f32 1.0, %v2981
    %v2983 = vrcp.pop %v2968
    %v2984 = vmul.f32 1.0, %v2983
    %v2985 = vxor.u32 %v2906, 2147483648
    %v2986 = vxor.u32 %v2910, 2147483648
    %v2987 = vxor.u32 %v2914, 2147483648
    %v2988 = vxor.u32 %v2918, 2147483648
    %v2989 = vxor.u32 %v2922, 2147483648
    %v2990 = vxor.u32 %v2926, 2147483648
    %v2991 = vxor.u32 %v2930, 2147483648
    %v2992 = vxor.u32 %v2934, 2147483648
    %v2993 = vmul.f32 %v2985, 1.442695
    %v2994 = vpow.pop %v2993
    %v2995 = vmul.f32 %v2986, 1.442695
    %v2996 = vpow.pop %v2995
    %v2997 = vmul.f32 %v2987, 1.442695
    %v2998 = vpow.pop %v2997
    %v2999 = vmul.f32 %v2988, 1.442695
    %v3000 = vpow.pop %v2999
    %v3001 = vmul.f32 %v2989, 1.442695
    %v3002 = vpow.pop %v3001
    %v3003 = vmul.f32 %v2990, 1.442695
    %v3004 = vpow.pop %v3003
    %v3005 = vmul.f32 %v2991, 1.442695
    %v3006 = vpow.pop %v3005
    %v3007 = vmul.f32 %v2992, 1.442695
    %v3008 = vpow.pop %v3007
    %v3009 = vadd.f32 %v2994, 1.0
    %v3010 = vadd.f32 %v2996, 1.0
    %v3011 = vadd.f32 %v2998, 1.0
    %v3012 = vadd.f32 %v3000, 1.0
    %v3013 = vadd.f32 %v3002, 1.0
    %v3014 = vadd.f32 %v3004, 1.0
    %v3015 = vadd.f32 %v3006, 1.0
    %v3016 = vadd.f32 %v3008, 1.0
    %v3017 = vrcp.pop %v3009
    %v3018 = vmul.f32 1.0, %v3017
    %v3019 = vrcp.pop %v3010
    %v3020 = vmul.f32 1.0, %v3019
    %v3021 = vrcp.pop %v3011
    %v3022 = vmul.f32 1.0, %v3021
    %v3023 = vrcp.pop %v3012
    %v3024 = vmul.f32 1.0, %v3023
    %v3025 = vrcp.pop %v3013
    %v3026 = vmul.f32 1.0, %v3025
    %v3027 = vrcp.pop %v3014
    %v3028 = vmul.f32 1.0, %v3027
    %v3029 = vrcp.pop %v3015
    %v3030 = vmul.f32 1.0, %v3029
    %v3031 = vrcp.pop %v3016
    %v3032 = vmul.f32 1.0, %v3031
    %v3033 = vtanh.pop %v2907
    %v3034 = vtanh.pop %v2911
    %v3035 = vtanh.pop %v2915
    %v3036 = vtanh.pop %v2919
    %v3037 = vtanh.pop %v2923
    %v3038 = vtanh.pop %v2927
    %v3039 = vtanh.pop %v2931
    %v3040 = vtanh.pop %v2935
    %v3041 = vxor.u32 %v2908, 2147483648
    %v3042 = vxor.u32 %v2912, 2147483648
    %v3043 = vxor.u32 %v2916, 2147483648
    %v3044 = vxor.u32 %v2920, 2147483648
    %v3045 = vxor.u32 %v2924, 2147483648
    %v3046 = vxor.u32 %v2928, 2147483648
    %v3047 = vxor.u32 %v2932, 2147483648
    %v3048 = vxor.u32 %v2936, 2147483648
    %v3049 = vmul.f32 %v3041, 1.442695
    %v3050 = vpow.pop %v3049
    %v3051 = vmul.f32 %v3042, 1.442695
    %v3052 = vpow.pop %v3051
    %v3053 = vmul.f32 %v3043, 1.442695
    %v3054 = vpow.pop %v3053
    %v3055 = vmul.f32 %v3044, 1.442695
    %v3056 = vpow.pop %v3055
    %v3057 = vmul.f32 %v3045, 1.442695
    %v3058 = vpow.pop %v3057
    %v3059 = vmul.f32 %v3046, 1.442695
    %v3060 = vpow.pop %v3059
    %v3061 = vmul.f32 %v3047, 1.442695
    %v3062 = vpow.pop %v3061
    %v3063 = vmul.f32 %v3048, 1.442695
    %v3064 = vpow.pop %v3063
    %v3065 = vadd.f32 %v3050, 1.0
    %v3066 = vadd.f32 %v3052, 1.0
    %v3067 = vadd.f32 %v3054, 1.0
    %v3068 = vadd.f32 %v3056, 1.0
    %v3069 = vadd.f32 %v3058, 1.0
    %v3070 = vadd.f32 %v3060, 1.0
    %v3071 = vadd.f32 %v3062, 1.0
    %v3072 = vadd.f32 %v3064, 1.0
    %v3073 = vrcp.pop %v3065
    %v3074 = vmul.f32 1.0, %v3073
    %v3075 = vrcp.pop %v3066
    %v3076 = vmul.f32 1.0, %v3075
    %v3077 = vrcp.pop %v3067
    %v3078 = vmul.f32 1.0, %v3077
    %v3079 = vrcp.pop %v3068
    %v3080 = vmul.f32 1.0, %v3079
    %v3081 = vrcp.pop %v3069
    %v3082 = vmul.f32 1.0, %v3081
    %v3083 = vrcp.pop %v3070
    %v3084 = vmul.f32 1.0, %v3083
    %v3085 = vrcp.pop %v3071
    %v3086 = vmul.f32 1.0, %v3085
    %v3087 = vrcp.pop %v3072
    %v3088 = vmul.f32 1.0, %v3087
    %v3097 = vrot.slane %v2613, 7
    %v3098 = vrot.slane %v2614, 7
    %v3099 = vrot.slane %v2615, 7
    %v3100 = vrot.slane %v2616, 7
    %v3101 = vrot.slane %v2617, 7
    %v3102 = vrot.slane %v2618, 7
    %v3103 = vrot.slane %v2619, 7
    %v3104 = vrot.slane %v2620, 7
    %v3113 = vmul.f32 %v3018, %v3097
    %v3114 = vmul.f32 %v3020, %v3098
    %v3115 = vmul.f32 %v3022, %v3099
    %v3116 = vmul.f32 %v3024, %v3100
    %v3117 = vmul.f32 %v3026, %v3101
    %v3118 = vmul.f32 %v3028, %v3102
    %v3119 = vmul.f32 %v3030, %v3103
    %v3120 = vmul.f32 %v3032, %v3104
    %v3121 = vmul.f32 %v2970, %v3033
    %v3122 = vmul.f32 %v2972, %v3034
    %v3123 = vmul.f32 %v2974, %v3035
    %v3124 = vmul.f32 %v2976, %v3036
    %v3125 = vmul.f32 %v2978, %v3037
    %v3126 = vmul.f32 %v2980, %v3038
    %v3127 = vmul.f32 %v2982, %v3039
    %v3128 = vmul.f32 %v2984, %v3040
    %v3129 = vadd.f32 %v3113, %v3121
    %v3130 = vadd.f32 %v3114, %v3122
    %v3131 = vadd.f32 %v3115, %v3123
    %v3132 = vadd.f32 %v3116, %v3124
    %v3133 = vadd.f32 %v3117, %v3125
    %v3134 = vadd.f32 %v3118, %v3126
    %v3135 = vadd.f32 %v3119, %v3127
    %v3136 = vadd.f32 %v3120, %v3128
    %v3137 = vtanh.pop %v3129
    %v3138 = vtanh.pop %v3130
    %v3139 = vtanh.pop %v3131
    %v3140 = vtanh.pop %v3132
    %v3141 = vtanh.pop %v3133
    %v3142 = vtanh.pop %v3134
    %v3143 = vtanh.pop %v3135
    %v3144 = vtanh.pop %v3136
    %v3145 = vmul.f32 %v3074, %v3137
    %v3146 = vmul.f32 %v3076, %v3138
    %v3147 = vmul.f32 %v3078, %v3139
    %v3148 = vmul.f32 %v3080, %v3140
    %v3149 = vmul.f32 %v3082, %v3141
    %v3150 = vmul.f32 %v3084, %v3142
    %v3151 = vmul.f32 %v3086, %v3143
    %v3152 = vmul.f32 %v3088, %v3144
    %v3153 = vpack.c.bf16 %v3145, %v3145
    %v3154 = vpack.c.bf16 %v3146, %v3146
    %v3155 = vpack.c.bf16 %v3147, %v3147
    %v3156 = vpack.c.bf16 %v3148, %v3148
    %v3157 = vpack.c.bf16 %v3149, %v3149
    %v3158 = vpack.c.bf16 %v3150, %v3150
    %v3159 = vpack.c.bf16 %v3151, %v3151
    %v3160 = vpack.c.bf16 %v3152, %v3152
    %v3169 = vunpack.c.l.b16 %v3153
    %v3170 = vunpack.c.l.b16 %v3154
    %v3171 = vunpack.c.l.b16 %v3155
    %v3172 = vunpack.c.l.b16 %v3156
    %v3173 = vunpack.c.l.b16 %v3157
    %v3174 = vunpack.c.l.b16 %v3158
    %v3175 = vunpack.c.l.b16 %v3159
    %v3176 = vunpack.c.l.b16 %v3160
    %v3177 = vpack.c.b16 %v3169, %v3169
    %v3178 = vpack.c.b16 %v3170, %v3170
    %v3179 = vpack.c.b16 %v3171, %v3171
    %v3180 = vpack.c.b16 %v3172, %v3172
    %v3181 = vpack.c.b16 %v3173, %v3173
    %v3182 = vpack.c.b16 %v3174, %v3174
    %v3183 = vpack.c.b16 %v3175, %v3175
    %v3184 = vpack.c.b16 %v3176, %v3176
    %v3185 = vunpack.c.l.b16 %v3177
    %v3186 = vunpack.c.l.b16 %v3178
    %v3187 = vunpack.c.l.b16 %v3179
    %v3188 = vunpack.c.l.b16 %v3180
    %v3189 = vunpack.c.l.b16 %v3181
    %v3190 = vunpack.c.l.b16 %v3182
    %v3191 = vunpack.c.l.b16 %v3183
    %v3192 = vunpack.c.l.b16 %v3184
    %v3193 = vrot.slane %v3185, 4
    %v3194 = vrot.slane %v3186, 3
    %v3195 = vsel %vm1124, %v3194, %v3193
    %v3196 = vrot.slane %v3187, 2
    %v3197 = vsel %vm1127, %v3196, %v3195
    %v3198 = vrot.slane %v3188, 1
    %v3199 = vsel %vm1130, %v3198, %v3197
    %v3200 = vsel %vm1133, %v3189, %v3199
    %v3201 = vrot.slane %v3190, 7
    %v3202 = vsel %vm1136, %v3201, %v3200
    %v3203 = vrot.slane %v3191, 6
    %v3204 = vsel %vm1139, %v3203, %v3202
    %v3205 = vrot.slane %v3192, 5
    %v3206 = vsel %vm1142, %v3205, %v3204
    %v3207 = vpack.c.b16 %v3206, %v3206
    %s3209 = scalar_lea.vmem [#allocation3], 16
    %3210 = vst [vmem:[%s3209] sm:$0xf] %v3207
    %v3211 = vld [vmem:[#allocation2] sm:$0x44]
    %v3212 = vld [vmem:[#allocation2 + $0x8] sm:$0x44]
    %v3213 = vld [vmem:[#allocation2 + $0x10] sm:$0x44]
    %v3214 = vld [vmem:[#allocation2 + $0x18] sm:$0x44]
    %v3215 = vld [vmem:[#allocation2 + $0x20] sm:$0x44]
    %v3216 = vld [vmem:[#allocation2 + $0x28] sm:$0x44]
    %v3217 = vld [vmem:[#allocation2 + $0x30] sm:$0x44]
    %v3218 = vld [vmem:[#allocation2 + $0x38] sm:$0x44]
    %v3219 = vld [vmem:[#allocation2 + $0x40] sm:$0x44]
    %v3220 = vld [vmem:[#allocation2 + $0x48] sm:$0x44]
    %v3221 = vld [vmem:[#allocation2 + $0x50] sm:$0x44]
    %v3222 = vld [vmem:[#allocation2 + $0x58] sm:$0x44]
    %v3223 = vld [vmem:[#allocation2 + $0x60] sm:$0x44]
    %v3224 = vld [vmem:[#allocation2 + $0x68] sm:$0x44]
    %v3225 = vld [vmem:[#allocation2 + $0x70] sm:$0x44]
    %v3226 = vld [vmem:[#allocation2 + $0x78] sm:$0x44]
    %v3227 = vunpack.c.l.bf16 %v3211
    %v3228 = vunpack.c.h.bf16 %v3211
    %v3229 = vunpack.c.l.bf16 %v3212
    %v3230 = vunpack.c.h.bf16 %v3212
    %v3231 = vunpack.c.l.bf16 %v3213
    %v3232 = vunpack.c.h.bf16 %v3213
    %v3233 = vunpack.c.l.bf16 %v3214
    %v3234 = vunpack.c.h.bf16 %v3214
    %v3235 = vunpack.c.l.bf16 %v3215
    %v3236 = vunpack.c.h.bf16 %v3215
    %v3237 = vunpack.c.l.bf16 %v3216
    %v3238 = vunpack.c.h.bf16 %v3216
    %v3239 = vunpack.c.l.bf16 %v3217
    %v3240 = vunpack.c.h.bf16 %v3217
    %v3241 = vunpack.c.l.bf16 %v3218
    %v3242 = vunpack.c.h.bf16 %v3218
    %v3243 = vunpack.c.l.bf16 %v3219
    %v3244 = vunpack.c.h.bf16 %v3219
    %v3245 = vunpack.c.l.bf16 %v3220
    %v3246 = vunpack.c.h.bf16 %v3220
    %v3247 = vunpack.c.l.bf16 %v3221
    %v3248 = vunpack.c.h.bf16 %v3221
    %v3249 = vunpack.c.l.bf16 %v3222
    %v3250 = vunpack.c.h.bf16 %v3222
    %v3251 = vunpack.c.l.bf16 %v3223
    %v3252 = vunpack.c.h.bf16 %v3223
    %v3253 = vunpack.c.l.bf16 %v3224
    %v3254 = vunpack.c.h.bf16 %v3224
    %v3255 = vunpack.c.l.bf16 %v3225
    %v3256 = vunpack.c.h.bf16 %v3225
    %v3257 = vunpack.c.l.bf16 %v3226
    %v3258 = vunpack.c.h.bf16 %v3226
    %v3259 = vrot.slane %v3169, 4
    %v3260 = vrot.slane %v3170, 3
    %v3261 = vsel %vm1124, %v3260, %v3259
    %v3262 = vrot.slane %v3171, 2
    %v3263 = vsel %vm1127, %v3262, %v3261
    %v3264 = vrot.slane %v3172, 1
    %v3265 = vsel %vm1130, %v3264, %v3263
    %v3266 = vsel %vm1133, %v3173, %v3265
    %v3267 = vrot.slane %v3174, 7
    %v3268 = vsel %vm1136, %v3267, %v3266
    %v3269 = vrot.slane %v3175, 6
    %v3270 = vsel %vm1139, %v3269, %v3268
    %v3271 = vrot.slane %v3176, 5
    %v3272 = vsel %vm1142, %v3271, %v3270
    %v3273 = vpack.c.b16 %v3272, %v3272
    %3275 = vmatprep.subr.bf16.mxu0 %v650
    %3276 = vmatpush1.bf16.msra.mxu0 %v649
    %3277 = vmatprep.subr.bf16.mxu0 %v654
    %3278 = vmatpush1.bf16.msra.mxu0 %v653
    %3279 = vmatprep.subr.bf16.mxu0 %v658
    %3280 = vmatpush1.bf16.msra.mxu0 %v657
    %3281 = vmatprep.subr.bf16.mxu0 %v662
    %3282 = vmatpush1.bf16.msra.mxu0 %v661
    %3283 = vmatprep.subr.bf16.mxu0 %v666
    %3284 = vmatpush1.bf16.msra.mxu0 %v665
    %3285 = vmatprep.subr.bf16.mxu0 %v670
    %3286 = vmatpush1.bf16.msra.mxu0 %v669
    %3287 = vmatprep.subr.bf16.mxu0 %v674
    %3288 = vmatpush1.bf16.msra.mxu0 %v673
    %3289 = vmatprep.subr.bf16.mxu0 %v678
    %3290 = vmatpush1.bf16.msra.mxu0 %v677
    %3291 = vmatprep.subr.bf16.mxu0 0
    %3292 = vmatpush1.bf16.msra.mxu0 0
    %3293 = vmatprep.subr.bf16.mxu0 0
    %3294 = vmatpush1.bf16.msra.mxu0 0
    %3295 = vmatprep.subr.bf16.mxu0 0
    %3296 = vmatpush1.bf16.msra.mxu0 0
    %3297 = vmatprep.subr.bf16.mxu0 0
    %3298 = vmatpush1.bf16.msra.mxu0 0
    %3299 = vmatprep.subr.bf16.mxu0 0
    %3300 = vmatpush1.bf16.msra.mxu0 0
    %3301 = vmatprep.subr.bf16.mxu0 0
    %3302 = vmatpush1.bf16.msra.mxu0 0
    %3303 = vmatprep.subr.bf16.mxu0 0
    %3304 = vmatpush1.bf16.msra.mxu0 0
    %3305 = vmatprep.subr.bf16.mxu0 0
    %3306 = vmatpush1.bf16.msra.mxu0 0
    %3307 = vmatprep.mubr.bf16.mxu0 0
    %3308 = vmatmul.mubr.bf16.gmra.mrb[0].mxu0 %v3273
    %v3309 = vpop.f32.mrb[0].mxu0
    %v3310 = vadd.f32 0.0, %v3309
    %v3311 = vpop.f32.mrb[0].mxu0
    %v3312 = vadd.f32 0.0, %v3311
    %v3313 = vpop.f32.mrb[0].mxu0
    %v3314 = vpop.f32.mrb[0].mxu0
    %3315 = vdwg.mxu0
    %3316 = vmatprep.subr.bf16.mxu0 %v652
    %3317 = vmatpush1.bf16.msra.mxu0 %v651
    %3318 = vmatprep.subr.bf16.mxu0 %v656
    %3319 = vmatpush1.bf16.msra.mxu0 %v655
    %3320 = vmatprep.subr.bf16.mxu0 %v660
    %3321 = vmatpush1.bf16.msra.mxu0 %v659
    %3322 = vmatprep.subr.bf16.mxu0 %v664
    %3323 = vmatpush1.bf16.msra.mxu0 %v663
    %3324 = vmatprep.subr.bf16.mxu0 %v668
    %3325 = vmatpush1.bf16.msra.mxu0 %v667
    %3326 = vmatprep.subr.bf16.mxu0 %v672
    %3327 = vmatpush1.bf16.msra.mxu0 %v671
    %3328 = vmatprep.subr.bf16.mxu0 %v676
    %3329 = vmatpush1.bf16.msra.mxu0 %v675
    %3330 = vmatprep.subr.bf16.mxu0 %v680
    %3331 = vmatpush1.bf16.msra.mxu0 %v679
    %3332 = vmatprep.subr.bf16.mxu0 0
    %3333 = vmatpush1.bf16.msra.mxu0 0
    %3334 = vmatprep.subr.bf16.mxu0 0
    %3335 = vmatpush1.bf16.msra.mxu0 0
    %3336 = vmatprep.subr.bf16.mxu0 0
    %3337 = vmatpush1.bf16.msra.mxu0 0
    %3338 = vmatprep.subr.bf16.mxu0 0
    %3339 = vmatpush1.bf16.msra.mxu0 0
    %3340 = vmatprep.subr.bf16.mxu0 0
    %3341 = vmatpush1.bf16.msra.mxu0 0
    %3342 = vmatprep.subr.bf16.mxu0 0
    %3343 = vmatpush1.bf16.msra.mxu0 0
    %3344 = vmatprep.subr.bf16.mxu0 0
    %3345 = vmatpush1.bf16.msra.mxu0 0
    %3346 = vmatprep.subr.bf16.mxu0 0
    %3347 = vmatpush1.bf16.msra.mxu0 0
    %3348 = vmatprep.mubr.bf16.mxu0 0
    %3349 = vmatmul.mubr.bf16.gmra.mrb[0].mxu0 %v3273
    %v3350 = vpop.f32.mrb[0].mxu0
    %v3351 = vadd.f32 0.0, %v3350
    %v3352 = vpop.f32.mrb[0].mxu0
    %v3353 = vadd.f32 0.0, %v3352
    %v3354 = vpop.f32.mrb[0].mxu0
    %v3355 = vpop.f32.mrb[0].mxu0
    %3356 = vdwg.mxu0
    %v3361 = vrot.slane %v3310, 3
    %v3362 = vrot.slane %v3312, 3
    %v3363 = vrot.slane %v3351, 3
    %v3364 = vrot.slane %v3353, 3
    %v3365 = vrot.slane %v3310, 4
    %v3366 = vrot.slane %v3312, 4
    %v3367 = vrot.slane %v3351, 4
    %v3368 = vrot.slane %v3353, 4
    %v3369 = vrot.slane %v3310, 5
    %v3370 = vrot.slane %v3312, 5
    %v3371 = vrot.slane %v3351, 5
    %v3372 = vrot.slane %v3353, 5
    %v3373 = vrot.slane %v3310, 6
    %v3374 = vrot.slane %v3312, 6
    %v3375 = vrot.slane %v3351, 6
    %v3376 = vrot.slane %v3353, 6
    %v3377 = vrot.slane %v3310, 7
    %v3378 = vrot.slane %v3312, 7
    %v3379 = vrot.slane %v3351, 7
    %v3380 = vrot.slane %v3353, 7
    %v3381 = vrot.slane %v3310, 1
    %v3382 = vrot.slane %v3312, 1
    %v3383 = vrot.slane %v3351, 1
    %v3384 = vrot.slane %v3353, 1
    %v3385 = vrot.slane %v3310, 2
    %v3386 = vrot.slane %v3312, 2
    %v3387 = vrot.slane %v3351, 2
    %v3388 = vrot.slane %v3353, 2
    %v3421 = vadd.f32 %v3227, %v3361
    %v3422 = vadd.f32 %v3228, %v3362
    %v3423 = vadd.f32 %v3229, %v3363
    %v3424 = vadd.f32 %v3230, %v3364
    %v3425 = vadd.f32 %v3231, %v3365
    %v3426 = vadd.f32 %v3232, %v3366
    %v3427 = vadd.f32 %v3233, %v3367
    %v3428 = vadd.f32 %v3234, %v3368
    %v3429 = vadd.f32 %v3235, %v3369
    %v3430 = vadd.f32 %v3236, %v3370
    %v3431 = vadd.f32 %v3237, %v3371
    %v3432 = vadd.f32 %v3238, %v3372
    %v3433 = vadd.f32 %v3239, %v3373
    %v3434 = vadd.f32 %v3240, %v3374
    %v3435 = vadd.f32 %v3241, %v3375
    %v3436 = vadd.f32 %v3242, %v3376
    %v3437 = vadd.f32 %v3243, %v3377
    %v3438 = vadd.f32 %v3244, %v3378
    %v3439 = vadd.f32 %v3245, %v3379
    %v3440 = vadd.f32 %v3246, %v3380
    %v3441 = vadd.f32 %v3247, %v3310
    %v3442 = vadd.f32 %v3248, %v3312
    %v3443 = vadd.f32 %v3249, %v3351
    %v3444 = vadd.f32 %v3250, %v3353
    %v3445 = vadd.f32 %v3251, %v3381
    %v3446 = vadd.f32 %v3252, %v3382
    %v3447 = vadd.f32 %v3253, %v3383
    %v3448 = vadd.f32 %v3254, %v3384
    %v3449 = vadd.f32 %v3255, %v3385
    %v3450 = vadd.f32 %v3256, %v3386
    %v3451 = vadd.f32 %v3257, %v3387
    %v3452 = vadd.f32 %v3258, %v3388
    %v3453 = vxor.u32 %v3421, 2147483648
    %v3454 = vxor.u32 %v3425, 2147483648
    %v3455 = vxor.u32 %v3429, 2147483648
    %v3456 = vxor.u32 %v3433, 2147483648
    %v3457 = vxor.u32 %v3437, 2147483648
    %v3458 = vxor.u32 %v3441, 2147483648
    %v3459 = vxor.u32 %v3445, 2147483648
    %v3460 = vxor.u32 %v3449, 2147483648
    %v3461 = vmul.f32 %v3453, 1.442695
    %v3462 = vpow.pop %v3461
    %v3463 = vmul.f32 %v3454, 1.442695
    %v3464 = vpow.pop %v3463
    %v3465 = vmul.f32 %v3455, 1.442695
    %v3466 = vpow.pop %v3465
    %v3467 = vmul.f32 %v3456, 1.442695
    %v3468 = vpow.pop %v3467
    %v3469 = vmul.f32 %v3457, 1.442695
    %v3470 = vpow.pop %v3469
    %v3471 = vmul.f32 %v3458, 1.442695
    %v3472 = vpow.pop %v3471
    %v3473 = vmul.f32 %v3459, 1.442695
    %v3474 = vpow.pop %v3473
    %v3475 = vmul.f32 %v3460, 1.442695
    %v3476 = vpow.pop %v3475
    %v3477 = vadd.f32 %v3462, 1.0
    %v3478 = vadd.f32 %v3464, 1.0
    %v3479 = vadd.f32 %v3466, 1.0
    %v3480 = vadd.f32 %v3468, 1.0
    %v3481 = vadd.f32 %v3470, 1.0
    %v3482 = vadd.f32 %v3472, 1.0
    %v3483 = vadd.f32 %v3474, 1.0
    %v3484 = vadd.f32 %v3476, 1.0
    %v3485 = vrcp.pop %v3477
    %v3486 = vmul.f32 1.0, %v3485
    %v3487 = vrcp.pop %v3478
    %v3488 = vmul.f32 1.0, %v3487
    %v3489 = vrcp.pop %v3479
    %v3490 = vmul.f32 1.0, %v3489
    %v3491 = vrcp.pop %v3480
    %v3492 = vmul.f32 1.0, %v3491
    %v3493 = vrcp.pop %v3481
    %v3494 = vmul.f32 1.0, %v3493
    %v3495 = vrcp.pop %v3482
    %v3496 = vmul.f32 1.0, %v3495
    %v3497 = vrcp.pop %v3483
    %v3498 = vmul.f32 1.0, %v3497
    %v3499 = vrcp.pop %v3484
    %v3500 = vmul.f32 1.0, %v3499
    %v3501 = vxor.u32 %v3422, 2147483648
    %v3502 = vxor.u32 %v3426, 2147483648
    %v3503 = vxor.u32 %v3430, 2147483648
    %v3504 = vxor.u32 %v3434, 2147483648
    %v3505 = vxor.u32 %v3438, 2147483648
    %v3506 = vxor.u32 %v3442, 2147483648
    %v3507 = vxor.u32 %v3446, 2147483648
    %v3508 = vxor.u32 %v3450, 2147483648
    %v3509 = vmul.f32 %v3501, 1.442695
    %v3510 = vpow.pop %v3509
    %v3511 = vmul.f32 %v3502, 1.442695
    %v3512 = vpow.pop %v3511
    %v3513 = vmul.f32 %v3503, 1.442695
    %v3514 = vpow.pop %v3513
    %v3515 = vmul.f32 %v3504, 1.442695
    %v3516 = vpow.pop %v3515
    %v3517 = vmul.f32 %v3505, 1.442695
    %v3518 = vpow.pop %v3517
    %v3519 = vmul.f32 %v3506, 1.442695
    %v3520 = vpow.pop %v3519
    %v3521 = vmul.f32 %v3507, 1.442695
    %v3522 = vpow.pop %v3521
    %v3523 = vmul.f32 %v3508, 1.442695
    %v3524 = vpow.pop %v3523
    %v3525 = vadd.f32 %v3510, 1.0
    %v3526 = vadd.f32 %v3512, 1.0
    %v3527 = vadd.f32 %v3514, 1.0
    %v3528 = vadd.f32 %v3516, 1.0
    %v3529 = vadd.f32 %v3518, 1.0
    %v3530 = vadd.f32 %v3520, 1.0
    %v3531 = vadd.f32 %v3522, 1.0
    %v3532 = vadd.f32 %v3524, 1.0
    %v3533 = vrcp.pop %v3525
    %v3534 = vmul.f32 1.0, %v3533
    %v3535 = vrcp.pop %v3526
    %v3536 = vmul.f32 1.0, %v3535
    %v3537 = vrcp.pop %v3527
    %v3538 = vmul.f32 1.0, %v3537
    %v3539 = vrcp.pop %v3528
    %v3540 = vmul.f32 1.0, %v3539
    %v3541 = vrcp.pop %v3529
    %v3542 = vmul.f32 1.0, %v3541
    %v3543 = vrcp.pop %v3530
    %v3544 = vmul.f32 1.0, %v3543
    %v3545 = vrcp.pop %v3531
    %v3546 = vmul.f32 1.0, %v3545
    %v3547 = vrcp.pop %v3532
    %v3548 = vmul.f32 1.0, %v3547
    %v3549 = vtanh.pop %v3423
    %v3550 = vtanh.pop %v3427
    %v3551 = vtanh.pop %v3431
    %v3552 = vtanh.pop %v3435
    %v3553 = vtanh.pop %v3439
    %v3554 = vtanh.pop %v3443
    %v3555 = vtanh.pop %v3447
    %v3556 = vtanh.pop %v3451
    %v3557 = vxor.u32 %v3424, 2147483648
    %v3558 = vxor.u32 %v3428, 2147483648
    %v3559 = vxor.u32 %v3432, 2147483648
    %v3560 = vxor.u32 %v3436, 2147483648
    %v3561 = vxor.u32 %v3440, 2147483648
    %v3562 = vxor.u32 %v3444, 2147483648
    %v3563 = vxor.u32 %v3448, 2147483648
    %v3564 = vxor.u32 %v3452, 2147483648
    %v3565 = vmul.f32 %v3557, 1.442695
    %v3566 = vpow.pop %v3565
    %v3567 = vmul.f32 %v3558, 1.442695
    %v3568 = vpow.pop %v3567
    %v3569 = vmul.f32 %v3559, 1.442695
    %v3570 = vpow.pop %v3569
    %v3571 = vmul.f32 %v3560, 1.442695
    %v3572 = vpow.pop %v3571
    %v3573 = vmul.f32 %v3561, 1.442695
    %v3574 = vpow.pop %v3573
    %v3575 = vmul.f32 %v3562, 1.442695
    %v3576 = vpow.pop %v3575
    %v3577 = vmul.f32 %v3563, 1.442695
    %v3578 = vpow.pop %v3577
    %v3579 = vmul.f32 %v3564, 1.442695
    %v3580 = vpow.pop %v3579
    %v3581 = vadd.f32 %v3566, 1.0
    %v3582 = vadd.f32 %v3568, 1.0
    %v3583 = vadd.f32 %v3570, 1.0
    %v3584 = vadd.f32 %v3572, 1.0
    %v3585 = vadd.f32 %v3574, 1.0
    %v3586 = vadd.f32 %v3576, 1.0
    %v3587 = vadd.f32 %v3578, 1.0
    %v3588 = vadd.f32 %v3580, 1.0
    %v3589 = vrcp.pop %v3581
    %v3590 = vmul.f32 1.0, %v3589
    %v3591 = vrcp.pop %v3582
    %v3592 = vmul.f32 1.0, %v3591
    %v3593 = vrcp.pop %v3583
    %v3594 = vmul.f32 1.0, %v3593
    %v3595 = vrcp.pop %v3584
    %v3596 = vmul.f32 1.0, %v3595
    %v3597 = vrcp.pop %v3585
    %v3598 = vmul.f32 1.0, %v3597
    %v3599 = vrcp.pop %v3586
    %v3600 = vmul.f32 1.0, %v3599
    %v3601 = vrcp.pop %v3587
    %v3602 = vmul.f32 1.0, %v3601
    %v3603 = vrcp.pop %v3588
    %v3604 = vmul.f32 1.0, %v3603
    %v3613 = vrot.slane %v3129, 7
    %v3614 = vrot.slane %v3130, 7
    %v3615 = vrot.slane %v3131, 7
    %v3616 = vrot.slane %v3132, 7
    %v3617 = vrot.slane %v3133, 7
    %v3618 = vrot.slane %v3134, 7
    %v3619 = vrot.slane %v3135, 7
    %v3620 = vrot.slane %v3136, 7
    %v3629 = vmul.f32 %v3534, %v3613
    %v3630 = vmul.f32 %v3536, %v3614
    %v3631 = vmul.f32 %v3538, %v3615
    %v3632 = vmul.f32 %v3540, %v3616
    %v3633 = vmul.f32 %v3542, %v3617
    %v3634 = vmul.f32 %v3544, %v3618
    %v3635 = vmul.f32 %v3546, %v3619
    %v3636 = vmul.f32 %v3548, %v3620
    %v3637 = vmul.f32 %v3486, %v3549
    %v3638 = vmul.f32 %v3488, %v3550
    %v3639 = vmul.f32 %v3490, %v3551
    %v3640 = vmul.f32 %v3492, %v3552
    %v3641 = vmul.f32 %v3494, %v3553
    %v3642 = vmul.f32 %v3496, %v3554
    %v3643 = vmul.f32 %v3498, %v3555
    %v3644 = vmul.f32 %v3500, %v3556
    %v3645 = vadd.f32 %v3629, %v3637
    %v3646 = vadd.f32 %v3630, %v3638
    %v3647 = vadd.f32 %v3631, %v3639
    %v3648 = vadd.f32 %v3632, %v3640
    %v3649 = vadd.f32 %v3633, %v3641
    %v3650 = vadd.f32 %v3634, %v3642
    %v3651 = vadd.f32 %v3635, %v3643
    %v3652 = vadd.f32 %v3636, %v3644
    %v3653 = vtanh.pop %v3645
    %v3654 = vtanh.pop %v3646
    %v3655 = vtanh.pop %v3647
    %v3656 = vtanh.pop %v3648
    %v3657 = vtanh.pop %v3649
    %v3658 = vtanh.pop %v3650
    %v3659 = vtanh.pop %v3651
    %v3660 = vtanh.pop %v3652
    %v3661 = vmul.f32 %v3590, %v3653
    %v3662 = vmul.f32 %v3592, %v3654
    %v3663 = vmul.f32 %v3594, %v3655
    %v3664 = vmul.f32 %v3596, %v3656
    %v3665 = vmul.f32 %v3598, %v3657
    %v3666 = vmul.f32 %v3600, %v3658
    %v3667 = vmul.f32 %v3602, %v3659
    %v3668 = vmul.f32 %v3604, %v3660
    %v3669 = vpack.c.bf16 %v3661, %v3661
    %v3670 = vpack.c.bf16 %v3662, %v3662
    %v3671 = vpack.c.bf16 %v3663, %v3663
    %v3672 = vpack.c.bf16 %v3664, %v3664
    %v3673 = vpack.c.bf16 %v3665, %v3665
    %v3674 = vpack.c.bf16 %v3666, %v3666
    %v3675 = vpack.c.bf16 %v3667, %v3667
    %v3676 = vpack.c.bf16 %v3668, %v3668
    %v3685 = vunpack.c.l.b16 %v3669
    %v3686 = vunpack.c.l.b16 %v3670
    %v3687 = vunpack.c.l.b16 %v3671
    %v3688 = vunpack.c.l.b16 %v3672
    %v3689 = vunpack.c.l.b16 %v3673
    %v3690 = vunpack.c.l.b16 %v3674
    %v3691 = vunpack.c.l.b16 %v3675
    %v3692 = vunpack.c.l.b16 %v3676
    %v3693 = vpack.c.b16 %v3685, %v3685
    %v3694 = vpack.c.b16 %v3686, %v3686
    %v3695 = vpack.c.b16 %v3687, %v3687
    %v3696 = vpack.c.b16 %v3688, %v3688
    %v3697 = vpack.c.b16 %v3689, %v3689
    %v3698 = vpack.c.b16 %v3690, %v3690
    %v3699 = vpack.c.b16 %v3691, %v3691
    %v3700 = vpack.c.b16 %v3692, %v3692
    %v3701 = vunpack.c.l.b16 %v3693
    %v3702 = vunpack.c.l.b16 %v3694
    %v3703 = vunpack.c.l.b16 %v3695
    %v3704 = vunpack.c.l.b16 %v3696
    %v3705 = vunpack.c.l.b16 %v3697
    %v3706 = vunpack.c.l.b16 %v3698
    %v3707 = vunpack.c.l.b16 %v3699
    %v3708 = vunpack.c.l.b16 %v3700
    %v3709 = vrot.slane %v3701, 5
    %v3710 = vrot.slane %v3702, 4
    %v3711 = vsel %vm1124, %v3710, %v3709
    %v3712 = vrot.slane %v3703, 3
    %v3713 = vsel %vm1127, %v3712, %v3711
    %v3714 = vrot.slane %v3704, 2
    %v3715 = vsel %vm1130, %v3714, %v3713
    %v3716 = vrot.slane %v3705, 1
    %v3717 = vsel %vm1133, %v3716, %v3715
    %v3718 = vsel %vm1136, %v3706, %v3717
    %v3719 = vrot.slane %v3707, 7
    %v3720 = vsel %vm1139, %v3719, %v3718
    %v3721 = vrot.slane %v3708, 6
    %v3722 = vsel %vm1142, %v3721, %v3720
    %v3723 = vpack.c.b16 %v3722, %v3722
    %s3725 = scalar_lea.vmem [#allocation3], 20
    %3726 = vst [vmem:[%s3725] sm:$0xf] %v3723
    %v3727 = vld [vmem:[#allocation2] sm:$0x88]
    %v3728 = vld [vmem:[#allocation2 + $0x8] sm:$0x88]
    %v3729 = vld [vmem:[#allocation2 + $0x10] sm:$0x88]
    %v3730 = vld [vmem:[#allocation2 + $0x18] sm:$0x88]
    %v3731 = vld [vmem:[#allocation2 + $0x20] sm:$0x88]
    %v3732 = vld [vmem:[#allocation2 + $0x28] sm:$0x88]
    %v3733 = vld [vmem:[#allocation2 + $0x30] sm:$0x88]
    %v3734 = vld [vmem:[#allocation2 + $0x38] sm:$0x88]
    %v3735 = vld [vmem:[#allocation2 + $0x40] sm:$0x88]
    %v3736 = vld [vmem:[#allocation2 + $0x48] sm:$0x88]
    %v3737 = vld [vmem:[#allocation2 + $0x50] sm:$0x88]
    %v3738 = vld [vmem:[#allocation2 + $0x58] sm:$0x88]
    %v3739 = vld [vmem:[#allocation2 + $0x60] sm:$0x88]
    %v3740 = vld [vmem:[#allocation2 + $0x68] sm:$0x88]
    %v3741 = vld [vmem:[#allocation2 + $0x70] sm:$0x88]
    %v3742 = vld [vmem:[#allocation2 + $0x78] sm:$0x88]
    %v3743 = vunpack.c.l.bf16 %v3727
    %v3744 = vunpack.c.h.bf16 %v3727
    %v3745 = vunpack.c.l.bf16 %v3728
    %v3746 = vunpack.c.h.bf16 %v3728
    %v3747 = vunpack.c.l.bf16 %v3729
    %v3748 = vunpack.c.h.bf16 %v3729
    %v3749 = vunpack.c.l.bf16 %v3730
    %v3750 = vunpack.c.h.bf16 %v3730
    %v3751 = vunpack.c.l.bf16 %v3731
    %v3752 = vunpack.c.h.bf16 %v3731
    %v3753 = vunpack.c.l.bf16 %v3732
    %v3754 = vunpack.c.h.bf16 %v3732
    %v3755 = vunpack.c.l.bf16 %v3733
    %v3756 = vunpack.c.h.bf16 %v3733
    %v3757 = vunpack.c.l.bf16 %v3734
    %v3758 = vunpack.c.h.bf16 %v3734
    %v3759 = vunpack.c.l.bf16 %v3735
    %v3760 = vunpack.c.h.bf16 %v3735
    %v3761 = vunpack.c.l.bf16 %v3736
    %v3762 = vunpack.c.h.bf16 %v3736
    %v3763 = vunpack.c.l.bf16 %v3737
    %v3764 = vunpack.c.h.bf16 %v3737
    %v3765 = vunpack.c.l.bf16 %v3738
    %v3766 = vunpack.c.h.bf16 %v3738
    %v3767 = vunpack.c.l.bf16 %v3739
    %v3768 = vunpack.c.h.bf16 %v3739
    %v3769 = vunpack.c.l.bf16 %v3740
    %v3770 = vunpack.c.h.bf16 %v3740
    %v3771 = vunpack.c.l.bf16 %v3741
    %v3772 = vunpack.c.h.bf16 %v3741
    %v3773 = vunpack.c.l.bf16 %v3742
    %v3774 = vunpack.c.h.bf16 %v3742
    %v3775 = vrot.slane %v3685, 5
    %v3776 = vrot.slane %v3686, 4
    %v3777 = vsel %vm1124, %v3776, %v3775
    %v3778 = vrot.slane %v3687, 3
    %v3779 = vsel %vm1127, %v3778, %v3777
    %v3780 = vrot.slane %v3688, 2
    %v3781 = vsel %vm1130, %v3780, %v3779
    %v3782 = vrot.slane %v3689, 1
    %v3783 = vsel %vm1133, %v3782, %v3781
    %v3784 = vsel %vm1136, %v3690, %v3783
    %v3785 = vrot.slane %v3691, 7
    %v3786 = vsel %vm1139, %v3785, %v3784
    %v3787 = vrot.slane %v3692, 6
    %v3788 = vsel %vm1142, %v3787, %v3786
    %v3789 = vpack.c.b16 %v3788, %v3788
    %3791 = vmatprep.subr.bf16.mxu0 %v650
    %3792 = vmatpush1.bf16.msra.mxu0 %v649
    %3793 = vmatprep.subr.bf16.mxu0 %v654
    %3794 = vmatpush1.bf16.msra.mxu0 %v653
    %3795 = vmatprep.subr.bf16.mxu0 %v658
    %3796 = vmatpush1.bf16.msra.mxu0 %v657
    %3797 = vmatprep.subr.bf16.mxu0 %v662
    %3798 = vmatpush1.bf16.msra.mxu0 %v661
    %3799 = vmatprep.subr.bf16.mxu0 %v666
    %3800 = vmatpush1.bf16.msra.mxu0 %v665
    %3801 = vmatprep.subr.bf16.mxu0 %v670
    %3802 = vmatpush1.bf16.msra.mxu0 %v669
    %3803 = vmatprep.subr.bf16.mxu0 %v674
    %3804 = vmatpush1.bf16.msra.mxu0 %v673
    %3805 = vmatprep.subr.bf16.mxu0 %v678
    %3806 = vmatpush1.bf16.msra.mxu0 %v677
    %3807 = vmatprep.subr.bf16.mxu0 0
    %3808 = vmatpush1.bf16.msra.mxu0 0
    %3809 = vmatprep.subr.bf16.mxu0 0
    %3810 = vmatpush1.bf16.msra.mxu0 0
    %3811 = vmatprep.subr.bf16.mxu0 0
    %3812 = vmatpush1.bf16.msra.mxu0 0
    %3813 = vmatprep.subr.bf16.mxu0 0
    %3814 = vmatpush1.bf16.msra.mxu0 0
    %3815 = vmatprep.subr.bf16.mxu0 0
    %3816 = vmatpush1.bf16.msra.mxu0 0
    %3817 = vmatprep.subr.bf16.mxu0 0
    %3818 = vmatpush1.bf16.msra.mxu0 0
    %3819 = vmatprep.subr.bf16.mxu0 0
    %3820 = vmatpush1.bf16.msra.mxu0 0
    %3821 = vmatprep.subr.bf16.mxu0 0
    %3822 = vmatpush1.bf16.msra.mxu0 0
    %3823 = vmatprep.mubr.bf16.mxu0 0
    %3824 = vmatmul.mubr.bf16.gmra.mrb[0].mxu0 %v3789
    %v3825 = vpop.f32.mrb[0].mxu0
    %v3826 = vadd.f32 0.0, %v3825
    %v3827 = vpop.f32.mrb[0].mxu0
    %v3828 = vadd.f32 0.0, %v3827
    %v3829 = vpop.f32.mrb[0].mxu0
    %v3830 = vpop.f32.mrb[0].mxu0
    %3831 = vdwg.mxu0
    %3832 = vmatprep.subr.bf16.mxu0 %v652
    %3833 = vmatpush1.bf16.msra.mxu0 %v651
    %3834 = vmatprep.subr.bf16.mxu0 %v656
    %3835 = vmatpush1.bf16.msra.mxu0 %v655
    %3836 = vmatprep.subr.bf16.mxu0 %v660
    %3837 = vmatpush1.bf16.msra.mxu0 %v659
    %3838 = vmatprep.subr.bf16.mxu0 %v664
    %3839 = vmatpush1.bf16.msra.mxu0 %v663
    %3840 = vmatprep.subr.bf16.mxu0 %v668
    %3841 = vmatpush1.bf16.msra.mxu0 %v667
    %3842 = vmatprep.subr.bf16.mxu0 %v672
    %3843 = vmatpush1.bf16.msra.mxu0 %v671
    %3844 = vmatprep.subr.bf16.mxu0 %v676
    %3845 = vmatpush1.bf16.msra.mxu0 %v675
    %3846 = vmatprep.subr.bf16.mxu0 %v680
    %3847 = vmatpush1.bf16.msra.mxu0 %v679
    %3848 = vmatprep.subr.bf16.mxu0 0
    %3849 = vmatpush1.bf16.msra.mxu0 0
    %3850 = vmatprep.subr.bf16.mxu0 0
    %3851 = vmatpush1.bf16.msra.mxu0 0
    %3852 = vmatprep.subr.bf16.mxu0 0
    %3853 = vmatpush1.bf16.msra.mxu0 0
    %3854 = vmatprep.subr.bf16.mxu0 0
    %3855 = vmatpush1.bf16.msra.mxu0 0
    %3856 = vmatprep.subr.bf16.mxu0 0
    %3857 = vmatpush1.bf16.msra.mxu0 0
    %3858 = vmatprep.subr.bf16.mxu0 0
    %3859 = vmatpush1.bf16.msra.mxu0 0
    %3860 = vmatprep.subr.bf16.mxu0 0
    %3861 = vmatpush1.bf16.msra.mxu0 0
    %3862 = vmatprep.subr.bf16.mxu0 0
    %3863 = vmatpush1.bf16.msra.mxu0 0
    %3864 = vmatprep.mubr.bf16.mxu0 0
    %3865 = vmatmul.mubr.bf16.gmra.mrb[0].mxu0 %v3789
    %v3866 = vpop.f32.mrb[0].mxu0
    %v3867 = vadd.f32 0.0, %v3866
    %v3868 = vpop.f32.mrb[0].mxu0
    %v3869 = vadd.f32 0.0, %v3868
    %v3870 = vpop.f32.mrb[0].mxu0
    %v3871 = vpop.f32.mrb[0].mxu0
    %3872 = vdwg.mxu0
    %v3877 = vrot.slane %v3826, 2
    %v3878 = vrot.slane %v3828, 2
    %v3879 = vrot.slane %v3867, 2
    %v3880 = vrot.slane %v3869, 2
    %v3881 = vrot.slane %v3826, 3
    %v3882 = vrot.slane %v3828, 3
    %v3883 = vrot.slane %v3867, 3
    %v3884 = vrot.slane %v3869, 3
    %v3885 = vrot.slane %v3826, 4
    %v3886 = vrot.slane %v3828, 4
    %v3887 = vrot.slane %v3867, 4
    %v3888 = vrot.slane %v3869, 4
    %v3889 = vrot.slane %v3826, 5
    %v3890 = vrot.slane %v3828, 5
    %v3891 = vrot.slane %v3867, 5
    %v3892 = vrot.slane %v3869, 5
    %v3893 = vrot.slane %v3826, 6
    %v3894 = vrot.slane %v3828, 6
    %v3895 = vrot.slane %v3867, 6
    %v3896 = vrot.slane %v3869, 6
    %v3897 = vrot.slane %v3826, 7
    %v3898 = vrot.slane %v3828, 7
    %v3899 = vrot.slane %v3867, 7
    %v3900 = vrot.slane %v3869, 7
    %v3901 = vrot.slane %v3826, 1
    %v3902 = vrot.slane %v3828, 1
    %v3903 = vrot.slane %v3867, 1
    %v3904 = vrot.slane %v3869, 1
    %v3937 = vadd.f32 %v3743, %v3877
    %v3938 = vadd.f32 %v3744, %v3878
    %v3939 = vadd.f32 %v3745, %v3879
    %v3940 = vadd.f32 %v3746, %v3880
    %v3941 = vadd.f32 %v3747, %v3881
    %v3942 = vadd.f32 %v3748, %v3882
    %v3943 = vadd.f32 %v3749, %v3883
    %v3944 = vadd.f32 %v3750, %v3884
    %v3945 = vadd.f32 %v3751, %v3885
    %v3946 = vadd.f32 %v3752, %v3886
    %v3947 = vadd.f32 %v3753, %v3887
    %v3948 = vadd.f32 %v3754, %v3888
    %v3949 = vadd.f32 %v3755, %v3889
    %v3950 = vadd.f32 %v3756, %v3890
    %v3951 = vadd.f32 %v3757, %v3891
    %v3952 = vadd.f32 %v3758, %v3892
    %v3953 = vadd.f32 %v3759, %v3893
    %v3954 = vadd.f32 %v3760, %v3894
    %v3955 = vadd.f32 %v3761, %v3895
    %v3956 = vadd.f32 %v3762, %v3896
    %v3957 = vadd.f32 %v3763, %v3897
    %v3958 = vadd.f32 %v3764, %v3898
    %v3959 = vadd.f32 %v3765, %v3899
    %v3960 = vadd.f32 %v3766, %v3900
    %v3961 = vadd.f32 %v3767, %v3826
    %v3962 = vadd.f32 %v3768, %v3828
    %v3963 = vadd.f32 %v3769, %v3867
    %v3964 = vadd.f32 %v3770, %v3869
    %v3965 = vadd.f32 %v3771, %v3901
    %v3966 = vadd.f32 %v3772, %v3902
    %v3967 = vadd.f32 %v3773, %v3903
    %v3968 = vadd.f32 %v3774, %v3904
    %v3969 = vxor.u32 %v3937, 2147483648
    %v3970 = vxor.u32 %v3941, 2147483648
    %v3971 = vxor.u32 %v3945, 2147483648
    %v3972 = vxor.u32 %v3949, 2147483648
    %v3973 = vxor.u32 %v3953, 2147483648
    %v3974 = vxor.u32 %v3957, 2147483648
    %v3975 = vxor.u32 %v3961, 2147483648
    %v3976 = vxor.u32 %v3965, 2147483648
    %v3977 = vmul.f32 %v3969, 1.442695
    %v3978 = vpow.pop %v3977
    %v3979 = vmul.f32 %v3970, 1.442695
    %v3980 = vpow.pop %v3979
    %v3981 = vmul.f32 %v3971, 1.442695
    %v3982 = vpow.pop %v3981
    %v3983 = vmul.f32 %v3972, 1.442695
    %v3984 = vpow.pop %v3983
    %v3985 = vmul.f32 %v3973, 1.442695
    %v3986 = vpow.pop %v3985
    %v3987 = vmul.f32 %v3974, 1.442695
    %v3988 = vpow.pop %v3987
    %v3989 = vmul.f32 %v3975, 1.442695
    %v3990 = vpow.pop %v3989
    %v3991 = vmul.f32 %v3976, 1.442695
    %v3992 = vpow.pop %v3991
    %v3993 = vadd.f32 %v3978, 1.0
    %v3994 = vadd.f32 %v3980, 1.0
    %v3995 = vadd.f32 %v3982, 1.0
    %v3996 = vadd.f32 %v3984, 1.0
    %v3997 = vadd.f32 %v3986, 1.0
    %v3998 = vadd.f32 %v3988, 1.0
    %v3999 = vadd.f32 %v3990, 1.0
    %v4000 = vadd.f32 %v3992, 1.0
    %v4001 = vrcp.pop %v3993
    %v4002 = vmul.f32 1.0, %v4001
    %v4003 = vrcp.pop %v3994
    %v4004 = vmul.f32 1.0, %v4003
    %v4005 = vrcp.pop %v3995
    %v4006 = vmul.f32 1.0, %v4005
    %v4007 = vrcp.pop %v3996
    %v4008 = vmul.f32 1.0, %v4007
    %v4009 = vrcp.pop %v3997
    %v4010 = vmul.f32 1.0, %v4009
    %v4011 = vrcp.pop %v3998
    %v4012 = vmul.f32 1.0, %v4011
    %v4013 = vrcp.pop %v3999
    %v4014 = vmul.f32 1.0, %v4013
    %v4015 = vrcp.pop %v4000
    %v4016 = vmul.f32 1.0, %v4015
    %v4017 = vxor.u32 %v3938, 2147483648
    %v4018 = vxor.u32 %v3942, 2147483648
    %v4019 = vxor.u32 %v3946, 2147483648
    %v4020 = vxor.u32 %v3950, 2147483648
    %v4021 = vxor.u32 %v3954, 2147483648
    %v4022 = vxor.u32 %v3958, 2147483648
    %v4023 = vxor.u32 %v3962, 2147483648
    %v4024 = vxor.u32 %v3966, 2147483648
    %v4025 = vmul.f32 %v4017, 1.442695
    %v4026 = vpow.pop %v4025
    %v4027 = vmul.f32 %v4018, 1.442695
    %v4028 = vpow.pop %v4027
    %v4029 = vmul.f32 %v4019, 1.442695
    %v4030 = vpow.pop %v4029
    %v4031 = vmul.f32 %v4020, 1.442695
    %v4032 = vpow.pop %v4031
    %v4033 = vmul.f32 %v4021, 1.442695
    %v4034 = vpow.pop %v4033
    %v4035 = vmul.f32 %v4022, 1.442695
    %v4036 = vpow.pop %v4035
    %v4037 = vmul.f32 %v4023, 1.442695
    %v4038 = vpow.pop %v4037
    %v4039 = vmul.f32 %v4024, 1.442695
    %v4040 = vpow.pop %v4039
    %v4041 = vadd.f32 %v4026, 1.0
    %v4042 = vadd.f32 %v4028, 1.0
    %v4043 = vadd.f32 %v4030, 1.0
    %v4044 = vadd.f32 %v4032, 1.0
    %v4045 = vadd.f32 %v4034, 1.0
    %v4046 = vadd.f32 %v4036, 1.0
    %v4047 = vadd.f32 %v4038, 1.0
    %v4048 = vadd.f32 %v4040, 1.0
    %v4049 = vrcp.pop %v4041
    %v4050 = vmul.f32 1.0, %v4049
    %v4051 = vrcp.pop %v4042
    %v4052 = vmul.f32 1.0, %v4051
    %v4053 = vrcp.pop %v4043
    %v4054 = vmul.f32 1.0, %v4053
    %v4055 = vrcp.pop %v4044
    %v4056 = vmul.f32 1.0, %v4055
    %v4057 = vrcp.pop %v4045
    %v4058 = vmul.f32 1.0, %v4057
    %v4059 = vrcp.pop %v4046
    %v4060 = vmul.f32 1.0, %v4059
    %v4061 = vrcp.pop %v4047
    %v4062 = vmul.f32 1.0, %v4061
    %v4063 = vrcp.pop %v4048
    %v4064 = vmul.f32 1.0, %v4063
    %v4065 = vtanh.pop %v3939
    %v4066 = vtanh.pop %v3943
    %v4067 = vtanh.pop %v3947
    %v4068 = vtanh.pop %v3951
    %v4069 = vtanh.pop %v3955
    %v4070 = vtanh.pop %v3959
    %v4071 = vtanh.pop %v3963
    %v4072 = vtanh.pop %v3967
    %v4073 = vxor.u32 %v3940, 2147483648
    %v4074 = vxor.u32 %v3944, 2147483648
    %v4075 = vxor.u32 %v3948, 2147483648
    %v4076 = vxor.u32 %v3952, 2147483648
    %v4077 = vxor.u32 %v3956, 2147483648
    %v4078 = vxor.u32 %v3960, 2147483648
    %v4079 = vxor.u32 %v3964, 2147483648
    %v4080 = vxor.u32 %v3968, 2147483648
    %v4081 = vmul.f32 %v4073, 1.442695
    %v4082 = vpow.pop %v4081
    %v4083 = vmul.f32 %v4074, 1.442695
    %v4084 = vpow.pop %v4083
    %v4085 = vmul.f32 %v4075, 1.442695
    %v4086 = vpow.pop %v4085
    %v4087 = vmul.f32 %v4076, 1.442695
    %v4088 = vpow.pop %v4087
    %v4089 = vmul.f32 %v4077, 1.442695
    %v4090 = vpow.pop %v4089
    %v4091 = vmul.f32 %v4078, 1.442695
    %v4092 = vpow.pop %v4091
    %v4093 = vmul.f32 %v4079, 1.442695
    %v4094 = vpow.pop %v4093
    %v4095 = vmul.f32 %v4080, 1.442695
    %v4096 = vpow.pop %v4095
    %v4097 = vadd.f32 %v4082, 1.0
    %v4098 = vadd.f32 %v4084, 1.0
    %v4099 = vadd.f32 %v4086, 1.0
    %v4100 = vadd.f32 %v4088, 1.0
    %v4101 = vadd.f32 %v4090, 1.0
    %v4102 = vadd.f32 %v4092, 1.0
    %v4103 = vadd.f32 %v4094, 1.0
    %v4104 = vadd.f32 %v4096, 1.0
    %v4105 = vrcp.pop %v4097
    %v4106 = vmul.f32 1.0, %v4105
    %v4107 = vrcp.pop %v4098
    %v4108 = vmul.f32 1.0, %v4107
    %v4109 = vrcp.pop %v4099
    %v4110 = vmul.f32 1.0, %v4109
    %v4111 = vrcp.pop %v4100
    %v4112 = vmul.f32 1.0, %v4111
    %v4113 = vrcp.pop %v4101
    %v4114 = vmul.f32 1.0, %v4113
    %v4115 = vrcp.pop %v4102
    %v4116 = vmul.f32 1.0, %v4115
    %v4117 = vrcp.pop %v4103
    %v4118 = vmul.f32 1.0, %v4117
    %v4119 = vrcp.pop %v4104
    %v4120 = vmul.f32 1.0, %v4119
    %v4129 = vrot.slane %v3645, 7
    %v4130 = vrot.slane %v3646, 7
    %v4131 = vrot.slane %v3647, 7
    %v4132 = vrot.slane %v3648, 7
    %v4133 = vrot.slane %v3649, 7
    %v4134 = vrot.slane %v3650, 7
    %v4135 = vrot.slane %v3651, 7
    %v4136 = vrot.slane %v3652, 7
    %v4145 = vmul.f32 %v4050, %v4129
    %v4146 = vmul.f32 %v4052, %v4130
    %v4147 = vmul.f32 %v4054, %v4131
    %v4148 = vmul.f32 %v4056, %v4132
    %v4149 = vmul.f32 %v4058, %v4133
    %v4150 = vmul.f32 %v4060, %v4134
    %v4151 = vmul.f32 %v4062, %v4135
    %v4152 = vmul.f32 %v4064, %v4136
    %v4153 = vmul.f32 %v4002, %v4065
    %v4154 = vmul.f32 %v4004, %v4066
    %v4155 = vmul.f32 %v4006, %v4067
    %v4156 = vmul.f32 %v4008, %v4068
    %v4157 = vmul.f32 %v4010, %v4069
    %v4158 = vmul.f32 %v4012, %v4070
    %v4159 = vmul.f32 %v4014, %v4071
    %v4160 = vmul.f32 %v4016, %v4072
    %v4161 = vadd.f32 %v4145, %v4153
    %v4162 = vadd.f32 %v4146, %v4154
    %v4163 = vadd.f32 %v4147, %v4155
    %v4164 = vadd.f32 %v4148, %v4156
    %v4165 = vadd.f32 %v4149, %v4157
    %v4166 = vadd.f32 %v4150, %v4158
    %v4167 = vadd.f32 %v4151, %v4159
    %v4168 = vadd.f32 %v4152, %v4160
    %v4169 = vtanh.pop %v4161
    %v4170 = vtanh.pop %v4162
    %v4171 = vtanh.pop %v4163
    %v4172 = vtanh.pop %v4164
    %v4173 = vtanh.pop %v4165
    %v4174 = vtanh.pop %v4166
    %v4175 = vtanh.pop %v4167
    %v4176 = vtanh.pop %v4168
    %v4177 = vmul.f32 %v4106, %v4169
    %v4178 = vmul.f32 %v4108, %v4170
    %v4179 = vmul.f32 %v4110, %v4171
    %v4180 = vmul.f32 %v4112, %v4172
    %v4181 = vmul.f32 %v4114, %v4173
    %v4182 = vmul.f32 %v4116, %v4174
    %v4183 = vmul.f32 %v4118, %v4175
    %v4184 = vmul.f32 %v4120, %v4176
    %v4185 = vpack.c.bf16 %v4177, %v4177
    %v4186 = vpack.c.bf16 %v4178, %v4178
    %v4187 = vpack.c.bf16 %v4179, %v4179
    %v4188 = vpack.c.bf16 %v4180, %v4180
    %v4189 = vpack.c.bf16 %v4181, %v4181
    %v4190 = vpack.c.bf16 %v4182, %v4182
    %v4191 = vpack.c.bf16 %v4183, %v4183
    %v4192 = vpack.c.bf16 %v4184, %v4184
    %v4201 = vunpack.c.l.b16 %v4185
    %v4202 = vunpack.c.l.b16 %v4186
    %v4203 = vunpack.c.l.b16 %v4187
    %v4204 = vunpack.c.l.b16 %v4188
    %v4205 = vunpack.c.l.b16 %v4189
    %v4206 = vunpack.c.l.b16 %v4190
    %v4207 = vunpack.c.l.b16 %v4191
    %v4208 = vunpack.c.l.b16 %v4192
    %v4209 = vpack.c.b16 %v4201, %v4201
    %v4210 = vpack.c.b16 %v4202, %v4202
    %v4211 = vpack.c.b16 %v4203, %v4203
    %v4212 = vpack.c.b16 %v4204, %v4204
    %v4213 = vpack.c.b16 %v4205, %v4205
    %v4214 = vpack.c.b16 %v4206, %v4206
    %v4215 = vpack.c.b16 %v4207, %v4207
    %v4216 = vpack.c.b16 %v4208, %v4208
    %v4217 = vunpack.c.l.b16 %v4209
    %v4218 = vunpack.c.l.b16 %v4210
    %v4219 = vunpack.c.l.b16 %v4211
    %v4220 = vunpack.c.l.b16 %v4212
    %v4221 = vunpack.c.l.b16 %v4213
    %v4222 = vunpack.c.l.b16 %v4214
    %v4223 = vunpack.c.l.b16 %v4215
    %v4224 = vunpack.c.l.b16 %v4216
    %v4225 = vrot.slane %v4217, 6
    %v4226 = vrot.slane %v4218, 5
    %v4227 = vsel %vm1124, %v4226, %v4225
    %v4228 = vrot.slane %v4219, 4
    %v4229 = vsel %vm1127, %v4228, %v4227
    %v4230 = vrot.slane %v4220, 3
    %v4231 = vsel %vm1130, %v4230, %v4229
    %v4232 = vrot.slane %v4221, 2
    %v4233 = vsel %vm1133, %v4232, %v4231
    %v4234 = vrot.slane %v4222, 1
    %v4235 = vsel %vm1136, %v4234, %v4233
    %v4236 = vsel %vm1139, %v4223, %v4235
    %v4237 = vrot.slane %v4224, 7
    %v4238 = vsel %vm1142, %v4237, %v4236
    %v4239 = vpack.c.b16 %v4238, %v4238
    %s4241 = scalar_lea.vmem [#allocation3], 24
    %4242 = vst [vmem:[%s4241] sm:$0xf] %v4239
    %v4243 = vld [vmem:[#allocation2] sm:$0x88]
    %v4244 = vld [vmem:[#allocation2 + $0x8] sm:$0x88]
    %v4245 = vld [vmem:[#allocation2 + $0x10] sm:$0x88]
    %v4246 = vld [vmem:[#allocation2 + $0x18] sm:$0x88]
    %v4247 = vld [vmem:[#allocation2 + $0x20] sm:$0x88]
    %v4248 = vld [vmem:[#allocation2 + $0x28] sm:$0x88]
    %v4249 = vld [vmem:[#allocation2 + $0x30] sm:$0x88]
    %v4250 = vld [vmem:[#allocation2 + $0x38] sm:$0x88]
    %v4251 = vld [vmem:[#allocation2 + $0x40] sm:$0x88]
    %v4252 = vld [vmem:[#allocation2 + $0x48] sm:$0x88]
    %v4253 = vld [vmem:[#allocation2 + $0x50] sm:$0x88]
    %v4254 = vld [vmem:[#allocation2 + $0x58] sm:$0x88]
    %v4255 = vld [vmem:[#allocation2 + $0x60] sm:$0x88]
    %v4256 = vld [vmem:[#allocation2 + $0x68] sm:$0x88]
    %v4257 = vld [vmem:[#allocation2 + $0x70] sm:$0x88]
    %v4258 = vld [vmem:[#allocation2 + $0x78] sm:$0x88]
    %v4259 = vunpack.c.l.bf16 %v4243
    %v4260 = vunpack.c.h.bf16 %v4243
    %v4261 = vunpack.c.l.bf16 %v4244
    %v4262 = vunpack.c.h.bf16 %v4244
    %v4263 = vunpack.c.l.bf16 %v4245
    %v4264 = vunpack.c.h.bf16 %v4245
    %v4265 = vunpack.c.l.bf16 %v4246
    %v4266 = vunpack.c.h.bf16 %v4246
    %v4267 = vunpack.c.l.bf16 %v4247
    %v4268 = vunpack.c.h.bf16 %v4247
    %v4269 = vunpack.c.l.bf16 %v4248
    %v4270 = vunpack.c.h.bf16 %v4248
    %v4271 = vunpack.c.l.bf16 %v4249
    %v4272 = vunpack.c.h.bf16 %v4249
    %v4273 = vunpack.c.l.bf16 %v4250
    %v4274 = vunpack.c.h.bf16 %v4250
    %v4275 = vunpack.c.l.bf16 %v4251
    %v4276 = vunpack.c.h.bf16 %v4251
    %v4277 = vunpack.c.l.bf16 %v4252
    %v4278 = vunpack.c.h.bf16 %v4252
    %v4279 = vunpack.c.l.bf16 %v4253
    %v4280 = vunpack.c.h.bf16 %v4253
    %v4281 = vunpack.c.l.bf16 %v4254
    %v4282 = vunpack.c.h.bf16 %v4254
    %v4283 = vunpack.c.l.bf16 %v4255
    %v4284 = vunpack.c.h.bf16 %v4255
    %v4285 = vunpack.c.l.bf16 %v4256
    %v4286 = vunpack.c.h.bf16 %v4256
    %v4287 = vunpack.c.l.bf16 %v4257
    %v4288 = vunpack.c.h.bf16 %v4257
    %v4289 = vunpack.c.l.bf16 %v4258
    %v4290 = vunpack.c.h.bf16 %v4258
    %v4291 = vrot.slane %v4201, 6
    %v4292 = vrot.slane %v4202, 5
    %v4293 = vsel %vm1124, %v4292, %v4291
    %v4294 = vrot.slane %v4203, 4
    %v4295 = vsel %vm1127, %v4294, %v4293
    %v4296 = vrot.slane %v4204, 3
    %v4297 = vsel %vm1130, %v4296, %v4295
    %v4298 = vrot.slane %v4205, 2
    %v4299 = vsel %vm1133, %v4298, %v4297
    %v4300 = vrot.slane %v4206, 1
    %v4301 = vsel %vm1136, %v4300, %v4299
    %v4302 = vsel %vm1139, %v4207, %v4301
    %v4303 = vrot.slane %v4208, 7
    %v4304 = vsel %vm1142, %v4303, %v4302
    %v4305 = vpack.c.b16 %v4304, %v4304
    %4307 = vmatprep.subr.bf16.mxu0 %v650
    %4308 = vmatpush1.bf16.msra.mxu0 %v649
    %4309 = vmatprep.subr.bf16.mxu0 %v654
    %4310 = vmatpush1.bf16.msra.mxu0 %v653
    %4311 = vmatprep.subr.bf16.mxu0 %v658
    %4312 = vmatpush1.bf16.msra.mxu0 %v657
    %4313 = vmatprep.subr.bf16.mxu0 %v662
    %4314 = vmatpush1.bf16.msra.mxu0 %v661
    %4315 = vmatprep.subr.bf16.mxu0 %v666
    %4316 = vmatpush1.bf16.msra.mxu0 %v665
    %4317 = vmatprep.subr.bf16.mxu0 %v670
    %4318 = vmatpush1.bf16.msra.mxu0 %v669
    %4319 = vmatprep.subr.bf16.mxu0 %v674
    %4320 = vmatpush1.bf16.msra.mxu0 %v673
    %4321 = vmatprep.subr.bf16.mxu0 %v678
    %4322 = vmatpush1.bf16.msra.mxu0 %v677
    %4323 = vmatprep.subr.bf16.mxu0 0
    %4324 = vmatpush1.bf16.msra.mxu0 0
    %4325 = vmatprep.subr.bf16.mxu0 0
    %4326 = vmatpush1.bf16.msra.mxu0 0
    %4327 = vmatprep.subr.bf16.mxu0 0
    %4328 = vmatpush1.bf16.msra.mxu0 0
    %4329 = vmatprep.subr.bf16.mxu0 0
    %4330 = vmatpush1.bf16.msra.mxu0 0
    %4331 = vmatprep.subr.bf16.mxu0 0
    %4332 = vmatpush1.bf16.msra.mxu0 0
    %4333 = vmatprep.subr.bf16.mxu0 0
    %4334 = vmatpush1.bf16.msra.mxu0 0
    %4335 = vmatprep.subr.bf16.mxu0 0
    %4336 = vmatpush1.bf16.msra.mxu0 0
    %4337 = vmatprep.subr.bf16.mxu0 0
    %4338 = vmatpush1.bf16.msra.mxu0 0
    %4339 = vmatprep.mubr.bf16.mxu0 0
    %4340 = vmatmul.mubr.bf16.gmra.mrb[0].mxu0 %v4305
    %v4341 = vpop.f32.mrb[0].mxu0
    %v4342 = vadd.f32 0.0, %v4341
    %v4343 = vpop.f32.mrb[0].mxu0
    %v4344 = vadd.f32 0.0, %v4343
    %v4345 = vpop.f32.mrb[0].mxu0
    %v4346 = vpop.f32.mrb[0].mxu0
    %4347 = vdwg.mxu0
    %4348 = vmatprep.subr.bf16.mxu0 %v652
    %4349 = vmatpush1.bf16.msra.mxu0 %v651
    %4350 = vmatprep.subr.bf16.mxu0 %v656
    %4351 = vmatpush1.bf16.msra.mxu0 %v655
    %4352 = vmatprep.subr.bf16.mxu0 %v660
    %4353 = vmatpush1.bf16.msra.mxu0 %v659
    %4354 = vmatprep.subr.bf16.mxu0 %v664
    %4355 = vmatpush1.bf16.msra.mxu0 %v663
    %4356 = vmatprep.subr.bf16.mxu0 %v668
    %4357 = vmatpush1.bf16.msra.mxu0 %v667
    %4358 = vmatprep.subr.bf16.mxu0 %v672
    %4359 = vmatpush1.bf16.msra.mxu0 %v671
    %4360 = vmatprep.subr.bf16.mxu0 %v676
    %4361 = vmatpush1.bf16.msra.mxu0 %v675
    %4362 = vmatprep.subr.bf16.mxu0 %v680
    %4363 = vmatpush1.bf16.msra.mxu0 %v679
    %4364 = vmatprep.subr.bf16.mxu0 0
    %4365 = vmatpush1.bf16.msra.mxu0 0
    %4366 = vmatprep.subr.bf16.mxu0 0
    %4367 = vmatpush1.bf16.msra.mxu0 0
    %4368 = vmatprep.subr.bf16.mxu0 0
    %4369 = vmatpush1.bf16.msra.mxu0 0
    %4370 = vmatprep.subr.bf16.mxu0 0
    %4371 = vmatpush1.bf16.msra.mxu0 0
    %4372 = vmatprep.subr.bf16.mxu0 0
    %4373 = vmatpush1.bf16.msra.mxu0 0
    %4374 = vmatprep.subr.bf16.mxu0 0
    %4375 = vmatpush1.bf16.msra.mxu0 0
    %4376 = vmatprep.subr.bf16.mxu0 0
    %4377 = vmatpush1.bf16.msra.mxu0 0
    %4378 = vmatprep.subr.bf16.mxu0 0
    %4379 = vmatpush1.bf16.msra.mxu0 0
    %4380 = vmatprep.mubr.bf16.mxu0 0
    %4381 = vmatmul.mubr.bf16.gmra.mrb[0].mxu0 %v4305
    %v4382 = vpop.f32.mrb[0].mxu0
    %v4383 = vadd.f32 0.0, %v4382
    %v4384 = vpop.f32.mrb[0].mxu0
    %v4385 = vadd.f32 0.0, %v4384
    %v4386 = vpop.f32.mrb[0].mxu0
    %v4387 = vpop.f32.mrb[0].mxu0
    %4388 = vdwg.mxu0
    %v4393 = vrot.slane %v4342, 1
    %v4394 = vrot.slane %v4344, 1
    %v4395 = vrot.slane %v4383, 1
    %v4396 = vrot.slane %v4385, 1
    %v4397 = vrot.slane %v4342, 2
    %v4398 = vrot.slane %v4344, 2
    %v4399 = vrot.slane %v4383, 2
    %v4400 = vrot.slane %v4385, 2
    %v4401 = vrot.slane %v4342, 3
    %v4402 = vrot.slane %v4344, 3
    %v4403 = vrot.slane %v4383, 3
    %v4404 = vrot.slane %v4385, 3
    %v4405 = vrot.slane %v4342, 4
    %v4406 = vrot.slane %v4344, 4
    %v4407 = vrot.slane %v4383, 4
    %v4408 = vrot.slane %v4385, 4
    %v4409 = vrot.slane %v4342, 5
    %v4410 = vrot.slane %v4344, 5
    %v4411 = vrot.slane %v4383, 5
    %v4412 = vrot.slane %v4385, 5
    %v4413 = vrot.slane %v4342, 6
    %v4414 = vrot.slane %v4344, 6
    %v4415 = vrot.slane %v4383, 6
    %v4416 = vrot.slane %v4385, 6
    %v4417 = vrot.slane %v4342, 7
    %v4418 = vrot.slane %v4344, 7
    %v4419 = vrot.slane %v4383, 7
    %v4420 = vrot.slane %v4385, 7
    %v4453 = vadd.f32 %v4259, %v4393
    %v4454 = vadd.f32 %v4260, %v4394
    %v4455 = vadd.f32 %v4261, %v4395
    %v4456 = vadd.f32 %v4262, %v4396
    %v4457 = vadd.f32 %v4263, %v4397
    %v4458 = vadd.f32 %v4264, %v4398
    %v4459 = vadd.f32 %v4265, %v4399
    %v4460 = vadd.f32 %v4266, %v4400
    %v4461 = vadd.f32 %v4267, %v4401
    %v4462 = vadd.f32 %v4268, %v4402
    %v4463 = vadd.f32 %v4269, %v4403
    %v4464 = vadd.f32 %v4270, %v4404
    %v4465 = vadd.f32 %v4271, %v4405
    %v4466 = vadd.f32 %v4272, %v4406
    %v4467 = vadd.f32 %v4273, %v4407
    %v4468 = vadd.f32 %v4274, %v4408
    %v4469 = vadd.f32 %v4275, %v4409
    %v4470 = vadd.f32 %v4276, %v4410
    %v4471 = vadd.f32 %v4277, %v4411
    %v4472 = vadd.f32 %v4278, %v4412
    %v4473 = vadd.f32 %v4279, %v4413
    %v4474 = vadd.f32 %v4280, %v4414
    %v4475 = vadd.f32 %v4281, %v4415
    %v4476 = vadd.f32 %v4282, %v4416
    %v4477 = vadd.f32 %v4283, %v4417
    %v4478 = vadd.f32 %v4284, %v4418
    %v4479 = vadd.f32 %v4285, %v4419
    %v4480 = vadd.f32 %v4286, %v4420
    %v4481 = vadd.f32 %v4287, %v4342
    %v4482 = vadd.f32 %v4288, %v4344
    %v4483 = vadd.f32 %v4289, %v4383
    %v4484 = vadd.f32 %v4290, %v4385
    %v4485 = vxor.u32 %v4453, 2147483648
    %v4486 = vxor.u32 %v4457, 2147483648
    %v4487 = vxor.u32 %v4461, 2147483648
    %v4488 = vxor.u32 %v4465, 2147483648
    %v4489 = vxor.u32 %v4469, 2147483648
    %v4490 = vxor.u32 %v4473, 2147483648
    %v4491 = vxor.u32 %v4477, 2147483648
    %v4492 = vxor.u32 %v4481, 2147483648
    %v4493 = vmul.f32 %v4485, 1.442695
    %v4494 = vpow.pop %v4493
    %v4495 = vmul.f32 %v4486, 1.442695
    %v4496 = vpow.pop %v4495
    %v4497 = vmul.f32 %v4487, 1.442695
    %v4498 = vpow.pop %v4497
    %v4499 = vmul.f32 %v4488, 1.442695
    %v4500 = vpow.pop %v4499
    %v4501 = vmul.f32 %v4489, 1.442695
    %v4502 = vpow.pop %v4501
    %v4503 = vmul.f32 %v4490, 1.442695
    %v4504 = vpow.pop %v4503
    %v4505 = vmul.f32 %v4491, 1.442695
    %v4506 = vpow.pop %v4505
    %v4507 = vmul.f32 %v4492, 1.442695
    %v4508 = vpow.pop %v4507
    %v4509 = vadd.f32 %v4494, 1.0
    %v4510 = vadd.f32 %v4496, 1.0
    %v4511 = vadd.f32 %v4498, 1.0
    %v4512 = vadd.f32 %v4500, 1.0
    %v4513 = vadd.f32 %v4502, 1.0
    %v4514 = vadd.f32 %v4504, 1.0
    %v4515 = vadd.f32 %v4506, 1.0
    %v4516 = vadd.f32 %v4508, 1.0
    %v4517 = vrcp.pop %v4509
    %v4518 = vmul.f32 1.0, %v4517
    %v4519 = vrcp.pop %v4510
    %v4520 = vmul.f32 1.0, %v4519
    %v4521 = vrcp.pop %v4511
    %v4522 = vmul.f32 1.0, %v4521
    %v4523 = vrcp.pop %v4512
    %v4524 = vmul.f32 1.0, %v4523
    %v4525 = vrcp.pop %v4513
    %v4526 = vmul.f32 1.0, %v4525
    %v4527 = vrcp.pop %v4514
    %v4528 = vmul.f32 1.0, %v4527
    %v4529 = vrcp.pop %v4515
    %v4530 = vmul.f32 1.0, %v4529
    %v4531 = vrcp.pop %v4516
    %v4532 = vmul.f32 1.0, %v4531
    %v4533 = vxor.u32 %v4454, 2147483648
    %v4534 = vxor.u32 %v4458, 2147483648
    %v4535 = vxor.u32 %v4462, 2147483648
    %v4536 = vxor.u32 %v4466, 2147483648
    %v4537 = vxor.u32 %v4470, 2147483648
    %v4538 = vxor.u32 %v4474, 2147483648
    %v4539 = vxor.u32 %v4478, 2147483648
    %v4540 = vxor.u32 %v4482, 2147483648
    %v4541 = vmul.f32 %v4533, 1.442695
    %v4542 = vpow.pop %v4541
    %v4543 = vmul.f32 %v4534, 1.442695
    %v4544 = vpow.pop %v4543
    %v4545 = vmul.f32 %v4535, 1.442695
    %v4546 = vpow.pop %v4545
    %v4547 = vmul.f32 %v4536, 1.442695
    %v4548 = vpow.pop %v4547
    %v4549 = vmul.f32 %v4537, 1.442695
    %v4550 = vpow.pop %v4549
    %v4551 = vmul.f32 %v4538, 1.442695
    %v4552 = vpow.pop %v4551
    %v4553 = vmul.f32 %v4539, 1.442695
    %v4554 = vpow.pop %v4553
    %v4555 = vmul.f32 %v4540, 1.442695
    %v4556 = vpow.pop %v4555
    %v4557 = vadd.f32 %v4542, 1.0
    %v4558 = vadd.f32 %v4544, 1.0
    %v4559 = vadd.f32 %v4546, 1.0
    %v4560 = vadd.f32 %v4548, 1.0
    %v4561 = vadd.f32 %v4550, 1.0
    %v4562 = vadd.f32 %v4552, 1.0
    %v4563 = vadd.f32 %v4554, 1.0
    %v4564 = vadd.f32 %v4556, 1.0
    %v4565 = vrcp.pop %v4557
    %v4566 = vmul.f32 1.0, %v4565
    %v4567 = vrcp.pop %v4558
    %v4568 = vmul.f32 1.0, %v4567
    %v4569 = vrcp.pop %v4559
    %v4570 = vmul.f32 1.0, %v4569
    %v4571 = vrcp.pop %v4560
    %v4572 = vmul.f32 1.0, %v4571
    %v4573 = vrcp.pop %v4561
    %v4574 = vmul.f32 1.0, %v4573
    %v4575 = vrcp.pop %v4562
    %v4576 = vmul.f32 1.0, %v4575
    %v4577 = vrcp.pop %v4563
    %v4578 = vmul.f32 1.0, %v4577
    %v4579 = vrcp.pop %v4564
    %v4580 = vmul.f32 1.0, %v4579
    %v4581 = vtanh.pop %v4455
    %v4582 = vtanh.pop %v4459
    %v4583 = vtanh.pop %v4463
    %v4584 = vtanh.pop %v4467
    %v4585 = vtanh.pop %v4471
    %v4586 = vtanh.pop %v4475
    %v4587 = vtanh.pop %v4479
    %v4588 = vtanh.pop %v4483
    %v4589 = vxor.u32 %v4456, 2147483648
    %v4590 = vxor.u32 %v4460, 2147483648
    %v4591 = vxor.u32 %v4464, 2147483648
    %v4592 = vxor.u32 %v4468, 2147483648
    %v4593 = vxor.u32 %v4472, 2147483648
    %v4594 = vxor.u32 %v4476, 2147483648
    %v4595 = vxor.u32 %v4480, 2147483648
    %v4596 = vxor.u32 %v4484, 2147483648
    %v4597 = vmul.f32 %v4589, 1.442695
    %v4598 = vpow.pop %v4597
    %v4599 = vmul.f32 %v4590, 1.442695
    %v4600 = vpow.pop %v4599
    %v4601 = vmul.f32 %v4591, 1.442695
    %v4602 = vpow.pop %v4601
    %v4603 = vmul.f32 %v4592, 1.442695
    %v4604 = vpow.pop %v4603
    %v4605 = vmul.f32 %v4593, 1.442695
    %v4606 = vpow.pop %v4605
    %v4607 = vmul.f32 %v4594, 1.442695
    %v4608 = vpow.pop %v4607
    %v4609 = vmul.f32 %v4595, 1.442695
    %v4610 = vpow.pop %v4609
    %v4611 = vmul.f32 %v4596, 1.442695
    %v4612 = vpow.pop %v4611
    %v4613 = vadd.f32 %v4598, 1.0
    %v4614 = vadd.f32 %v4600, 1.0
    %v4615 = vadd.f32 %v4602, 1.0
    %v4616 = vadd.f32 %v4604, 1.0
    %v4617 = vadd.f32 %v4606, 1.0
    %v4618 = vadd.f32 %v4608, 1.0
    %v4619 = vadd.f32 %v4610, 1.0
    %v4620 = vadd.f32 %v4612, 1.0
    %v4621 = vrcp.pop %v4613
    %v4622 = vmul.f32 1.0, %v4621
    %v4623 = vrcp.pop %v4614
    %v4624 = vmul.f32 1.0, %v4623
    %v4625 = vrcp.pop %v4615
    %v4626 = vmul.f32 1.0, %v4625
    %v4627 = vrcp.pop %v4616
    %v4628 = vmul.f32 1.0, %v4627
    %v4629 = vrcp.pop %v4617
    %v4630 = vmul.f32 1.0, %v4629
    %v4631 = vrcp.pop %v4618
    %v4632 = vmul.f32 1.0, %v4631
    %v4633 = vrcp.pop %v4619
    %v4634 = vmul.f32 1.0, %v4633
    %v4635 = vrcp.pop %v4620
    %v4636 = vmul.f32 1.0, %v4635
    %v4645 = vrot.slane %v4161, 7
    %v4646 = vrot.slane %v4162, 7
    %v4647 = vrot.slane %v4163, 7
    %v4648 = vrot.slane %v4164, 7
    %v4649 = vrot.slane %v4165, 7
    %v4650 = vrot.slane %v4166, 7
    %v4651 = vrot.slane %v4167, 7
    %v4652 = vrot.slane %v4168, 7
    %v4661 = vmul.f32 %v4566, %v4645
    %v4662 = vmul.f32 %v4568, %v4646
    %v4663 = vmul.f32 %v4570, %v4647
    %v4664 = vmul.f32 %v4572, %v4648
    %v4665 = vmul.f32 %v4574, %v4649
    %v4666 = vmul.f32 %v4576, %v4650
    %v4667 = vmul.f32 %v4578, %v4651
    %v4668 = vmul.f32 %v4580, %v4652
    %v4669 = vmul.f32 %v4518, %v4581
    %v4670 = vmul.f32 %v4520, %v4582
    %v4671 = vmul.f32 %v4522, %v4583
    %v4672 = vmul.f32 %v4524, %v4584
    %v4673 = vmul.f32 %v4526, %v4585
    %v4674 = vmul.f32 %v4528, %v4586
    %v4675 = vmul.f32 %v4530, %v4587
    %v4676 = vmul.f32 %v4532, %v4588
    %v4677 = vadd.f32 %v4661, %v4669
    %v4678 = vadd.f32 %v4662, %v4670
    %v4679 = vadd.f32 %v4663, %v4671
    %v4680 = vadd.f32 %v4664, %v4672
    %v4681 = vadd.f32 %v4665, %v4673
    %v4682 = vadd.f32 %v4666, %v4674
    %v4683 = vadd.f32 %v4667, %v4675
    %v4684 = vadd.f32 %v4668, %v4676
    %v4685 = vtanh.pop %v4677
    %v4686 = vtanh.pop %v4678
    %v4687 = vtanh.pop %v4679
    %v4688 = vtanh.pop %v4680
    %v4689 = vtanh.pop %v4681
    %v4690 = vtanh.pop %v4682
    %v4691 = vtanh.pop %v4683
    %v4692 = vtanh.pop %v4684
    %v4693 = vmul.f32 %v4622, %v4685
    %v4694 = vmul.f32 %v4624, %v4686
    %v4695 = vmul.f32 %v4626, %v4687
    %v4696 = vmul.f32 %v4628, %v4688
    %v4697 = vmul.f32 %v4630, %v4689
    %v4698 = vmul.f32 %v4632, %v4690
    %v4699 = vmul.f32 %v4634, %v4691
    %v4700 = vmul.f32 %v4636, %v4692
    %v4701 = vpack.c.bf16 %v4693, %v4693
    %v4702 = vpack.c.bf16 %v4694, %v4694
    %v4703 = vpack.c.bf16 %v4695, %v4695
    %v4704 = vpack.c.bf16 %v4696, %v4696
    %v4705 = vpack.c.bf16 %v4697, %v4697
    %v4706 = vpack.c.bf16 %v4698, %v4698
    %v4707 = vpack.c.bf16 %v4699, %v4699
    %v4708 = vpack.c.bf16 %v4700, %v4700
    %v4717 = vunpack.c.l.b16 %v4701
    %v4718 = vunpack.c.l.b16 %v4702
    %v4719 = vunpack.c.l.b16 %v4703
    %v4720 = vunpack.c.l.b16 %v4704
    %v4721 = vunpack.c.l.b16 %v4705
    %v4722 = vunpack.c.l.b16 %v4706
    %v4723 = vunpack.c.l.b16 %v4707
    %v4724 = vunpack.c.l.b16 %v4708
    %v4725 = vpack.c.b16 %v4717, %v4717
    %v4726 = vpack.c.b16 %v4718, %v4718
    %v4727 = vpack.c.b16 %v4719, %v4719
    %v4728 = vpack.c.b16 %v4720, %v4720
    %v4729 = vpack.c.b16 %v4721, %v4721
    %v4730 = vpack.c.b16 %v4722, %v4722
    %v4731 = vpack.c.b16 %v4723, %v4723
    %v4732 = vpack.c.b16 %v4724, %v4724
    %v4733 = vunpack.c.l.b16 %v4725
    %v4734 = vunpack.c.l.b16 %v4726
    %v4735 = vunpack.c.l.b16 %v4727
    %v4736 = vunpack.c.l.b16 %v4728
    %v4737 = vunpack.c.l.b16 %v4729
    %v4738 = vunpack.c.l.b16 %v4730
    %v4739 = vunpack.c.l.b16 %v4731
    %v4740 = vunpack.c.l.b16 %v4732
    %v4741 = vrot.slane %v4733, 7
    %v4742 = vrot.slane %v4734, 6
    %v4743 = vsel %vm1124, %v4742, %v4741
    %v4744 = vrot.slane %v4735, 5
    %v4745 = vsel %vm1127, %v4744, %v4743
    %v4746 = vrot.slane %v4736, 4
    %v4747 = vsel %vm1130, %v4746, %v4745
    %v4748 = vrot.slane %v4737, 3
    %v4749 = vsel %vm1133, %v4748, %v4747
    %v4750 = vrot.slane %v4738, 2
    %v4751 = vsel %vm1136, %v4750, %v4749
    %v4752 = vrot.slane %v4739, 1
    %v4753 = vsel %vm1139, %v4752, %v4751
    %v4754 = vsel %vm1142, %v4740, %v4753
    %v4755 = vpack.c.b16 %v4754, %v4754
    %s4757 = scalar_lea.vmem [#allocation3], 28
    %4758 = vst [vmem:[%s4757] sm:$0xf] %v4755
    %v4759 = vld [vmem:[#allocation3] sm:$0xf]
    %v4760 = vld [vmem:[#allocation3 + $0x4] sm:$0xf]
    %v4761 = vld [vmem:[#allocation3 + $0x8] sm:$0xf]
    %v4762 = vld [vmem:[#allocation3 + $0xc] sm:$0xf]
    %v4763 = vld [vmem:[#allocation3 + $0x10] sm:$0xf]
    %v4764 = vld [vmem:[#allocation3 + $0x14] sm:$0xf]
    %v4765 = vld [vmem:[#allocation3 + $0x18] sm:$0xf]
    %v4766 = vld [vmem:[#allocation3 + $0x1c] sm:$0xf]
    %v4767 = vld [vmem:[%s1] sm:$0x1]
    %v4768 = vlaneseq
    %v4769 = vshrl.u32 %v4768, 7
    %v4770 = vlaneseq
    %v4771 = vshrl.u32 %v4770, 7
    %v4772 = vsub.s32 0, %v4771
    %v4773 = vrot.slane %v4767, %v4772
    %vm4774 = vcmp.lt.s32.totalorder %v4769, %v4773
    %v4775 = vsel %vm4774, 1, 0
    %v4776 = vcvt.s32.f32 %v4775
    %v4777 = vld [vmem:[#allocation11] sm:$0xf]
    %v4778 = vld [vmem:[#allocation11 + $0x4] sm:$0xf]
    %v4779 = vld [vmem:[#allocation11 + $0x8] sm:$0xf]
    %v4780 = vld [vmem:[#allocation11 + $0xc] sm:$0xf]
    %v4781 = vld [vmem:[#allocation11 + $0x10] sm:$0xf]
    %v4782 = vld [vmem:[#allocation11 + $0x14] sm:$0xf]
    %v4783 = vld [vmem:[#allocation11 + $0x18] sm:$0xf]
    %v4784 = vld [vmem:[#allocation11 + $0x1c] sm:$0xf]
    %v4785 = vld [vmem:[#allocation11 + $0x20] sm:$0xf]
    %v4786 = vld [vmem:[#allocation11 + $0x24] sm:$0xf]
    %v4787 = vld [vmem:[#allocation11 + $0x28] sm:$0xf]
    %v4788 = vld [vmem:[#allocation11 + $0x2c] sm:$0xf]
    %v4789 = vld [vmem:[#allocation11 + $0x30] sm:$0xf]
    %v4790 = vld [vmem:[#allocation11 + $0x34] sm:$0xf]
    %v4791 = vld [vmem:[#allocation11 + $0x38] sm:$0xf]
    %v4792 = vld [vmem:[#allocation11 + $0x3c] sm:$0xf]
    %v4793 = vld [vmem:[%s6] sm:$0x1]
    %v4795 = vlaneseq
    %v4796 = vshrl.u32 %v4795, 7
    %v4797 = vsub.s32 0, %v4796
    %v4798 = vrot.slane %v4793, %v4797
    %v4808 = vunpack.c.l.b16 %v4759
    %v4809 = vunpack.c.l.b16 %v4760
    %v4810 = vunpack.c.l.b16 %v4761
    %v4811 = vunpack.c.l.b16 %v4762
    %v4812 = vunpack.c.l.b16 %v4763
    %v4813 = vunpack.c.l.b16 %v4764
    %v4814 = vunpack.c.l.b16 %v4765
    %v4815 = vunpack.c.l.b16 %v4766
    %v4816 = vpack.c.b16 %v4809, %v4808
    %v4817 = vpack.c.b16 %v4811, %v4810
    %v4818 = vpack.c.b16 %v4813, %v4812
    %v4819 = vpack.c.b16 %v4815, %v4814
    %v4840 = vunpack.c.l.b16 %v4777
    %v4841 = vunpack.c.l.b16 %v4778
    %v4842 = vunpack.c.l.b16 %v4779
    %v4843 = vunpack.c.l.b16 %v4780
    %v4844 = vunpack.c.l.b16 %v4781
    %v4845 = vunpack.c.l.b16 %v4782
    %v4846 = vunpack.c.l.b16 %v4783
    %v4847 = vunpack.c.l.b16 %v4784
    %v4848 = vunpack.c.l.b16 %v4785
    %v4849 = vunpack.c.l.b16 %v4786
    %v4850 = vunpack.c.l.b16 %v4787
    %v4851 = vunpack.c.l.b16 %v4788
    %v4852 = vunpack.c.l.b16 %v4789
    %v4853 = vunpack.c.l.b16 %v4790
    %v4854 = vunpack.c.l.b16 %v4791
    %v4855 = vunpack.c.l.b16 %v4792
    %v4856 = vpack.c.b16 %v4841, %v4840
    %v4857 = vpack.c.b16 %v4843, %v4842
    %v4858 = vpack.c.b16 %v4845, %v4844
    %v4859 = vpack.c.b16 %v4847, %v4846
    %v4860 = vpack.c.b16 %v4849, %v4848
    %v4861 = vpack.c.b16 %v4851, %v4850
    %v4862 = vpack.c.b16 %v4853, %v4852
    %v4863 = vpack.c.b16 %v4855, %v4854
    %4872 = vmatprep.subr.bf16.mxu0 0
    %4873 = vmatpush1.bf16.msra.mxu0 %v4856
    %4874 = vmatprep.subr.bf16.mxu0 0
    %4875 = vmatpush1.bf16.msra.mxu0 %v4857
    %4876 = vmatprep.subr.bf16.mxu0 0
    %4877 = vmatpush1.bf16.msra.mxu0 %v4858
    %4878 = vmatprep.subr.bf16.mxu0 0
    %4879 = vmatpush1.bf16.msra.mxu0 %v4859
    %4880 = vmatprep.subr.bf16.mxu0 0
    %4881 = vmatpush1.bf16.msra.mxu0 %v4860
    %4882 = vmatprep.subr.bf16.mxu0 0
    %4883 = vmatpush1.bf16.msra.mxu0 %v4861
    %4884 = vmatprep.subr.bf16.mxu0 0
    %4885 = vmatpush1.bf16.msra.mxu0 %v4862
    %4886 = vmatprep.subr.bf16.mxu0 0
    %4887 = vmatpush1.bf16.msra.mxu0 %v4863
    %4888 = vmatprep.subr.bf16.mxu0 0
    %4889 = vmatpush1.bf16.msra.mxu0 0
    %4890 = vmatprep.subr.bf16.mxu0 0
    %4891 = vmatpush1.bf16.msra.mxu0 0
    %4892 = vmatprep.subr.bf16.mxu0 0
    %4893 = vmatpush1.bf16.msra.mxu0 0
    %4894 = vmatprep.subr.bf16.mxu0 0
    %4895 = vmatpush1.bf16.msra.mxu0 0
    %4896 = vmatprep.subr.bf16.mxu0 0
    %4897 = vmatpush1.bf16.msra.mxu0 0
    %4898 = vmatprep.subr.bf16.mxu0 0
    %4899 = vmatpush1.bf16.msra.mxu0 0
    %4900 = vmatprep.subr.bf16.mxu0 0
    %4901 = vmatpush1.bf16.msra.mxu0 0
    %4902 = vmatprep.subr.bf16.mxu0 0
    %4903 = vmatpush1.bf16.msra.mxu0 0
    %4904 = vmatprep.mubr.bf16.mxu0 0
    %4905 = vmatmul.mubr.bf16.gmra.mrb[0].mxu0 %v4816
    %v4906 = vpop.f32.mrb[0].mxu0
    %v4907 = vadd.f32 %v4798, %v4906
    %v4908 = vpop.f32.mrb[0].mxu0
    %v4909 = vpop.f32.mrb[0].mxu0
    %v4910 = vadd.f32 %v4798, %v4909
    %v4911 = vpop.f32.mrb[0].mxu0
    %4912 = vmatprep.mubr.bf16.mxu0 0
    %4913 = vmatmul.mubr.bf16.gmra.mrb[0].mxu0 %v4817
    %v4914 = vpop.f32.mrb[0].mxu0
    %v4915 = vadd.f32 %v4798, %v4914
    %v4916 = vpop.f32.mrb[0].mxu0
    %v4917 = vpop.f32.mrb[0].mxu0
    %v4918 = vadd.f32 %v4798, %v4917
    %v4919 = vpop.f32.mrb[0].mxu0
    %4920 = vmatprep.mubr.bf16.mxu0 0
    %4921 = vmatmul.mubr.bf16.gmra.mrb[0].mxu0 %v4818
    %v4922 = vpop.f32.mrb[0].mxu0
    %v4923 = vadd.f32 %v4798, %v4922
    %v4924 = vpop.f32.mrb[0].mxu0
    %v4925 = vpop.f32.mrb[0].mxu0
    %v4926 = vadd.f32 %v4798, %v4925
    %v4927 = vpop.f32.mrb[0].mxu0
    %4928 = vmatprep.mubr.bf16.mxu0 0
    %4929 = vmatmul.mubr.bf16.gmra.mrb[0].mxu0 %v4819
    %v4930 = vpop.f32.mrb[0].mxu0
    %v4931 = vadd.f32 %v4798, %v4930
    %v4932 = vpop.f32.mrb[0].mxu0
    %v4933 = vpop.f32.mrb[0].mxu0
    %v4934 = vadd.f32 %v4798, %v4933
    %v4935 = vpop.f32.mrb[0].mxu0
    %4936 = vdwg.mxu0
    %v4937 = vtanh.pop %v4907
    %v4938 = vtanh.pop %v4910
    %v4939 = vtanh.pop %v4915
    %v4940 = vtanh.pop %v4918
    %v4941 = vtanh.pop %v4923
    %v4942 = vtanh.pop %v4926
    %v4943 = vtanh.pop %v4931
    %v4944 = vtanh.pop %v4934
    %v4945 = vld [vmem:[%s7] sm:$0x1]
    %v4947 = vlaneseq
    %v4948 = vshrl.u32 %v4947, 7
    %v4949 = vsub.s32 0, %v4948
    %v4950 = vrot.slane %v4945, %v4949
    %v4952 = vmul.f32 %v4937, %v4950
    %v4953 = vmul.f32 %v4938, %v4950
    %v4954 = vmul.f32 %v4939, %v4950
    %v4955 = vmul.f32 %v4940, %v4950
    %v4956 = vmul.f32 %v4941, %v4950
    %v4957 = vmul.f32 %v4942, %v4950
    %v4958 = vmul.f32 %v4943, %v4950
    %v4959 = vmul.f32 %v4944, %v4950
    %4960 = vadd.xlane.f32.xlu0 %v4952
    %v4961 = vpop.xlane.xlu0 %4960
    %4962 = vadd.xlane.f32.xlu0 %v4953
    %v4963 = vpop.xlane.xlu0 %4962
    %4964 = vadd.xlane.f32.xlu0 %v4954
    %v4965 = vpop.xlane.xlu0 %4964
    %4966 = vadd.xlane.f32.xlu0 %v4955
    %v4967 = vpop.xlane.xlu0 %4966
    %4968 = vadd.xlane.f32.xlu0 %v4956
    %v4969 = vpop.xlane.xlu0 %4968
    %4970 = vadd.xlane.f32.xlu0 %v4957
    %v4971 = vpop.xlane.xlu0 %4970
    %4972 = vadd.xlane.f32.xlu0 %v4958
    %v4973 = vpop.xlane.xlu0 %4972
    %4974 = vadd.xlane.f32.xlu0 %v4959
    %v4975 = vpop.xlane.xlu0 %4974
    %v4984 = vlaneseq
    %v4985 = vand.u32 %v4984, 127
    %v4986 = vlaneseq
    %v4987 = vshrl.u32 %v4986, 7
    %v4988 = vsub.s32 %v4985, %v4987
    %v4989 = vrot.slane %v4961, %v4988
    %v4990 = vlaneseq
    %v4991 = vshrl.u32 %v4990, 7
    %v4992 = vsub.s32 %v4985, %v4991
    %v4993 = vrot.slane %v4963, %v4992
    %v4994 = vlaneseq
    %v4995 = vshrl.u32 %v4994, 7
    %v4996 = vsub.s32 %v4985, %v4995
    %v4997 = vrot.slane %v4965, %v4996
    %v4998 = vlaneseq
    %v4999 = vshrl.u32 %v4998, 7
    %v5000 = vsub.s32 %v4985, %v4999
    %v5001 = vrot.slane %v4967, %v5000
    %v5002 = vlaneseq
    %v5003 = vshrl.u32 %v5002, 7
    %v5004 = vsub.s32 %v4985, %v5003
    %v5005 = vrot.slane %v4969, %v5004
    %v5006 = vlaneseq
    %v5007 = vshrl.u32 %v5006, 7
    %v5008 = vsub.s32 %v4985, %v5007
    %v5009 = vrot.slane %v4971, %v5008
    %v5010 = vlaneseq
    %v5011 = vshrl.u32 %v5010, 7
    %v5012 = vsub.s32 %v4985, %v5011
    %v5013 = vrot.slane %v4973, %v5012
    %v5014 = vlaneseq
    %v5015 = vshrl.u32 %v5014, 7
    %v5016 = vsub.s32 %v4985, %v5015
    %v5017 = vrot.slane %v4975, %v5016
    %v5018 = vsel %vm1124, %v4993, %v4989
    %v5019 = vsel %vm1127, %v4997, %v5018
    %v5020 = vsel %vm1130, %v5001, %v5019
    %v5021 = vsel %vm1133, %v5005, %v5020
    %v5022 = vsel %vm1136, %v5009, %v5021
    %v5023 = vsel %vm1139, %v5013, %v5022
    %v5024 = vsel %vm1142, %v5017, %v5023
    %v5026 = vsel %vm4774, %v5024, -1e+30
    %vm5027 = vcmask 64512
    %v5028 = vsel %vm5027, %v5026, -inf
    %v5029 = vrot.slane %v5028, 4
    %v5030 = vmax.f32 %v5028, %v5029
    %v5031 = vrot.slane %v5030, 2
    %v5032 = vmax.f32 %v5030, %v5031
    %v5033 = vrot.slane %v5032, 1
    %v5034 = vmax.f32 %v5032, %v5033
    %v5035 = vsub.f32 %v5026, %v5034
    %v5036 = vmul.f32 %v5035, 1.442695
    %v5037 = vpow.pop %v5036
    %v5038 = vmul.f32 %v5037, %v4776
    %v5039 = vsel %vm5027, %v5038, 0.0
    %v5040 = vrot.slane %v5039, 4
    %v5041 = vadd.f32 %v5039, %v5040
    %v5042 = vrot.slane %v5041, 2
    %v5043 = vadd.f32 %v5041, %v5042
    %v5044 = vrot.slane %v5043, 1
    %v5045 = vadd.f32 %v5043, %v5044
    %v5046 = vmax.f32 %v5045, 1e-20
    %v5047 = vrcp.pop %v5046
    %v5048 = vmul.f32 %v5038, %v5047
    %v5049 = vlaneseq
    %v5050 = vshrl.u32 %v5049, 7
    %v5051 = vsub.s32 0, %v5050
    %v5052 = vrot.slane %v5048, %v5051
    %5054 = vbcast.lane.b32.xlu0 %v5052, 256
    %v5055 = vpop.permute.xlu0 %5054
    %v5056 = vlaneseq
    %v5057 = vshrl.u32 %v5056, 7
    %v5058 = vsub.s32 1, %v5057
    %v5059 = vrot.slane %v5048, %v5058
    %5061 = vbcast.lane.b32.xlu0 %v5059, 256
    %v5062 = vpop.permute.xlu0 %5061
    %v5063 = vlaneseq
    %v5064 = vshrl.u32 %v5063, 7
    %v5065 = vsub.s32 2, %v5064
    %v5066 = vrot.slane %v5048, %v5065
    %5068 = vbcast.lane.b32.xlu0 %v5066, 256
    %v5069 = vpop.permute.xlu0 %5068
    %v5070 = vlaneseq
    %v5071 = vshrl.u32 %v5070, 7
    %v5072 = vsub.s32 3, %v5071
    %v5073 = vrot.slane %v5048, %v5072
    %5075 = vbcast.lane.b32.xlu0 %v5073, 256
    %v5076 = vpop.permute.xlu0 %5075
    %v5077 = vlaneseq
    %v5078 = vshrl.u32 %v5077, 7
    %v5079 = vsub.s32 4, %v5078
    %v5080 = vrot.slane %v5048, %v5079
    %5082 = vbcast.lane.b32.xlu0 %v5080, 256
    %v5083 = vpop.permute.xlu0 %5082
    %v5084 = vlaneseq
    %v5085 = vshrl.u32 %v5084, 7
    %v5086 = vsub.s32 5, %v5085
    %v5087 = vrot.slane %v5048, %v5086
    %5089 = vbcast.lane.b32.xlu0 %v5087, 256
    %v5090 = vpop.permute.xlu0 %5089
    %v5091 = vlaneseq
    %v5092 = vshrl.u32 %v5091, 7
    %v5093 = vsub.s32 6, %v5092
    %v5094 = vrot.slane %v5048, %v5093
    %5096 = vbcast.lane.b32.xlu0 %v5094, 256
    %v5097 = vpop.permute.xlu0 %5096
    %v5098 = vlaneseq
    %v5099 = vshrl.u32 %v5098, 7
    %v5100 = vsub.s32 7, %v5099
    %v5101 = vrot.slane %v5048, %v5100
    %5103 = vbcast.lane.b32.xlu0 %v5101, 256
    %v5104 = vpop.permute.xlu0 %5103
    %v5105 = vunpack.c.l.bf16 %v4759
    %v5106 = vunpack.c.l.bf16 %v4760
    %v5107 = vunpack.c.l.bf16 %v4761
    %v5108 = vunpack.c.l.bf16 %v4762
    %v5109 = vunpack.c.l.bf16 %v4763
    %v5110 = vunpack.c.l.bf16 %v4764
    %v5111 = vunpack.c.l.bf16 %v4765
    %v5112 = vunpack.c.l.bf16 %v4766
    %v5113 = vmul.f32 %v5055, %v5105
    %v5114 = vmul.f32 %v5062, %v5106
    %v5115 = vmul.f32 %v5069, %v5107
    %v5116 = vmul.f32 %v5076, %v5108
    %v5117 = vmul.f32 %v5083, %v5109
    %v5118 = vmul.f32 %v5090, %v5110
    %v5119 = vmul.f32 %v5097, %v5111
    %v5120 = vmul.f32 %v5104, %v5112
    %v5121 = vadd.f32 %v5113, %v5114
    %v5122 = vadd.f32 %v5121, %v5115
    %v5123 = vadd.f32 %v5122, %v5116
    %v5124 = vadd.f32 %v5123, %v5117
    %v5125 = vadd.f32 %v5124, %v5118
    %v5126 = vadd.f32 %v5125, %v5119
    %v5127 = vadd.f32 %v5126, %v5120
    %5128 = vst [vmem:[#allocation13] sm:$0xff] %v5127
    %v5129 = vld [vmem:[%s8] sm:$0x1]
    %v5130 = vld [vmem:[#allocation4] sm:$0x1]
    %v5132 = vlaneseq
    %v5133 = vshrl.u32 %v5132, 7
    %v5134 = vsub.s32 0, %v5133
    %v5135 = vrot.slane %v5129, %v5134
    %v5137 = vmul.f32 %v5127, %v5135
    %5138 = vadd.xlane.f32.xlu0 %v5137
    %v5139 = vpop.xlane.xlu0 %5138
    %v5141 = vlaneseq
    %v5142 = vshrl.u32 %v5141, 7
    %v5143 = vsub.s32 0, %v5142
    %v5144 = vrot.slane %v5130, %v5143
    %v5146 = vadd.f32 %v5139, %v5144
    %v5147 = vxor.u32 %v5146, 2147483648
    %v5148 = vmul.f32 %v5147, 1.442695
    %v5149 = vpow.pop %v5148
    %v5150 = vadd.f32 %v5149, 1.0
    %v5151 = vrcp.pop %v5150
    %v5152 = vmul.f32 1.0, %v5151
    %vm5153 = vcmask 7168
    %5154 = vst.msk [vmem:[%s11] sm:$0xff] %vm5153, %v5152
    // Predicated region
    $region58: #{tpu_custom_call.1} parent=1 // pred_check
      _
    $region59: #{tpu_custom_call.1} parent=1 // pred_check_branch
      %5156 = sbr.rel (0) target = $region61
    $region60: #{tpu_custom_call.1} parent=1 // pred_region
      %s5158 = ssub.s32 128, 128
      %5159 = vsyncadd [#allocation7], %s5158
      %s5161 = sshll.u32 [#allocation13], 4
      %s5162 = int_to_ptr.vmem [resolvable:$true] %s5161
      %5164 = dma.vmem_to_hbm [thread:$0]  %s5162, 128, %s10, [#allocation7]
    $region61: #{tpu_custom_call.1} parent=1 // pred_fallthru
      _
    // Predicated region
    $region62: #{tpu_custom_call.1} parent=1 // pred_check
      _
    $region63: #{tpu_custom_call.1} parent=1 // pred_check_branch
      %5166 = sbr.rel (0) target = $region65
    $region64: #{tpu_custom_call.1} parent=1 // pred_region
      _
    $region65: #{tpu_custom_call.1} parent=1 // pred_fallthru
      _
    // Predicated region
    $region66: #{tpu_custom_call.1} parent=1 // pred_check
      _
    $region67: #{tpu_custom_call.1} parent=1 // pred_check_branch
      %5168 = sbr.rel (0) target = $region69
    $region68: #{tpu_custom_call.1} parent=1 // pred_region
      %5169 = dma.done [#allocation7], 128
    $region69: #{tpu_custom_call.1} parent=1 // pred_fallthru
      _
    // Predicated region
    $region70: #{tpu_custom_call.1} parent=1 // pred_check
      _
    $region71: #{tpu_custom_call.1} parent=1 // pred_check_branch
      %5171 = sbr.rel (0) target = $region73
    $region72: #{tpu_custom_call.1} parent=1 // pred_region
      _
    $region73: #{tpu_custom_call.1} parent=1 // pred_fallthru
      _
    %5172 = vsyncpa [#allocation6], 1
    %5173 = vsyncpa [#allocation9], 1
    %5174 = vsyncpa [#allocation12], 1
    %5175 = vsyncpa [#allocation7], 1

</llo_original>
